<compile_context>
chip_gen: v5e
topology: v5e:2x2
jax: 0.10.0
libtpu: 0.0.40
codegen_flags: <defaults>
</compile_context>

<pallas_src>
import functools

import jax
import jax.numpy as jnp
from jax import lax
from jax.experimental import pallas as pl
from jax.experimental.pallas import tpu as pltpu

EPS = 1e-5

# Whole-problem-in-VMEM fused path (single pallas_call) is taken when the input
# activation is at most this big and the batch is small enough to unroll.
_FUSED_MAX_X_BYTES = 4 << 20
_FUSED_MAX_BATCH = 8

# Lane (H*W) tile sizes for the tiled 3-pass path.
_T_HW = 1024        # passes A/B: x tile = 608*1024*4B ~ 2.4 MB (double buffered)
_T_HW_BN2 = 4096    # pass C: y tile = 128*4096*4B ~ 2 MB


# ---------------------------------------------------------------------------
# bf16 hi/lo split matmul: ~f32 accuracy at bf16 MXU speed.
# ---------------------------------------------------------------------------
def _split_bf16(a_f32):
    hi = a_f32.astype(jnp.bfloat16)
    lo = (a_f32 - hi.astype(jnp.float32)).astype(jnp.bfloat16)
    return hi, lo


def _split_matmul(w_hi, w_lo, xh_f32):
    """(Cout, Cin) @ (Cin, T) as three bf16 MXU matmuls with f32 accumulation.

    Error vs. a true f32 matmul is ~1e-4 relative (dropped lo*lo term), well
    inside the test tolerance, while staying on the fast bf16 MXU path that the
    review asked for on v5e/v7x.  Note: bf16 storage of the y intermediate was
    considered and skipped -- it alone would exceed the ~1e-3 tolerance.
    """
    xh_hi = xh_f32.astype(jnp.bfloat16)
    xh_lo = (xh_f32 - xh_hi.astype(jnp.float32)).astype(jnp.bfloat16)
    y = jnp.dot(w_hi, xh_hi, preferred_element_type=jnp.float32)
    y = y + jnp.dot(w_lo, xh_hi, preferred_element_type=jnp.float32)
    y = y + jnp.dot(w_hi, xh_lo, preferred_element_type=jnp.float32)
    return y


# ---------------------------------------------------------------------------
# Fused single-invocation kernel (small shapes -- includes the spec shape).
# ---------------------------------------------------------------------------
def _fused_small_kernel(x_ref, g1_ref, b1_ref, wh_ref, wl_ref, g2_ref, b2_ref,
                        o_ref, *, n_batch, inv_m):
    # x_ref: (N, Cin, HW) f32, fully resident in VMEM.  o_ref: (N, Cout, HW).
    # g1/b1: (Cin, 1); g2/b2: (Cout, 1); w_hi/w_lo: (Cout, Cin) bf16.
    # --- BN1 batch statistics (sum over batch and spatial lanes) -------------
    s1 = jnp.zeros_like(g1_ref[...])
    q1 = jnp.zeros_like(g1_ref[...])
    for n in range(n_batch):                       # static unroll (n_batch <= 8)
        xn = x_ref[n]                              # (Cin, HW)
        s1 = s1 + jnp.sum(xn, axis=1, keepdims=True)
        q1 = q1 + jnp.sum(xn * xn, axis=1, keepdims=True)
    mean1 = s1 * inv_m
    # E[x^2] - mean^2 with a clamp against tiny negative cancellation.
    var1 = jnp.maximum(q1 * inv_m - mean1 * mean1, 0.0)
    scale1 = g1_ref[...] * lax.rsqrt(var1 + EPS)
    shift1 = b1_ref[...] - mean1 * scale1

    # --- BN1 affine + ReLU + 1x1 conv (MXU) + BN2 statistics -----------------
    w_hi = wh_ref[...]
    w_lo = wl_ref[...]
    s2 = jnp.zeros_like(g2_ref[...])
    q2 = jnp.zeros_like(g2_ref[...])
    for n in range(n_batch):
        xh = jnp.maximum(x_ref[n] * scale1 + shift1, 0.0)     # (Cin, HW)
        yn = _split_matmul(w_hi, w_lo, xh)                     # (Cout, HW) f32
        o_ref[n] = yn                      # stage y in the VMEM output block
        s2 = s2 + jnp.sum(yn, axis=1, keepdims=True)
        q2 = q2 + jnp.sum(yn * yn, axis=1, keepdims=True)
    mean2 = s2 * inv_m
    var2 = jnp.maximum(q2 * inv_m - mean2 * mean2, 0.0)
    scale2 = g2_ref[...] * lax.rsqrt(var2 + EPS)
    shift2 = b2_ref[...] - mean2 * scale2

    # --- BN2 affine, in place over the staged y -------------------------------
    for n in range(n_batch):
        o_ref[n] = o_ref[n] * scale2 + shift2


# ---------------------------------------------------------------------------
# Tiled 3-pass path (large shapes).
# ---------------------------------------------------------------------------
def _stats1_kernel(x_ref, sum_ref, sq_ref, *, t_hw, hw_valid, ragged):
    """Pass A: per-channel sum / sum-of-squares of x, accumulated over the grid."""
    b = pl.program_id(0)
    j = pl.program_id(1)

    @pl.when(jnp.logical_and(b == 0, j == 0))
    def _():
        sum_ref[...] = jnp.zeros_like(sum_ref)
        sq_ref[...] = jnp.zeros_like(sq_ref)

    x = x_ref[0]                                   # (Cin, t_hw)
    if ragged:
        # Pallas does not zero out-of-bounds lanes of a ragged edge block.
        lane = lax.broadcasted_iota(jnp.int32, x.shape, 1) + j * t_hw
        x = jnp.where(lane < hw_valid, x, 0.0)
    sum_ref[...] += jnp.sum(x, axis=1, keepdims=True)
    sq_ref[...] += jnp.sum(x * x, axis=1, keepdims=True)


def _bn1_relu_conv_kernel(x_ref, sc1_ref, sh1_ref, wh_ref, wl_ref,
                          y_ref, sum2_ref, sq2_ref, *, t_hw, hw_valid, ragged):
    """Pass B: fused BN1 affine + ReLU + 1x1-conv matmul; y write + BN2 stats."""
    b = pl.program_id(0)
    j = pl.program_id(1)

    @pl.when(jnp.logical_and(b == 0, j == 0))
    def _():
        sum2_ref[...] = jnp.zeros_like(sum2_ref)
        sq2_ref[...] = jnp.zeros_like(sq2_ref)

    xh = jnp.maximum(x_ref[0] * sc1_ref[...] + sh1_ref[...], 0.0)   # (Cin, t_hw)
    y = _split_matmul(wh_ref[...], wl_ref[...], xh)                  # (Cout, t_hw)
    if ragged:
        # Mask only the (Cout, t_hw) matmul output (5x smaller than x): padded
        # lanes then contribute exactly 0 to the BN2 statistics.  Out-of-bounds
        # lanes are never written back to HBM (the store is clamped).
        lane = lax.broadcasted_iota(jnp.int32, y.shape, 1) + j * t_hw
        y = jnp.where(lane < hw_valid, y, 0.0)
    y_ref[0] = y
    sum2_ref[...] += jnp.sum(y, axis=1, keepdims=True)
    sq2_ref[...] += jnp.sum(y * y, axis=1, keepdims=True)


def _bn2_kernel(y_ref, sc2_ref, sh2_ref, o_ref):
    """Pass C: BN2 as a fused affine, applied in place (output aliases y)."""
    o_ref[0] = y_ref[0] * sc2_ref[...] + sh2_ref[...]


# ---------------------------------------------------------------------------
# Wrapper
# ---------------------------------------------------------------------------
@jax.jit
def bn_relu_conv_bn(x_nchw, gamma1, beta1, conv_w, gamma2, beta2):
    """x_nchw: (N, Cin, H, W) f32.  conv_w: (Cout, Cin, 1, 1).  -> (N, Cout, H, W)."""
    n, cin, h, w = x_nchw.shape
    cout = conv_w.shape[0]
    hw = h * w
    inv_m = 1.0 / (n * hw)

    # Channels-first everywhere: reshapes only, no XLA transpose / pad of x.
    x3 = x_nchw.reshape(n, cin, hw).astype(jnp.float32)
    g1 = gamma1.reshape(cin, 1).astype(jnp.float32)
    b1 = beta1.reshape(cin, 1).astype(jnp.float32)
    g2 = gamma2.reshape(cout, 1).astype(jnp.float32)
    b2 = beta2.reshape(cout, 1).astype(jnp.float32)
    w2 = conv_w.reshape(cout, cin).astype(jnp.float32)
    w_hi, w_lo = _split_bf16(w2)                    # precomputed once (tiny)

    x_bytes = n * cin * hw * 4

    # -------- fast path: whole problem in VMEM, one kernel launch ------------
    if x_bytes <= _FUSED_MAX_X_BYTES and n <= _FUSED_MAX_BATCH:
        kern = functools.partial(_fused_small_kernel, n_batch=n, inv_m=inv_m)
        out3 = pl.pallas_call(
            kern,
            out_shape=jax.ShapeDtypeStruct((n, cout, hw), jnp.float32),
        )(x3, g1, b1, w_hi, w_lo, g2, b2)
        return out3.reshape(n, cout, h, w)

    # -------- tiled 3-pass path ----------------------------------------------
    # TODO(synk): batches with tiny H*W (< ~512) through this path pay grid-step
    # overhead per batch element; fold several batch elements per block if that
    # case becomes hot.
    if hw <= 2048:
        t_hw = hw                                   # full extent: always legal
    else:
        t_hw = _T_HW                                # multiple of 128
    nj = -(-hw // t_hw)
    ragged = (hw % t_hw) != 0

    # ---- pass A: BN1 batch statistics ----------------------------------------
    kern_a = functools.partial(_stats1_kernel, t_hw=t_hw, hw_valid=hw, ragged=ragged)
    sum1, sq1 = pl.pallas_call(
        kern_a,
        out_shape=(jax.ShapeDtypeStruct((cin, 1), jnp.float32),
                   jax.ShapeDtypeStruct((cin, 1), jnp.float32)),
        grid=(n, nj),
        in_specs=[pl.BlockSpec((1, cin, t_hw), lambda b, j: (b, 0, j))],
        out_specs=(pl.BlockSpec((cin, 1), lambda b, j: (0, 0)),
                   pl.BlockSpec((cin, 1), lambda b, j: (0, 0))),
        compiler_params=pltpu.CompilerParams(
            dimension_semantics=("arbitrary", "arbitrary")),
    )(x3)

    mean1 = sum1 * inv_m
    var1 = jnp.maximum(sq1 * inv_m - mean1 * mean1, 0.0)
    scale1 = g1 * lax.rsqrt(var1 + EPS)             # (Cin, 1)
    shift1 = b1 - mean1 * scale1

    # ---- pass B: BN1 affine + ReLU + 1x1 conv + BN2 statistics ---------------
    kern_b = functools.partial(_bn1_relu_conv_kernel,
                               t_hw=t_hw, hw_valid=hw, ragged=ragged)
    y3, sum2, sq2 = pl.pallas_call(
        kern_b,
        out_shape=(jax.ShapeDtypeStruct((n, cout, hw), jnp.float32),
                   jax.ShapeDtypeStruct((cout, 1), jnp.float32),
                   jax.ShapeDtypeStruct((cout, 1), jnp.float32)),
        grid=(n, nj),
        in_specs=[pl.BlockSpec((1, cin, t_hw), lambda b, j: (b, 0, j)),
                  pl.BlockSpec((cin, 1), lambda b, j: (0, 0)),
                  pl.BlockSpec((cin, 1), lambda b, j: (0, 0)),
                  pl.BlockSpec((cout, cin), lambda b, j: (0, 0)),   # resident bf16 w_hi
                  pl.BlockSpec((cout, cin), lambda b, j: (0, 0))],  # resident bf16 w_lo
        out_specs=(pl.BlockSpec((1, cout, t_hw), lambda b, j: (b, 0, j)),
                   pl.BlockSpec((cout, 1), lambda b, j: (0, 0)),
                   pl.BlockSpec((cout, 1), lambda b, j: (0, 0))),
        compiler_params=pltpu.CompilerParams(
            dimension_semantics=("arbitrary", "arbitrary")),
    )(x3, scale1, shift1, w_hi, w_lo)

    mean2 = sum2 * inv_m
    var2 = jnp.maximum(sq2 * inv_m - mean2 * mean2, 0.0)
    scale2 = g2 * lax.rsqrt(var2 + EPS)             # (Cout, 1)
    shift2 = b2 - mean2 * scale2

    # ---- pass C: BN2 affine, in place over y (large lane-dense tiles) --------
    t_hw_c = hw if hw <= _T_HW_BN2 else _T_HW_BN2
    njc = -(-hw // t_hw_c)
    out3 = pl.pallas_call(
        _bn2_kernel,
        out_shape=jax.ShapeDtypeStruct((n, cout, hw), jnp.float32),
        grid=(n, njc),
        in_specs=[pl.BlockSpec((1, cout, t_hw_c), lambda b, j: (b, 0, j)),
                  pl.BlockSpec((cout, 1), lambda b, j: (0, 0)),
                  pl.BlockSpec((cout, 1), lambda b, j: (0, 0))],
        out_specs=pl.BlockSpec((1, cout, t_hw_c), lambda b, j: (b, 0, j)),
        compiler_params=pltpu.CompilerParams(
            dimension_semantics=("parallel", "parallel")),
        input_output_aliases={0: 0},                # normalize y in place
    )(y3, scale2, shift2)

    return out3.reshape(n, cout, h, w)


# ---------------------------------------------------------------------------
# Pure-JAX reference (training-mode batchnorms) for correctness checking.
# ---------------------------------------------------------------------------
def _reference(x_nchw, gamma1, beta1, conv_w, gamma2, beta2):
    def bn(x, g, b):
        mean = jnp.mean(x, axis=(0, 2, 3), keepdims=True)
        var = jnp.mean((x - mean) ** 2, axis=(0, 2, 3), keepdims=True)
        return ((x - mean) * lax.rsqrt(var + EPS) * g.reshape(1, -1, 1, 1)
                + b.reshape(1, -1, 1, 1))

    y = bn(x_nchw, gamma1, beta1)
    y = jnp.maximum(y, 0.0)
    y = lax.conv_general_dilated(y, conv_w, window_strides=(1, 1), padding="VALID",
                                 dimension_numbers=("NCHW", "OIHW", "NCHW"),
                                 precision=lax.Precision.HIGHEST)
    return bn(y, gamma2, beta2)


if __name__ == "__main__":
    key = jax.random.PRNGKey(0)
    k_x, k_w, k_g1, k_b1, k_g2, k_b2 = jax.random.split(key, 6)

    CIN, COUT = 608, 128   # channel counts fixed by the module

    conv_w = jax.random.normal(k_w, (COUT, CIN, 1, 1), dtype=jnp.float32) * 0.05
    gamma1 = 1.0 + 0.1 * jax.random.normal(k_g1, (CIN,), dtype=jnp.float32)
    beta1 = 0.1 * jax.random.normal(k_b1, (CIN,), dtype=jnp.float32)
    gamma2 = 1.0 + 0.1 * jax.random.normal(k_g2, (COUT,), dtype=jnp.float32)
    beta2 = 0.1 * jax.random.normal(k_b2, (COUT,), dtype=jnp.float32)

    shapes = [
        (1, CIN, 14, 14),   # spec shape      -> fused single-kernel path
        (2, CIN, 16, 16),   # batch > 1       -> fused single-kernel path
        (2, CIN, 48, 48),   # larger input    -> tiled 3-pass path (ragged HW tile)
    ]
    for shape in shapes:
        x = jax.random.normal(k_x, shape, dtype=jnp.float32)
        out = jax.block_until_ready(
            bn_relu_conv_bn(x, gamma1, beta1, conv_w, gamma2, beta2))
        ref = jax.block_until_ready(
            _reference(x, gamma1, beta1, conv_w, gamma2, beta2))
        assert out.shape == (shape[0], COUT, shape[2], shape[3])
        err = float(jnp.max(jnp.abs(out - ref)))
        # bf16 hi/lo split matmul keeps max-abs error at the few-1e-4 level.
        assert err < 2e-3, (shape, err)

    print("KERNEL_OK")
</pallas_src>

<mosaic_0001>
module attributes {stable_mosaic.version = 11 : i64} {
  func.func @_fused_small_kernel(%arg0: memref<1x608x196xf32, #tpu.memory_space<vmem>>, %arg1: memref<608x1xf32, #tpu.memory_space<vmem>>, %arg2: memref<608x1xf32, #tpu.memory_space<vmem>>, %arg3: memref<128x608xbf16, #tpu.memory_space<vmem>>, %arg4: memref<128x608xbf16, #tpu.memory_space<vmem>>, %arg5: memref<128x1xf32, #tpu.memory_space<vmem>>, %arg6: memref<128x1xf32, #tpu.memory_space<vmem>>, %arg7: memref<1x128x196xf32, #tpu.memory_space<vmem>>) attributes {dimension_semantics = [], scalar_prefetch = 0 : i64, scratch_operands = 0 : i64, tpu.core_type = #tpu.core_type<tc>} {
    %cst = arith.constant 0.000000e+00 : f32
    %0 = vector.broadcast %cst : f32 to vector<608x1xf32>
    %cst_0 = arith.constant 0.000000e+00 : f32
    %1 = vector.broadcast %cst_0 : f32 to vector<608x1xf32>
    %c0 = arith.constant 0 : index
    %c0_1 = arith.constant 0 : index
    %c0_2 = arith.constant 0 : index
    %2 = vector.load %arg0[%c0, %c0_1, %c0_2] : memref<1x608x196xf32, #tpu.memory_space<vmem>>, vector<1x608x196xf32>
    %3 = vector.shape_cast %2 : vector<1x608x196xf32> to vector<608x196xf32>
    %cst_3 = arith.constant dense<0.000000e+00> : vector<608xf32>
    %4 = vector.multi_reduction <add>, %3, %cst_3 [1] : vector<608x196xf32> to vector<608xf32>
    %5 = vector.shape_cast %4 : vector<608xf32> to vector<608x1xf32>
    %6 = arith.addf %0, %5 : vector<608x1xf32>
    %7 = arith.mulf %3, %3 : vector<608x196xf32>
    %cst_4 = arith.constant dense<0.000000e+00> : vector<608xf32>
    %8 = vector.multi_reduction <add>, %7, %cst_4 [1] : vector<608x196xf32> to vector<608xf32>
    %9 = vector.shape_cast %8 : vector<608xf32> to vector<608x1xf32>
    %10 = arith.addf %1, %9 : vector<608x1xf32>
    %cst_5 = arith.constant 0.00510204071 : f32
    %11 = vector.broadcast %cst_5 : f32 to vector<608x1xf32>
    %12 = arith.mulf %6, %11 : vector<608x1xf32>
    %cst_6 = arith.constant 0.00510204071 : f32
    %13 = vector.broadcast %cst_6 : f32 to vector<608x1xf32>
    %14 = arith.mulf %10, %13 : vector<608x1xf32>
    %15 = arith.mulf %12, %12 : vector<608x1xf32>
    %16 = arith.subf %14, %15 : vector<608x1xf32>
    %cst_7 = arith.constant 0.000000e+00 : f32
    %17 = vector.broadcast %cst_7 : f32 to vector<608x1xf32>
    %18 = arith.maximumf %16, %17 : vector<608x1xf32>
    %c0_8 = arith.constant 0 : index
    %c0_9 = arith.constant 0 : index
    %19 = vector.load %arg1[%c0_8, %c0_9] : memref<608x1xf32, #tpu.memory_space<vmem>>, vector<608x1xf32>
    %cst_10 = arith.constant 9.99999974E-6 : f32
    %20 = vector.broadcast %cst_10 : f32 to vector<608x1xf32>
    %21 = arith.addf %18, %20 : vector<608x1xf32>
    %22 = math.rsqrt %21 : vector<608x1xf32>
    %23 = arith.mulf %19, %22 : vector<608x1xf32>
    %c0_11 = arith.constant 0 : index
    %c0_12 = arith.constant 0 : index
    %24 = vector.load %arg2[%c0_11, %c0_12] : memref<608x1xf32, #tpu.memory_space<vmem>>, vector<608x1xf32>
    %25 = arith.mulf %12, %23 : vector<608x1xf32>
    %26 = arith.subf %24, %25 : vector<608x1xf32>
    %c0_13 = arith.constant 0 : index
    %c0_14 = arith.constant 0 : index
    %27 = vector.load %arg3[%c0_13, %c0_14] : memref<128x608xbf16, #tpu.memory_space<vmem>>, vector<128x608xbf16>
    %c0_15 = arith.constant 0 : index
    %c0_16 = arith.constant 0 : index
    %28 = vector.load %arg4[%c0_15, %c0_16] : memref<128x608xbf16, #tpu.memory_space<vmem>>, vector<128x608xbf16>
    %cst_17 = arith.constant 0.000000e+00 : f32
    %29 = vector.broadcast %cst_17 : f32 to vector<128x1xf32>
    %cst_18 = arith.constant 0.000000e+00 : f32
    %30 = vector.broadcast %cst_18 : f32 to vector<128x1xf32>
    %c0_19 = arith.constant 0 : index
    %c0_20 = arith.constant 0 : index
    %c0_21 = arith.constant 0 : index
    %31 = vector.load %arg0[%c0_19, %c0_20, %c0_21] : memref<1x608x196xf32, #tpu.memory_space<vmem>>, vector<1x608x196xf32>
    %32 = vector.shape_cast %31 : vector<1x608x196xf32> to vector<608x196xf32>
    %33 = vector.broadcast %23 : vector<608x1xf32> to vector<608x196xf32>
    %34 = arith.mulf %32, %33 : vector<608x196xf32>
    %35 = vector.broadcast %26 : vector<608x1xf32> to vector<608x196xf32>
    %36 = arith.addf %34, %35 : vector<608x196xf32>
    %cst_22 = arith.constant 0.000000e+00 : f32
    %37 = vector.broadcast %cst_22 : f32 to vector<608x196xf32>
    %38 = arith.maximumf %36, %37 : vector<608x196xf32>
    %39 = arith.truncf %38 : vector<608x196xf32> to vector<608x196xbf16>
    %40 = arith.extf %39 : vector<608x196xbf16> to vector<608x196xf32>
    %41 = arith.subf %38, %40 : vector<608x196xf32>
    %42 = arith.truncf %41 : vector<608x196xf32> to vector<608x196xbf16>
    %cst_23 = arith.constant dense<0.000000e+00> : vector<128x196xf32>
    %43 = tpu.matmul %27, %39, %cst_23 {dimension_numbers = #tpu.dot_dimension_numbers<[1], [0], [0], [1], [0, 0, 1, 1], [], []>} : vector<128x608xbf16>, vector<608x196xbf16>, vector<128x196xf32> -> vector<128x196xf32>
    %cst_24 = arith.constant dense<0.000000e+00> : vector<128x196xf32>
    %44 = tpu.matmul %28, %39, %cst_24 {dimension_numbers = #tpu.dot_dimension_numbers<[1], [0], [0], [1], [0, 0, 1, 1], [], []>} : vector<128x608xbf16>, vector<608x196xbf16>, vector<128x196xf32> -> vector<128x196xf32>
    %45 = arith.addf %43, %44 : vector<128x196xf32>
    %cst_25 = arith.constant dense<0.000000e+00> : vector<128x196xf32>
    %46 = tpu.matmul %27, %42, %cst_25 {dimension_numbers = #tpu.dot_dimension_numbers<[1], [0], [0], [1], [0, 0, 1, 1], [], []>} : vector<128x608xbf16>, vector<608x196xbf16>, vector<128x196xf32> -> vector<128x196xf32>
    %47 = arith.addf %45, %46 : vector<128x196xf32>
    %c0_26 = arith.constant 0 : index
    %c0_27 = arith.constant 0 : index
    %c0_28 = arith.constant 0 : index
    %48 = vector.load %arg7[%c0_26, %c0_27, %c0_28] : memref<1x128x196xf32, #tpu.memory_space<vmem>>, vector<1x128x196xf32>
    %49 = vector.shape_cast %48 : vector<1x128x196xf32> to vector<128x196xf32>
    %50 = vector.shape_cast %47 : vector<128x196xf32> to vector<1x128x196xf32>
    tpu.vector_store %arg7[%c0_26, %c0_27, %c0_28], %50 {strides = array<i32>} : memref<1x128x196xf32, #tpu.memory_space<vmem>>, vector<1x128x196xf32>,
    %cst_29 = arith.constant dense<0.000000e+00> : vector<128xf32>
    %51 = vector.multi_reduction <add>, %47, %cst_29 [1] : vector<128x196xf32> to vector<128xf32>
    %52 = vector.shape_cast %51 : vector<128xf32> to vector<128x1xf32>
    %53 = arith.addf %29, %52 : vector<128x1xf32>
    %54 = arith.mulf %47, %47 : vector<128x196xf32>
    %cst_30 = arith.constant dense<0.000000e+00> : vector<128xf32>
    %55 = vector.multi_reduction <add>, %54, %cst_30 [1] : vector<128x196xf32> to vector<128xf32>
    %56 = vector.shape_cast %55 : vector<128xf32> to vector<128x1xf32>
    %57 = arith.addf %30, %56 : vector<128x1xf32>
    %cst_31 = arith.constant 0.00510204071 : f32
    %58 = vector.broadcast %cst_31 : f32 to vector<128x1xf32>
    %59 = arith.mulf %53, %58 : vector<128x1xf32>
    %cst_32 = arith.constant 0.00510204071 : f32
    %60 = vector.broadcast %cst_32 : f32 to vector<128x1xf32>
    %61 = arith.mulf %57, %60 : vector<128x1xf32>
    %62 = arith.mulf %59, %59 : vector<128x1xf32>
    %63 = arith.subf %61, %62 : vector<128x1xf32>
    %cst_33 = arith.constant 0.000000e+00 : f32
    %64 = vector.broadcast %cst_33 : f32 to vector<128x1xf32>
    %65 = arith.maximumf %63, %64 : vector<128x1xf32>
    %c0_34 = arith.constant 0 : index
    %c0_35 = arith.constant 0 : index
    %66 = vector.load %arg5[%c0_34, %c0_35] : memref<128x1xf32, #tpu.memory_space<vmem>>, vector<128x1xf32>
    %cst_36 = arith.constant 9.99999974E-6 : f32
    %67 = vector.broadcast %cst_36 : f32 to vector<128x1xf32>
    %68 = arith.addf %65, %67 : vector<128x1xf32>
    %69 = math.rsqrt %68 : vector<128x1xf32>
    %70 = arith.mulf %66, %69 : vector<128x1xf32>
    %c0_37 = arith.constant 0 : index
    %c0_38 = arith.constant 0 : index
    %71 = vector.load %arg6[%c0_37, %c0_38] : memref<128x1xf32, #tpu.memory_space<vmem>>, vector<128x1xf32>
    %72 = arith.mulf %59, %70 : vector<128x1xf32>
    %73 = arith.subf %71, %72 : vector<128x1xf32>
    %c0_39 = arith.constant 0 : index
    %c0_40 = arith.constant 0 : index
    %c0_41 = arith.constant 0 : index
    %74 = vector.load %arg7[%c0_39, %c0_40, %c0_41] : memref<1x128x196xf32, #tpu.memory_space<vmem>>, vector<1x128x196xf32>
    %75 = vector.shape_cast %74 : vector<1x128x196xf32> to vector<128x196xf32>
    %76 = vector.broadcast %70 : vector<128x1xf32> to vector<128x196xf32>
    %77 = arith.mulf %75, %76 : vector<128x196xf32>
    %78 = vector.broadcast %73 : vector<128x1xf32> to vector<128x196xf32>
    %79 = arith.addf %77, %78 : vector<128x196xf32>
    %c0_42 = arith.constant 0 : index
    %c0_43 = arith.constant 0 : index
    %c0_44 = arith.constant 0 : index
    %80 = vector.load %arg7[%c0_42, %c0_43, %c0_44] : memref<1x128x196xf32, #tpu.memory_space<vmem>>, vector<1x128x196xf32>
    %81 = vector.shape_cast %80 : vector<1x128x196xf32> to vector<128x196xf32>
    %82 = vector.shape_cast %79 : vector<128x196xf32> to vector<1x128x196xf32>
    tpu.vector_store %arg7[%c0_42, %c0_43, %c0_44], %82 {strides = array<i32>} : memref<1x128x196xf32, #tpu.memory_space<vmem>>, vector<1x128x196xf32>,
    return
  }
}

</mosaic_0001>

<llo_original>
// kernel: bn_relu_conv_bn.1
$region0: #{bn_relu_conv_bn.1}
  #allocation0 [shape = 'u32[]', space=smem, size = 0x4, offset = 0x4, fixed_abs, tag = 'smem constant byte address 0x4 - core index']
  #allocation1 [shape = 'u32[72,128]{1,0:T(1,128)}', space=vmem, size = 0x9000, scoped, tag = 'internal scratch']
  %s0 = inlined_call_operand.vmem [shape: f32[1,608,196], index: 0, kind: input, shape index: {}]
  %s1 = inlined_call_operand.vmem [shape: f32[608,1], index: 1, kind: input, shape index: {}]
  %s2 = inlined_call_operand.vmem [shape: f32[608,1], index: 2, kind: input, shape index: {}]
  %s3 = inlined_call_operand.vmem [shape: bf16[128,608], index: 3, kind: input, shape index: {}]
  %s4 = inlined_call_operand.vmem [shape: bf16[128,608], index: 4, kind: input, shape index: {}]
  %s5 = inlined_call_operand.vmem [shape: f32[128,1], index: 5, kind: input, shape index: {}]
  %s6 = inlined_call_operand.vmem [shape: f32[128,1], index: 6, kind: input, shape index: {}]
  %s7 = inlined_call_operand.vmem [shape: f32[1,128,196], index: 7, kind: output, shape index: {}]
  %s8 = sld [smem:[#allocation0]]
  $region38: #{bn_relu_conv_bn.1} parent=0
    _
  %s10 = ssub.s32 1, %s8
  %s11 = scalar_select 0, %s10, %s8
  // Predicated region
  $region2: #{bn_relu_conv_bn.1} parent=0 // pred_check
    _
  $region3: #{bn_relu_conv_bn.1} parent=0 // pred_check_branch
    %13 = sbr.rel (0) target = $region5
  $region4: #{bn_relu_conv_bn.1} parent=0 // pred_region
    _
  $region5: #{bn_relu_conv_bn.1} parent=0 // pred_fallthru
    _
  // Predicated region
  $region6: #{bn_relu_conv_bn.1} parent=0 // pred_check
    _
  $region7: #{bn_relu_conv_bn.1} parent=0 // pred_check_branch
    %15 = sbr.rel (0) target = $region9
  $region8: #{bn_relu_conv_bn.1} parent=0 // pred_region
    _
  $region9: #{bn_relu_conv_bn.1} parent=0 // pred_fallthru
    _
  // Predicated region
  $region10: #{bn_relu_conv_bn.1} parent=0 // pred_check
    _
  $region11: #{bn_relu_conv_bn.1} parent=0 // pred_check_branch
    %17 = sbr.rel (0) target = $region13
  $region12: #{bn_relu_conv_bn.1} parent=0 // pred_region
    _
  $region13: #{bn_relu_conv_bn.1} parent=0 // pred_fallthru
    _
  // Predicated region
  $region14: #{bn_relu_conv_bn.1} parent=0 // pred_check
    _
  $region15: #{bn_relu_conv_bn.1} parent=0 // pred_check_branch
    %19 = sbr.rel (0) target = $region17
  $region16: #{bn_relu_conv_bn.1} parent=0 // pred_region
    _
  $region17: #{bn_relu_conv_bn.1} parent=0 // pred_fallthru
    _
  // Predicated region
  $region18: #{bn_relu_conv_bn.1} parent=0 // pred_check
    _
  $region19: #{bn_relu_conv_bn.1} parent=0 // pred_check_branch
    %21 = sbr.rel (0) target = $region21
  $region20: #{bn_relu_conv_bn.1} parent=0 // pred_region
    _
  $region21: #{bn_relu_conv_bn.1} parent=0 // pred_fallthru
    _
  // Predicated region
  $region22: #{bn_relu_conv_bn.1} parent=0 // pred_check
    _
  $region23: #{bn_relu_conv_bn.1} parent=0 // pred_check_branch
    %23 = sbr.rel (0) target = $region25
  $region24: #{bn_relu_conv_bn.1} parent=0 // pred_region
    _
  $region25: #{bn_relu_conv_bn.1} parent=0 // pred_fallthru
    _
  // Predicated region
  $region26: #{bn_relu_conv_bn.1} parent=0 // pred_check
    _
  $region27: #{bn_relu_conv_bn.1} parent=0 // pred_check_branch
    %25 = sbr.rel (0) target = $region29
  $region28: #{bn_relu_conv_bn.1} parent=0 // pred_region
    _
  $region29: #{bn_relu_conv_bn.1} parent=0 // pred_fallthru
    _
  %v27 = vld [vmem:[%s0] sm:$0xff]
  %v28 = vld [vmem:[%s0 + $0x8] sm:$0xff]
  %v29 = vld [vmem:[%s0 + $0x10] sm:$0xff]
  %v30 = vld [vmem:[%s0 + $0x18] sm:$0xff]
  %v31 = vld [vmem:[%s0 + $0x20] sm:$0xff]
  %v32 = vld [vmem:[%s0 + $0x28] sm:$0xff]
  %v33 = vld [vmem:[%s0 + $0x30] sm:$0xff]
  %v34 = vld [vmem:[%s0 + $0x38] sm:$0xff]
  %v35 = vld [vmem:[%s0 + $0x40] sm:$0xff]
  %v36 = vld [vmem:[%s0 + $0x48] sm:$0xff]
  %v37 = vld [vmem:[%s0 + $0x50] sm:$0xff]
  %v38 = vld [vmem:[%s0 + $0x58] sm:$0xff]
  %v39 = vld [vmem:[%s0 + $0x60] sm:$0xff]
  %v40 = vld [vmem:[%s0 + $0x68] sm:$0xff]
  %v41 = vld [vmem:[%s0 + $0x70] sm:$0xff]
  %v42 = vld [vmem:[%s0 + $0x78] sm:$0xff]
  %v43 = vld [vmem:[%s0 + $0x80] sm:$0xff]
  %v44 = vld [vmem:[%s0 + $0x88] sm:$0xff]
  %v45 = vld [vmem:[%s0 + $0x90] sm:$0xff]
  %v46 = vld [vmem:[%s0 + $0x98] sm:$0xff]
  %v47 = vld [vmem:[%s0 + $0xa0] sm:$0xff]
  %v48 = vld [vmem:[%s0 + $0xa8] sm:$0xff]
  %v49 = vld [vmem:[%s0 + $0xb0] sm:$0xff]
  %v50 = vld [vmem:[%s0 + $0xb8] sm:$0xff]
  %v51 = vld [vmem:[%s0 + $0xc0] sm:$0xff]
  %v52 = vld [vmem:[%s0 + $0xc8] sm:$0xff]
  %v53 = vld [vmem:[%s0 + $0xd0] sm:$0xff]
  %v54 = vld [vmem:[%s0 + $0xd8] sm:$0xff]
  %v55 = vld [vmem:[%s0 + $0xe0] sm:$0xff]
  %v56 = vld [vmem:[%s0 + $0xe8] sm:$0xff]
  %v57 = vld [vmem:[%s0 + $0xf0] sm:$0xff]
  %v58 = vld [vmem:[%s0 + $0xf8] sm:$0xff]
  %v59 = vld [vmem:[%s0 + $0x100] sm:$0xff]
  %v60 = vld [vmem:[%s0 + $0x108] sm:$0xff]
  %v61 = vld [vmem:[%s0 + $0x110] sm:$0xff]
  %v62 = vld [vmem:[%s0 + $0x118] sm:$0xff]
  %v63 = vld [vmem:[%s0 + $0x120] sm:$0xff]
  %v64 = vld [vmem:[%s0 + $0x128] sm:$0xff]
  %v65 = vld [vmem:[%s0 + $0x130] sm:$0xff]
  %v66 = vld [vmem:[%s0 + $0x138] sm:$0xff]
  %v67 = vld [vmem:[%s0 + $0x140] sm:$0xff]
  %v68 = vld [vmem:[%s0 + $0x148] sm:$0xff]
  %v69 = vld [vmem:[%s0 + $0x150] sm:$0xff]
  %v70 = vld [vmem:[%s0 + $0x158] sm:$0xff]
  %v71 = vld [vmem:[%s0 + $0x160] sm:$0xff]
  %v72 = vld [vmem:[%s0 + $0x168] sm:$0xff]
  %v73 = vld [vmem:[%s0 + $0x170] sm:$0xff]
  %v74 = vld [vmem:[%s0 + $0x178] sm:$0xff]
  %v75 = vld [vmem:[%s0 + $0x180] sm:$0xff]
  %v76 = vld [vmem:[%s0 + $0x188] sm:$0xff]
  %v77 = vld [vmem:[%s0 + $0x190] sm:$0xff]
  %v78 = vld [vmem:[%s0 + $0x198] sm:$0xff]
  %v79 = vld [vmem:[%s0 + $0x1a0] sm:$0xff]
  %v80 = vld [vmem:[%s0 + $0x1a8] sm:$0xff]
  %v81 = vld [vmem:[%s0 + $0x1b0] sm:$0xff]
  %v82 = vld [vmem:[%s0 + $0x1b8] sm:$0xff]
  %v83 = vld [vmem:[%s0 + $0x1c0] sm:$0xff]
  %v84 = vld [vmem:[%s0 + $0x1c8] sm:$0xff]
  %v85 = vld [vmem:[%s0 + $0x1d0] sm:$0xff]
  %v86 = vld [vmem:[%s0 + $0x1d8] sm:$0xff]
  %v87 = vld [vmem:[%s0 + $0x1e0] sm:$0xff]
  %v88 = vld [vmem:[%s0 + $0x1e8] sm:$0xff]
  %v89 = vld [vmem:[%s0 + $0x1f0] sm:$0xff]
  %v90 = vld [vmem:[%s0 + $0x1f8] sm:$0xff]
  %v91 = vld [vmem:[%s0 + $0x200] sm:$0xff]
  %v92 = vld [vmem:[%s0 + $0x208] sm:$0xff]
  %v93 = vld [vmem:[%s0 + $0x210] sm:$0xff]
  %v94 = vld [vmem:[%s0 + $0x218] sm:$0xff]
  %v95 = vld [vmem:[%s0 + $0x220] sm:$0xff]
  %v96 = vld [vmem:[%s0 + $0x228] sm:$0xff]
  %v97 = vld [vmem:[%s0 + $0x230] sm:$0xff]
  %v98 = vld [vmem:[%s0 + $0x238] sm:$0xff]
  %v99 = vld [vmem:[%s0 + $0x240] sm:$0xff]
  %v100 = vld [vmem:[%s0 + $0x248] sm:$0xff]
  %v101 = vld [vmem:[%s0 + $0x250] sm:$0xff]
  %v102 = vld [vmem:[%s0 + $0x258] sm:$0xff]
  %v103 = vld [vmem:[%s0 + $0x260] sm:$0xff]
  %v104 = vld [vmem:[%s0 + $0x268] sm:$0xff]
  %v105 = vld [vmem:[%s0 + $0x270] sm:$0xff]
  %v106 = vld [vmem:[%s0 + $0x278] sm:$0xff]
  %v107 = vld [vmem:[%s0 + $0x280] sm:$0xff]
  %v108 = vld [vmem:[%s0 + $0x288] sm:$0xff]
  %v109 = vld [vmem:[%s0 + $0x290] sm:$0xff]
  %v110 = vld [vmem:[%s0 + $0x298] sm:$0xff]
  %v111 = vld [vmem:[%s0 + $0x2a0] sm:$0xff]
  %v112 = vld [vmem:[%s0 + $0x2a8] sm:$0xff]
  %v113 = vld [vmem:[%s0 + $0x2b0] sm:$0xff]
  %v114 = vld [vmem:[%s0 + $0x2b8] sm:$0xff]
  %v115 = vld [vmem:[%s0 + $0x2c0] sm:$0xff]
  %v116 = vld [vmem:[%s0 + $0x2c8] sm:$0xff]
  %v117 = vld [vmem:[%s0 + $0x2d0] sm:$0xff]
  %v118 = vld [vmem:[%s0 + $0x2d8] sm:$0xff]
  %v119 = vld [vmem:[%s0 + $0x2e0] sm:$0xff]
  %v120 = vld [vmem:[%s0 + $0x2e8] sm:$0xff]
  %v121 = vld [vmem:[%s0 + $0x2f0] sm:$0xff]
  %v122 = vld [vmem:[%s0 + $0x2f8] sm:$0xff]
  %v123 = vld [vmem:[%s0 + $0x300] sm:$0xff]
  %v124 = vld [vmem:[%s0 + $0x308] sm:$0xff]
  %v125 = vld [vmem:[%s0 + $0x310] sm:$0xff]
  %v126 = vld [vmem:[%s0 + $0x318] sm:$0xff]
  %v127 = vld [vmem:[%s0 + $0x320] sm:$0xff]
  %v128 = vld [vmem:[%s0 + $0x328] sm:$0xff]
  %v129 = vld [vmem:[%s0 + $0x330] sm:$0xff]
  %v130 = vld [vmem:[%s0 + $0x338] sm:$0xff]
  %v131 = vld [vmem:[%s0 + $0x340] sm:$0xff]
  %v132 = vld [vmem:[%s0 + $0x348] sm:$0xff]
  %v133 = vld [vmem:[%s0 + $0x350] sm:$0xff]
  %v134 = vld [vmem:[%s0 + $0x358] sm:$0xff]
  %v135 = vld [vmem:[%s0 + $0x360] sm:$0xff]
  %v136 = vld [vmem:[%s0 + $0x368] sm:$0xff]
  %v137 = vld [vmem:[%s0 + $0x370] sm:$0xff]
  %v138 = vld [vmem:[%s0 + $0x378] sm:$0xff]
  %v139 = vld [vmem:[%s0 + $0x380] sm:$0xff]
  %v140 = vld [vmem:[%s0 + $0x388] sm:$0xff]
  %v141 = vld [vmem:[%s0 + $0x390] sm:$0xff]
  %v142 = vld [vmem:[%s0 + $0x398] sm:$0xff]
  %v143 = vld [vmem:[%s0 + $0x3a0] sm:$0xff]
  %v144 = vld [vmem:[%s0 + $0x3a8] sm:$0xff]
  %v145 = vld [vmem:[%s0 + $0x3b0] sm:$0xff]
  %v146 = vld [vmem:[%s0 + $0x3b8] sm:$0xff]
  %v147 = vld [vmem:[%s0 + $0x3c0] sm:$0xff]
  %v148 = vld [vmem:[%s0 + $0x3c8] sm:$0xff]
  %v149 = vld [vmem:[%s0 + $0x3d0] sm:$0xff]
  %v150 = vld [vmem:[%s0 + $0x3d8] sm:$0xff]
  %v151 = vld [vmem:[%s0 + $0x3e0] sm:$0xff]
  %v152 = vld [vmem:[%s0 + $0x3e8] sm:$0xff]
  %v153 = vld [vmem:[%s0 + $0x3f0] sm:$0xff]
  %v154 = vld [vmem:[%s0 + $0x3f8] sm:$0xff]
  %v155 = vld [vmem:[%s0 + $0x400] sm:$0xff]
  %v156 = vld [vmem:[%s0 + $0x408] sm:$0xff]
  %v157 = vld [vmem:[%s0 + $0x410] sm:$0xff]
  %v158 = vld [vmem:[%s0 + $0x418] sm:$0xff]
  %v159 = vld [vmem:[%s0 + $0x420] sm:$0xff]
  %v160 = vld [vmem:[%s0 + $0x428] sm:$0xff]
  %v161 = vld [vmem:[%s0 + $0x430] sm:$0xff]
  %v162 = vld [vmem:[%s0 + $0x438] sm:$0xff]
  %v163 = vld [vmem:[%s0 + $0x440] sm:$0xff]
  %v164 = vld [vmem:[%s0 + $0x448] sm:$0xff]
  %v165 = vld [vmem:[%s0 + $0x450] sm:$0xff]
  %v166 = vld [vmem:[%s0 + $0x458] sm:$0xff]
  %v167 = vld [vmem:[%s0 + $0x460] sm:$0xff]
  %v168 = vld [vmem:[%s0 + $0x468] sm:$0xff]
  %v169 = vld [vmem:[%s0 + $0x470] sm:$0xff]
  %v170 = vld [vmem:[%s0 + $0x478] sm:$0xff]
  %v171 = vld [vmem:[%s0 + $0x480] sm:$0xff]
  %v172 = vld [vmem:[%s0 + $0x488] sm:$0xff]
  %v173 = vld [vmem:[%s0 + $0x490] sm:$0xff]
  %v174 = vld [vmem:[%s0 + $0x498] sm:$0xff]
  %v175 = vld [vmem:[%s0 + $0x4a0] sm:$0xff]
  %v176 = vld [vmem:[%s0 + $0x4a8] sm:$0xff]
  %v177 = vld [vmem:[%s0 + $0x4b0] sm:$0xff]
  %v178 = vld [vmem:[%s0 + $0x4b8] sm:$0xff]
  %vm179 = vcmask 556032
  %v180 = vsel %vm179, %v28, 0.0
  %v181 = vadd.f32 %v27, %v180
  %182 = vadd.xlane.f32.xlu0 %v181
  %v183 = vpop.xlane.xlu0 %182
  %v184 = vsel %vm179, %v30, 0.0
  %v185 = vadd.f32 %v29, %v184
  %186 = vadd.xlane.f32.xlu0 %v185
  %v187 = vpop.xlane.xlu0 %186
  %v188 = vsel %vm179, %v32, 0.0
  %v189 = vadd.f32 %v31, %v188
  %190 = vadd.xlane.f32.xlu0 %v189
  %v191 = vpop.xlane.xlu0 %190
  %v192 = vsel %vm179, %v34, 0.0
  %v193 = vadd.f32 %v33, %v192
  %194 = vadd.xlane.f32.xlu0 %v193
  %v195 = vpop.xlane.xlu0 %194
  %v196 = vsel %vm179, %v36, 0.0
  %v197 = vadd.f32 %v35, %v196
  %198 = vadd.xlane.f32.xlu0 %v197
  %v199 = vpop.xlane.xlu0 %198
  %v200 = vsel %vm179, %v38, 0.0
  %v201 = vadd.f32 %v37, %v200
  %202 = vadd.xlane.f32.xlu0 %v201
  %v203 = vpop.xlane.xlu0 %202
  %v204 = vsel %vm179, %v40, 0.0
  %v205 = vadd.f32 %v39, %v204
  %206 = vadd.xlane.f32.xlu0 %v205
  %v207 = vpop.xlane.xlu0 %206
  %v208 = vsel %vm179, %v42, 0.0
  %v209 = vadd.f32 %v41, %v208
  %210 = vadd.xlane.f32.xlu0 %v209
  %v211 = vpop.xlane.xlu0 %210
  %v212 = vsel %vm179, %v44, 0.0
  %v213 = vadd.f32 %v43, %v212
  %214 = vadd.xlane.f32.xlu0 %v213
  %v215 = vpop.xlane.xlu0 %214
  %v216 = vsel %vm179, %v46, 0.0
  %v217 = vadd.f32 %v45, %v216
  %218 = vadd.xlane.f32.xlu0 %v217
  %v219 = vpop.xlane.xlu0 %218
  %v220 = vsel %vm179, %v48, 0.0
  %v221 = vadd.f32 %v47, %v220
  %222 = vadd.xlane.f32.xlu0 %v221
  %v223 = vpop.xlane.xlu0 %222
  %v224 = vsel %vm179, %v50, 0.0
  %v225 = vadd.f32 %v49, %v224
  %226 = vadd.xlane.f32.xlu0 %v225
  %v227 = vpop.xlane.xlu0 %226
  %v228 = vsel %vm179, %v52, 0.0
  %v229 = vadd.f32 %v51, %v228
  %230 = vadd.xlane.f32.xlu0 %v229
  %v231 = vpop.xlane.xlu0 %230
  %v232 = vsel %vm179, %v54, 0.0
  %v233 = vadd.f32 %v53, %v232
  %234 = vadd.xlane.f32.xlu0 %v233
  %v235 = vpop.xlane.xlu0 %234
  %v236 = vsel %vm179, %v56, 0.0
  %v237 = vadd.f32 %v55, %v236
  %238 = vadd.xlane.f32.xlu0 %v237
  %v239 = vpop.xlane.xlu0 %238
  %v240 = vsel %vm179, %v58, 0.0
  %v241 = vadd.f32 %v57, %v240
  %242 = vadd.xlane.f32.xlu0 %v241
  %v243 = vpop.xlane.xlu0 %242
  %v244 = vsel %vm179, %v60, 0.0
  %v245 = vadd.f32 %v59, %v244
  %246 = vadd.xlane.f32.xlu0 %v245
  %v247 = vpop.xlane.xlu0 %246
  %v248 = vsel %vm179, %v62, 0.0
  %v249 = vadd.f32 %v61, %v248
  %250 = vadd.xlane.f32.xlu0 %v249
  %v251 = vpop.xlane.xlu0 %250
  %v252 = vsel %vm179, %v64, 0.0
  %v253 = vadd.f32 %v63, %v252
  %254 = vadd.xlane.f32.xlu0 %v253
  %v255 = vpop.xlane.xlu0 %254
  %v256 = vsel %vm179, %v66, 0.0
  %v257 = vadd.f32 %v65, %v256
  %258 = vadd.xlane.f32.xlu0 %v257
  %v259 = vpop.xlane.xlu0 %258
  %v260 = vsel %vm179, %v68, 0.0
  %v261 = vadd.f32 %v67, %v260
  %262 = vadd.xlane.f32.xlu0 %v261
  %v263 = vpop.xlane.xlu0 %262
  %v264 = vsel %vm179, %v70, 0.0
  %v265 = vadd.f32 %v69, %v264
  %266 = vadd.xlane.f32.xlu0 %v265
  %v267 = vpop.xlane.xlu0 %266
  %v268 = vsel %vm179, %v72, 0.0
  %v269 = vadd.f32 %v71, %v268
  %270 = vadd.xlane.f32.xlu0 %v269
  %v271 = vpop.xlane.xlu0 %270
  %v272 = vsel %vm179, %v74, 0.0
  %v273 = vadd.f32 %v73, %v272
  %274 = vadd.xlane.f32.xlu0 %v273
  %v275 = vpop.xlane.xlu0 %274
  %v276 = vsel %vm179, %v76, 0.0
  %v277 = vadd.f32 %v75, %v276
  %278 = vadd.xlane.f32.xlu0 %v277
  %v279 = vpop.xlane.xlu0 %278
  %v280 = vsel %vm179, %v78, 0.0
  %v281 = vadd.f32 %v77, %v280
  %282 = vadd.xlane.f32.xlu0 %v281
  %v283 = vpop.xlane.xlu0 %282
  %v284 = vsel %vm179, %v80, 0.0
  %v285 = vadd.f32 %v79, %v284
  %286 = vadd.xlane.f32.xlu0 %v285
  %v287 = vpop.xlane.xlu0 %286
  %v288 = vsel %vm179, %v82, 0.0
  %v289 = vadd.f32 %v81, %v288
  %290 = vadd.xlane.f32.xlu0 %v289
  %v291 = vpop.xlane.xlu0 %290
  %v292 = vsel %vm179, %v84, 0.0
  %v293 = vadd.f32 %v83, %v292
  %294 = vadd.xlane.f32.xlu0 %v293
  %v295 = vpop.xlane.xlu0 %294
  %v296 = vsel %vm179, %v86, 0.0
  %v297 = vadd.f32 %v85, %v296
  %298 = vadd.xlane.f32.xlu0 %v297
  %v299 = vpop.xlane.xlu0 %298
  %v300 = vsel %vm179, %v88, 0.0
  %v301 = vadd.f32 %v87, %v300
  %302 = vadd.xlane.f32.xlu0 %v301
  %v303 = vpop.xlane.xlu0 %302
  %v304 = vsel %vm179, %v90, 0.0
  %v305 = vadd.f32 %v89, %v304
  %306 = vadd.xlane.f32.xlu0 %v305
  %v307 = vpop.xlane.xlu0 %306
  %v308 = vsel %vm179, %v92, 0.0
  %v309 = vadd.f32 %v91, %v308
  %310 = vadd.xlane.f32.xlu0 %v309
  %v311 = vpop.xlane.xlu0 %310
  %v312 = vsel %vm179, %v94, 0.0
  %v313 = vadd.f32 %v93, %v312
  %314 = vadd.xlane.f32.xlu0 %v313
  %v315 = vpop.xlane.xlu0 %314
  %v316 = vsel %vm179, %v96, 0.0
  %v317 = vadd.f32 %v95, %v316
  %318 = vadd.xlane.f32.xlu0 %v317
  %v319 = vpop.xlane.xlu0 %318
  %v320 = vsel %vm179, %v98, 0.0
  %v321 = vadd.f32 %v97, %v320
  %322 = vadd.xlane.f32.xlu0 %v321
  %v323 = vpop.xlane.xlu0 %322
  %v324 = vsel %vm179, %v100, 0.0
  %v325 = vadd.f32 %v99, %v324
  %326 = vadd.xlane.f32.xlu0 %v325
  %v327 = vpop.xlane.xlu0 %326
  %v328 = vsel %vm179, %v102, 0.0
  %v329 = vadd.f32 %v101, %v328
  %330 = vadd.xlane.f32.xlu0 %v329
  %v331 = vpop.xlane.xlu0 %330
  %v332 = vsel %vm179, %v104, 0.0
  %v333 = vadd.f32 %v103, %v332
  %334 = vadd.xlane.f32.xlu0 %v333
  %v335 = vpop.xlane.xlu0 %334
  %v336 = vsel %vm179, %v106, 0.0
  %v337 = vadd.f32 %v105, %v336
  %338 = vadd.xlane.f32.xlu0 %v337
  %v339 = vpop.xlane.xlu0 %338
  %v340 = vsel %vm179, %v108, 0.0
  %v341 = vadd.f32 %v107, %v340
  %342 = vadd.xlane.f32.xlu0 %v341
  %v343 = vpop.xlane.xlu0 %342
  %v344 = vsel %vm179, %v110, 0.0
  %v345 = vadd.f32 %v109, %v344
  %346 = vadd.xlane.f32.xlu0 %v345
  %v347 = vpop.xlane.xlu0 %346
  %v348 = vsel %vm179, %v112, 0.0
  %v349 = vadd.f32 %v111, %v348
  %350 = vadd.xlane.f32.xlu0 %v349
  %v351 = vpop.xlane.xlu0 %350
  %v352 = vsel %vm179, %v114, 0.0
  %v353 = vadd.f32 %v113, %v352
  %354 = vadd.xlane.f32.xlu0 %v353
  %v355 = vpop.xlane.xlu0 %354
  %v356 = vsel %vm179, %v116, 0.0
  %v357 = vadd.f32 %v115, %v356
  %358 = vadd.xlane.f32.xlu0 %v357
  %v359 = vpop.xlane.xlu0 %358
  %v360 = vsel %vm179, %v118, 0.0
  %v361 = vadd.f32 %v117, %v360
  %362 = vadd.xlane.f32.xlu0 %v361
  %v363 = vpop.xlane.xlu0 %362
  %v364 = vsel %vm179, %v120, 0.0
  %v365 = vadd.f32 %v119, %v364
  %366 = vadd.xlane.f32.xlu0 %v365
  %v367 = vpop.xlane.xlu0 %366
  %v368 = vsel %vm179, %v122, 0.0
  %v369 = vadd.f32 %v121, %v368
  %370 = vadd.xlane.f32.xlu0 %v369
  %v371 = vpop.xlane.xlu0 %370
  %v372 = vsel %vm179, %v124, 0.0
  %v373 = vadd.f32 %v123, %v372
  %374 = vadd.xlane.f32.xlu0 %v373
  %v375 = vpop.xlane.xlu0 %374
  %v376 = vsel %vm179, %v126, 0.0
  %v377 = vadd.f32 %v125, %v376
  %378 = vadd.xlane.f32.xlu0 %v377
  %v379 = vpop.xlane.xlu0 %378
  %v380 = vsel %vm179, %v128, 0.0
  %v381 = vadd.f32 %v127, %v380
  %382 = vadd.xlane.f32.xlu0 %v381
  %v383 = vpop.xlane.xlu0 %382
  %v384 = vsel %vm179, %v130, 0.0
  %v385 = vadd.f32 %v129, %v384
  %386 = vadd.xlane.f32.xlu0 %v385
  %v387 = vpop.xlane.xlu0 %386
  %v388 = vsel %vm179, %v132, 0.0
  %v389 = vadd.f32 %v131, %v388
  %390 = vadd.xlane.f32.xlu0 %v389
  %v391 = vpop.xlane.xlu0 %390
  %v392 = vsel %vm179, %v134, 0.0
  %v393 = vadd.f32 %v133, %v392
  %394 = vadd.xlane.f32.xlu0 %v393
  %v395 = vpop.xlane.xlu0 %394
  %v396 = vsel %vm179, %v136, 0.0
  %v397 = vadd.f32 %v135, %v396
  %398 = vadd.xlane.f32.xlu0 %v397
  %v399 = vpop.xlane.xlu0 %398
  %v400 = vsel %vm179, %v138, 0.0
  %v401 = vadd.f32 %v137, %v400
  %402 = vadd.xlane.f32.xlu0 %v401
  %v403 = vpop.xlane.xlu0 %402
  %v404 = vsel %vm179, %v140, 0.0
  %v405 = vadd.f32 %v139, %v404
  %406 = vadd.xlane.f32.xlu0 %v405
  %v407 = vpop.xlane.xlu0 %406
  %v408 = vsel %vm179, %v142, 0.0
  %v409 = vadd.f32 %v141, %v408
  %410 = vadd.xlane.f32.xlu0 %v409
  %v411 = vpop.xlane.xlu0 %410
  %v412 = vsel %vm179, %v144, 0.0
  %v413 = vadd.f32 %v143, %v412
  %414 = vadd.xlane.f32.xlu0 %v413
  %v415 = vpop.xlane.xlu0 %414
  %v416 = vsel %vm179, %v146, 0.0
  %v417 = vadd.f32 %v145, %v416
  %418 = vadd.xlane.f32.xlu0 %v417
  %v419 = vpop.xlane.xlu0 %418
  %v420 = vsel %vm179, %v148, 0.0
  %v421 = vadd.f32 %v147, %v420
  %422 = vadd.xlane.f32.xlu0 %v421
  %v423 = vpop.xlane.xlu0 %422
  %v424 = vsel %vm179, %v150, 0.0
  %v425 = vadd.f32 %v149, %v424
  %426 = vadd.xlane.f32.xlu0 %v425
  %v427 = vpop.xlane.xlu0 %426
  %v428 = vsel %vm179, %v152, 0.0
  %v429 = vadd.f32 %v151, %v428
  %430 = vadd.xlane.f32.xlu0 %v429
  %v431 = vpop.xlane.xlu0 %430
  %v432 = vsel %vm179, %v154, 0.0
  %v433 = vadd.f32 %v153, %v432
  %434 = vadd.xlane.f32.xlu0 %v433
  %v435 = vpop.xlane.xlu0 %434
  %v436 = vsel %vm179, %v156, 0.0
  %v437 = vadd.f32 %v155, %v436
  %438 = vadd.xlane.f32.xlu0 %v437
  %v439 = vpop.xlane.xlu0 %438
  %v440 = vsel %vm179, %v158, 0.0
  %v441 = vadd.f32 %v157, %v440
  %442 = vadd.xlane.f32.xlu0 %v441
  %v443 = vpop.xlane.xlu0 %442
  %v444 = vsel %vm179, %v160, 0.0
  %v445 = vadd.f32 %v159, %v444
  %446 = vadd.xlane.f32.xlu0 %v445
  %v447 = vpop.xlane.xlu0 %446
  %v448 = vsel %vm179, %v162, 0.0
  %v449 = vadd.f32 %v161, %v448
  %450 = vadd.xlane.f32.xlu0 %v449
  %v451 = vpop.xlane.xlu0 %450
  %v452 = vsel %vm179, %v164, 0.0
  %v453 = vadd.f32 %v163, %v452
  %454 = vadd.xlane.f32.xlu0 %v453
  %v455 = vpop.xlane.xlu0 %454
  %v456 = vsel %vm179, %v166, 0.0
  %v457 = vadd.f32 %v165, %v456
  %458 = vadd.xlane.f32.xlu0 %v457
  %v459 = vpop.xlane.xlu0 %458
  %v460 = vsel %vm179, %v168, 0.0
  %v461 = vadd.f32 %v167, %v460
  %462 = vadd.xlane.f32.xlu0 %v461
  %v463 = vpop.xlane.xlu0 %462
  %v464 = vsel %vm179, %v170, 0.0
  %v465 = vadd.f32 %v169, %v464
  %466 = vadd.xlane.f32.xlu0 %v465
  %v467 = vpop.xlane.xlu0 %466
  %v468 = vsel %vm179, %v172, 0.0
  %v469 = vadd.f32 %v171, %v468
  %470 = vadd.xlane.f32.xlu0 %v469
  %v471 = vpop.xlane.xlu0 %470
  %v472 = vsel %vm179, %v174, 0.0
  %v473 = vadd.f32 %v173, %v472
  %474 = vadd.xlane.f32.xlu0 %v473
  %v475 = vpop.xlane.xlu0 %474
  %v476 = vsel %vm179, %v176, 0.0
  %v477 = vadd.f32 %v175, %v476
  %478 = vadd.xlane.f32.xlu0 %v477
  %v479 = vpop.xlane.xlu0 %478
  %v480 = vsel %vm179, %v178, 0.0
  %v481 = vadd.f32 %v177, %v480
  %482 = vadd.xlane.f32.xlu0 %v481
  %v483 = vpop.xlane.xlu0 %482
  %v484 = vadd.f32 %v183, 0.0
  %v485 = vadd.f32 %v187, 0.0
  %v486 = vadd.f32 %v191, 0.0
  %v487 = vadd.f32 %v195, 0.0
  %v488 = vadd.f32 %v199, 0.0
  %v489 = vadd.f32 %v203, 0.0
  %v490 = vadd.f32 %v207, 0.0
  %v491 = vadd.f32 %v211, 0.0
  %v492 = vadd.f32 %v215, 0.0
  %v493 = vadd.f32 %v219, 0.0
  %v494 = vadd.f32 %v223, 0.0
  %v495 = vadd.f32 %v227, 0.0
  %v496 = vadd.f32 %v231, 0.0
  %v497 = vadd.f32 %v235, 0.0
  %v498 = vadd.f32 %v239, 0.0
  %v499 = vadd.f32 %v243, 0.0
  %v500 = vadd.f32 %v247, 0.0
  %v501 = vadd.f32 %v251, 0.0
  %v502 = vadd.f32 %v255, 0.0
  %v503 = vadd.f32 %v259, 0.0
  %v504 = vadd.f32 %v263, 0.0
  %v505 = vadd.f32 %v267, 0.0
  %v506 = vadd.f32 %v271, 0.0
  %v507 = vadd.f32 %v275, 0.0
  %v508 = vadd.f32 %v279, 0.0
  %v509 = vadd.f32 %v283, 0.0
  %v510 = vadd.f32 %v287, 0.0
  %v511 = vadd.f32 %v291, 0.0
  %v512 = vadd.f32 %v295, 0.0
  %v513 = vadd.f32 %v299, 0.0
  %v514 = vadd.f32 %v303, 0.0
  %v515 = vadd.f32 %v307, 0.0
  %v516 = vadd.f32 %v311, 0.0
  %v517 = vadd.f32 %v315, 0.0
  %v518 = vadd.f32 %v319, 0.0
  %v519 = vadd.f32 %v323, 0.0
  %v520 = vadd.f32 %v327, 0.0
  %v521 = vadd.f32 %v331, 0.0
  %v522 = vadd.f32 %v335, 0.0
  %v523 = vadd.f32 %v339, 0.0
  %v524 = vadd.f32 %v343, 0.0
  %v525 = vadd.f32 %v347, 0.0
  %v526 = vadd.f32 %v351, 0.0
  %v527 = vadd.f32 %v355, 0.0
  %v528 = vadd.f32 %v359, 0.0
  %v529 = vadd.f32 %v363, 0.0
  %v530 = vadd.f32 %v367, 0.0
  %v531 = vadd.f32 %v371, 0.0
  %v532 = vadd.f32 %v375, 0.0
  %v533 = vadd.f32 %v379, 0.0
  %v534 = vadd.f32 %v383, 0.0
  %v535 = vadd.f32 %v387, 0.0
  %v536 = vadd.f32 %v391, 0.0
  %v537 = vadd.f32 %v395, 0.0
  %v538 = vadd.f32 %v399, 0.0
  %v539 = vadd.f32 %v403, 0.0
  %v540 = vadd.f32 %v407, 0.0
  %v541 = vadd.f32 %v411, 0.0
  %v542 = vadd.f32 %v415, 0.0
  %v543 = vadd.f32 %v419, 0.0
  %v544 = vadd.f32 %v423, 0.0
  %v545 = vadd.f32 %v427, 0.0
  %v546 = vadd.f32 %v431, 0.0
  %v547 = vadd.f32 %v435, 0.0
  %v548 = vadd.f32 %v439, 0.0
  %v549 = vadd.f32 %v443, 0.0
  %v550 = vadd.f32 %v447, 0.0
  %v551 = vadd.f32 %v451, 0.0
  %v552 = vadd.f32 %v455, 0.0
  %v553 = vadd.f32 %v459, 0.0
  %v554 = vadd.f32 %v463, 0.0
  %v555 = vadd.f32 %v467, 0.0
  %v556 = vadd.f32 %v471, 0.0
  %v557 = vadd.f32 %v475, 0.0
  %v558 = vadd.f32 %v479, 0.0
  %v559 = vadd.f32 %v483, 0.0
  %v560 = vmul.f32 %v27, %v27
  %v561 = vmul.f32 %v28, %v28
  %v562 = vmul.f32 %v29, %v29
  %v563 = vmul.f32 %v30, %v30
  %v564 = vmul.f32 %v31, %v31
  %v565 = vmul.f32 %v32, %v32
  %v566 = vmul.f32 %v33, %v33
  %v567 = vmul.f32 %v34, %v34
  %v568 = vmul.f32 %v35, %v35
  %v569 = vmul.f32 %v36, %v36
  %v570 = vmul.f32 %v37, %v37
  %v571 = vmul.f32 %v38, %v38
  %v572 = vmul.f32 %v39, %v39
  %v573 = vmul.f32 %v40, %v40
  %v574 = vmul.f32 %v41, %v41
  %v575 = vmul.f32 %v42, %v42
  %v576 = vmul.f32 %v43, %v43
  %v577 = vmul.f32 %v44, %v44
  %v578 = vmul.f32 %v45, %v45
  %v579 = vmul.f32 %v46, %v46
  %v580 = vmul.f32 %v47, %v47
  %v581 = vmul.f32 %v48, %v48
  %v582 = vmul.f32 %v49, %v49
  %v583 = vmul.f32 %v50, %v50
  %v584 = vmul.f32 %v51, %v51
  %v585 = vmul.f32 %v52, %v52
  %v586 = vmul.f32 %v53, %v53
  %v587 = vmul.f32 %v54, %v54
  %v588 = vmul.f32 %v55, %v55
  %v589 = vmul.f32 %v56, %v56
  %v590 = vmul.f32 %v57, %v57
  %v591 = vmul.f32 %v58, %v58
  %v592 = vmul.f32 %v59, %v59
  %v593 = vmul.f32 %v60, %v60
  %v594 = vmul.f32 %v61, %v61
  %v595 = vmul.f32 %v62, %v62
  %v596 = vmul.f32 %v63, %v63
  %v597 = vmul.f32 %v64, %v64
  %v598 = vmul.f32 %v65, %v65
  %v599 = vmul.f32 %v66, %v66
  %v600 = vmul.f32 %v67, %v67
  %v601 = vmul.f32 %v68, %v68
  %v602 = vmul.f32 %v69, %v69
  %v603 = vmul.f32 %v70, %v70
  %v604 = vmul.f32 %v71, %v71
  %v605 = vmul.f32 %v72, %v72
  %v606 = vmul.f32 %v73, %v73
  %v607 = vmul.f32 %v74, %v74
  %v608 = vmul.f32 %v75, %v75
  %v609 = vmul.f32 %v76, %v76
  %v610 = vmul.f32 %v77, %v77
  %v611 = vmul.f32 %v78, %v78
  %v612 = vmul.f32 %v79, %v79
  %v613 = vmul.f32 %v80, %v80
  %v614 = vmul.f32 %v81, %v81
  %v615 = vmul.f32 %v82, %v82
  %v616 = vmul.f32 %v83, %v83
  %v617 = vmul.f32 %v84, %v84
  %v618 = vmul.f32 %v85, %v85
  %v619 = vmul.f32 %v86, %v86
  %v620 = vmul.f32 %v87, %v87
  %v621 = vmul.f32 %v88, %v88
  %v622 = vmul.f32 %v89, %v89
  %v623 = vmul.f32 %v90, %v90
  %v624 = vmul.f32 %v91, %v91
  %v625 = vmul.f32 %v92, %v92
  %v626 = vmul.f32 %v93, %v93
  %v627 = vmul.f32 %v94, %v94
  %v628 = vmul.f32 %v95, %v95
  %v629 = vmul.f32 %v96, %v96
  %v630 = vmul.f32 %v97, %v97
  %v631 = vmul.f32 %v98, %v98
  %v632 = vmul.f32 %v99, %v99
  %v633 = vmul.f32 %v100, %v100
  %v634 = vmul.f32 %v101, %v101
  %v635 = vmul.f32 %v102, %v102
  %v636 = vmul.f32 %v103, %v103
  %v637 = vmul.f32 %v104, %v104
  %v638 = vmul.f32 %v105, %v105
  %v639 = vmul.f32 %v106, %v106
  %v640 = vmul.f32 %v107, %v107
  %v641 = vmul.f32 %v108, %v108
  %v642 = vmul.f32 %v109, %v109
  %v643 = vmul.f32 %v110, %v110
  %v644 = vmul.f32 %v111, %v111
  %v645 = vmul.f32 %v112, %v112
  %v646 = vmul.f32 %v113, %v113
  %v647 = vmul.f32 %v114, %v114
  %v648 = vmul.f32 %v115, %v115
  %v649 = vmul.f32 %v116, %v116
  %v650 = vmul.f32 %v117, %v117
  %v651 = vmul.f32 %v118, %v118
  %v652 = vmul.f32 %v119, %v119
  %v653 = vmul.f32 %v120, %v120
  %v654 = vmul.f32 %v121, %v121
  %v655 = vmul.f32 %v122, %v122
  %v656 = vmul.f32 %v123, %v123
  %v657 = vmul.f32 %v124, %v124
  %v658 = vmul.f32 %v125, %v125
  %v659 = vmul.f32 %v126, %v126
  %v660 = vmul.f32 %v127, %v127
  %v661 = vmul.f32 %v128, %v128
  %v662 = vmul.f32 %v129, %v129
  %v663 = vmul.f32 %v130, %v130
  %v664 = vmul.f32 %v131, %v131
  %v665 = vmul.f32 %v132, %v132
  %v666 = vmul.f32 %v133, %v133
  %v667 = vmul.f32 %v134, %v134
  %v668 = vmul.f32 %v135, %v135
  %v669 = vmul.f32 %v136, %v136
  %v670 = vmul.f32 %v137, %v137
  %v671 = vmul.f32 %v138, %v138
  %v672 = vmul.f32 %v139, %v139
  %v673 = vmul.f32 %v140, %v140
  %v674 = vmul.f32 %v141, %v141
  %v675 = vmul.f32 %v142, %v142
  %v676 = vmul.f32 %v143, %v143
  %v677 = vmul.f32 %v144, %v144
  %v678 = vmul.f32 %v145, %v145
  %v679 = vmul.f32 %v146, %v146
  %v680 = vmul.f32 %v147, %v147
  %v681 = vmul.f32 %v148, %v148
  %v682 = vmul.f32 %v149, %v149
  %v683 = vmul.f32 %v150, %v150
  %v684 = vmul.f32 %v151, %v151
  %v685 = vmul.f32 %v152, %v152
  %v686 = vmul.f32 %v153, %v153
  %v687 = vmul.f32 %v154, %v154
  %v688 = vmul.f32 %v155, %v155
  %v689 = vmul.f32 %v156, %v156
  %v690 = vmul.f32 %v157, %v157
  %v691 = vmul.f32 %v158, %v158
  %v692 = vmul.f32 %v159, %v159
  %v693 = vmul.f32 %v160, %v160
  %v694 = vmul.f32 %v161, %v161
  %v695 = vmul.f32 %v162, %v162
  %v696 = vmul.f32 %v163, %v163
  %v697 = vmul.f32 %v164, %v164
  %v698 = vmul.f32 %v165, %v165
  %v699 = vmul.f32 %v166, %v166
  %v700 = vmul.f32 %v167, %v167
  %v701 = vmul.f32 %v168, %v168
  %v702 = vmul.f32 %v169, %v169
  %v703 = vmul.f32 %v170, %v170
  %v704 = vmul.f32 %v171, %v171
  %v705 = vmul.f32 %v172, %v172
  %v706 = vmul.f32 %v173, %v173
  %v707 = vmul.f32 %v174, %v174
  %v708 = vmul.f32 %v175, %v175
  %v709 = vmul.f32 %v176, %v176
  %v710 = vmul.f32 %v177, %v177
  %v711 = vmul.f32 %v178, %v178
  %v712 = vsel %vm179, %v561, 0.0
  %v713 = vadd.f32 %v560, %v712
  %714 = vadd.xlane.f32.xlu0 %v713
  %v715 = vpop.xlane.xlu0 %714
  %v716 = vsel %vm179, %v563, 0.0
  %v717 = vadd.f32 %v562, %v716
  %718 = vadd.xlane.f32.xlu0 %v717
  %v719 = vpop.xlane.xlu0 %718
  %v720 = vsel %vm179, %v565, 0.0
  %v721 = vadd.f32 %v564, %v720
  %722 = vadd.xlane.f32.xlu0 %v721
  %v723 = vpop.xlane.xlu0 %722
  %v724 = vsel %vm179, %v567, 0.0
  %v725 = vadd.f32 %v566, %v724
  %726 = vadd.xlane.f32.xlu0 %v725
  %v727 = vpop.xlane.xlu0 %726
  %v728 = vsel %vm179, %v569, 0.0
  %v729 = vadd.f32 %v568, %v728
  %730 = vadd.xlane.f32.xlu0 %v729
  %v731 = vpop.xlane.xlu0 %730
  %v732 = vsel %vm179, %v571, 0.0
  %v733 = vadd.f32 %v570, %v732
  %734 = vadd.xlane.f32.xlu0 %v733
  %v735 = vpop.xlane.xlu0 %734
  %v736 = vsel %vm179, %v573, 0.0
  %v737 = vadd.f32 %v572, %v736
  %738 = vadd.xlane.f32.xlu0 %v737
  %v739 = vpop.xlane.xlu0 %738
  %v740 = vsel %vm179, %v575, 0.0
  %v741 = vadd.f32 %v574, %v740
  %742 = vadd.xlane.f32.xlu0 %v741
  %v743 = vpop.xlane.xlu0 %742
  %v744 = vsel %vm179, %v577, 0.0
  %v745 = vadd.f32 %v576, %v744
  %746 = vadd.xlane.f32.xlu0 %v745
  %v747 = vpop.xlane.xlu0 %746
  %v748 = vsel %vm179, %v579, 0.0
  %v749 = vadd.f32 %v578, %v748
  %750 = vadd.xlane.f32.xlu0 %v749
  %v751 = vpop.xlane.xlu0 %750
  %v752 = vsel %vm179, %v581, 0.0
  %v753 = vadd.f32 %v580, %v752
  %754 = vadd.xlane.f32.xlu0 %v753
  %v755 = vpop.xlane.xlu0 %754
  %v756 = vsel %vm179, %v583, 0.0
  %v757 = vadd.f32 %v582, %v756
  %758 = vadd.xlane.f32.xlu0 %v757
  %v759 = vpop.xlane.xlu0 %758
  %v760 = vsel %vm179, %v585, 0.0
  %v761 = vadd.f32 %v584, %v760
  %762 = vadd.xlane.f32.xlu0 %v761
  %v763 = vpop.xlane.xlu0 %762
  %v764 = vsel %vm179, %v587, 0.0
  %v765 = vadd.f32 %v586, %v764
  %766 = vadd.xlane.f32.xlu0 %v765
  %v767 = vpop.xlane.xlu0 %766
  %v768 = vsel %vm179, %v589, 0.0
  %v769 = vadd.f32 %v588, %v768
  %770 = vadd.xlane.f32.xlu0 %v769
  %v771 = vpop.xlane.xlu0 %770
  %v772 = vsel %vm179, %v591, 0.0
  %v773 = vadd.f32 %v590, %v772
  %774 = vadd.xlane.f32.xlu0 %v773
  %v775 = vpop.xlane.xlu0 %774
  %v776 = vsel %vm179, %v593, 0.0
  %v777 = vadd.f32 %v592, %v776
  %778 = vadd.xlane.f32.xlu0 %v777
  %v779 = vpop.xlane.xlu0 %778
  %v780 = vsel %vm179, %v595, 0.0
  %v781 = vadd.f32 %v594, %v780
  %782 = vadd.xlane.f32.xlu0 %v781
  %v783 = vpop.xlane.xlu0 %782
  %v784 = vsel %vm179, %v597, 0.0
  %v785 = vadd.f32 %v596, %v784
  %786 = vadd.xlane.f32.xlu0 %v785
  %v787 = vpop.xlane.xlu0 %786
  %v788 = vsel %vm179, %v599, 0.0
  %v789 = vadd.f32 %v598, %v788
  %790 = vadd.xlane.f32.xlu0 %v789
  %v791 = vpop.xlane.xlu0 %790
  %v792 = vsel %vm179, %v601, 0.0
  %v793 = vadd.f32 %v600, %v792
  %794 = vadd.xlane.f32.xlu0 %v793
  %v795 = vpop.xlane.xlu0 %794
  %v796 = vsel %vm179, %v603, 0.0
  %v797 = vadd.f32 %v602, %v796
  %798 = vadd.xlane.f32.xlu0 %v797
  %v799 = vpop.xlane.xlu0 %798
  %v800 = vsel %vm179, %v605, 0.0
  %v801 = vadd.f32 %v604, %v800
  %802 = vadd.xlane.f32.xlu0 %v801
  %v803 = vpop.xlane.xlu0 %802
  %v804 = vsel %vm179, %v607, 0.0
  %v805 = vadd.f32 %v606, %v804
  %806 = vadd.xlane.f32.xlu0 %v805
  %v807 = vpop.xlane.xlu0 %806
  %v808 = vsel %vm179, %v609, 0.0
  %v809 = vadd.f32 %v608, %v808
  %810 = vadd.xlane.f32.xlu0 %v809
  %v811 = vpop.xlane.xlu0 %810
  %v812 = vsel %vm179, %v611, 0.0
  %v813 = vadd.f32 %v610, %v812
  %814 = vadd.xlane.f32.xlu0 %v813
  %v815 = vpop.xlane.xlu0 %814
  %v816 = vsel %vm179, %v613, 0.0
  %v817 = vadd.f32 %v612, %v816
  %818 = vadd.xlane.f32.xlu0 %v817
  %v819 = vpop.xlane.xlu0 %818
  %v820 = vsel %vm179, %v615, 0.0
  %v821 = vadd.f32 %v614, %v820
  %822 = vadd.xlane.f32.xlu0 %v821
  %v823 = vpop.xlane.xlu0 %822
  %v824 = vsel %vm179, %v617, 0.0
  %v825 = vadd.f32 %v616, %v824
  %826 = vadd.xlane.f32.xlu0 %v825
  %v827 = vpop.xlane.xlu0 %826
  %v828 = vsel %vm179, %v619, 0.0
  %v829 = vadd.f32 %v618, %v828
  %830 = vadd.xlane.f32.xlu0 %v829
  %v831 = vpop.xlane.xlu0 %830
  %v832 = vsel %vm179, %v621, 0.0
  %v833 = vadd.f32 %v620, %v832
  %834 = vadd.xlane.f32.xlu0 %v833
  %v835 = vpop.xlane.xlu0 %834
  %v836 = vsel %vm179, %v623, 0.0
  %v837 = vadd.f32 %v622, %v836
  %838 = vadd.xlane.f32.xlu0 %v837
  %v839 = vpop.xlane.xlu0 %838
  %v840 = vsel %vm179, %v625, 0.0
  %v841 = vadd.f32 %v624, %v840
  %842 = vadd.xlane.f32.xlu0 %v841
  %v843 = vpop.xlane.xlu0 %842
  %v844 = vsel %vm179, %v627, 0.0
  %v845 = vadd.f32 %v626, %v844
  %846 = vadd.xlane.f32.xlu0 %v845
  %v847 = vpop.xlane.xlu0 %846
  %v848 = vsel %vm179, %v629, 0.0
  %v849 = vadd.f32 %v628, %v848
  %850 = vadd.xlane.f32.xlu0 %v849
  %v851 = vpop.xlane.xlu0 %850
  %v852 = vsel %vm179, %v631, 0.0
  %v853 = vadd.f32 %v630, %v852
  %854 = vadd.xlane.f32.xlu0 %v853
  %v855 = vpop.xlane.xlu0 %854
  %v856 = vsel %vm179, %v633, 0.0
  %v857 = vadd.f32 %v632, %v856
  %858 = vadd.xlane.f32.xlu0 %v857
  %v859 = vpop.xlane.xlu0 %858
  %v860 = vsel %vm179, %v635, 0.0
  %v861 = vadd.f32 %v634, %v860
  %862 = vadd.xlane.f32.xlu0 %v861
  %v863 = vpop.xlane.xlu0 %862
  %v864 = vsel %vm179, %v637, 0.0
  %v865 = vadd.f32 %v636, %v864
  %866 = vadd.xlane.f32.xlu0 %v865
  %v867 = vpop.xlane.xlu0 %866
  %v868 = vsel %vm179, %v639, 0.0
  %v869 = vadd.f32 %v638, %v868
  %870 = vadd.xlane.f32.xlu0 %v869
  %v871 = vpop.xlane.xlu0 %870
  %v872 = vsel %vm179, %v641, 0.0
  %v873 = vadd.f32 %v640, %v872
  %874 = vadd.xlane.f32.xlu0 %v873
  %v875 = vpop.xlane.xlu0 %874
  %v876 = vsel %vm179, %v643, 0.0
  %v877 = vadd.f32 %v642, %v876
  %878 = vadd.xlane.f32.xlu0 %v877
  %v879 = vpop.xlane.xlu0 %878
  %v880 = vsel %vm179, %v645, 0.0
  %v881 = vadd.f32 %v644, %v880
  %882 = vadd.xlane.f32.xlu0 %v881
  %v883 = vpop.xlane.xlu0 %882
  %v884 = vsel %vm179, %v647, 0.0
  %v885 = vadd.f32 %v646, %v884
  %886 = vadd.xlane.f32.xlu0 %v885
  %v887 = vpop.xlane.xlu0 %886
  %v888 = vsel %vm179, %v649, 0.0
  %v889 = vadd.f32 %v648, %v888
  %890 = vadd.xlane.f32.xlu0 %v889
  %v891 = vpop.xlane.xlu0 %890
  %v892 = vsel %vm179, %v651, 0.0
  %v893 = vadd.f32 %v650, %v892
  %894 = vadd.xlane.f32.xlu0 %v893
  %v895 = vpop.xlane.xlu0 %894
  %v896 = vsel %vm179, %v653, 0.0
  %v897 = vadd.f32 %v652, %v896
  %898 = vadd.xlane.f32.xlu0 %v897
  %v899 = vpop.xlane.xlu0 %898
  %v900 = vsel %vm179, %v655, 0.0
  %v901 = vadd.f32 %v654, %v900
  %902 = vadd.xlane.f32.xlu0 %v901
  %v903 = vpop.xlane.xlu0 %902
  %v904 = vsel %vm179, %v657, 0.0
  %v905 = vadd.f32 %v656, %v904
  %906 = vadd.xlane.f32.xlu0 %v905
  %v907 = vpop.xlane.xlu0 %906
  %v908 = vsel %vm179, %v659, 0.0
  %v909 = vadd.f32 %v658, %v908
  %910 = vadd.xlane.f32.xlu0 %v909
  %v911 = vpop.xlane.xlu0 %910
  %v912 = vsel %vm179, %v661, 0.0
  %v913 = vadd.f32 %v660, %v912
  %914 = vadd.xlane.f32.xlu0 %v913
  %v915 = vpop.xlane.xlu0 %914
  %v916 = vsel %vm179, %v663, 0.0
  %v917 = vadd.f32 %v662, %v916
  %918 = vadd.xlane.f32.xlu0 %v917
  %v919 = vpop.xlane.xlu0 %918
  %v920 = vsel %vm179, %v665, 0.0
  %v921 = vadd.f32 %v664, %v920
  %922 = vadd.xlane.f32.xlu0 %v921
  %v923 = vpop.xlane.xlu0 %922
  %v924 = vsel %vm179, %v667, 0.0
  %v925 = vadd.f32 %v666, %v924
  %926 = vadd.xlane.f32.xlu0 %v925
  %v927 = vpop.xlane.xlu0 %926
  %v928 = vsel %vm179, %v669, 0.0
  %v929 = vadd.f32 %v668, %v928
  %930 = vadd.xlane.f32.xlu0 %v929
  %v931 = vpop.xlane.xlu0 %930
  %v932 = vsel %vm179, %v671, 0.0
  %v933 = vadd.f32 %v670, %v932
  %934 = vadd.xlane.f32.xlu0 %v933
  %v935 = vpop.xlane.xlu0 %934
  %v936 = vsel %vm179, %v673, 0.0
  %v937 = vadd.f32 %v672, %v936
  %938 = vadd.xlane.f32.xlu0 %v937
  %v939 = vpop.xlane.xlu0 %938
  %v940 = vsel %vm179, %v675, 0.0
  %v941 = vadd.f32 %v674, %v940
  %942 = vadd.xlane.f32.xlu0 %v941
  %v943 = vpop.xlane.xlu0 %942
  %v944 = vsel %vm179, %v677, 0.0
  %v945 = vadd.f32 %v676, %v944
  %946 = vadd.xlane.f32.xlu0 %v945
  %v947 = vpop.xlane.xlu0 %946
  %v948 = vsel %vm179, %v679, 0.0
  %v949 = vadd.f32 %v678, %v948
  %950 = vadd.xlane.f32.xlu0 %v949
  %v951 = vpop.xlane.xlu0 %950
  %v952 = vsel %vm179, %v681, 0.0
  %v953 = vadd.f32 %v680, %v952
  %954 = vadd.xlane.f32.xlu0 %v953
  %v955 = vpop.xlane.xlu0 %954
  %v956 = vsel %vm179, %v683, 0.0
  %v957 = vadd.f32 %v682, %v956
  %958 = vadd.xlane.f32.xlu0 %v957
  %v959 = vpop.xlane.xlu0 %958
  %v960 = vsel %vm179, %v685, 0.0
  %v961 = vadd.f32 %v684, %v960
  %962 = vadd.xlane.f32.xlu0 %v961
  %v963 = vpop.xlane.xlu0 %962
  %v964 = vsel %vm179, %v687, 0.0
  %v965 = vadd.f32 %v686, %v964
  %966 = vadd.xlane.f32.xlu0 %v965
  %v967 = vpop.xlane.xlu0 %966
  %v968 = vsel %vm179, %v689, 0.0
  %v969 = vadd.f32 %v688, %v968
  %970 = vadd.xlane.f32.xlu0 %v969
  %v971 = vpop.xlane.xlu0 %970
  %v972 = vsel %vm179, %v691, 0.0
  %v973 = vadd.f32 %v690, %v972
  %974 = vadd.xlane.f32.xlu0 %v973
  %v975 = vpop.xlane.xlu0 %974
  %v976 = vsel %vm179, %v693, 0.0
  %v977 = vadd.f32 %v692, %v976
  %978 = vadd.xlane.f32.xlu0 %v977
  %v979 = vpop.xlane.xlu0 %978
  %v980 = vsel %vm179, %v695, 0.0
  %v981 = vadd.f32 %v694, %v980
  %982 = vadd.xlane.f32.xlu0 %v981
  %v983 = vpop.xlane.xlu0 %982
  %v984 = vsel %vm179, %v697, 0.0
  %v985 = vadd.f32 %v696, %v984
  %986 = vadd.xlane.f32.xlu0 %v985
  %v987 = vpop.xlane.xlu0 %986
  %v988 = vsel %vm179, %v699, 0.0
  %v989 = vadd.f32 %v698, %v988
  %990 = vadd.xlane.f32.xlu0 %v989
  %v991 = vpop.xlane.xlu0 %990
  %v992 = vsel %vm179, %v701, 0.0
  %v993 = vadd.f32 %v700, %v992
  %994 = vadd.xlane.f32.xlu0 %v993
  %v995 = vpop.xlane.xlu0 %994
  %v996 = vsel %vm179, %v703, 0.0
  %v997 = vadd.f32 %v702, %v996
  %998 = vadd.xlane.f32.xlu0 %v997
  %v999 = vpop.xlane.xlu0 %998
  %v1000 = vsel %vm179, %v705, 0.0
  %v1001 = vadd.f32 %v704, %v1000
  %1002 = vadd.xlane.f32.xlu0 %v1001
  %v1003 = vpop.xlane.xlu0 %1002
  %v1004 = vsel %vm179, %v707, 0.0
  %v1005 = vadd.f32 %v706, %v1004
  %1006 = vadd.xlane.f32.xlu0 %v1005
  %v1007 = vpop.xlane.xlu0 %1006
  %v1008 = vsel %vm179, %v709, 0.0
  %v1009 = vadd.f32 %v708, %v1008
  %1010 = vadd.xlane.f32.xlu0 %v1009
  %v1011 = vpop.xlane.xlu0 %1010
  %v1012 = vsel %vm179, %v711, 0.0
  %v1013 = vadd.f32 %v710, %v1012
  %1014 = vadd.xlane.f32.xlu0 %v1013
  %v1015 = vpop.xlane.xlu0 %1014
  %v1016 = vadd.f32 %v715, 0.0
  %v1017 = vadd.f32 %v719, 0.0
  %v1018 = vadd.f32 %v723, 0.0
  %v1019 = vadd.f32 %v727, 0.0
  %v1020 = vadd.f32 %v731, 0.0
  %v1021 = vadd.f32 %v735, 0.0
  %v1022 = vadd.f32 %v739, 0.0
  %v1023 = vadd.f32 %v743, 0.0
  %v1024 = vadd.f32 %v747, 0.0
  %v1025 = vadd.f32 %v751, 0.0
  %v1026 = vadd.f32 %v755, 0.0
  %v1027 = vadd.f32 %v759, 0.0
  %v1028 = vadd.f32 %v763, 0.0
  %v1029 = vadd.f32 %v767, 0.0
  %v1030 = vadd.f32 %v771, 0.0
  %v1031 = vadd.f32 %v775, 0.0
  %v1032 = vadd.f32 %v779, 0.0
  %v1033 = vadd.f32 %v783, 0.0
  %v1034 = vadd.f32 %v787, 0.0
  %v1035 = vadd.f32 %v791, 0.0
  %v1036 = vadd.f32 %v795, 0.0
  %v1037 = vadd.f32 %v799, 0.0
  %v1038 = vadd.f32 %v803, 0.0
  %v1039 = vadd.f32 %v807, 0.0
  %v1040 = vadd.f32 %v811, 0.0
  %v1041 = vadd.f32 %v815, 0.0
  %v1042 = vadd.f32 %v819, 0.0
  %v1043 = vadd.f32 %v823, 0.0
  %v1044 = vadd.f32 %v827, 0.0
  %v1045 = vadd.f32 %v831, 0.0
  %v1046 = vadd.f32 %v835, 0.0
  %v1047 = vadd.f32 %v839, 0.0
  %v1048 = vadd.f32 %v843, 0.0
  %v1049 = vadd.f32 %v847, 0.0
  %v1050 = vadd.f32 %v851, 0.0
  %v1051 = vadd.f32 %v855, 0.0
  %v1052 = vadd.f32 %v859, 0.0
  %v1053 = vadd.f32 %v863, 0.0
  %v1054 = vadd.f32 %v867, 0.0
  %v1055 = vadd.f32 %v871, 0.0
  %v1056 = vadd.f32 %v875, 0.0
  %v1057 = vadd.f32 %v879, 0.0
  %v1058 = vadd.f32 %v883, 0.0
  %v1059 = vadd.f32 %v887, 0.0
  %v1060 = vadd.f32 %v891, 0.0
  %v1061 = vadd.f32 %v895, 0.0
  %v1062 = vadd.f32 %v899, 0.0
  %v1063 = vadd.f32 %v903, 0.0
  %v1064 = vadd.f32 %v907, 0.0
  %v1065 = vadd.f32 %v911, 0.0
  %v1066 = vadd.f32 %v915, 0.0
  %v1067 = vadd.f32 %v919, 0.0
  %v1068 = vadd.f32 %v923, 0.0
  %v1069 = vadd.f32 %v927, 0.0
  %v1070 = vadd.f32 %v931, 0.0
  %v1071 = vadd.f32 %v935, 0.0
  %v1072 = vadd.f32 %v939, 0.0
  %v1073 = vadd.f32 %v943, 0.0
  %v1074 = vadd.f32 %v947, 0.0
  %v1075 = vadd.f32 %v951, 0.0
  %v1076 = vadd.f32 %v955, 0.0
  %v1077 = vadd.f32 %v959, 0.0
  %v1078 = vadd.f32 %v963, 0.0
  %v1079 = vadd.f32 %v967, 0.0
  %v1080 = vadd.f32 %v971, 0.0
  %v1081 = vadd.f32 %v975, 0.0
  %v1082 = vadd.f32 %v979, 0.0
  %v1083 = vadd.f32 %v983, 0.0
  %v1084 = vadd.f32 %v987, 0.0
  %v1085 = vadd.f32 %v991, 0.0
  %v1086 = vadd.f32 %v995, 0.0
  %v1087 = vadd.f32 %v999, 0.0
  %v1088 = vadd.f32 %v1003, 0.0
  %v1089 = vadd.f32 %v1007, 0.0
  %v1090 = vadd.f32 %v1011, 0.0
  %v1091 = vadd.f32 %v1015, 0.0
  %v1092 = vmul.f32 %v484, 0.0051020407
  %v1093 = vmul.f32 %v485, 0.0051020407
  %v1094 = vmul.f32 %v486, 0.0051020407
  %v1095 = vmul.f32 %v487, 0.0051020407
  %v1096 = vmul.f32 %v488, 0.0051020407
  %v1097 = vmul.f32 %v489, 0.0051020407
  %v1098 = vmul.f32 %v490, 0.0051020407
  %v1099 = vmul.f32 %v491, 0.0051020407
  %v1100 = vmul.f32 %v492, 0.0051020407
  %v1101 = vmul.f32 %v493, 0.0051020407
  %v1102 = vmul.f32 %v494, 0.0051020407
  %v1103 = vmul.f32 %v495, 0.0051020407
  %v1104 = vmul.f32 %v496, 0.0051020407
  %v1105 = vmul.f32 %v497, 0.0051020407
  %v1106 = vmul.f32 %v498, 0.0051020407
  %v1107 = vmul.f32 %v499, 0.0051020407
  %v1108 = vmul.f32 %v500, 0.0051020407
  %v1109 = vmul.f32 %v501, 0.0051020407
  %v1110 = vmul.f32 %v502, 0.0051020407
  %v1111 = vmul.f32 %v503, 0.0051020407
  %v1112 = vmul.f32 %v504, 0.0051020407
  %v1113 = vmul.f32 %v505, 0.0051020407
  %v1114 = vmul.f32 %v506, 0.0051020407
  %v1115 = vmul.f32 %v507, 0.0051020407
  %v1116 = vmul.f32 %v508, 0.0051020407
  %v1117 = vmul.f32 %v509, 0.0051020407
  %v1118 = vmul.f32 %v510, 0.0051020407
  %v1119 = vmul.f32 %v511, 0.0051020407
  %v1120 = vmul.f32 %v512, 0.0051020407
  %v1121 = vmul.f32 %v513, 0.0051020407
  %v1122 = vmul.f32 %v514, 0.0051020407
  %v1123 = vmul.f32 %v515, 0.0051020407
  %v1124 = vmul.f32 %v516, 0.0051020407
  %v1125 = vmul.f32 %v517, 0.0051020407
  %v1126 = vmul.f32 %v518, 0.0051020407
  %v1127 = vmul.f32 %v519, 0.0051020407
  %v1128 = vmul.f32 %v520, 0.0051020407
  %v1129 = vmul.f32 %v521, 0.0051020407
  %v1130 = vmul.f32 %v522, 0.0051020407
  %v1131 = vmul.f32 %v523, 0.0051020407
  %v1132 = vmul.f32 %v524, 0.0051020407
  %v1133 = vmul.f32 %v525, 0.0051020407
  %v1134 = vmul.f32 %v526, 0.0051020407
  %v1135 = vmul.f32 %v527, 0.0051020407
  %v1136 = vmul.f32 %v528, 0.0051020407
  %v1137 = vmul.f32 %v529, 0.0051020407
  %v1138 = vmul.f32 %v530, 0.0051020407
  %v1139 = vmul.f32 %v531, 0.0051020407
  %v1140 = vmul.f32 %v532, 0.0051020407
  %v1141 = vmul.f32 %v533, 0.0051020407
  %v1142 = vmul.f32 %v534, 0.0051020407
  %v1143 = vmul.f32 %v535, 0.0051020407
  %v1144 = vmul.f32 %v536, 0.0051020407
  %v1145 = vmul.f32 %v537, 0.0051020407
  %v1146 = vmul.f32 %v538, 0.0051020407
  %v1147 = vmul.f32 %v539, 0.0051020407
  %v1148 = vmul.f32 %v540, 0.0051020407
  %v1149 = vmul.f32 %v541, 0.0051020407
  %v1150 = vmul.f32 %v542, 0.0051020407
  %v1151 = vmul.f32 %v543, 0.0051020407
  %v1152 = vmul.f32 %v544, 0.0051020407
  %v1153 = vmul.f32 %v545, 0.0051020407
  %v1154 = vmul.f32 %v546, 0.0051020407
  %v1155 = vmul.f32 %v547, 0.0051020407
  %v1156 = vmul.f32 %v548, 0.0051020407
  %v1157 = vmul.f32 %v549, 0.0051020407
  %v1158 = vmul.f32 %v550, 0.0051020407
  %v1159 = vmul.f32 %v551, 0.0051020407
  %v1160 = vmul.f32 %v552, 0.0051020407
  %v1161 = vmul.f32 %v553, 0.0051020407
  %v1162 = vmul.f32 %v554, 0.0051020407
  %v1163 = vmul.f32 %v555, 0.0051020407
  %v1164 = vmul.f32 %v556, 0.0051020407
  %v1165 = vmul.f32 %v557, 0.0051020407
  %v1166 = vmul.f32 %v558, 0.0051020407
  %v1167 = vmul.f32 %v559, 0.0051020407
  %v1168 = vmul.f32 %v1016, 0.0051020407
  %v1169 = vmul.f32 %v1017, 0.0051020407
  %v1170 = vmul.f32 %v1018, 0.0051020407
  %v1171 = vmul.f32 %v1019, 0.0051020407
  %v1172 = vmul.f32 %v1020, 0.0051020407
  %v1173 = vmul.f32 %v1021, 0.0051020407
  %v1174 = vmul.f32 %v1022, 0.0051020407
  %v1175 = vmul.f32 %v1023, 0.0051020407
  %v1176 = vmul.f32 %v1024, 0.0051020407
  %v1177 = vmul.f32 %v1025, 0.0051020407
  %v1178 = vmul.f32 %v1026, 0.0051020407
  %v1179 = vmul.f32 %v1027, 0.0051020407
  %v1180 = vmul.f32 %v1028, 0.0051020407
  %v1181 = vmul.f32 %v1029, 0.0051020407
  %v1182 = vmul.f32 %v1030, 0.0051020407
  %v1183 = vmul.f32 %v1031, 0.0051020407
  %v1184 = vmul.f32 %v1032, 0.0051020407
  %v1185 = vmul.f32 %v1033, 0.0051020407
  %v1186 = vmul.f32 %v1034, 0.0051020407
  %v1187 = vmul.f32 %v1035, 0.0051020407
  %v1188 = vmul.f32 %v1036, 0.0051020407
  %v1189 = vmul.f32 %v1037, 0.0051020407
  %v1190 = vmul.f32 %v1038, 0.0051020407
  %v1191 = vmul.f32 %v1039, 0.0051020407
  %v1192 = vmul.f32 %v1040, 0.0051020407
  %v1193 = vmul.f32 %v1041, 0.0051020407
  %v1194 = vmul.f32 %v1042, 0.0051020407
  %v1195 = vmul.f32 %v1043, 0.0051020407
  %v1196 = vmul.f32 %v1044, 0.0051020407
  %v1197 = vmul.f32 %v1045, 0.0051020407
  %v1198 = vmul.f32 %v1046, 0.0051020407
  %v1199 = vmul.f32 %v1047, 0.0051020407
  %v1200 = vmul.f32 %v1048, 0.0051020407
  %v1201 = vmul.f32 %v1049, 0.0051020407
  %v1202 = vmul.f32 %v1050, 0.0051020407
  %v1203 = vmul.f32 %v1051, 0.0051020407
  %v1204 = vmul.f32 %v1052, 0.0051020407
  %v1205 = vmul.f32 %v1053, 0.0051020407
  %v1206 = vmul.f32 %v1054, 0.0051020407
  %v1207 = vmul.f32 %v1055, 0.0051020407
  %v1208 = vmul.f32 %v1056, 0.0051020407
  %v1209 = vmul.f32 %v1057, 0.0051020407
  %v1210 = vmul.f32 %v1058, 0.0051020407
  %v1211 = vmul.f32 %v1059, 0.0051020407
  %v1212 = vmul.f32 %v1060, 0.0051020407
  %v1213 = vmul.f32 %v1061, 0.0051020407
  %v1214 = vmul.f32 %v1062, 0.0051020407
  %v1215 = vmul.f32 %v1063, 0.0051020407
  %v1216 = vmul.f32 %v1064, 0.0051020407
  %v1217 = vmul.f32 %v1065, 0.0051020407
  %v1218 = vmul.f32 %v1066, 0.0051020407
  %v1219 = vmul.f32 %v1067, 0.0051020407
  %v1220 = vmul.f32 %v1068, 0.0051020407
  %v1221 = vmul.f32 %v1069, 0.0051020407
  %v1222 = vmul.f32 %v1070, 0.0051020407
  %v1223 = vmul.f32 %v1071, 0.0051020407
  %v1224 = vmul.f32 %v1072, 0.0051020407
  %v1225 = vmul.f32 %v1073, 0.0051020407
  %v1226 = vmul.f32 %v1074, 0.0051020407
  %v1227 = vmul.f32 %v1075, 0.0051020407
  %v1228 = vmul.f32 %v1076, 0.0051020407
  %v1229 = vmul.f32 %v1077, 0.0051020407
  %v1230 = vmul.f32 %v1078, 0.0051020407
  %v1231 = vmul.f32 %v1079, 0.0051020407
  %v1232 = vmul.f32 %v1080, 0.0051020407
  %v1233 = vmul.f32 %v1081, 0.0051020407
  %v1234 = vmul.f32 %v1082, 0.0051020407
  %v1235 = vmul.f32 %v1083, 0.0051020407
  %v1236 = vmul.f32 %v1084, 0.0051020407
  %v1237 = vmul.f32 %v1085, 0.0051020407
  %v1238 = vmul.f32 %v1086, 0.0051020407
  %v1239 = vmul.f32 %v1087, 0.0051020407
  %v1240 = vmul.f32 %v1088, 0.0051020407
  %v1241 = vmul.f32 %v1089, 0.0051020407
  %v1242 = vmul.f32 %v1090, 0.0051020407
  %v1243 = vmul.f32 %v1091, 0.0051020407
  %v1244 = vmul.f32 %v1092, %v1092
  %v1245 = vmul.f32 %v1093, %v1093
  %v1246 = vmul.f32 %v1094, %v1094
  %v1247 = vmul.f32 %v1095, %v1095
  %v1248 = vmul.f32 %v1096, %v1096
  %v1249 = vmul.f32 %v1097, %v1097
  %v1250 = vmul.f32 %v1098, %v1098
  %v1251 = vmul.f32 %v1099, %v1099
  %v1252 = vmul.f32 %v1100, %v1100
  %v1253 = vmul.f32 %v1101, %v1101
  %v1254 = vmul.f32 %v1102, %v1102
  %v1255 = vmul.f32 %v1103, %v1103
  %v1256 = vmul.f32 %v1104, %v1104
  %v1257 = vmul.f32 %v1105, %v1105
  %v1258 = vmul.f32 %v1106, %v1106
  %v1259 = vmul.f32 %v1107, %v1107
  %v1260 = vmul.f32 %v1108, %v1108
  %v1261 = vmul.f32 %v1109, %v1109
  %v1262 = vmul.f32 %v1110, %v1110
  %v1263 = vmul.f32 %v1111, %v1111
  %v1264 = vmul.f32 %v1112, %v1112
  %v1265 = vmul.f32 %v1113, %v1113
  %v1266 = vmul.f32 %v1114, %v1114
  %v1267 = vmul.f32 %v1115, %v1115
  %v1268 = vmul.f32 %v1116, %v1116
  %v1269 = vmul.f32 %v1117, %v1117
  %v1270 = vmul.f32 %v1118, %v1118
  %v1271 = vmul.f32 %v1119, %v1119
  %v1272 = vmul.f32 %v1120, %v1120
  %v1273 = vmul.f32 %v1121, %v1121
  %v1274 = vmul.f32 %v1122, %v1122
  %v1275 = vmul.f32 %v1123, %v1123
  %v1276 = vmul.f32 %v1124, %v1124
  %v1277 = vmul.f32 %v1125, %v1125
  %v1278 = vmul.f32 %v1126, %v1126
  %v1279 = vmul.f32 %v1127, %v1127
  %v1280 = vmul.f32 %v1128, %v1128
  %v1281 = vmul.f32 %v1129, %v1129
  %v1282 = vmul.f32 %v1130, %v1130
  %v1283 = vmul.f32 %v1131, %v1131
  %v1284 = vmul.f32 %v1132, %v1132
  %v1285 = vmul.f32 %v1133, %v1133
  %v1286 = vmul.f32 %v1134, %v1134
  %v1287 = vmul.f32 %v1135, %v1135
  %v1288 = vmul.f32 %v1136, %v1136
  %v1289 = vmul.f32 %v1137, %v1137
  %v1290 = vmul.f32 %v1138, %v1138
  %v1291 = vmul.f32 %v1139, %v1139
  %v1292 = vmul.f32 %v1140, %v1140
  %v1293 = vmul.f32 %v1141, %v1141
  %v1294 = vmul.f32 %v1142, %v1142
  %v1295 = vmul.f32 %v1143, %v1143
  %v1296 = vmul.f32 %v1144, %v1144
  %v1297 = vmul.f32 %v1145, %v1145
  %v1298 = vmul.f32 %v1146, %v1146
  %v1299 = vmul.f32 %v1147, %v1147
  %v1300 = vmul.f32 %v1148, %v1148
  %v1301 = vmul.f32 %v1149, %v1149
  %v1302 = vmul.f32 %v1150, %v1150
  %v1303 = vmul.f32 %v1151, %v1151
  %v1304 = vmul.f32 %v1152, %v1152
  %v1305 = vmul.f32 %v1153, %v1153
  %v1306 = vmul.f32 %v1154, %v1154
  %v1307 = vmul.f32 %v1155, %v1155
  %v1308 = vmul.f32 %v1156, %v1156
  %v1309 = vmul.f32 %v1157, %v1157
  %v1310 = vmul.f32 %v1158, %v1158
  %v1311 = vmul.f32 %v1159, %v1159
  %v1312 = vmul.f32 %v1160, %v1160
  %v1313 = vmul.f32 %v1161, %v1161
  %v1314 = vmul.f32 %v1162, %v1162
  %v1315 = vmul.f32 %v1163, %v1163
  %v1316 = vmul.f32 %v1164, %v1164
  %v1317 = vmul.f32 %v1165, %v1165
  %v1318 = vmul.f32 %v1166, %v1166
  %v1319 = vmul.f32 %v1167, %v1167
  %v1320 = vsub.f32 %v1168, %v1244
  %v1321 = vsub.f32 %v1169, %v1245
  %v1322 = vsub.f32 %v1170, %v1246
  %v1323 = vsub.f32 %v1171, %v1247
  %v1324 = vsub.f32 %v1172, %v1248
  %v1325 = vsub.f32 %v1173, %v1249
  %v1326 = vsub.f32 %v1174, %v1250
  %v1327 = vsub.f32 %v1175, %v1251
  %v1328 = vsub.f32 %v1176, %v1252
  %v1329 = vsub.f32 %v1177, %v1253
  %v1330 = vsub.f32 %v1178, %v1254
  %v1331 = vsub.f32 %v1179, %v1255
  %v1332 = vsub.f32 %v1180, %v1256
  %v1333 = vsub.f32 %v1181, %v1257
  %v1334 = vsub.f32 %v1182, %v1258
  %v1335 = vsub.f32 %v1183, %v1259
  %v1336 = vsub.f32 %v1184, %v1260
  %v1337 = vsub.f32 %v1185, %v1261
  %v1338 = vsub.f32 %v1186, %v1262
  %v1339 = vsub.f32 %v1187, %v1263
  %v1340 = vsub.f32 %v1188, %v1264
  %v1341 = vsub.f32 %v1189, %v1265
  %v1342 = vsub.f32 %v1190, %v1266
  %v1343 = vsub.f32 %v1191, %v1267
  %v1344 = vsub.f32 %v1192, %v1268
  %v1345 = vsub.f32 %v1193, %v1269
  %v1346 = vsub.f32 %v1194, %v1270
  %v1347 = vsub.f32 %v1195, %v1271
  %v1348 = vsub.f32 %v1196, %v1272
  %v1349 = vsub.f32 %v1197, %v1273
  %v1350 = vsub.f32 %v1198, %v1274
  %v1351 = vsub.f32 %v1199, %v1275
  %v1352 = vsub.f32 %v1200, %v1276
  %v1353 = vsub.f32 %v1201, %v1277
  %v1354 = vsub.f32 %v1202, %v1278
  %v1355 = vsub.f32 %v1203, %v1279
  %v1356 = vsub.f32 %v1204, %v1280
  %v1357 = vsub.f32 %v1205, %v1281
  %v1358 = vsub.f32 %v1206, %v1282
  %v1359 = vsub.f32 %v1207, %v1283
  %v1360 = vsub.f32 %v1208, %v1284
  %v1361 = vsub.f32 %v1209, %v1285
  %v1362 = vsub.f32 %v1210, %v1286
  %v1363 = vsub.f32 %v1211, %v1287
  %v1364 = vsub.f32 %v1212, %v1288
  %v1365 = vsub.f32 %v1213, %v1289
  %v1366 = vsub.f32 %v1214, %v1290
  %v1367 = vsub.f32 %v1215, %v1291
  %v1368 = vsub.f32 %v1216, %v1292
  %v1369 = vsub.f32 %v1217, %v1293
  %v1370 = vsub.f32 %v1218, %v1294
  %v1371 = vsub.f32 %v1219, %v1295
  %v1372 = vsub.f32 %v1220, %v1296
  %v1373 = vsub.f32 %v1221, %v1297
  %v1374 = vsub.f32 %v1222, %v1298
  %v1375 = vsub.f32 %v1223, %v1299
  %v1376 = vsub.f32 %v1224, %v1300
  %v1377 = vsub.f32 %v1225, %v1301
  %v1378 = vsub.f32 %v1226, %v1302
  %v1379 = vsub.f32 %v1227, %v1303
  %v1380 = vsub.f32 %v1228, %v1304
  %v1381 = vsub.f32 %v1229, %v1305
  %v1382 = vsub.f32 %v1230, %v1306
  %v1383 = vsub.f32 %v1231, %v1307
  %v1384 = vsub.f32 %v1232, %v1308
  %v1385 = vsub.f32 %v1233, %v1309
  %v1386 = vsub.f32 %v1234, %v1310
  %v1387 = vsub.f32 %v1235, %v1311
  %v1388 = vsub.f32 %v1236, %v1312
  %v1389 = vsub.f32 %v1237, %v1313
  %v1390 = vsub.f32 %v1238, %v1314
  %v1391 = vsub.f32 %v1239, %v1315
  %v1392 = vsub.f32 %v1240, %v1316
  %v1393 = vsub.f32 %v1241, %v1317
  %v1394 = vsub.f32 %v1242, %v1318
  %v1395 = vsub.f32 %v1243, %v1319
  %v1396 = vmax.f32 %v1320, 0.0
  %v1397 = vmax.f32 %v1321, 0.0
  %v1398 = vmax.f32 %v1322, 0.0
  %v1399 = vmax.f32 %v1323, 0.0
  %v1400 = vmax.f32 %v1324, 0.0
  %v1401 = vmax.f32 %v1325, 0.0
  %v1402 = vmax.f32 %v1326, 0.0
  %v1403 = vmax.f32 %v1327, 0.0
  %v1404 = vmax.f32 %v1328, 0.0
  %v1405 = vmax.f32 %v1329, 0.0
  %v1406 = vmax.f32 %v1330, 0.0
  %v1407 = vmax.f32 %v1331, 0.0
  %v1408 = vmax.f32 %v1332, 0.0
  %v1409 = vmax.f32 %v1333, 0.0
  %v1410 = vmax.f32 %v1334, 0.0
  %v1411 = vmax.f32 %v1335, 0.0
  %v1412 = vmax.f32 %v1336, 0.0
  %v1413 = vmax.f32 %v1337, 0.0
  %v1414 = vmax.f32 %v1338, 0.0
  %v1415 = vmax.f32 %v1339, 0.0
  %v1416 = vmax.f32 %v1340, 0.0
  %v1417 = vmax.f32 %v1341, 0.0
  %v1418 = vmax.f32 %v1342, 0.0
  %v1419 = vmax.f32 %v1343, 0.0
  %v1420 = vmax.f32 %v1344, 0.0
  %v1421 = vmax.f32 %v1345, 0.0
  %v1422 = vmax.f32 %v1346, 0.0
  %v1423 = vmax.f32 %v1347, 0.0
  %v1424 = vmax.f32 %v1348, 0.0
  %v1425 = vmax.f32 %v1349, 0.0
  %v1426 = vmax.f32 %v1350, 0.0
  %v1427 = vmax.f32 %v1351, 0.0
  %v1428 = vmax.f32 %v1352, 0.0
  %v1429 = vmax.f32 %v1353, 0.0
  %v1430 = vmax.f32 %v1354, 0.0
  %v1431 = vmax.f32 %v1355, 0.0
  %v1432 = vmax.f32 %v1356, 0.0
  %v1433 = vmax.f32 %v1357, 0.0
  %v1434 = vmax.f32 %v1358, 0.0
  %v1435 = vmax.f32 %v1359, 0.0
  %v1436 = vmax.f32 %v1360, 0.0
  %v1437 = vmax.f32 %v1361, 0.0
  %v1438 = vmax.f32 %v1362, 0.0
  %v1439 = vmax.f32 %v1363, 0.0
  %v1440 = vmax.f32 %v1364, 0.0
  %v1441 = vmax.f32 %v1365, 0.0
  %v1442 = vmax.f32 %v1366, 0.0
  %v1443 = vmax.f32 %v1367, 0.0
  %v1444 = vmax.f32 %v1368, 0.0
  %v1445 = vmax.f32 %v1369, 0.0
  %v1446 = vmax.f32 %v1370, 0.0
  %v1447 = vmax.f32 %v1371, 0.0
  %v1448 = vmax.f32 %v1372, 0.0
  %v1449 = vmax.f32 %v1373, 0.0
  %v1450 = vmax.f32 %v1374, 0.0
  %v1451 = vmax.f32 %v1375, 0.0
  %v1452 = vmax.f32 %v1376, 0.0
  %v1453 = vmax.f32 %v1377, 0.0
  %v1454 = vmax.f32 %v1378, 0.0
  %v1455 = vmax.f32 %v1379, 0.0
  %v1456 = vmax.f32 %v1380, 0.0
  %v1457 = vmax.f32 %v1381, 0.0
  %v1458 = vmax.f32 %v1382, 0.0
  %v1459 = vmax.f32 %v1383, 0.0
  %v1460 = vmax.f32 %v1384, 0.0
  %v1461 = vmax.f32 %v1385, 0.0
  %v1462 = vmax.f32 %v1386, 0.0
  %v1463 = vmax.f32 %v1387, 0.0
  %v1464 = vmax.f32 %v1388, 0.0
  %v1465 = vmax.f32 %v1389, 0.0
  %v1466 = vmax.f32 %v1390, 0.0
  %v1467 = vmax.f32 %v1391, 0.0
  %v1468 = vmax.f32 %v1392, 0.0
  %v1469 = vmax.f32 %v1393, 0.0
  %v1470 = vmax.f32 %v1394, 0.0
  %v1471 = vmax.f32 %v1395, 0.0
  %v1472 = vld [vmem:[%s1] sm:$0xff]
  %v1473 = vld [vmem:[%s1 + $0x8] sm:$0xff]
  %v1474 = vld [vmem:[%s1 + $0x10] sm:$0xff]
  %v1475 = vld [vmem:[%s1 + $0x18] sm:$0xff]
  %v1476 = vld [vmem:[%s1 + $0x20] sm:$0xff]
  %v1477 = vld [vmem:[%s1 + $0x28] sm:$0xff]
  %v1478 = vld [vmem:[%s1 + $0x30] sm:$0xff]
  %v1479 = vld [vmem:[%s1 + $0x38] sm:$0xff]
  %v1480 = vld [vmem:[%s1 + $0x40] sm:$0xff]
  %v1481 = vld [vmem:[%s1 + $0x48] sm:$0xff]
  %v1482 = vld [vmem:[%s1 + $0x50] sm:$0xff]
  %v1483 = vld [vmem:[%s1 + $0x58] sm:$0xff]
  %v1484 = vld [vmem:[%s1 + $0x60] sm:$0xff]
  %v1485 = vld [vmem:[%s1 + $0x68] sm:$0xff]
  %v1486 = vld [vmem:[%s1 + $0x70] sm:$0xff]
  %v1487 = vld [vmem:[%s1 + $0x78] sm:$0xff]
  %v1488 = vld [vmem:[%s1 + $0x80] sm:$0xff]
  %v1489 = vld [vmem:[%s1 + $0x88] sm:$0xff]
  %v1490 = vld [vmem:[%s1 + $0x90] sm:$0xff]
  %v1491 = vld [vmem:[%s1 + $0x98] sm:$0xff]
  %v1492 = vld [vmem:[%s1 + $0xa0] sm:$0xff]
  %v1493 = vld [vmem:[%s1 + $0xa8] sm:$0xff]
  %v1494 = vld [vmem:[%s1 + $0xb0] sm:$0xff]
  %v1495 = vld [vmem:[%s1 + $0xb8] sm:$0xff]
  %v1496 = vld [vmem:[%s1 + $0xc0] sm:$0xff]
  %v1497 = vld [vmem:[%s1 + $0xc8] sm:$0xff]
  %v1498 = vld [vmem:[%s1 + $0xd0] sm:$0xff]
  %v1499 = vld [vmem:[%s1 + $0xd8] sm:$0xff]
  %v1500 = vld [vmem:[%s1 + $0xe0] sm:$0xff]
  %v1501 = vld [vmem:[%s1 + $0xe8] sm:$0xff]
  %v1502 = vld [vmem:[%s1 + $0xf0] sm:$0xff]
  %v1503 = vld [vmem:[%s1 + $0xf8] sm:$0xff]
  %v1504 = vld [vmem:[%s1 + $0x100] sm:$0xff]
  %v1505 = vld [vmem:[%s1 + $0x108] sm:$0xff]
  %v1506 = vld [vmem:[%s1 + $0x110] sm:$0xff]
  %v1507 = vld [vmem:[%s1 + $0x118] sm:$0xff]
  %v1508 = vld [vmem:[%s1 + $0x120] sm:$0xff]
  %v1509 = vld [vmem:[%s1 + $0x128] sm:$0xff]
  %v1510 = vld [vmem:[%s1 + $0x130] sm:$0xff]
  %v1511 = vld [vmem:[%s1 + $0x138] sm:$0xff]
  %v1512 = vld [vmem:[%s1 + $0x140] sm:$0xff]
  %v1513 = vld [vmem:[%s1 + $0x148] sm:$0xff]
  %v1514 = vld [vmem:[%s1 + $0x150] sm:$0xff]
  %v1515 = vld [vmem:[%s1 + $0x158] sm:$0xff]
  %v1516 = vld [vmem:[%s1 + $0x160] sm:$0xff]
  %v1517 = vld [vmem:[%s1 + $0x168] sm:$0xff]
  %v1518 = vld [vmem:[%s1 + $0x170] sm:$0xff]
  %v1519 = vld [vmem:[%s1 + $0x178] sm:$0xff]
  %v1520 = vld [vmem:[%s1 + $0x180] sm:$0xff]
  %v1521 = vld [vmem:[%s1 + $0x188] sm:$0xff]
  %v1522 = vld [vmem:[%s1 + $0x190] sm:$0xff]
  %v1523 = vld [vmem:[%s1 + $0x198] sm:$0xff]
  %v1524 = vld [vmem:[%s1 + $0x1a0] sm:$0xff]
  %v1525 = vld [vmem:[%s1 + $0x1a8] sm:$0xff]
  %v1526 = vld [vmem:[%s1 + $0x1b0] sm:$0xff]
  %v1527 = vld [vmem:[%s1 + $0x1b8] sm:$0xff]
  %v1528 = vld [vmem:[%s1 + $0x1c0] sm:$0xff]
  %v1529 = vld [vmem:[%s1 + $0x1c8] sm:$0xff]
  %v1530 = vld [vmem:[%s1 + $0x1d0] sm:$0xff]
  %v1531 = vld [vmem:[%s1 + $0x1d8] sm:$0xff]
  %v1532 = vld [vmem:[%s1 + $0x1e0] sm:$0xff]
  %v1533 = vld [vmem:[%s1 + $0x1e8] sm:$0xff]
  %v1534 = vld [vmem:[%s1 + $0x1f0] sm:$0xff]
  %v1535 = vld [vmem:[%s1 + $0x1f8] sm:$0xff]
  %v1536 = vld [vmem:[%s1 + $0x200] sm:$0xff]
  %v1537 = vld [vmem:[%s1 + $0x208] sm:$0xff]
  %v1538 = vld [vmem:[%s1 + $0x210] sm:$0xff]
  %v1539 = vld [vmem:[%s1 + $0x218] sm:$0xff]
  %v1540 = vld [vmem:[%s1 + $0x220] sm:$0xff]
  %v1541 = vld [vmem:[%s1 + $0x228] sm:$0xff]
  %v1542 = vld [vmem:[%s1 + $0x230] sm:$0xff]
  %v1543 = vld [vmem:[%s1 + $0x238] sm:$0xff]
  %v1544 = vld [vmem:[%s1 + $0x240] sm:$0xff]
  %v1545 = vld [vmem:[%s1 + $0x248] sm:$0xff]
  %v1546 = vld [vmem:[%s1 + $0x250] sm:$0xff]
  %v1547 = vld [vmem:[%s1 + $0x258] sm:$0xff]
  %v1548 = vadd.f32 %v1396, 1e-05
  %v1549 = vadd.f32 %v1397, 1e-05
  %v1550 = vadd.f32 %v1398, 1e-05
  %v1551 = vadd.f32 %v1399, 1e-05
  %v1552 = vadd.f32 %v1400, 1e-05
  %v1553 = vadd.f32 %v1401, 1e-05
  %v1554 = vadd.f32 %v1402, 1e-05
  %v1555 = vadd.f32 %v1403, 1e-05
  %v1556 = vadd.f32 %v1404, 1e-05
  %v1557 = vadd.f32 %v1405, 1e-05
  %v1558 = vadd.f32 %v1406, 1e-05
  %v1559 = vadd.f32 %v1407, 1e-05
  %v1560 = vadd.f32 %v1408, 1e-05
  %v1561 = vadd.f32 %v1409, 1e-05
  %v1562 = vadd.f32 %v1410, 1e-05
  %v1563 = vadd.f32 %v1411, 1e-05
  %v1564 = vadd.f32 %v1412, 1e-05
  %v1565 = vadd.f32 %v1413, 1e-05
  %v1566 = vadd.f32 %v1414, 1e-05
  %v1567 = vadd.f32 %v1415, 1e-05
  %v1568 = vadd.f32 %v1416, 1e-05
  %v1569 = vadd.f32 %v1417, 1e-05
  %v1570 = vadd.f32 %v1418, 1e-05
  %v1571 = vadd.f32 %v1419, 1e-05
  %v1572 = vadd.f32 %v1420, 1e-05
  %v1573 = vadd.f32 %v1421, 1e-05
  %v1574 = vadd.f32 %v1422, 1e-05
  %v1575 = vadd.f32 %v1423, 1e-05
  %v1576 = vadd.f32 %v1424, 1e-05
  %v1577 = vadd.f32 %v1425, 1e-05
  %v1578 = vadd.f32 %v1426, 1e-05
  %v1579 = vadd.f32 %v1427, 1e-05
  %v1580 = vadd.f32 %v1428, 1e-05
  %v1581 = vadd.f32 %v1429, 1e-05
  %v1582 = vadd.f32 %v1430, 1e-05
  %v1583 = vadd.f32 %v1431, 1e-05
  %v1584 = vadd.f32 %v1432, 1e-05
  %v1585 = vadd.f32 %v1433, 1e-05
  %v1586 = vadd.f32 %v1434, 1e-05
  %v1587 = vadd.f32 %v1435, 1e-05
  %v1588 = vadd.f32 %v1436, 1e-05
  %v1589 = vadd.f32 %v1437, 1e-05
  %v1590 = vadd.f32 %v1438, 1e-05
  %v1591 = vadd.f32 %v1439, 1e-05
  %v1592 = vadd.f32 %v1440, 1e-05
  %v1593 = vadd.f32 %v1441, 1e-05
  %v1594 = vadd.f32 %v1442, 1e-05
  %v1595 = vadd.f32 %v1443, 1e-05
  %v1596 = vadd.f32 %v1444, 1e-05
  %v1597 = vadd.f32 %v1445, 1e-05
  %v1598 = vadd.f32 %v1446, 1e-05
  %v1599 = vadd.f32 %v1447, 1e-05
  %v1600 = vadd.f32 %v1448, 1e-05
  %v1601 = vadd.f32 %v1449, 1e-05
  %v1602 = vadd.f32 %v1450, 1e-05
  %v1603 = vadd.f32 %v1451, 1e-05
  %v1604 = vadd.f32 %v1452, 1e-05
  %v1605 = vadd.f32 %v1453, 1e-05
  %v1606 = vadd.f32 %v1454, 1e-05
  %v1607 = vadd.f32 %v1455, 1e-05
  %v1608 = vadd.f32 %v1456, 1e-05
  %v1609 = vadd.f32 %v1457, 1e-05
  %v1610 = vadd.f32 %v1458, 1e-05
  %v1611 = vadd.f32 %v1459, 1e-05
  %v1612 = vadd.f32 %v1460, 1e-05
  %v1613 = vadd.f32 %v1461, 1e-05
  %v1614 = vadd.f32 %v1462, 1e-05
  %v1615 = vadd.f32 %v1463, 1e-05
  %v1616 = vadd.f32 %v1464, 1e-05
  %v1617 = vadd.f32 %v1465, 1e-05
  %v1618 = vadd.f32 %v1466, 1e-05
  %v1619 = vadd.f32 %v1467, 1e-05
  %v1620 = vadd.f32 %v1468, 1e-05
  %v1621 = vadd.f32 %v1469, 1e-05
  %v1622 = vadd.f32 %v1470, 1e-05
  %v1623 = vadd.f32 %v1471, 1e-05
  %v1624 = vrsqrt.pop %v1548
  %v1625 = vmul.f32 %v1624, %v1548
  %v1626 = vmul.f32 %v1625, %v1624
  %v1627 = vmul.f32 0.5, %v1626
  %v1628 = vsub.f32 1.5, %v1627
  %v1629 = vmul.f32 %v1624, %v1628
  %vm1630 = vweird.f32 %v1548
  %vm1631 = vweird.f32 %v1624
  %vm1632 = vmor %vm1630, %vm1631
  %v1633 = vsel %vm1632, %v1624, %v1629
  %v1634 = vrsqrt.pop %v1549
  %v1635 = vmul.f32 %v1634, %v1549
  %v1636 = vmul.f32 %v1635, %v1634
  %v1637 = vmul.f32 0.5, %v1636
  %v1638 = vsub.f32 1.5, %v1637
  %v1639 = vmul.f32 %v1634, %v1638
  %vm1640 = vweird.f32 %v1549
  %vm1641 = vweird.f32 %v1634
  %vm1642 = vmor %vm1640, %vm1641
  %v1643 = vsel %vm1642, %v1634, %v1639
  %v1644 = vrsqrt.pop %v1550
  %v1645 = vmul.f32 %v1644, %v1550
  %v1646 = vmul.f32 %v1645, %v1644
  %v1647 = vmul.f32 0.5, %v1646
  %v1648 = vsub.f32 1.5, %v1647
  %v1649 = vmul.f32 %v1644, %v1648
  %vm1650 = vweird.f32 %v1550
  %vm1651 = vweird.f32 %v1644
  %vm1652 = vmor %vm1650, %vm1651
  %v1653 = vsel %vm1652, %v1644, %v1649
  %v1654 = vrsqrt.pop %v1551
  %v1655 = vmul.f32 %v1654, %v1551
  %v1656 = vmul.f32 %v1655, %v1654
  %v1657 = vmul.f32 0.5, %v1656
  %v1658 = vsub.f32 1.5, %v1657
  %v1659 = vmul.f32 %v1654, %v1658
  %vm1660 = vweird.f32 %v1551
  %vm1661 = vweird.f32 %v1654
  %vm1662 = vmor %vm1660, %vm1661
  %v1663 = vsel %vm1662, %v1654, %v1659
  %v1664 = vrsqrt.pop %v1552
  %v1665 = vmul.f32 %v1664, %v1552
  %v1666 = vmul.f32 %v1665, %v1664
  %v1667 = vmul.f32 0.5, %v1666
  %v1668 = vsub.f32 1.5, %v1667
  %v1669 = vmul.f32 %v1664, %v1668
  %vm1670 = vweird.f32 %v1552
  %vm1671 = vweird.f32 %v1664
  %vm1672 = vmor %vm1670, %vm1671
  %v1673 = vsel %vm1672, %v1664, %v1669
  %v1674 = vrsqrt.pop %v1553
  %v1675 = vmul.f32 %v1674, %v1553
  %v1676 = vmul.f32 %v1675, %v1674
  %v1677 = vmul.f32 0.5, %v1676
  %v1678 = vsub.f32 1.5, %v1677
  %v1679 = vmul.f32 %v1674, %v1678
  %vm1680 = vweird.f32 %v1553
  %vm1681 = vweird.f32 %v1674
  %vm1682 = vmor %vm1680, %vm1681
  %v1683 = vsel %vm1682, %v1674, %v1679
  %v1684 = vrsqrt.pop %v1554
  %v1685 = vmul.f32 %v1684, %v1554
  %v1686 = vmul.f32 %v1685, %v1684
  %v1687 = vmul.f32 0.5, %v1686
  %v1688 = vsub.f32 1.5, %v1687
  %v1689 = vmul.f32 %v1684, %v1688
  %vm1690 = vweird.f32 %v1554
  %vm1691 = vweird.f32 %v1684
  %vm1692 = vmor %vm1690, %vm1691
  %v1693 = vsel %vm1692, %v1684, %v1689
  %v1694 = vrsqrt.pop %v1555
  %v1695 = vmul.f32 %v1694, %v1555
  %v1696 = vmul.f32 %v1695, %v1694
  %v1697 = vmul.f32 0.5, %v1696
  %v1698 = vsub.f32 1.5, %v1697
  %v1699 = vmul.f32 %v1694, %v1698
  %vm1700 = vweird.f32 %v1555
  %vm1701 = vweird.f32 %v1694
  %vm1702 = vmor %vm1700, %vm1701
  %v1703 = vsel %vm1702, %v1694, %v1699
  %v1704 = vrsqrt.pop %v1556
  %v1705 = vmul.f32 %v1704, %v1556
  %v1706 = vmul.f32 %v1705, %v1704
  %v1707 = vmul.f32 0.5, %v1706
  %v1708 = vsub.f32 1.5, %v1707
  %v1709 = vmul.f32 %v1704, %v1708
  %vm1710 = vweird.f32 %v1556
  %vm1711 = vweird.f32 %v1704
  %vm1712 = vmor %vm1710, %vm1711
  %v1713 = vsel %vm1712, %v1704, %v1709
  %v1714 = vrsqrt.pop %v1557
  %v1715 = vmul.f32 %v1714, %v1557
  %v1716 = vmul.f32 %v1715, %v1714
  %v1717 = vmul.f32 0.5, %v1716
  %v1718 = vsub.f32 1.5, %v1717
  %v1719 = vmul.f32 %v1714, %v1718
  %vm1720 = vweird.f32 %v1557
  %vm1721 = vweird.f32 %v1714
  %vm1722 = vmor %vm1720, %vm1721
  %v1723 = vsel %vm1722, %v1714, %v1719
  %v1724 = vrsqrt.pop %v1558
  %v1725 = vmul.f32 %v1724, %v1558
  %v1726 = vmul.f32 %v1725, %v1724
  %v1727 = vmul.f32 0.5, %v1726
  %v1728 = vsub.f32 1.5, %v1727
  %v1729 = vmul.f32 %v1724, %v1728
  %vm1730 = vweird.f32 %v1558
  %vm1731 = vweird.f32 %v1724
  %vm1732 = vmor %vm1730, %vm1731
  %v1733 = vsel %vm1732, %v1724, %v1729
  %v1734 = vrsqrt.pop %v1559
  %v1735 = vmul.f32 %v1734, %v1559
  %v1736 = vmul.f32 %v1735, %v1734
  %v1737 = vmul.f32 0.5, %v1736
  %v1738 = vsub.f32 1.5, %v1737
  %v1739 = vmul.f32 %v1734, %v1738
  %vm1740 = vweird.f32 %v1559
  %vm1741 = vweird.f32 %v1734
  %vm1742 = vmor %vm1740, %vm1741
  %v1743 = vsel %vm1742, %v1734, %v1739
  %v1744 = vrsqrt.pop %v1560
  %v1745 = vmul.f32 %v1744, %v1560
  %v1746 = vmul.f32 %v1745, %v1744
  %v1747 = vmul.f32 0.5, %v1746
  %v1748 = vsub.f32 1.5, %v1747
  %v1749 = vmul.f32 %v1744, %v1748
  %vm1750 = vweird.f32 %v1560
  %vm1751 = vweird.f32 %v1744
  %vm1752 = vmor %vm1750, %vm1751
  %v1753 = vsel %vm1752, %v1744, %v1749
  %v1754 = vrsqrt.pop %v1561
  %v1755 = vmul.f32 %v1754, %v1561
  %v1756 = vmul.f32 %v1755, %v1754
  %v1757 = vmul.f32 0.5, %v1756
  %v1758 = vsub.f32 1.5, %v1757
  %v1759 = vmul.f32 %v1754, %v1758
  %vm1760 = vweird.f32 %v1561
  %vm1761 = vweird.f32 %v1754
  %vm1762 = vmor %vm1760, %vm1761
  %v1763 = vsel %vm1762, %v1754, %v1759
  %v1764 = vrsqrt.pop %v1562
  %v1765 = vmul.f32 %v1764, %v1562
  %v1766 = vmul.f32 %v1765, %v1764
  %v1767 = vmul.f32 0.5, %v1766
  %v1768 = vsub.f32 1.5, %v1767
  %v1769 = vmul.f32 %v1764, %v1768
  %vm1770 = vweird.f32 %v1562
  %vm1771 = vweird.f32 %v1764
  %vm1772 = vmor %vm1770, %vm1771
  %v1773 = vsel %vm1772, %v1764, %v1769
  %v1774 = vrsqrt.pop %v1563
  %v1775 = vmul.f32 %v1774, %v1563
  %v1776 = vmul.f32 %v1775, %v1774
  %v1777 = vmul.f32 0.5, %v1776
  %v1778 = vsub.f32 1.5, %v1777
  %v1779 = vmul.f32 %v1774, %v1778
  %vm1780 = vweird.f32 %v1563
  %vm1781 = vweird.f32 %v1774
  %vm1782 = vmor %vm1780, %vm1781
  %v1783 = vsel %vm1782, %v1774, %v1779
  %v1784 = vrsqrt.pop %v1564
  %v1785 = vmul.f32 %v1784, %v1564
  %v1786 = vmul.f32 %v1785, %v1784
  %v1787 = vmul.f32 0.5, %v1786
  %v1788 = vsub.f32 1.5, %v1787
  %v1789 = vmul.f32 %v1784, %v1788
  %vm1790 = vweird.f32 %v1564
  %vm1791 = vweird.f32 %v1784
  %vm1792 = vmor %vm1790, %vm1791
  %v1793 = vsel %vm1792, %v1784, %v1789
  %v1794 = vrsqrt.pop %v1565
  %v1795 = vmul.f32 %v1794, %v1565
  %v1796 = vmul.f32 %v1795, %v1794
  %v1797 = vmul.f32 0.5, %v1796
  %v1798 = vsub.f32 1.5, %v1797
  %v1799 = vmul.f32 %v1794, %v1798
  %vm1800 = vweird.f32 %v1565
  %vm1801 = vweird.f32 %v1794
  %vm1802 = vmor %vm1800, %vm1801
  %v1803 = vsel %vm1802, %v1794, %v1799
  %v1804 = vrsqrt.pop %v1566
  %v1805 = vmul.f32 %v1804, %v1566
  %v1806 = vmul.f32 %v1805, %v1804
  %v1807 = vmul.f32 0.5, %v1806
  %v1808 = vsub.f32 1.5, %v1807
  %v1809 = vmul.f32 %v1804, %v1808
  %vm1810 = vweird.f32 %v1566
  %vm1811 = vweird.f32 %v1804
  %vm1812 = vmor %vm1810, %vm1811
  %v1813 = vsel %vm1812, %v1804, %v1809
  %v1814 = vrsqrt.pop %v1567
  %v1815 = vmul.f32 %v1814, %v1567
  %v1816 = vmul.f32 %v1815, %v1814
  %v1817 = vmul.f32 0.5, %v1816
  %v1818 = vsub.f32 1.5, %v1817
  %v1819 = vmul.f32 %v1814, %v1818
  %vm1820 = vweird.f32 %v1567
  %vm1821 = vweird.f32 %v1814
  %vm1822 = vmor %vm1820, %vm1821
  %v1823 = vsel %vm1822, %v1814, %v1819
  %v1824 = vrsqrt.pop %v1568
  %v1825 = vmul.f32 %v1824, %v1568
  %v1826 = vmul.f32 %v1825, %v1824
  %v1827 = vmul.f32 0.5, %v1826
  %v1828 = vsub.f32 1.5, %v1827
  %v1829 = vmul.f32 %v1824, %v1828
  %vm1830 = vweird.f32 %v1568
  %vm1831 = vweird.f32 %v1824
  %vm1832 = vmor %vm1830, %vm1831
  %v1833 = vsel %vm1832, %v1824, %v1829
  %v1834 = vrsqrt.pop %v1569
  %v1835 = vmul.f32 %v1834, %v1569
  %v1836 = vmul.f32 %v1835, %v1834
  %v1837 = vmul.f32 0.5, %v1836
  %v1838 = vsub.f32 1.5, %v1837
  %v1839 = vmul.f32 %v1834, %v1838
  %vm1840 = vweird.f32 %v1569
  %vm1841 = vweird.f32 %v1834
  %vm1842 = vmor %vm1840, %vm1841
  %v1843 = vsel %vm1842, %v1834, %v1839
  %v1844 = vrsqrt.pop %v1570
  %v1845 = vmul.f32 %v1844, %v1570
  %v1846 = vmul.f32 %v1845, %v1844
  %v1847 = vmul.f32 0.5, %v1846
  %v1848 = vsub.f32 1.5, %v1847
  %v1849 = vmul.f32 %v1844, %v1848
  %vm1850 = vweird.f32 %v1570
  %vm1851 = vweird.f32 %v1844
  %vm1852 = vmor %vm1850, %vm1851
  %v1853 = vsel %vm1852, %v1844, %v1849
  %v1854 = vrsqrt.pop %v1571
  %v1855 = vmul.f32 %v1854, %v1571
  %v1856 = vmul.f32 %v1855, %v1854
  %v1857 = vmul.f32 0.5, %v1856
  %v1858 = vsub.f32 1.5, %v1857
  %v1859 = vmul.f32 %v1854, %v1858
  %vm1860 = vweird.f32 %v1571
  %vm1861 = vweird.f32 %v1854
  %vm1862 = vmor %vm1860, %vm1861
  %v1863 = vsel %vm1862, %v1854, %v1859
  %v1864 = vrsqrt.pop %v1572
  %v1865 = vmul.f32 %v1864, %v1572
  %v1866 = vmul.f32 %v1865, %v1864
  %v1867 = vmul.f32 0.5, %v1866
  %v1868 = vsub.f32 1.5, %v1867
  %v1869 = vmul.f32 %v1864, %v1868
  %vm1870 = vweird.f32 %v1572
  %vm1871 = vweird.f32 %v1864
  %vm1872 = vmor %vm1870, %vm1871
  %v1873 = vsel %vm1872, %v1864, %v1869
  %v1874 = vrsqrt.pop %v1573
  %v1875 = vmul.f32 %v1874, %v1573
  %v1876 = vmul.f32 %v1875, %v1874
  %v1877 = vmul.f32 0.5, %v1876
  %v1878 = vsub.f32 1.5, %v1877
  %v1879 = vmul.f32 %v1874, %v1878
  %vm1880 = vweird.f32 %v1573
  %vm1881 = vweird.f32 %v1874
  %vm1882 = vmor %vm1880, %vm1881
  %v1883 = vsel %vm1882, %v1874, %v1879
  %v1884 = vrsqrt.pop %v1574
  %v1885 = vmul.f32 %v1884, %v1574
  %v1886 = vmul.f32 %v1885, %v1884
  %v1887 = vmul.f32 0.5, %v1886
  %v1888 = vsub.f32 1.5, %v1887
  %v1889 = vmul.f32 %v1884, %v1888
  %vm1890 = vweird.f32 %v1574
  %vm1891 = vweird.f32 %v1884
  %vm1892 = vmor %vm1890, %vm1891
  %v1893 = vsel %vm1892, %v1884, %v1889
  %v1894 = vrsqrt.pop %v1575
  %v1895 = vmul.f32 %v1894, %v1575
  %v1896 = vmul.f32 %v1895, %v1894
  %v1897 = vmul.f32 0.5, %v1896
  %v1898 = vsub.f32 1.5, %v1897
  %v1899 = vmul.f32 %v1894, %v1898
  %vm1900 = vweird.f32 %v1575
  %vm1901 = vweird.f32 %v1894
  %vm1902 = vmor %vm1900, %vm1901
  %v1903 = vsel %vm1902, %v1894, %v1899
  %v1904 = vrsqrt.pop %v1576
  %v1905 = vmul.f32 %v1904, %v1576
  %v1906 = vmul.f32 %v1905, %v1904
  %v1907 = vmul.f32 0.5, %v1906
  %v1908 = vsub.f32 1.5, %v1907
  %v1909 = vmul.f32 %v1904, %v1908
  %vm1910 = vweird.f32 %v1576
  %vm1911 = vweird.f32 %v1904
  %vm1912 = vmor %vm1910, %vm1911
  %v1913 = vsel %vm1912, %v1904, %v1909
  %v1914 = vrsqrt.pop %v1577
  %v1915 = vmul.f32 %v1914, %v1577
  %v1916 = vmul.f32 %v1915, %v1914
  %v1917 = vmul.f32 0.5, %v1916
  %v1918 = vsub.f32 1.5, %v1917
  %v1919 = vmul.f32 %v1914, %v1918
  %vm1920 = vweird.f32 %v1577
  %vm1921 = vweird.f32 %v1914
  %vm1922 = vmor %vm1920, %vm1921
  %v1923 = vsel %vm1922, %v1914, %v1919
  %v1924 = vrsqrt.pop %v1578
  %v1925 = vmul.f32 %v1924, %v1578
  %v1926 = vmul.f32 %v1925, %v1924
  %v1927 = vmul.f32 0.5, %v1926
  %v1928 = vsub.f32 1.5, %v1927
  %v1929 = vmul.f32 %v1924, %v1928
  %vm1930 = vweird.f32 %v1578
  %vm1931 = vweird.f32 %v1924
  %vm1932 = vmor %vm1930, %vm1931
  %v1933 = vsel %vm1932, %v1924, %v1929
  %v1934 = vrsqrt.pop %v1579
  %v1935 = vmul.f32 %v1934, %v1579
  %v1936 = vmul.f32 %v1935, %v1934
  %v1937 = vmul.f32 0.5, %v1936
  %v1938 = vsub.f32 1.5, %v1937
  %v1939 = vmul.f32 %v1934, %v1938
  %vm1940 = vweird.f32 %v1579
  %vm1941 = vweird.f32 %v1934
  %vm1942 = vmor %vm1940, %vm1941
  %v1943 = vsel %vm1942, %v1934, %v1939
  %v1944 = vrsqrt.pop %v1580
  %v1945 = vmul.f32 %v1944, %v1580
  %v1946 = vmul.f32 %v1945, %v1944
  %v1947 = vmul.f32 0.5, %v1946
  %v1948 = vsub.f32 1.5, %v1947
  %v1949 = vmul.f32 %v1944, %v1948
  %vm1950 = vweird.f32 %v1580
  %vm1951 = vweird.f32 %v1944
  %vm1952 = vmor %vm1950, %vm1951
  %v1953 = vsel %vm1952, %v1944, %v1949
  %v1954 = vrsqrt.pop %v1581
  %v1955 = vmul.f32 %v1954, %v1581
  %v1956 = vmul.f32 %v1955, %v1954
  %v1957 = vmul.f32 0.5, %v1956
  %v1958 = vsub.f32 1.5, %v1957
  %v1959 = vmul.f32 %v1954, %v1958
  %vm1960 = vweird.f32 %v1581
  %vm1961 = vweird.f32 %v1954
  %vm1962 = vmor %vm1960, %vm1961
  %v1963 = vsel %vm1962, %v1954, %v1959
  %v1964 = vrsqrt.pop %v1582
  %v1965 = vmul.f32 %v1964, %v1582
  %v1966 = vmul.f32 %v1965, %v1964
  %v1967 = vmul.f32 0.5, %v1966
  %v1968 = vsub.f32 1.5, %v1967
  %v1969 = vmul.f32 %v1964, %v1968
  %vm1970 = vweird.f32 %v1582
  %vm1971 = vweird.f32 %v1964
  %vm1972 = vmor %vm1970, %vm1971
  %v1973 = vsel %vm1972, %v1964, %v1969
  %v1974 = vrsqrt.pop %v1583
  %v1975 = vmul.f32 %v1974, %v1583
  %v1976 = vmul.f32 %v1975, %v1974
  %v1977 = vmul.f32 0.5, %v1976
  %v1978 = vsub.f32 1.5, %v1977
  %v1979 = vmul.f32 %v1974, %v1978
  %vm1980 = vweird.f32 %v1583
  %vm1981 = vweird.f32 %v1974
  %vm1982 = vmor %vm1980, %vm1981
  %v1983 = vsel %vm1982, %v1974, %v1979
  %v1984 = vrsqrt.pop %v1584
  %v1985 = vmul.f32 %v1984, %v1584
  %v1986 = vmul.f32 %v1985, %v1984
  %v1987 = vmul.f32 0.5, %v1986
  %v1988 = vsub.f32 1.5, %v1987
  %v1989 = vmul.f32 %v1984, %v1988
  %vm1990 = vweird.f32 %v1584
  %vm1991 = vweird.f32 %v1984
  %vm1992 = vmor %vm1990, %vm1991
  %v1993 = vsel %vm1992, %v1984, %v1989
  %v1994 = vrsqrt.pop %v1585
  %v1995 = vmul.f32 %v1994, %v1585
  %v1996 = vmul.f32 %v1995, %v1994
  %v1997 = vmul.f32 0.5, %v1996
  %v1998 = vsub.f32 1.5, %v1997
  %v1999 = vmul.f32 %v1994, %v1998
  %vm2000 = vweird.f32 %v1585
  %vm2001 = vweird.f32 %v1994
  %vm2002 = vmor %vm2000, %vm2001
  %v2003 = vsel %vm2002, %v1994, %v1999
  %v2004 = vrsqrt.pop %v1586
  %v2005 = vmul.f32 %v2004, %v1586
  %v2006 = vmul.f32 %v2005, %v2004
  %v2007 = vmul.f32 0.5, %v2006
  %v2008 = vsub.f32 1.5, %v2007
  %v2009 = vmul.f32 %v2004, %v2008
  %vm2010 = vweird.f32 %v1586
  %vm2011 = vweird.f32 %v2004
  %vm2012 = vmor %vm2010, %vm2011
  %v2013 = vsel %vm2012, %v2004, %v2009
  %v2014 = vrsqrt.pop %v1587
  %v2015 = vmul.f32 %v2014, %v1587
  %v2016 = vmul.f32 %v2015, %v2014
  %v2017 = vmul.f32 0.5, %v2016
  %v2018 = vsub.f32 1.5, %v2017
  %v2019 = vmul.f32 %v2014, %v2018
  %vm2020 = vweird.f32 %v1587
  %vm2021 = vweird.f32 %v2014
  %vm2022 = vmor %vm2020, %vm2021
  %v2023 = vsel %vm2022, %v2014, %v2019
  %v2024 = vrsqrt.pop %v1588
  %v2025 = vmul.f32 %v2024, %v1588
  %v2026 = vmul.f32 %v2025, %v2024
  %v2027 = vmul.f32 0.5, %v2026
  %v2028 = vsub.f32 1.5, %v2027
  %v2029 = vmul.f32 %v2024, %v2028
  %vm2030 = vweird.f32 %v1588
  %vm2031 = vweird.f32 %v2024
  %vm2032 = vmor %vm2030, %vm2031
  %v2033 = vsel %vm2032, %v2024, %v2029
  %v2034 = vrsqrt.pop %v1589
  %v2035 = vmul.f32 %v2034, %v1589
  %v2036 = vmul.f32 %v2035, %v2034
  %v2037 = vmul.f32 0.5, %v2036
  %v2038 = vsub.f32 1.5, %v2037
  %v2039 = vmul.f32 %v2034, %v2038
  %vm2040 = vweird.f32 %v1589
  %vm2041 = vweird.f32 %v2034
  %vm2042 = vmor %vm2040, %vm2041
  %v2043 = vsel %vm2042, %v2034, %v2039
  %v2044 = vrsqrt.pop %v1590
  %v2045 = vmul.f32 %v2044, %v1590
  %v2046 = vmul.f32 %v2045, %v2044
  %v2047 = vmul.f32 0.5, %v2046
  %v2048 = vsub.f32 1.5, %v2047
  %v2049 = vmul.f32 %v2044, %v2048
  %vm2050 = vweird.f32 %v1590
  %vm2051 = vweird.f32 %v2044
  %vm2052 = vmor %vm2050, %vm2051
  %v2053 = vsel %vm2052, %v2044, %v2049
  %v2054 = vrsqrt.pop %v1591
  %v2055 = vmul.f32 %v2054, %v1591
  %v2056 = vmul.f32 %v2055, %v2054
  %v2057 = vmul.f32 0.5, %v2056
  %v2058 = vsub.f32 1.5, %v2057
  %v2059 = vmul.f32 %v2054, %v2058
  %vm2060 = vweird.f32 %v1591
  %vm2061 = vweird.f32 %v2054
  %vm2062 = vmor %vm2060, %vm2061
  %v2063 = vsel %vm2062, %v2054, %v2059
  %v2064 = vrsqrt.pop %v1592
  %v2065 = vmul.f32 %v2064, %v1592
  %v2066 = vmul.f32 %v2065, %v2064
  %v2067 = vmul.f32 0.5, %v2066
  %v2068 = vsub.f32 1.5, %v2067
  %v2069 = vmul.f32 %v2064, %v2068
  %vm2070 = vweird.f32 %v1592
  %vm2071 = vweird.f32 %v2064
  %vm2072 = vmor %vm2070, %vm2071
  %v2073 = vsel %vm2072, %v2064, %v2069
  %v2074 = vrsqrt.pop %v1593
  %v2075 = vmul.f32 %v2074, %v1593
  %v2076 = vmul.f32 %v2075, %v2074
  %v2077 = vmul.f32 0.5, %v2076
  %v2078 = vsub.f32 1.5, %v2077
  %v2079 = vmul.f32 %v2074, %v2078
  %vm2080 = vweird.f32 %v1593
  %vm2081 = vweird.f32 %v2074
  %vm2082 = vmor %vm2080, %vm2081
  %v2083 = vsel %vm2082, %v2074, %v2079
  %v2084 = vrsqrt.pop %v1594
  %v2085 = vmul.f32 %v2084, %v1594
  %v2086 = vmul.f32 %v2085, %v2084
  %v2087 = vmul.f32 0.5, %v2086
  %v2088 = vsub.f32 1.5, %v2087
  %v2089 = vmul.f32 %v2084, %v2088
  %vm2090 = vweird.f32 %v1594
  %vm2091 = vweird.f32 %v2084
  %vm2092 = vmor %vm2090, %vm2091
  %v2093 = vsel %vm2092, %v2084, %v2089
  %v2094 = vrsqrt.pop %v1595
  %v2095 = vmul.f32 %v2094, %v1595
  %v2096 = vmul.f32 %v2095, %v2094
  %v2097 = vmul.f32 0.5, %v2096
  %v2098 = vsub.f32 1.5, %v2097
  %v2099 = vmul.f32 %v2094, %v2098
  %vm2100 = vweird.f32 %v1595
  %vm2101 = vweird.f32 %v2094
  %vm2102 = vmor %vm2100, %vm2101
  %v2103 = vsel %vm2102, %v2094, %v2099
  %v2104 = vrsqrt.pop %v1596
  %v2105 = vmul.f32 %v2104, %v1596
  %v2106 = vmul.f32 %v2105, %v2104
  %v2107 = vmul.f32 0.5, %v2106
  %v2108 = vsub.f32 1.5, %v2107
  %v2109 = vmul.f32 %v2104, %v2108
  %vm2110 = vweird.f32 %v1596
  %vm2111 = vweird.f32 %v2104
  %vm2112 = vmor %vm2110, %vm2111
  %v2113 = vsel %vm2112, %v2104, %v2109
  %v2114 = vrsqrt.pop %v1597
  %v2115 = vmul.f32 %v2114, %v1597
  %v2116 = vmul.f32 %v2115, %v2114
  %v2117 = vmul.f32 0.5, %v2116
  %v2118 = vsub.f32 1.5, %v2117
  %v2119 = vmul.f32 %v2114, %v2118
  %vm2120 = vweird.f32 %v1597
  %vm2121 = vweird.f32 %v2114
  %vm2122 = vmor %vm2120, %vm2121
  %v2123 = vsel %vm2122, %v2114, %v2119
  %v2124 = vrsqrt.pop %v1598
  %v2125 = vmul.f32 %v2124, %v1598
  %v2126 = vmul.f32 %v2125, %v2124
  %v2127 = vmul.f32 0.5, %v2126
  %v2128 = vsub.f32 1.5, %v2127
  %v2129 = vmul.f32 %v2124, %v2128
  %vm2130 = vweird.f32 %v1598
  %vm2131 = vweird.f32 %v2124
  %vm2132 = vmor %vm2130, %vm2131
  %v2133 = vsel %vm2132, %v2124, %v2129
  %v2134 = vrsqrt.pop %v1599
  %v2135 = vmul.f32 %v2134, %v1599
  %v2136 = vmul.f32 %v2135, %v2134
  %v2137 = vmul.f32 0.5, %v2136
  %v2138 = vsub.f32 1.5, %v2137
  %v2139 = vmul.f32 %v2134, %v2138
  %vm2140 = vweird.f32 %v1599
  %vm2141 = vweird.f32 %v2134
  %vm2142 = vmor %vm2140, %vm2141
  %v2143 = vsel %vm2142, %v2134, %v2139
  %v2144 = vrsqrt.pop %v1600
  %v2145 = vmul.f32 %v2144, %v1600
  %v2146 = vmul.f32 %v2145, %v2144
  %v2147 = vmul.f32 0.5, %v2146
  %v2148 = vsub.f32 1.5, %v2147
  %v2149 = vmul.f32 %v2144, %v2148
  %vm2150 = vweird.f32 %v1600
  %vm2151 = vweird.f32 %v2144
  %vm2152 = vmor %vm2150, %vm2151
  %v2153 = vsel %vm2152, %v2144, %v2149
  %v2154 = vrsqrt.pop %v1601
  %v2155 = vmul.f32 %v2154, %v1601
  %v2156 = vmul.f32 %v2155, %v2154
  %v2157 = vmul.f32 0.5, %v2156
  %v2158 = vsub.f32 1.5, %v2157
  %v2159 = vmul.f32 %v2154, %v2158
  %vm2160 = vweird.f32 %v1601
  %vm2161 = vweird.f32 %v2154
  %vm2162 = vmor %vm2160, %vm2161
  %v2163 = vsel %vm2162, %v2154, %v2159
  %v2164 = vrsqrt.pop %v1602
  %v2165 = vmul.f32 %v2164, %v1602
  %v2166 = vmul.f32 %v2165, %v2164
  %v2167 = vmul.f32 0.5, %v2166
  %v2168 = vsub.f32 1.5, %v2167
  %v2169 = vmul.f32 %v2164, %v2168
  %vm2170 = vweird.f32 %v1602
  %vm2171 = vweird.f32 %v2164
  %vm2172 = vmor %vm2170, %vm2171
  %v2173 = vsel %vm2172, %v2164, %v2169
  %v2174 = vrsqrt.pop %v1603
  %v2175 = vmul.f32 %v2174, %v1603
  %v2176 = vmul.f32 %v2175, %v2174
  %v2177 = vmul.f32 0.5, %v2176
  %v2178 = vsub.f32 1.5, %v2177
  %v2179 = vmul.f32 %v2174, %v2178
  %vm2180 = vweird.f32 %v1603
  %vm2181 = vweird.f32 %v2174
  %vm2182 = vmor %vm2180, %vm2181
  %v2183 = vsel %vm2182, %v2174, %v2179
  %v2184 = vrsqrt.pop %v1604
  %v2185 = vmul.f32 %v2184, %v1604
  %v2186 = vmul.f32 %v2185, %v2184
  %v2187 = vmul.f32 0.5, %v2186
  %v2188 = vsub.f32 1.5, %v2187
  %v2189 = vmul.f32 %v2184, %v2188
  %vm2190 = vweird.f32 %v1604
  %vm2191 = vweird.f32 %v2184
  %vm2192 = vmor %vm2190, %vm2191
  %v2193 = vsel %vm2192, %v2184, %v2189
  %v2194 = vrsqrt.pop %v1605
  %v2195 = vmul.f32 %v2194, %v1605
  %v2196 = vmul.f32 %v2195, %v2194
  %v2197 = vmul.f32 0.5, %v2196
  %v2198 = vsub.f32 1.5, %v2197
  %v2199 = vmul.f32 %v2194, %v2198
  %vm2200 = vweird.f32 %v1605
  %vm2201 = vweird.f32 %v2194
  %vm2202 = vmor %vm2200, %vm2201
  %v2203 = vsel %vm2202, %v2194, %v2199
  %v2204 = vrsqrt.pop %v1606
  %v2205 = vmul.f32 %v2204, %v1606
  %v2206 = vmul.f32 %v2205, %v2204
  %v2207 = vmul.f32 0.5, %v2206
  %v2208 = vsub.f32 1.5, %v2207
  %v2209 = vmul.f32 %v2204, %v2208
  %vm2210 = vweird.f32 %v1606
  %vm2211 = vweird.f32 %v2204
  %vm2212 = vmor %vm2210, %vm2211
  %v2213 = vsel %vm2212, %v2204, %v2209
  %v2214 = vrsqrt.pop %v1607
  %v2215 = vmul.f32 %v2214, %v1607
  %v2216 = vmul.f32 %v2215, %v2214
  %v2217 = vmul.f32 0.5, %v2216
  %v2218 = vsub.f32 1.5, %v2217
  %v2219 = vmul.f32 %v2214, %v2218
  %vm2220 = vweird.f32 %v1607
  %vm2221 = vweird.f32 %v2214
  %vm2222 = vmor %vm2220, %vm2221
  %v2223 = vsel %vm2222, %v2214, %v2219
  %v2224 = vrsqrt.pop %v1608
  %v2225 = vmul.f32 %v2224, %v1608
  %v2226 = vmul.f32 %v2225, %v2224
  %v2227 = vmul.f32 0.5, %v2226
  %v2228 = vsub.f32 1.5, %v2227
  %v2229 = vmul.f32 %v2224, %v2228
  %vm2230 = vweird.f32 %v1608
  %vm2231 = vweird.f32 %v2224
  %vm2232 = vmor %vm2230, %vm2231
  %v2233 = vsel %vm2232, %v2224, %v2229
  %v2234 = vrsqrt.pop %v1609
  %v2235 = vmul.f32 %v2234, %v1609
  %v2236 = vmul.f32 %v2235, %v2234
  %v2237 = vmul.f32 0.5, %v2236
  %v2238 = vsub.f32 1.5, %v2237
  %v2239 = vmul.f32 %v2234, %v2238
  %vm2240 = vweird.f32 %v1609
  %vm2241 = vweird.f32 %v2234
  %vm2242 = vmor %vm2240, %vm2241
  %v2243 = vsel %vm2242, %v2234, %v2239
  %v2244 = vrsqrt.pop %v1610
  %v2245 = vmul.f32 %v2244, %v1610
  %v2246 = vmul.f32 %v2245, %v2244
  %v2247 = vmul.f32 0.5, %v2246
  %v2248 = vsub.f32 1.5, %v2247
  %v2249 = vmul.f32 %v2244, %v2248
  %vm2250 = vweird.f32 %v1610
  %vm2251 = vweird.f32 %v2244
  %vm2252 = vmor %vm2250, %vm2251
  %v2253 = vsel %vm2252, %v2244, %v2249
  %v2254 = vrsqrt.pop %v1611
  %v2255 = vmul.f32 %v2254, %v1611
  %v2256 = vmul.f32 %v2255, %v2254
  %v2257 = vmul.f32 0.5, %v2256
  %v2258 = vsub.f32 1.5, %v2257
  %v2259 = vmul.f32 %v2254, %v2258
  %vm2260 = vweird.f32 %v1611
  %vm2261 = vweird.f32 %v2254
  %vm2262 = vmor %vm2260, %vm2261
  %v2263 = vsel %vm2262, %v2254, %v2259
  %v2264 = vrsqrt.pop %v1612
  %v2265 = vmul.f32 %v2264, %v1612
  %v2266 = vmul.f32 %v2265, %v2264
  %v2267 = vmul.f32 0.5, %v2266
  %v2268 = vsub.f32 1.5, %v2267
  %v2269 = vmul.f32 %v2264, %v2268
  %vm2270 = vweird.f32 %v1612
  %vm2271 = vweird.f32 %v2264
  %vm2272 = vmor %vm2270, %vm2271
  %v2273 = vsel %vm2272, %v2264, %v2269
  %v2274 = vrsqrt.pop %v1613
  %v2275 = vmul.f32 %v2274, %v1613
  %v2276 = vmul.f32 %v2275, %v2274
  %v2277 = vmul.f32 0.5, %v2276
  %v2278 = vsub.f32 1.5, %v2277
  %v2279 = vmul.f32 %v2274, %v2278
  %vm2280 = vweird.f32 %v1613
  %vm2281 = vweird.f32 %v2274
  %vm2282 = vmor %vm2280, %vm2281
  %v2283 = vsel %vm2282, %v2274, %v2279
  %v2284 = vrsqrt.pop %v1614
  %v2285 = vmul.f32 %v2284, %v1614
  %v2286 = vmul.f32 %v2285, %v2284
  %v2287 = vmul.f32 0.5, %v2286
  %v2288 = vsub.f32 1.5, %v2287
  %v2289 = vmul.f32 %v2284, %v2288
  %vm2290 = vweird.f32 %v1614
  %vm2291 = vweird.f32 %v2284
  %vm2292 = vmor %vm2290, %vm2291
  %v2293 = vsel %vm2292, %v2284, %v2289
  %v2294 = vrsqrt.pop %v1615
  %v2295 = vmul.f32 %v2294, %v1615
  %v2296 = vmul.f32 %v2295, %v2294
  %v2297 = vmul.f32 0.5, %v2296
  %v2298 = vsub.f32 1.5, %v2297
  %v2299 = vmul.f32 %v2294, %v2298
  %vm2300 = vweird.f32 %v1615
  %vm2301 = vweird.f32 %v2294
  %vm2302 = vmor %vm2300, %vm2301
  %v2303 = vsel %vm2302, %v2294, %v2299
  %v2304 = vrsqrt.pop %v1616
  %v2305 = vmul.f32 %v2304, %v1616
  %v2306 = vmul.f32 %v2305, %v2304
  %v2307 = vmul.f32 0.5, %v2306
  %v2308 = vsub.f32 1.5, %v2307
  %v2309 = vmul.f32 %v2304, %v2308
  %vm2310 = vweird.f32 %v1616
  %vm2311 = vweird.f32 %v2304
  %vm2312 = vmor %vm2310, %vm2311
  %v2313 = vsel %vm2312, %v2304, %v2309
  %v2314 = vrsqrt.pop %v1617
  %v2315 = vmul.f32 %v2314, %v1617
  %v2316 = vmul.f32 %v2315, %v2314
  %v2317 = vmul.f32 0.5, %v2316
  %v2318 = vsub.f32 1.5, %v2317
  %v2319 = vmul.f32 %v2314, %v2318
  %vm2320 = vweird.f32 %v1617
  %vm2321 = vweird.f32 %v2314
  %vm2322 = vmor %vm2320, %vm2321
  %v2323 = vsel %vm2322, %v2314, %v2319
  %v2324 = vrsqrt.pop %v1618
  %v2325 = vmul.f32 %v2324, %v1618
  %v2326 = vmul.f32 %v2325, %v2324
  %v2327 = vmul.f32 0.5, %v2326
  %v2328 = vsub.f32 1.5, %v2327
  %v2329 = vmul.f32 %v2324, %v2328
  %vm2330 = vweird.f32 %v1618
  %vm2331 = vweird.f32 %v2324
  %vm2332 = vmor %vm2330, %vm2331
  %v2333 = vsel %vm2332, %v2324, %v2329
  %v2334 = vrsqrt.pop %v1619
  %v2335 = vmul.f32 %v2334, %v1619
  %v2336 = vmul.f32 %v2335, %v2334
  %v2337 = vmul.f32 0.5, %v2336
  %v2338 = vsub.f32 1.5, %v2337
  %v2339 = vmul.f32 %v2334, %v2338
  %vm2340 = vweird.f32 %v1619
  %vm2341 = vweird.f32 %v2334
  %vm2342 = vmor %vm2340, %vm2341
  %v2343 = vsel %vm2342, %v2334, %v2339
  %v2344 = vrsqrt.pop %v1620
  %v2345 = vmul.f32 %v2344, %v1620
  %v2346 = vmul.f32 %v2345, %v2344
  %v2347 = vmul.f32 0.5, %v2346
  %v2348 = vsub.f32 1.5, %v2347
  %v2349 = vmul.f32 %v2344, %v2348
  %vm2350 = vweird.f32 %v1620
  %vm2351 = vweird.f32 %v2344
  %vm2352 = vmor %vm2350, %vm2351
  %v2353 = vsel %vm2352, %v2344, %v2349
  %v2354 = vrsqrt.pop %v1621
  %v2355 = vmul.f32 %v2354, %v1621
  %v2356 = vmul.f32 %v2355, %v2354
  %v2357 = vmul.f32 0.5, %v2356
  %v2358 = vsub.f32 1.5, %v2357
  %v2359 = vmul.f32 %v2354, %v2358
  %vm2360 = vweird.f32 %v1621
  %vm2361 = vweird.f32 %v2354
  %vm2362 = vmor %vm2360, %vm2361
  %v2363 = vsel %vm2362, %v2354, %v2359
  %v2364 = vrsqrt.pop %v1622
  %v2365 = vmul.f32 %v2364, %v1622
  %v2366 = vmul.f32 %v2365, %v2364
  %v2367 = vmul.f32 0.5, %v2366
  %v2368 = vsub.f32 1.5, %v2367
  %v2369 = vmul.f32 %v2364, %v2368
  %vm2370 = vweird.f32 %v1622
  %vm2371 = vweird.f32 %v2364
  %vm2372 = vmor %vm2370, %vm2371
  %v2373 = vsel %vm2372, %v2364, %v2369
  %v2374 = vrsqrt.pop %v1623
  %v2375 = vmul.f32 %v2374, %v1623
  %v2376 = vmul.f32 %v2375, %v2374
  %v2377 = vmul.f32 0.5, %v2376
  %v2378 = vsub.f32 1.5, %v2377
  %v2379 = vmul.f32 %v2374, %v2378
  %vm2380 = vweird.f32 %v1623
  %vm2381 = vweird.f32 %v2374
  %vm2382 = vmor %vm2380, %vm2381
  %v2383 = vsel %vm2382, %v2374, %v2379
  %v2384 = vmul.f32 %v1472, %v1633
  %v2385 = vmul.f32 %v1473, %v1643
  %v2386 = vmul.f32 %v1474, %v1653
  %v2387 = vmul.f32 %v1475, %v1663
  %v2388 = vmul.f32 %v1476, %v1673
  %v2389 = vmul.f32 %v1477, %v1683
  %v2390 = vmul.f32 %v1478, %v1693
  %v2391 = vmul.f32 %v1479, %v1703
  %v2392 = vmul.f32 %v1480, %v1713
  %v2393 = vmul.f32 %v1481, %v1723
  %v2394 = vmul.f32 %v1482, %v1733
  %v2395 = vmul.f32 %v1483, %v1743
  %v2396 = vmul.f32 %v1484, %v1753
  %v2397 = vmul.f32 %v1485, %v1763
  %v2398 = vmul.f32 %v1486, %v1773
  %v2399 = vmul.f32 %v1487, %v1783
  %v2400 = vmul.f32 %v1488, %v1793
  %v2401 = vmul.f32 %v1489, %v1803
  %v2402 = vmul.f32 %v1490, %v1813
  %v2403 = vmul.f32 %v1491, %v1823
  %v2404 = vmul.f32 %v1492, %v1833
  %v2405 = vmul.f32 %v1493, %v1843
  %v2406 = vmul.f32 %v1494, %v1853
  %v2407 = vmul.f32 %v1495, %v1863
  %v2408 = vmul.f32 %v1496, %v1873
  %v2409 = vmul.f32 %v1497, %v1883
  %v2410 = vmul.f32 %v1498, %v1893
  %v2411 = vmul.f32 %v1499, %v1903
  %v2412 = vmul.f32 %v1500, %v1913
  %v2413 = vmul.f32 %v1501, %v1923
  %v2414 = vmul.f32 %v1502, %v1933
  %v2415 = vmul.f32 %v1503, %v1943
  %v2416 = vmul.f32 %v1504, %v1953
  %v2417 = vmul.f32 %v1505, %v1963
  %v2418 = vmul.f32 %v1506, %v1973
  %v2419 = vmul.f32 %v1507, %v1983
  %v2420 = vmul.f32 %v1508, %v1993
  %v2421 = vmul.f32 %v1509, %v2003
  %v2422 = vmul.f32 %v1510, %v2013
  %v2423 = vmul.f32 %v1511, %v2023
  %v2424 = vmul.f32 %v1512, %v2033
  %v2425 = vmul.f32 %v1513, %v2043
  %v2426 = vmul.f32 %v1514, %v2053
  %v2427 = vmul.f32 %v1515, %v2063
  %v2428 = vmul.f32 %v1516, %v2073
  %v2429 = vmul.f32 %v1517, %v2083
  %v2430 = vmul.f32 %v1518, %v2093
  %v2431 = vmul.f32 %v1519, %v2103
  %v2432 = vmul.f32 %v1520, %v2113
  %v2433 = vmul.f32 %v1521, %v2123
  %v2434 = vmul.f32 %v1522, %v2133
  %v2435 = vmul.f32 %v1523, %v2143
  %v2436 = vmul.f32 %v1524, %v2153
  %v2437 = vmul.f32 %v1525, %v2163
  %v2438 = vmul.f32 %v1526, %v2173
  %v2439 = vmul.f32 %v1527, %v2183
  %v2440 = vmul.f32 %v1528, %v2193
  %v2441 = vmul.f32 %v1529, %v2203
  %v2442 = vmul.f32 %v1530, %v2213
  %v2443 = vmul.f32 %v1531, %v2223
  %v2444 = vmul.f32 %v1532, %v2233
  %v2445 = vmul.f32 %v1533, %v2243
  %v2446 = vmul.f32 %v1534, %v2253
  %v2447 = vmul.f32 %v1535, %v2263
  %v2448 = vmul.f32 %v1536, %v2273
  %v2449 = vmul.f32 %v1537, %v2283
  %v2450 = vmul.f32 %v1538, %v2293
  %v2451 = vmul.f32 %v1539, %v2303
  %v2452 = vmul.f32 %v1540, %v2313
  %v2453 = vmul.f32 %v1541, %v2323
  %v2454 = vmul.f32 %v1542, %v2333
  %v2455 = vmul.f32 %v1543, %v2343
  %v2456 = vmul.f32 %v1544, %v2353
  %v2457 = vmul.f32 %v1545, %v2363
  %v2458 = vmul.f32 %v1546, %v2373
  %v2459 = vmul.f32 %v1547, %v2383
  %v2460 = vld [vmem:[%s2] sm:$0xff]
  %v2461 = vld [vmem:[%s2 + $0x8] sm:$0xff]
  %v2462 = vld [vmem:[%s2 + $0x10] sm:$0xff]
  %v2463 = vld [vmem:[%s2 + $0x18] sm:$0xff]
  %v2464 = vld [vmem:[%s2 + $0x20] sm:$0xff]
  %v2465 = vld [vmem:[%s2 + $0x28] sm:$0xff]
  %v2466 = vld [vmem:[%s2 + $0x30] sm:$0xff]
  %v2467 = vld [vmem:[%s2 + $0x38] sm:$0xff]
  %v2468 = vld [vmem:[%s2 + $0x40] sm:$0xff]
  %v2469 = vld [vmem:[%s2 + $0x48] sm:$0xff]
  %v2470 = vld [vmem:[%s2 + $0x50] sm:$0xff]
  %v2471 = vld [vmem:[%s2 + $0x58] sm:$0xff]
  %v2472 = vld [vmem:[%s2 + $0x60] sm:$0xff]
  %v2473 = vld [vmem:[%s2 + $0x68] sm:$0xff]
  %v2474 = vld [vmem:[%s2 + $0x70] sm:$0xff]
  %v2475 = vld [vmem:[%s2 + $0x78] sm:$0xff]
  %v2476 = vld [vmem:[%s2 + $0x80] sm:$0xff]
  %v2477 = vld [vmem:[%s2 + $0x88] sm:$0xff]
  %v2478 = vld [vmem:[%s2 + $0x90] sm:$0xff]
  %v2479 = vld [vmem:[%s2 + $0x98] sm:$0xff]
  %v2480 = vld [vmem:[%s2 + $0xa0] sm:$0xff]
  %v2481 = vld [vmem:[%s2 + $0xa8] sm:$0xff]
  %v2482 = vld [vmem:[%s2 + $0xb0] sm:$0xff]
  %v2483 = vld [vmem:[%s2 + $0xb8] sm:$0xff]
  %v2484 = vld [vmem:[%s2 + $0xc0] sm:$0xff]
  %v2485 = vld [vmem:[%s2 + $0xc8] sm:$0xff]
  %v2486 = vld [vmem:[%s2 + $0xd0] sm:$0xff]
  %v2487 = vld [vmem:[%s2 + $0xd8] sm:$0xff]
  %v2488 = vld [vmem:[%s2 + $0xe0] sm:$0xff]
  %v2489 = vld [vmem:[%s2 + $0xe8] sm:$0xff]
  %v2490 = vld [vmem:[%s2 + $0xf0] sm:$0xff]
  %v2491 = vld [vmem:[%s2 + $0xf8] sm:$0xff]
  %v2492 = vld [vmem:[%s2 + $0x100] sm:$0xff]
  %v2493 = vld [vmem:[%s2 + $0x108] sm:$0xff]
  %v2494 = vld [vmem:[%s2 + $0x110] sm:$0xff]
  %v2495 = vld [vmem:[%s2 + $0x118] sm:$0xff]
  %v2496 = vld [vmem:[%s2 + $0x120] sm:$0xff]
  %v2497 = vld [vmem:[%s2 + $0x128] sm:$0xff]
  %v2498 = vld [vmem:[%s2 + $0x130] sm:$0xff]
  %v2499 = vld [vmem:[%s2 + $0x138] sm:$0xff]
  %v2500 = vld [vmem:[%s2 + $0x140] sm:$0xff]
  %v2501 = vld [vmem:[%s2 + $0x148] sm:$0xff]
  %v2502 = vld [vmem:[%s2 + $0x150] sm:$0xff]
  %v2503 = vld [vmem:[%s2 + $0x158] sm:$0xff]
  %v2504 = vld [vmem:[%s2 + $0x160] sm:$0xff]
  %v2505 = vld [vmem:[%s2 + $0x168] sm:$0xff]
  %v2506 = vld [vmem:[%s2 + $0x170] sm:$0xff]
  %v2507 = vld [vmem:[%s2 + $0x178] sm:$0xff]
  %v2508 = vld [vmem:[%s2 + $0x180] sm:$0xff]
  %v2509 = vld [vmem:[%s2 + $0x188] sm:$0xff]
  %v2510 = vld [vmem:[%s2 + $0x190] sm:$0xff]
  %v2511 = vld [vmem:[%s2 + $0x198] sm:$0xff]
  %v2512 = vld [vmem:[%s2 + $0x1a0] sm:$0xff]
  %v2513 = vld [vmem:[%s2 + $0x1a8] sm:$0xff]
  %v2514 = vld [vmem:[%s2 + $0x1b0] sm:$0xff]
  %v2515 = vld [vmem:[%s2 + $0x1b8] sm:$0xff]
  %v2516 = vld [vmem:[%s2 + $0x1c0] sm:$0xff]
  %v2517 = vld [vmem:[%s2 + $0x1c8] sm:$0xff]
  %v2518 = vld [vmem:[%s2 + $0x1d0] sm:$0xff]
  %v2519 = vld [vmem:[%s2 + $0x1d8] sm:$0xff]
  %v2520 = vld [vmem:[%s2 + $0x1e0] sm:$0xff]
  %v2521 = vld [vmem:[%s2 + $0x1e8] sm:$0xff]
  %v2522 = vld [vmem:[%s2 + $0x1f0] sm:$0xff]
  %v2523 = vld [vmem:[%s2 + $0x1f8] sm:$0xff]
  %v2524 = vld [vmem:[%s2 + $0x200] sm:$0xff]
  %v2525 = vld [vmem:[%s2 + $0x208] sm:$0xff]
  %v2526 = vld [vmem:[%s2 + $0x210] sm:$0xff]
  %v2527 = vld [vmem:[%s2 + $0x218] sm:$0xff]
  %v2528 = vld [vmem:[%s2 + $0x220] sm:$0xff]
  %v2529 = vld [vmem:[%s2 + $0x228] sm:$0xff]
  %v2530 = vld [vmem:[%s2 + $0x230] sm:$0xff]
  %v2531 = vld [vmem:[%s2 + $0x238] sm:$0xff]
  %v2532 = vld [vmem:[%s2 + $0x240] sm:$0xff]
  %v2533 = vld [vmem:[%s2 + $0x248] sm:$0xff]
  %v2534 = vld [vmem:[%s2 + $0x250] sm:$0xff]
  %v2535 = vld [vmem:[%s2 + $0x258] sm:$0xff]
  %v2536 = vmul.f32 %v1092, %v2384
  %v2537 = vmul.f32 %v1093, %v2385
  %v2538 = vmul.f32 %v1094, %v2386
  %v2539 = vmul.f32 %v1095, %v2387
  %v2540 = vmul.f32 %v1096, %v2388
  %v2541 = vmul.f32 %v1097, %v2389
  %v2542 = vmul.f32 %v1098, %v2390
  %v2543 = vmul.f32 %v1099, %v2391
  %v2544 = vmul.f32 %v1100, %v2392
  %v2545 = vmul.f32 %v1101, %v2393
  %v2546 = vmul.f32 %v1102, %v2394
  %v2547 = vmul.f32 %v1103, %v2395
  %v2548 = vmul.f32 %v1104, %v2396
  %v2549 = vmul.f32 %v1105, %v2397
  %v2550 = vmul.f32 %v1106, %v2398
  %v2551 = vmul.f32 %v1107, %v2399
  %v2552 = vmul.f32 %v1108, %v2400
  %v2553 = vmul.f32 %v1109, %v2401
  %v2554 = vmul.f32 %v1110, %v2402
  %v2555 = vmul.f32 %v1111, %v2403
  %v2556 = vmul.f32 %v1112, %v2404
  %v2557 = vmul.f32 %v1113, %v2405
  %v2558 = vmul.f32 %v1114, %v2406
  %v2559 = vmul.f32 %v1115, %v2407
  %v2560 = vmul.f32 %v1116, %v2408
  %v2561 = vmul.f32 %v1117, %v2409
  %v2562 = vmul.f32 %v1118, %v2410
  %v2563 = vmul.f32 %v1119, %v2411
  %v2564 = vmul.f32 %v1120, %v2412
  %v2565 = vmul.f32 %v1121, %v2413
  %v2566 = vmul.f32 %v1122, %v2414
  %v2567 = vmul.f32 %v1123, %v2415
  %v2568 = vmul.f32 %v1124, %v2416
  %v2569 = vmul.f32 %v1125, %v2417
  %v2570 = vmul.f32 %v1126, %v2418
  %v2571 = vmul.f32 %v1127, %v2419
  %v2572 = vmul.f32 %v1128, %v2420
  %v2573 = vmul.f32 %v1129, %v2421
  %v2574 = vmul.f32 %v1130, %v2422
  %v2575 = vmul.f32 %v1131, %v2423
  %v2576 = vmul.f32 %v1132, %v2424
  %v2577 = vmul.f32 %v1133, %v2425
  %v2578 = vmul.f32 %v1134, %v2426
  %v2579 = vmul.f32 %v1135, %v2427
  %v2580 = vmul.f32 %v1136, %v2428
  %v2581 = vmul.f32 %v1137, %v2429
  %v2582 = vmul.f32 %v1138, %v2430
  %v2583 = vmul.f32 %v1139, %v2431
  %v2584 = vmul.f32 %v1140, %v2432
  %v2585 = vmul.f32 %v1141, %v2433
  %v2586 = vmul.f32 %v1142, %v2434
  %v2587 = vmul.f32 %v1143, %v2435
  %v2588 = vmul.f32 %v1144, %v2436
  %v2589 = vmul.f32 %v1145, %v2437
  %v2590 = vmul.f32 %v1146, %v2438
  %v2591 = vmul.f32 %v1147, %v2439
  %v2592 = vmul.f32 %v1148, %v2440
  %v2593 = vmul.f32 %v1149, %v2441
  %v2594 = vmul.f32 %v1150, %v2442
  %v2595 = vmul.f32 %v1151, %v2443
  %v2596 = vmul.f32 %v1152, %v2444
  %v2597 = vmul.f32 %v1153, %v2445
  %v2598 = vmul.f32 %v1154, %v2446
  %v2599 = vmul.f32 %v1155, %v2447
  %v2600 = vmul.f32 %v1156, %v2448
  %v2601 = vmul.f32 %v1157, %v2449
  %v2602 = vmul.f32 %v1158, %v2450
  %v2603 = vmul.f32 %v1159, %v2451
  %v2604 = vmul.f32 %v1160, %v2452
  %v2605 = vmul.f32 %v1161, %v2453
  %v2606 = vmul.f32 %v1162, %v2454
  %v2607 = vmul.f32 %v1163, %v2455
  %v2608 = vmul.f32 %v1164, %v2456
  %v2609 = vmul.f32 %v1165, %v2457
  %v2610 = vmul.f32 %v1166, %v2458
  %v2611 = vmul.f32 %v1167, %v2459
  %v2612 = vsub.f32 %v2460, %v2536
  %v2613 = vsub.f32 %v2461, %v2537
  %v2614 = vsub.f32 %v2462, %v2538
  %v2615 = vsub.f32 %v2463, %v2539
  %v2616 = vsub.f32 %v2464, %v2540
  %v2617 = vsub.f32 %v2465, %v2541
  %v2618 = vsub.f32 %v2466, %v2542
  %v2619 = vsub.f32 %v2467, %v2543
  %v2620 = vsub.f32 %v2468, %v2544
  %v2621 = vsub.f32 %v2469, %v2545
  %v2622 = vsub.f32 %v2470, %v2546
  %v2623 = vsub.f32 %v2471, %v2547
  %v2624 = vsub.f32 %v2472, %v2548
  %v2625 = vsub.f32 %v2473, %v2549
  %v2626 = vsub.f32 %v2474, %v2550
  %v2627 = vsub.f32 %v2475, %v2551
  %v2628 = vsub.f32 %v2476, %v2552
  %v2629 = vsub.f32 %v2477, %v2553
  %v2630 = vsub.f32 %v2478, %v2554
  %v2631 = vsub.f32 %v2479, %v2555
  %v2632 = vsub.f32 %v2480, %v2556
  %v2633 = vsub.f32 %v2481, %v2557
  %v2634 = vsub.f32 %v2482, %v2558
  %v2635 = vsub.f32 %v2483, %v2559
  %v2636 = vsub.f32 %v2484, %v2560
  %v2637 = vsub.f32 %v2485, %v2561
  %v2638 = vsub.f32 %v2486, %v2562
  %v2639 = vsub.f32 %v2487, %v2563
  %v2640 = vsub.f32 %v2488, %v2564
  %v2641 = vsub.f32 %v2489, %v2565
  %v2642 = vsub.f32 %v2490, %v2566
  %v2643 = vsub.f32 %v2491, %v2567
  %v2644 = vsub.f32 %v2492, %v2568
  %v2645 = vsub.f32 %v2493, %v2569
  %v2646 = vsub.f32 %v2494, %v2570
  %v2647 = vsub.f32 %v2495, %v2571
  %v2648 = vsub.f32 %v2496, %v2572
  %v2649 = vsub.f32 %v2497, %v2573
  %v2650 = vsub.f32 %v2498, %v2574
  %v2651 = vsub.f32 %v2499, %v2575
  %v2652 = vsub.f32 %v2500, %v2576
  %v2653 = vsub.f32 %v2501, %v2577
  %v2654 = vsub.f32 %v2502, %v2578
  %v2655 = vsub.f32 %v2503, %v2579
  %v2656 = vsub.f32 %v2504, %v2580
  %v2657 = vsub.f32 %v2505, %v2581
  %v2658 = vsub.f32 %v2506, %v2582
  %v2659 = vsub.f32 %v2507, %v2583
  %v2660 = vsub.f32 %v2508, %v2584
  %v2661 = vsub.f32 %v2509, %v2585
  %v2662 = vsub.f32 %v2510, %v2586
  %v2663 = vsub.f32 %v2511, %v2587
  %v2664 = vsub.f32 %v2512, %v2588
  %v2665 = vsub.f32 %v2513, %v2589
  %v2666 = vsub.f32 %v2514, %v2590
  %v2667 = vsub.f32 %v2515, %v2591
  %v2668 = vsub.f32 %v2516, %v2592
  %v2669 = vsub.f32 %v2517, %v2593
  %v2670 = vsub.f32 %v2518, %v2594
  %v2671 = vsub.f32 %v2519, %v2595
  %v2672 = vsub.f32 %v2520, %v2596
  %v2673 = vsub.f32 %v2521, %v2597
  %v2674 = vsub.f32 %v2522, %v2598
  %v2675 = vsub.f32 %v2523, %v2599
  %v2676 = vsub.f32 %v2524, %v2600
  %v2677 = vsub.f32 %v2525, %v2601
  %v2678 = vsub.f32 %v2526, %v2602
  %v2679 = vsub.f32 %v2527, %v2603
  %v2680 = vsub.f32 %v2528, %v2604
  %v2681 = vsub.f32 %v2529, %v2605
  %v2682 = vsub.f32 %v2530, %v2606
  %v2683 = vsub.f32 %v2531, %v2607
  %v2684 = vsub.f32 %v2532, %v2608
  %v2685 = vsub.f32 %v2533, %v2609
  %v2686 = vsub.f32 %v2534, %v2610
  %v2687 = vsub.f32 %v2535, %v2611
  %v2688 = vld [vmem:[%s3] sm:$0xff]
  %v2689 = vld [vmem:[%s3 + $0x8] sm:$0xff]
  %v2690 = vld [vmem:[%s3 + $0x10] sm:$0xf]
  %v2691 = vld [vmem:[%s3 + $0x14] sm:$0xff]
  %v2692 = vld [vmem:[%s3 + $0x1c] sm:$0xff]
  %v2693 = vld [vmem:[%s3 + $0x24] sm:$0xf]
  %v2694 = vld [vmem:[%s3 + $0x28] sm:$0xff]
  %v2695 = vld [vmem:[%s3 + $0x30] sm:$0xff]
  %v2696 = vld [vmem:[%s3 + $0x38] sm:$0xf]
  %v2697 = vld [vmem:[%s3 + $0x3c] sm:$0xff]
  %v2698 = vld [vmem:[%s3 + $0x44] sm:$0xff]
  %v2699 = vld [vmem:[%s3 + $0x4c] sm:$0xf]
  %v2700 = vld [vmem:[%s3 + $0x50] sm:$0xff]
  %v2701 = vld [vmem:[%s3 + $0x58] sm:$0xff]
  %v2702 = vld [vmem:[%s3 + $0x60] sm:$0xf]
  %v2703 = vld [vmem:[%s3 + $0x64] sm:$0xff]
  %v2704 = vld [vmem:[%s3 + $0x6c] sm:$0xff]
  %v2705 = vld [vmem:[%s3 + $0x74] sm:$0xf]
  %v2706 = vld [vmem:[%s3 + $0x78] sm:$0xff]
  %v2707 = vld [vmem:[%s3 + $0x80] sm:$0xff]
  %v2708 = vld [vmem:[%s3 + $0x88] sm:$0xf]
  %v2709 = vld [vmem:[%s3 + $0x8c] sm:$0xff]
  %v2710 = vld [vmem:[%s3 + $0x94] sm:$0xff]
  %v2711 = vld [vmem:[%s3 + $0x9c] sm:$0xf]
  %v2712 = vld [vmem:[%s3 + $0xa0] sm:$0xff]
  %v2713 = vld [vmem:[%s3 + $0xa8] sm:$0xff]
  %v2714 = vld [vmem:[%s3 + $0xb0] sm:$0xf]
  %v2715 = vld [vmem:[%s3 + $0xb4] sm:$0xff]
  %v2716 = vld [vmem:[%s3 + $0xbc] sm:$0xff]
  %v2717 = vld [vmem:[%s3 + $0xc4] sm:$0xf]
  %v2718 = vld [vmem:[%s3 + $0xc8] sm:$0xff]
  %v2719 = vld [vmem:[%s3 + $0xd0] sm:$0xff]
  %v2720 = vld [vmem:[%s3 + $0xd8] sm:$0xf]
  %v2721 = vld [vmem:[%s3 + $0xdc] sm:$0xff]
  %v2722 = vld [vmem:[%s3 + $0xe4] sm:$0xff]
  %v2723 = vld [vmem:[%s3 + $0xec] sm:$0xf]
  %v2724 = vld [vmem:[%s3 + $0xf0] sm:$0xff]
  %v2725 = vld [vmem:[%s3 + $0xf8] sm:$0xff]
  %v2726 = vld [vmem:[%s3 + $0x100] sm:$0xf]
  %v2727 = vld [vmem:[%s3 + $0x104] sm:$0xff]
  %v2728 = vld [vmem:[%s3 + $0x10c] sm:$0xff]
  %v2729 = vld [vmem:[%s3 + $0x114] sm:$0xf]
  %v2730 = vld [vmem:[%s3 + $0x118] sm:$0xff]
  %v2731 = vld [vmem:[%s3 + $0x120] sm:$0xff]
  %v2732 = vld [vmem:[%s3 + $0x128] sm:$0xf]
  %v2733 = vld [vmem:[%s3 + $0x12c] sm:$0xff]
  %v2734 = vld [vmem:[%s3 + $0x134] sm:$0xff]
  %v2735 = vld [vmem:[%s3 + $0x13c] sm:$0xf]
  %v2736 = vld [vmem:[%s4] sm:$0xff]
  %v2737 = vld [vmem:[%s4 + $0x8] sm:$0xff]
  %v2738 = vld [vmem:[%s4 + $0x10] sm:$0xf]
  %v2739 = vld [vmem:[%s4 + $0x14] sm:$0xff]
  %v2740 = vld [vmem:[%s4 + $0x1c] sm:$0xff]
  %v2741 = vld [vmem:[%s4 + $0x24] sm:$0xf]
  %v2742 = vld [vmem:[%s4 + $0x28] sm:$0xff]
  %v2743 = vld [vmem:[%s4 + $0x30] sm:$0xff]
  %v2744 = vld [vmem:[%s4 + $0x38] sm:$0xf]
  %v2745 = vld [vmem:[%s4 + $0x3c] sm:$0xff]
  %v2746 = vld [vmem:[%s4 + $0x44] sm:$0xff]
  %v2747 = vld [vmem:[%s4 + $0x4c] sm:$0xf]
  %v2748 = vld [vmem:[%s4 + $0x50] sm:$0xff]
  %v2749 = vld [vmem:[%s4 + $0x58] sm:$0xff]
  %v2750 = vld [vmem:[%s4 + $0x60] sm:$0xf]
  %v2751 = vld [vmem:[%s4 + $0x64] sm:$0xff]
  %v2752 = vld [vmem:[%s4 + $0x6c] sm:$0xff]
  %v2753 = vld [vmem:[%s4 + $0x74] sm:$0xf]
  %v2754 = vld [vmem:[%s4 + $0x78] sm:$0xff]
  %v2755 = vld [vmem:[%s4 + $0x80] sm:$0xff]
  %v2756 = vld [vmem:[%s4 + $0x88] sm:$0xf]
  %v2757 = vld [vmem:[%s4 + $0x8c] sm:$0xff]
  %v2758 = vld [vmem:[%s4 + $0x94] sm:$0xff]
  %v2759 = vld [vmem:[%s4 + $0x9c] sm:$0xf]
  %v2760 = vld [vmem:[%s4 + $0xa0] sm:$0xff]
  %v2761 = vld [vmem:[%s4 + $0xa8] sm:$0xff]
  %v2762 = vld [vmem:[%s4 + $0xb0] sm:$0xf]
  %v2763 = vld [vmem:[%s4 + $0xb4] sm:$0xff]
  %v2764 = vld [vmem:[%s4 + $0xbc] sm:$0xff]
  %v2765 = vld [vmem:[%s4 + $0xc4] sm:$0xf]
  %v2766 = vld [vmem:[%s4 + $0xc8] sm:$0xff]
  %v2767 = vld [vmem:[%s4 + $0xd0] sm:$0xff]
  %v2768 = vld [vmem:[%s4 + $0xd8] sm:$0xf]
  %v2769 = vld [vmem:[%s4 + $0xdc] sm:$0xff]
  %v2770 = vld [vmem:[%s4 + $0xe4] sm:$0xff]
  %v2771 = vld [vmem:[%s4 + $0xec] sm:$0xf]
  %v2772 = vld [vmem:[%s4 + $0xf0] sm:$0xff]
  %v2773 = vld [vmem:[%s4 + $0xf8] sm:$0xff]
  %v2774 = vld [vmem:[%s4 + $0x100] sm:$0xf]
  %v2775 = vld [vmem:[%s4 + $0x104] sm:$0xff]
  %v2776 = vld [vmem:[%s4 + $0x10c] sm:$0xff]
  %v2777 = vld [vmem:[%s4 + $0x114] sm:$0xf]
  %v2778 = vld [vmem:[%s4 + $0x118] sm:$0xff]
  %v2779 = vld [vmem:[%s4 + $0x120] sm:$0xff]
  %v2780 = vld [vmem:[%s4 + $0x128] sm:$0xf]
  %v2781 = vld [vmem:[%s4 + $0x12c] sm:$0xff]
  %v2782 = vld [vmem:[%s4 + $0x134] sm:$0xff]
  %v2783 = vld [vmem:[%s4 + $0x13c] sm:$0xf]
  %2785 = vset.pattern.permute.xlu0 0
  %2786 = vperm.xlu0 %2785, %v2384
  %v2787 = vpop.permute.xlu0 %2786
  %2790 = vset.pattern.permute.xlu0 0
  %2791 = vperm.xlu0 %2790, %v2385
  %v2792 = vpop.permute.xlu0 %2791
  %2795 = vset.pattern.permute.xlu0 0
  %2796 = vperm.xlu0 %2795, %v2386
  %v2797 = vpop.permute.xlu0 %2796
  %2800 = vset.pattern.permute.xlu0 0
  %2801 = vperm.xlu0 %2800, %v2387
  %v2802 = vpop.permute.xlu0 %2801
  %2805 = vset.pattern.permute.xlu0 0
  %2806 = vperm.xlu0 %2805, %v2388
  %v2807 = vpop.permute.xlu0 %2806
  %2810 = vset.pattern.permute.xlu0 0
  %2811 = vperm.xlu0 %2810, %v2389
  %v2812 = vpop.permute.xlu0 %2811
  %2815 = vset.pattern.permute.xlu0 0
  %2816 = vperm.xlu0 %2815, %v2390
  %v2817 = vpop.permute.xlu0 %2816
  %2820 = vset.pattern.permute.xlu0 0
  %2821 = vperm.xlu0 %2820, %v2391
  %v2822 = vpop.permute.xlu0 %2821
  %2825 = vset.pattern.permute.xlu0 0
  %2826 = vperm.xlu0 %2825, %v2392
  %v2827 = vpop.permute.xlu0 %2826
  %2830 = vset.pattern.permute.xlu0 0
  %2831 = vperm.xlu0 %2830, %v2393
  %v2832 = vpop.permute.xlu0 %2831
  %2835 = vset.pattern.permute.xlu0 0
  %2836 = vperm.xlu0 %2835, %v2394
  %v2837 = vpop.permute.xlu0 %2836
  %2840 = vset.pattern.permute.xlu0 0
  %2841 = vperm.xlu0 %2840, %v2395
  %v2842 = vpop.permute.xlu0 %2841
  %2845 = vset.pattern.permute.xlu0 0
  %2846 = vperm.xlu0 %2845, %v2396
  %v2847 = vpop.permute.xlu0 %2846
  %2850 = vset.pattern.permute.xlu0 0
  %2851 = vperm.xlu0 %2850, %v2397
  %v2852 = vpop.permute.xlu0 %2851
  %2855 = vset.pattern.permute.xlu0 0
  %2856 = vperm.xlu0 %2855, %v2398
  %v2857 = vpop.permute.xlu0 %2856
  %2860 = vset.pattern.permute.xlu0 0
  %2861 = vperm.xlu0 %2860, %v2399
  %v2862 = vpop.permute.xlu0 %2861
  %2865 = vset.pattern.permute.xlu0 0
  %2866 = vperm.xlu0 %2865, %v2400
  %v2867 = vpop.permute.xlu0 %2866
  %2870 = vset.pattern.permute.xlu0 0
  %2871 = vperm.xlu0 %2870, %v2401
  %v2872 = vpop.permute.xlu0 %2871
  %2875 = vset.pattern.permute.xlu0 0
  %2876 = vperm.xlu0 %2875, %v2402
  %v2877 = vpop.permute.xlu0 %2876
  %2880 = vset.pattern.permute.xlu0 0
  %2881 = vperm.xlu0 %2880, %v2403
  %v2882 = vpop.permute.xlu0 %2881
  %2885 = vset.pattern.permute.xlu0 0
  %2886 = vperm.xlu0 %2885, %v2404
  %v2887 = vpop.permute.xlu0 %2886
  %2890 = vset.pattern.permute.xlu0 0
  %2891 = vperm.xlu0 %2890, %v2405
  %v2892 = vpop.permute.xlu0 %2891
  %2895 = vset.pattern.permute.xlu0 0
  %2896 = vperm.xlu0 %2895, %v2406
  %v2897 = vpop.permute.xlu0 %2896
  %2900 = vset.pattern.permute.xlu0 0
  %2901 = vperm.xlu0 %2900, %v2407
  %v2902 = vpop.permute.xlu0 %2901
  %2905 = vset.pattern.permute.xlu0 0
  %2906 = vperm.xlu0 %2905, %v2408
  %v2907 = vpop.permute.xlu0 %2906
  %2910 = vset.pattern.permute.xlu0 0
  %2911 = vperm.xlu0 %2910, %v2409
  %v2912 = vpop.permute.xlu0 %2911
  %2915 = vset.pattern.permute.xlu0 0
  %2916 = vperm.xlu0 %2915, %v2410
  %v2917 = vpop.permute.xlu0 %2916
  %2920 = vset.pattern.permute.xlu0 0
  %2921 = vperm.xlu0 %2920, %v2411
  %v2922 = vpop.permute.xlu0 %2921
  %2925 = vset.pattern.permute.xlu0 0
  %2926 = vperm.xlu0 %2925, %v2412
  %v2927 = vpop.permute.xlu0 %2926
  %2930 = vset.pattern.permute.xlu0 0
  %2931 = vperm.xlu0 %2930, %v2413
  %v2932 = vpop.permute.xlu0 %2931
  %2935 = vset.pattern.permute.xlu0 0
  %2936 = vperm.xlu0 %2935, %v2414
  %v2937 = vpop.permute.xlu0 %2936
  %2940 = vset.pattern.permute.xlu0 0
  %2941 = vperm.xlu0 %2940, %v2415
  %v2942 = vpop.permute.xlu0 %2941
  %2945 = vset.pattern.permute.xlu0 0
  %2946 = vperm.xlu0 %2945, %v2416
  %v2947 = vpop.permute.xlu0 %2946
  %2950 = vset.pattern.permute.xlu0 0
  %2951 = vperm.xlu0 %2950, %v2417
  %v2952 = vpop.permute.xlu0 %2951
  %2955 = vset.pattern.permute.xlu0 0
  %2956 = vperm.xlu0 %2955, %v2418
  %v2957 = vpop.permute.xlu0 %2956
  %2960 = vset.pattern.permute.xlu0 0
  %2961 = vperm.xlu0 %2960, %v2419
  %v2962 = vpop.permute.xlu0 %2961
  %2965 = vset.pattern.permute.xlu0 0
  %2966 = vperm.xlu0 %2965, %v2420
  %v2967 = vpop.permute.xlu0 %2966
  %2970 = vset.pattern.permute.xlu0 0
  %2971 = vperm.xlu0 %2970, %v2421
  %v2972 = vpop.permute.xlu0 %2971
  %2975 = vset.pattern.permute.xlu0 0
  %2976 = vperm.xlu0 %2975, %v2422
  %v2977 = vpop.permute.xlu0 %2976
  %2980 = vset.pattern.permute.xlu0 0
  %2981 = vperm.xlu0 %2980, %v2423
  %v2982 = vpop.permute.xlu0 %2981
  %2985 = vset.pattern.permute.xlu0 0
  %2986 = vperm.xlu0 %2985, %v2424
  %v2987 = vpop.permute.xlu0 %2986
  %2990 = vset.pattern.permute.xlu0 0
  %2991 = vperm.xlu0 %2990, %v2425
  %v2992 = vpop.permute.xlu0 %2991
  %2995 = vset.pattern.permute.xlu0 0
  %2996 = vperm.xlu0 %2995, %v2426
  %v2997 = vpop.permute.xlu0 %2996
  %3000 = vset.pattern.permute.xlu0 0
  %3001 = vperm.xlu0 %3000, %v2427
  %v3002 = vpop.permute.xlu0 %3001
  %3005 = vset.pattern.permute.xlu0 0
  %3006 = vperm.xlu0 %3005, %v2428
  %v3007 = vpop.permute.xlu0 %3006
  %3010 = vset.pattern.permute.xlu0 0
  %3011 = vperm.xlu0 %3010, %v2429
  %v3012 = vpop.permute.xlu0 %3011
  %3015 = vset.pattern.permute.xlu0 0
  %3016 = vperm.xlu0 %3015, %v2430
  %v3017 = vpop.permute.xlu0 %3016
  %3020 = vset.pattern.permute.xlu0 0
  %3021 = vperm.xlu0 %3020, %v2431
  %v3022 = vpop.permute.xlu0 %3021
  %3025 = vset.pattern.permute.xlu0 0
  %3026 = vperm.xlu0 %3025, %v2432
  %v3027 = vpop.permute.xlu0 %3026
  %3030 = vset.pattern.permute.xlu0 0
  %3031 = vperm.xlu0 %3030, %v2433
  %v3032 = vpop.permute.xlu0 %3031
  %3035 = vset.pattern.permute.xlu0 0
  %3036 = vperm.xlu0 %3035, %v2434
  %v3037 = vpop.permute.xlu0 %3036
  %3040 = vset.pattern.permute.xlu0 0
  %3041 = vperm.xlu0 %3040, %v2435
  %v3042 = vpop.permute.xlu0 %3041
  %3045 = vset.pattern.permute.xlu0 0
  %3046 = vperm.xlu0 %3045, %v2436
  %v3047 = vpop.permute.xlu0 %3046
  %3050 = vset.pattern.permute.xlu0 0
  %3051 = vperm.xlu0 %3050, %v2437
  %v3052 = vpop.permute.xlu0 %3051
  %3055 = vset.pattern.permute.xlu0 0
  %3056 = vperm.xlu0 %3055, %v2438
  %v3057 = vpop.permute.xlu0 %3056
  %3060 = vset.pattern.permute.xlu0 0
  %3061 = vperm.xlu0 %3060, %v2439
  %v3062 = vpop.permute.xlu0 %3061
  %3065 = vset.pattern.permute.xlu0 0
  %3066 = vperm.xlu0 %3065, %v2440
  %v3067 = vpop.permute.xlu0 %3066
  %3070 = vset.pattern.permute.xlu0 0
  %3071 = vperm.xlu0 %3070, %v2441
  %v3072 = vpop.permute.xlu0 %3071
  %3075 = vset.pattern.permute.xlu0 0
  %3076 = vperm.xlu0 %3075, %v2442
  %v3077 = vpop.permute.xlu0 %3076
  %3080 = vset.pattern.permute.xlu0 0
  %3081 = vperm.xlu0 %3080, %v2443
  %v3082 = vpop.permute.xlu0 %3081
  %3085 = vset.pattern.permute.xlu0 0
  %3086 = vperm.xlu0 %3085, %v2444
  %v3087 = vpop.permute.xlu0 %3086
  %3090 = vset.pattern.permute.xlu0 0
  %3091 = vperm.xlu0 %3090, %v2445
  %v3092 = vpop.permute.xlu0 %3091
  %3095 = vset.pattern.permute.xlu0 0
  %3096 = vperm.xlu0 %3095, %v2446
  %v3097 = vpop.permute.xlu0 %3096
  %3100 = vset.pattern.permute.xlu0 0
  %3101 = vperm.xlu0 %3100, %v2447
  %v3102 = vpop.permute.xlu0 %3101
  %3105 = vset.pattern.permute.xlu0 0
  %3106 = vperm.xlu0 %3105, %v2448
  %v3107 = vpop.permute.xlu0 %3106
  %3110 = vset.pattern.permute.xlu0 0
  %3111 = vperm.xlu0 %3110, %v2449
  %v3112 = vpop.permute.xlu0 %3111
  %3115 = vset.pattern.permute.xlu0 0
  %3116 = vperm.xlu0 %3115, %v2450
  %v3117 = vpop.permute.xlu0 %3116
  %3120 = vset.pattern.permute.xlu0 0
  %3121 = vperm.xlu0 %3120, %v2451
  %v3122 = vpop.permute.xlu0 %3121
  %3125 = vset.pattern.permute.xlu0 0
  %3126 = vperm.xlu0 %3125, %v2452
  %v3127 = vpop.permute.xlu0 %3126
  %3130 = vset.pattern.permute.xlu0 0
  %3131 = vperm.xlu0 %3130, %v2453
  %v3132 = vpop.permute.xlu0 %3131
  %3135 = vset.pattern.permute.xlu0 0
  %3136 = vperm.xlu0 %3135, %v2454
  %v3137 = vpop.permute.xlu0 %3136
  %3140 = vset.pattern.permute.xlu0 0
  %3141 = vperm.xlu0 %3140, %v2455
  %v3142 = vpop.permute.xlu0 %3141
  %3145 = vset.pattern.permute.xlu0 0
  %3146 = vperm.xlu0 %3145, %v2456
  %v3147 = vpop.permute.xlu0 %3146
  %3150 = vset.pattern.permute.xlu0 0
  %3151 = vperm.xlu0 %3150, %v2457
  %v3152 = vpop.permute.xlu0 %3151
  %3155 = vset.pattern.permute.xlu0 0
  %3156 = vperm.xlu0 %3155, %v2458
  %v3157 = vpop.permute.xlu0 %3156
  %3160 = vset.pattern.permute.xlu0 0
  %3161 = vperm.xlu0 %3160, %v2459
  %v3162 = vpop.permute.xlu0 %3161
  %v3164 = vmul.f32 %v27, %v2787
  %v3165 = vmul.f32 %v28, %v2787
  %v3166 = vmul.f32 %v29, %v2792
  %v3167 = vmul.f32 %v30, %v2792
  %v3168 = vmul.f32 %v31, %v2797
  %v3169 = vmul.f32 %v32, %v2797
  %v3170 = vmul.f32 %v33, %v2802
  %v3171 = vmul.f32 %v34, %v2802
  %v3172 = vmul.f32 %v35, %v2807
  %v3173 = vmul.f32 %v36, %v2807
  %v3174 = vmul.f32 %v37, %v2812
  %v3175 = vmul.f32 %v38, %v2812
  %v3176 = vmul.f32 %v39, %v2817
  %v3177 = vmul.f32 %v40, %v2817
  %v3178 = vmul.f32 %v41, %v2822
  %v3179 = vmul.f32 %v42, %v2822
  %v3180 = vmul.f32 %v43, %v2827
  %v3181 = vmul.f32 %v44, %v2827
  %v3182 = vmul.f32 %v45, %v2832
  %v3183 = vmul.f32 %v46, %v2832
  %v3184 = vmul.f32 %v47, %v2837
  %v3185 = vmul.f32 %v48, %v2837
  %v3186 = vmul.f32 %v49, %v2842
  %v3187 = vmul.f32 %v50, %v2842
  %v3188 = vmul.f32 %v51, %v2847
  %v3189 = vmul.f32 %v52, %v2847
  %v3190 = vmul.f32 %v53, %v2852
  %v3191 = vmul.f32 %v54, %v2852
  %v3192 = vmul.f32 %v55, %v2857
  %v3193 = vmul.f32 %v56, %v2857
  %v3194 = vmul.f32 %v57, %v2862
  %v3195 = vmul.f32 %v58, %v2862
  %v3196 = vmul.f32 %v59, %v2867
  %v3197 = vmul.f32 %v60, %v2867
  %v3198 = vmul.f32 %v61, %v2872
  %v3199 = vmul.f32 %v62, %v2872
  %v3200 = vmul.f32 %v63, %v2877
  %v3201 = vmul.f32 %v64, %v2877
  %v3202 = vmul.f32 %v65, %v2882
  %v3203 = vmul.f32 %v66, %v2882
  %v3204 = vmul.f32 %v67, %v2887
  %v3205 = vmul.f32 %v68, %v2887
  %v3206 = vmul.f32 %v69, %v2892
  %v3207 = vmul.f32 %v70, %v2892
  %v3208 = vmul.f32 %v71, %v2897
  %v3209 = vmul.f32 %v72, %v2897
  %v3210 = vmul.f32 %v73, %v2902
  %v3211 = vmul.f32 %v74, %v2902
  %v3212 = vmul.f32 %v75, %v2907
  %v3213 = vmul.f32 %v76, %v2907
  %v3214 = vmul.f32 %v77, %v2912
  %v3215 = vmul.f32 %v78, %v2912
  %v3216 = vmul.f32 %v79, %v2917
  %v3217 = vmul.f32 %v80, %v2917
  %v3218 = vmul.f32 %v81, %v2922
  %v3219 = vmul.f32 %v82, %v2922
  %v3220 = vmul.f32 %v83, %v2927
  %v3221 = vmul.f32 %v84, %v2927
  %v3222 = vmul.f32 %v85, %v2932
  %v3223 = vmul.f32 %v86, %v2932
  %v3224 = vmul.f32 %v87, %v2937
  %v3225 = vmul.f32 %v88, %v2937
  %v3226 = vmul.f32 %v89, %v2942
  %v3227 = vmul.f32 %v90, %v2942
  %v3228 = vmul.f32 %v91, %v2947
  %v3229 = vmul.f32 %v92, %v2947
  %v3230 = vmul.f32 %v93, %v2952
  %v3231 = vmul.f32 %v94, %v2952
  %v3232 = vmul.f32 %v95, %v2957
  %v3233 = vmul.f32 %v96, %v2957
  %v3234 = vmul.f32 %v97, %v2962
  %v3235 = vmul.f32 %v98, %v2962
  %v3236 = vmul.f32 %v99, %v2967
  %v3237 = vmul.f32 %v100, %v2967
  %v3238 = vmul.f32 %v101, %v2972
  %v3239 = vmul.f32 %v102, %v2972
  %v3240 = vmul.f32 %v103, %v2977
  %v3241 = vmul.f32 %v104, %v2977
  %v3242 = vmul.f32 %v105, %v2982
  %v3243 = vmul.f32 %v106, %v2982
  %v3244 = vmul.f32 %v107, %v2987
  %v3245 = vmul.f32 %v108, %v2987
  %v3246 = vmul.f32 %v109, %v2992
  %v3247 = vmul.f32 %v110, %v2992
  %v3248 = vmul.f32 %v111, %v2997
  %v3249 = vmul.f32 %v112, %v2997
  %v3250 = vmul.f32 %v113, %v3002
  %v3251 = vmul.f32 %v114, %v3002
  %v3252 = vmul.f32 %v115, %v3007
  %v3253 = vmul.f32 %v116, %v3007
  %v3254 = vmul.f32 %v117, %v3012
  %v3255 = vmul.f32 %v118, %v3012
  %v3256 = vmul.f32 %v119, %v3017
  %v3257 = vmul.f32 %v120, %v3017
  %v3258 = vmul.f32 %v121, %v3022
  %v3259 = vmul.f32 %v122, %v3022
  %v3260 = vmul.f32 %v123, %v3027
  %v3261 = vmul.f32 %v124, %v3027
  %v3262 = vmul.f32 %v125, %v3032
  %v3263 = vmul.f32 %v126, %v3032
  %v3264 = vmul.f32 %v127, %v3037
  %v3265 = vmul.f32 %v128, %v3037
  %v3266 = vmul.f32 %v129, %v3042
  %v3267 = vmul.f32 %v130, %v3042
  %v3268 = vmul.f32 %v131, %v3047
  %v3269 = vmul.f32 %v132, %v3047
  %v3270 = vmul.f32 %v133, %v3052
  %v3271 = vmul.f32 %v134, %v3052
  %v3272 = vmul.f32 %v135, %v3057
  %v3273 = vmul.f32 %v136, %v3057
  %v3274 = vmul.f32 %v137, %v3062
  %v3275 = vmul.f32 %v138, %v3062
  %v3276 = vmul.f32 %v139, %v3067
  %v3277 = vmul.f32 %v140, %v3067
  %v3278 = vmul.f32 %v141, %v3072
  %v3279 = vmul.f32 %v142, %v3072
  %v3280 = vmul.f32 %v143, %v3077
  %v3281 = vmul.f32 %v144, %v3077
  %v3282 = vmul.f32 %v145, %v3082
  %v3283 = vmul.f32 %v146, %v3082
  %v3284 = vmul.f32 %v147, %v3087
  %v3285 = vmul.f32 %v148, %v3087
  %v3286 = vmul.f32 %v149, %v3092
  %v3287 = vmul.f32 %v150, %v3092
  %v3288 = vmul.f32 %v151, %v3097
  %v3289 = vmul.f32 %v152, %v3097
  %v3290 = vmul.f32 %v153, %v3102
  %v3291 = vmul.f32 %v154, %v3102
  %v3292 = vmul.f32 %v155, %v3107
  %v3293 = vmul.f32 %v156, %v3107
  %v3294 = vmul.f32 %v157, %v3112
  %v3295 = vmul.f32 %v158, %v3112
  %v3296 = vmul.f32 %v159, %v3117
  %v3297 = vmul.f32 %v160, %v3117
  %v3298 = vmul.f32 %v161, %v3122
  %v3299 = vmul.f32 %v162, %v3122
  %v3300 = vmul.f32 %v163, %v3127
  %v3301 = vmul.f32 %v164, %v3127
  %v3302 = vmul.f32 %v165, %v3132
  %v3303 = vmul.f32 %v166, %v3132
  %v3304 = vmul.f32 %v167, %v3137
  %v3305 = vmul.f32 %v168, %v3137
  %v3306 = vmul.f32 %v169, %v3142
  %v3307 = vmul.f32 %v170, %v3142
  %v3308 = vmul.f32 %v171, %v3147
  %v3309 = vmul.f32 %v172, %v3147
  %v3310 = vmul.f32 %v173, %v3152
  %v3311 = vmul.f32 %v174, %v3152
  %v3312 = vmul.f32 %v175, %v3157
  %v3313 = vmul.f32 %v176, %v3157
  %v3314 = vmul.f32 %v177, %v3162
  %v3315 = vmul.f32 %v178, %v3162
  %3317 = vset.pattern.permute.xlu0 0
  %3318 = vperm.xlu0 %3317, %v2612
  %v3319 = vpop.permute.xlu0 %3318
  %3322 = vset.pattern.permute.xlu0 0
  %3323 = vperm.xlu0 %3322, %v2613
  %v3324 = vpop.permute.xlu0 %3323
  %3327 = vset.pattern.permute.xlu0 0
  %3328 = vperm.xlu0 %3327, %v2614
  %v3329 = vpop.permute.xlu0 %3328
  %3332 = vset.pattern.permute.xlu0 0
  %3333 = vperm.xlu0 %3332, %v2615
  %v3334 = vpop.permute.xlu0 %3333
  %3337 = vset.pattern.permute.xlu0 0
  %3338 = vperm.xlu0 %3337, %v2616
  %v3339 = vpop.permute.xlu0 %3338
  %3342 = vset.pattern.permute.xlu0 0
  %3343 = vperm.xlu0 %3342, %v2617
  %v3344 = vpop.permute.xlu0 %3343
  %3347 = vset.pattern.permute.xlu0 0
  %3348 = vperm.xlu0 %3347, %v2618
  %v3349 = vpop.permute.xlu0 %3348
  %3352 = vset.pattern.permute.xlu0 0
  %3353 = vperm.xlu0 %3352, %v2619
  %v3354 = vpop.permute.xlu0 %3353
  %3357 = vset.pattern.permute.xlu0 0
  %3358 = vperm.xlu0 %3357, %v2620
  %v3359 = vpop.permute.xlu0 %3358
  %3362 = vset.pattern.permute.xlu0 0
  %3363 = vperm.xlu0 %3362, %v2621
  %v3364 = vpop.permute.xlu0 %3363
  %3367 = vset.pattern.permute.xlu0 0
  %3368 = vperm.xlu0 %3367, %v2622
  %v3369 = vpop.permute.xlu0 %3368
  %3372 = vset.pattern.permute.xlu0 0
  %3373 = vperm.xlu0 %3372, %v2623
  %v3374 = vpop.permute.xlu0 %3373
  %3377 = vset.pattern.permute.xlu0 0
  %3378 = vperm.xlu0 %3377, %v2624
  %v3379 = vpop.permute.xlu0 %3378
  %3382 = vset.pattern.permute.xlu0 0
  %3383 = vperm.xlu0 %3382, %v2625
  %v3384 = vpop.permute.xlu0 %3383
  %3387 = vset.pattern.permute.xlu0 0
  %3388 = vperm.xlu0 %3387, %v2626
  %v3389 = vpop.permute.xlu0 %3388
  %3392 = vset.pattern.permute.xlu0 0
  %3393 = vperm.xlu0 %3392, %v2627
  %v3394 = vpop.permute.xlu0 %3393
  %3397 = vset.pattern.permute.xlu0 0
  %3398 = vperm.xlu0 %3397, %v2628
  %v3399 = vpop.permute.xlu0 %3398
  %3402 = vset.pattern.permute.xlu0 0
  %3403 = vperm.xlu0 %3402, %v2629
  %v3404 = vpop.permute.xlu0 %3403
  %3407 = vset.pattern.permute.xlu0 0
  %3408 = vperm.xlu0 %3407, %v2630
  %v3409 = vpop.permute.xlu0 %3408
  %3412 = vset.pattern.permute.xlu0 0
  %3413 = vperm.xlu0 %3412, %v2631
  %v3414 = vpop.permute.xlu0 %3413
  %3417 = vset.pattern.permute.xlu0 0
  %3418 = vperm.xlu0 %3417, %v2632
  %v3419 = vpop.permute.xlu0 %3418
  %3422 = vset.pattern.permute.xlu0 0
  %3423 = vperm.xlu0 %3422, %v2633
  %v3424 = vpop.permute.xlu0 %3423
  %3427 = vset.pattern.permute.xlu0 0
  %3428 = vperm.xlu0 %3427, %v2634
  %v3429 = vpop.permute.xlu0 %3428
  %3432 = vset.pattern.permute.xlu0 0
  %3433 = vperm.xlu0 %3432, %v2635
  %v3434 = vpop.permute.xlu0 %3433
  %3437 = vset.pattern.permute.xlu0 0
  %3438 = vperm.xlu0 %3437, %v2636
  %v3439 = vpop.permute.xlu0 %3438
  %3442 = vset.pattern.permute.xlu0 0
  %3443 = vperm.xlu0 %3442, %v2637
  %v3444 = vpop.permute.xlu0 %3443
  %3447 = vset.pattern.permute.xlu0 0
  %3448 = vperm.xlu0 %3447, %v2638
  %v3449 = vpop.permute.xlu0 %3448
  %3452 = vset.pattern.permute.xlu0 0
  %3453 = vperm.xlu0 %3452, %v2639
  %v3454 = vpop.permute.xlu0 %3453
  %3457 = vset.pattern.permute.xlu0 0
  %3458 = vperm.xlu0 %3457, %v2640
  %v3459 = vpop.permute.xlu0 %3458
  %3462 = vset.pattern.permute.xlu0 0
  %3463 = vperm.xlu0 %3462, %v2641
  %v3464 = vpop.permute.xlu0 %3463
  %3467 = vset.pattern.permute.xlu0 0
  %3468 = vperm.xlu0 %3467, %v2642
  %v3469 = vpop.permute.xlu0 %3468
  %3472 = vset.pattern.permute.xlu0 0
  %3473 = vperm.xlu0 %3472, %v2643
  %v3474 = vpop.permute.xlu0 %3473
  %3477 = vset.pattern.permute.xlu0 0
  %3478 = vperm.xlu0 %3477, %v2644
  %v3479 = vpop.permute.xlu0 %3478
  %3482 = vset.pattern.permute.xlu0 0
  %3483 = vperm.xlu0 %3482, %v2645
  %v3484 = vpop.permute.xlu0 %3483
  %3487 = vset.pattern.permute.xlu0 0
  %3488 = vperm.xlu0 %3487, %v2646
  %v3489 = vpop.permute.xlu0 %3488
  %3492 = vset.pattern.permute.xlu0 0
  %3493 = vperm.xlu0 %3492, %v2647
  %v3494 = vpop.permute.xlu0 %3493
  %3497 = vset.pattern.permute.xlu0 0
  %3498 = vperm.xlu0 %3497, %v2648
  %v3499 = vpop.permute.xlu0 %3498
  %3502 = vset.pattern.permute.xlu0 0
  %3503 = vperm.xlu0 %3502, %v2649
  %v3504 = vpop.permute.xlu0 %3503
  %3507 = vset.pattern.permute.xlu0 0
  %3508 = vperm.xlu0 %3507, %v2650
  %v3509 = vpop.permute.xlu0 %3508
  %3512 = vset.pattern.permute.xlu0 0
  %3513 = vperm.xlu0 %3512, %v2651
  %v3514 = vpop.permute.xlu0 %3513
  %3517 = vset.pattern.permute.xlu0 0
  %3518 = vperm.xlu0 %3517, %v2652
  %v3519 = vpop.permute.xlu0 %3518
  %3522 = vset.pattern.permute.xlu0 0
  %3523 = vperm.xlu0 %3522, %v2653
  %v3524 = vpop.permute.xlu0 %3523
  %3527 = vset.pattern.permute.xlu0 0
  %3528 = vperm.xlu0 %3527, %v2654
  %v3529 = vpop.permute.xlu0 %3528
  %3532 = vset.pattern.permute.xlu0 0
  %3533 = vperm.xlu0 %3532, %v2655
  %v3534 = vpop.permute.xlu0 %3533
  %3537 = vset.pattern.permute.xlu0 0
  %3538 = vperm.xlu0 %3537, %v2656
  %v3539 = vpop.permute.xlu0 %3538
  %3542 = vset.pattern.permute.xlu0 0
  %3543 = vperm.xlu0 %3542, %v2657
  %v3544 = vpop.permute.xlu0 %3543
  %3547 = vset.pattern.permute.xlu0 0
  %3548 = vperm.xlu0 %3547, %v2658
  %v3549 = vpop.permute.xlu0 %3548
  %3552 = vset.pattern.permute.xlu0 0
  %3553 = vperm.xlu0 %3552, %v2659
  %v3554 = vpop.permute.xlu0 %3553
  %3557 = vset.pattern.permute.xlu0 0
  %3558 = vperm.xlu0 %3557, %v2660
  %v3559 = vpop.permute.xlu0 %3558
  %3562 = vset.pattern.permute.xlu0 0
  %3563 = vperm.xlu0 %3562, %v2661
  %v3564 = vpop.permute.xlu0 %3563
  %3567 = vset.pattern.permute.xlu0 0
  %3568 = vperm.xlu0 %3567, %v2662
  %v3569 = vpop.permute.xlu0 %3568
  %3572 = vset.pattern.permute.xlu0 0
  %3573 = vperm.xlu0 %3572, %v2663
  %v3574 = vpop.permute.xlu0 %3573
  %3577 = vset.pattern.permute.xlu0 0
  %3578 = vperm.xlu0 %3577, %v2664
  %v3579 = vpop.permute.xlu0 %3578
  %3582 = vset.pattern.permute.xlu0 0
  %3583 = vperm.xlu0 %3582, %v2665
  %v3584 = vpop.permute.xlu0 %3583
  %3587 = vset.pattern.permute.xlu0 0
  %3588 = vperm.xlu0 %3587, %v2666
  %v3589 = vpop.permute.xlu0 %3588
  %3592 = vset.pattern.permute.xlu0 0
  %3593 = vperm.xlu0 %3592, %v2667
  %v3594 = vpop.permute.xlu0 %3593
  %3597 = vset.pattern.permute.xlu0 0
  %3598 = vperm.xlu0 %3597, %v2668
  %v3599 = vpop.permute.xlu0 %3598
  %3602 = vset.pattern.permute.xlu0 0
  %3603 = vperm.xlu0 %3602, %v2669
  %v3604 = vpop.permute.xlu0 %3603
  %3607 = vset.pattern.permute.xlu0 0
  %3608 = vperm.xlu0 %3607, %v2670
  %v3609 = vpop.permute.xlu0 %3608
  %3612 = vset.pattern.permute.xlu0 0
  %3613 = vperm.xlu0 %3612, %v2671
  %v3614 = vpop.permute.xlu0 %3613
  %3617 = vset.pattern.permute.xlu0 0
  %3618 = vperm.xlu0 %3617, %v2672
  %v3619 = vpop.permute.xlu0 %3618
  %3622 = vset.pattern.permute.xlu0 0
  %3623 = vperm.xlu0 %3622, %v2673
  %v3624 = vpop.permute.xlu0 %3623
  %3627 = vset.pattern.permute.xlu0 0
  %3628 = vperm.xlu0 %3627, %v2674
  %v3629 = vpop.permute.xlu0 %3628
  %3632 = vset.pattern.permute.xlu0 0
  %3633 = vperm.xlu0 %3632, %v2675
  %v3634 = vpop.permute.xlu0 %3633
  %3637 = vset.pattern.permute.xlu0 0
  %3638 = vperm.xlu0 %3637, %v2676
  %v3639 = vpop.permute.xlu0 %3638
  %3642 = vset.pattern.permute.xlu0 0
  %3643 = vperm.xlu0 %3642, %v2677
  %v3644 = vpop.permute.xlu0 %3643
  %3647 = vset.pattern.permute.xlu0 0
  %3648 = vperm.xlu0 %3647, %v2678
  %v3649 = vpop.permute.xlu0 %3648
  %3652 = vset.pattern.permute.xlu0 0
  %3653 = vperm.xlu0 %3652, %v2679
  %v3654 = vpop.permute.xlu0 %3653
  %3657 = vset.pattern.permute.xlu0 0
  %3658 = vperm.xlu0 %3657, %v2680
  %v3659 = vpop.permute.xlu0 %3658
  %3662 = vset.pattern.permute.xlu0 0
  %3663 = vperm.xlu0 %3662, %v2681
  %v3664 = vpop.permute.xlu0 %3663
  %3667 = vset.pattern.permute.xlu0 0
  %3668 = vperm.xlu0 %3667, %v2682
  %v3669 = vpop.permute.xlu0 %3668
  %3672 = vset.pattern.permute.xlu0 0
  %3673 = vperm.xlu0 %3672, %v2683
  %v3674 = vpop.permute.xlu0 %3673
  %3677 = vset.pattern.permute.xlu0 0
  %3678 = vperm.xlu0 %3677, %v2684
  %v3679 = vpop.permute.xlu0 %3678
  %3682 = vset.pattern.permute.xlu0 0
  %3683 = vperm.xlu0 %3682, %v2685
  %v3684 = vpop.permute.xlu0 %3683
  %3687 = vset.pattern.permute.xlu0 0
  %3688 = vperm.xlu0 %3687, %v2686
  %v3689 = vpop.permute.xlu0 %3688
  %3692 = vset.pattern.permute.xlu0 0
  %3693 = vperm.xlu0 %3692, %v2687
  %v3694 = vpop.permute.xlu0 %3693
  %v3696 = vadd.f32 %v3164, %v3319
  %v3697 = vadd.f32 %v3165, %v3319
  %v3698 = vadd.f32 %v3166, %v3324
  %v3699 = vadd.f32 %v3167, %v3324
  %v3700 = vadd.f32 %v3168, %v3329
  %v3701 = vadd.f32 %v3169, %v3329
  %v3702 = vadd.f32 %v3170, %v3334
  %v3703 = vadd.f32 %v3171, %v3334
  %v3704 = vadd.f32 %v3172, %v3339
  %v3705 = vadd.f32 %v3173, %v3339
  %v3706 = vadd.f32 %v3174, %v3344
  %v3707 = vadd.f32 %v3175, %v3344
  %v3708 = vadd.f32 %v3176, %v3349
  %v3709 = vadd.f32 %v3177, %v3349
  %v3710 = vadd.f32 %v3178, %v3354
  %v3711 = vadd.f32 %v3179, %v3354
  %v3712 = vadd.f32 %v3180, %v3359
  %v3713 = vadd.f32 %v3181, %v3359
  %v3714 = vadd.f32 %v3182, %v3364
  %v3715 = vadd.f32 %v3183, %v3364
  %v3716 = vadd.f32 %v3184, %v3369
  %v3717 = vadd.f32 %v3185, %v3369
  %v3718 = vadd.f32 %v3186, %v3374
  %v3719 = vadd.f32 %v3187, %v3374
  %v3720 = vadd.f32 %v3188, %v3379
  %v3721 = vadd.f32 %v3189, %v3379
  %v3722 = vadd.f32 %v3190, %v3384
  %v3723 = vadd.f32 %v3191, %v3384
  %v3724 = vadd.f32 %v3192, %v3389
  %v3725 = vadd.f32 %v3193, %v3389
  %v3726 = vadd.f32 %v3194, %v3394
  %v3727 = vadd.f32 %v3195, %v3394
  %v3728 = vadd.f32 %v3196, %v3399
  %v3729 = vadd.f32 %v3197, %v3399
  %v3730 = vadd.f32 %v3198, %v3404
  %v3731 = vadd.f32 %v3199, %v3404
  %v3732 = vadd.f32 %v3200, %v3409
  %v3733 = vadd.f32 %v3201, %v3409
  %v3734 = vadd.f32 %v3202, %v3414
  %v3735 = vadd.f32 %v3203, %v3414
  %v3736 = vadd.f32 %v3204, %v3419
  %v3737 = vadd.f32 %v3205, %v3419
  %v3738 = vadd.f32 %v3206, %v3424
  %v3739 = vadd.f32 %v3207, %v3424
  %v3740 = vadd.f32 %v3208, %v3429
  %v3741 = vadd.f32 %v3209, %v3429
  %v3742 = vadd.f32 %v3210, %v3434
  %v3743 = vadd.f32 %v3211, %v3434
  %v3744 = vadd.f32 %v3212, %v3439
  %v3745 = vadd.f32 %v3213, %v3439
  %v3746 = vadd.f32 %v3214, %v3444
  %v3747 = vadd.f32 %v3215, %v3444
  %v3748 = vadd.f32 %v3216, %v3449
  %v3749 = vadd.f32 %v3217, %v3449
  %v3750 = vadd.f32 %v3218, %v3454
  %v3751 = vadd.f32 %v3219, %v3454
  %v3752 = vadd.f32 %v3220, %v3459
  %v3753 = vadd.f32 %v3221, %v3459
  %v3754 = vadd.f32 %v3222, %v3464
  %v3755 = vadd.f32 %v3223, %v3464
  %v3756 = vadd.f32 %v3224, %v3469
  %v3757 = vadd.f32 %v3225, %v3469
  %v3758 = vadd.f32 %v3226, %v3474
  %v3759 = vadd.f32 %v3227, %v3474
  %v3760 = vadd.f32 %v3228, %v3479
  %v3761 = vadd.f32 %v3229, %v3479
  %v3762 = vadd.f32 %v3230, %v3484
  %v3763 = vadd.f32 %v3231, %v3484
  %v3764 = vadd.f32 %v3232, %v3489
  %v3765 = vadd.f32 %v3233, %v3489
  %v3766 = vadd.f32 %v3234, %v3494
  %v3767 = vadd.f32 %v3235, %v3494
  %v3768 = vadd.f32 %v3236, %v3499
  %v3769 = vadd.f32 %v3237, %v3499
  %v3770 = vadd.f32 %v3238, %v3504
  %v3771 = vadd.f32 %v3239, %v3504
  %v3772 = vadd.f32 %v3240, %v3509
  %v3773 = vadd.f32 %v3241, %v3509
  %v3774 = vadd.f32 %v3242, %v3514
  %v3775 = vadd.f32 %v3243, %v3514
  %v3776 = vadd.f32 %v3244, %v3519
  %v3777 = vadd.f32 %v3245, %v3519
  %v3778 = vadd.f32 %v3246, %v3524
  %v3779 = vadd.f32 %v3247, %v3524
  %v3780 = vadd.f32 %v3248, %v3529
  %v3781 = vadd.f32 %v3249, %v3529
  %v3782 = vadd.f32 %v3250, %v3534
  %v3783 = vadd.f32 %v3251, %v3534
  %v3784 = vadd.f32 %v3252, %v3539
  %v3785 = vadd.f32 %v3253, %v3539
  %v3786 = vadd.f32 %v3254, %v3544
  %v3787 = vadd.f32 %v3255, %v3544
  %v3788 = vadd.f32 %v3256, %v3549
  %v3789 = vadd.f32 %v3257, %v3549
  %v3790 = vadd.f32 %v3258, %v3554
  %v3791 = vadd.f32 %v3259, %v3554
  %v3792 = vadd.f32 %v3260, %v3559
  %v3793 = vadd.f32 %v3261, %v3559
  %v3794 = vadd.f32 %v3262, %v3564
  %v3795 = vadd.f32 %v3263, %v3564
  %v3796 = vadd.f32 %v3264, %v3569
  %v3797 = vadd.f32 %v3265, %v3569
  %v3798 = vadd.f32 %v3266, %v3574
  %v3799 = vadd.f32 %v3267, %v3574
  %v3800 = vadd.f32 %v3268, %v3579
  %v3801 = vadd.f32 %v3269, %v3579
  %v3802 = vadd.f32 %v3270, %v3584
  %v3803 = vadd.f32 %v3271, %v3584
  %v3804 = vadd.f32 %v3272, %v3589
  %v3805 = vadd.f32 %v3273, %v3589
  %v3806 = vadd.f32 %v3274, %v3594
  %v3807 = vadd.f32 %v3275, %v3594
  %v3808 = vadd.f32 %v3276, %v3599
  %v3809 = vadd.f32 %v3277, %v3599
  %v3810 = vadd.f32 %v3278, %v3604
  %v3811 = vadd.f32 %v3279, %v3604
  %v3812 = vadd.f32 %v3280, %v3609
  %v3813 = vadd.f32 %v3281, %v3609
  %v3814 = vadd.f32 %v3282, %v3614
  %v3815 = vadd.f32 %v3283, %v3614
  %v3816 = vadd.f32 %v3284, %v3619
  %v3817 = vadd.f32 %v3285, %v3619
  %v3818 = vadd.f32 %v3286, %v3624
  %v3819 = vadd.f32 %v3287, %v3624
  %v3820 = vadd.f32 %v3288, %v3629
  %v3821 = vadd.f32 %v3289, %v3629
  %v3822 = vadd.f32 %v3290, %v3634
  %v3823 = vadd.f32 %v3291, %v3634
  %v3824 = vadd.f32 %v3292, %v3639
  %v3825 = vadd.f32 %v3293, %v3639
  %v3826 = vadd.f32 %v3294, %v3644
  %v3827 = vadd.f32 %v3295, %v3644
  %v3828 = vadd.f32 %v3296, %v3649
  %v3829 = vadd.f32 %v3297, %v3649
  %v3830 = vadd.f32 %v3298, %v3654
  %v3831 = vadd.f32 %v3299, %v3654
  %v3832 = vadd.f32 %v3300, %v3659
  %v3833 = vadd.f32 %v3301, %v3659
  %v3834 = vadd.f32 %v3302, %v3664
  %v3835 = vadd.f32 %v3303, %v3664
  %v3836 = vadd.f32 %v3304, %v3669
  %v3837 = vadd.f32 %v3305, %v3669
  %v3838 = vadd.f32 %v3306, %v3674
  %v3839 = vadd.f32 %v3307, %v3674
  %v3840 = vadd.f32 %v3308, %v3679
  %v3841 = vadd.f32 %v3309, %v3679
  %v3842 = vadd.f32 %v3310, %v3684
  %v3843 = vadd.f32 %v3311, %v3684
  %v3844 = vadd.f32 %v3312, %v3689
  %v3845 = vadd.f32 %v3313, %v3689
  %v3846 = vadd.f32 %v3314, %v3694
  %v3847 = vadd.f32 %v3315, %v3694
  %v3848 = vmax.f32 %v3696, 0.0
  %v3849 = vmax.f32 %v3697, 0.0
  %v3850 = vmax.f32 %v3698, 0.0
  %v3851 = vmax.f32 %v3699, 0.0
  %v3852 = vmax.f32 %v3700, 0.0
  %v3853 = vmax.f32 %v3701, 0.0
  %v3854 = vmax.f32 %v3702, 0.0
  %v3855 = vmax.f32 %v3703, 0.0
  %v3856 = vmax.f32 %v3704, 0.0
  %v3857 = vmax.f32 %v3705, 0.0
  %v3858 = vmax.f32 %v3706, 0.0
  %v3859 = vmax.f32 %v3707, 0.0
  %v3860 = vmax.f32 %v3708, 0.0
  %v3861 = vmax.f32 %v3709, 0.0
  %v3862 = vmax.f32 %v3710, 0.0
  %v3863 = vmax.f32 %v3711, 0.0
  %v3864 = vmax.f32 %v3712, 0.0
  %v3865 = vmax.f32 %v3713, 0.0
  %v3866 = vmax.f32 %v3714, 0.0
  %v3867 = vmax.f32 %v3715, 0.0
  %v3868 = vmax.f32 %v3716, 0.0
  %v3869 = vmax.f32 %v3717, 0.0
  %v3870 = vmax.f32 %v3718, 0.0
  %v3871 = vmax.f32 %v3719, 0.0
  %v3872 = vmax.f32 %v3720, 0.0
  %v3873 = vmax.f32 %v3721, 0.0
  %v3874 = vmax.f32 %v3722, 0.0
  %v3875 = vmax.f32 %v3723, 0.0
  %v3876 = vmax.f32 %v3724, 0.0
  %v3877 = vmax.f32 %v3725, 0.0
  %v3878 = vmax.f32 %v3726, 0.0
  %v3879 = vmax.f32 %v3727, 0.0
  %v3880 = vmax.f32 %v3728, 0.0
  %v3881 = vmax.f32 %v3729, 0.0
  %v3882 = vmax.f32 %v3730, 0.0
  %v3883 = vmax.f32 %v3731, 0.0
  %v3884 = vmax.f32 %v3732, 0.0
  %v3885 = vmax.f32 %v3733, 0.0
  %v3886 = vmax.f32 %v3734, 0.0
  %v3887 = vmax.f32 %v3735, 0.0
  %v3888 = vmax.f32 %v3736, 0.0
  %v3889 = vmax.f32 %v3737, 0.0
  %v3890 = vmax.f32 %v3738, 0.0
  %v3891 = vmax.f32 %v3739, 0.0
  %v3892 = vmax.f32 %v3740, 0.0
  %v3893 = vmax.f32 %v3741, 0.0
  %v3894 = vmax.f32 %v3742, 0.0
  %v3895 = vmax.f32 %v3743, 0.0
  %v3896 = vmax.f32 %v3744, 0.0
  %v3897 = vmax.f32 %v3745, 0.0
  %v3898 = vmax.f32 %v3746, 0.0
  %v3899 = vmax.f32 %v3747, 0.0
  %v3900 = vmax.f32 %v3748, 0.0
  %v3901 = vmax.f32 %v3749, 0.0
  %v3902 = vmax.f32 %v3750, 0.0
  %v3903 = vmax.f32 %v3751, 0.0
  %v3904 = vmax.f32 %v3752, 0.0
  %v3905 = vmax.f32 %v3753, 0.0
  %v3906 = vmax.f32 %v3754, 0.0
  %v3907 = vmax.f32 %v3755, 0.0
  %v3908 = vmax.f32 %v3756, 0.0
  %v3909 = vmax.f32 %v3757, 0.0
  %v3910 = vmax.f32 %v3758, 0.0
  %v3911 = vmax.f32 %v3759, 0.0
  %v3912 = vmax.f32 %v3760, 0.0
  %v3913 = vmax.f32 %v3761, 0.0
  %v3914 = vmax.f32 %v3762, 0.0
  %v3915 = vmax.f32 %v3763, 0.0
  %v3916 = vmax.f32 %v3764, 0.0
  %v3917 = vmax.f32 %v3765, 0.0
  %v3918 = vmax.f32 %v3766, 0.0
  %v3919 = vmax.f32 %v3767, 0.0
  %v3920 = vmax.f32 %v3768, 0.0
  %v3921 = vmax.f32 %v3769, 0.0
  %v3922 = vmax.f32 %v3770, 0.0
  %v3923 = vmax.f32 %v3771, 0.0
  %v3924 = vmax.f32 %v3772, 0.0
  %v3925 = vmax.f32 %v3773, 0.0
  %v3926 = vmax.f32 %v3774, 0.0
  %v3927 = vmax.f32 %v3775, 0.0
  %v3928 = vmax.f32 %v3776, 0.0
  %v3929 = vmax.f32 %v3777, 0.0
  %v3930 = vmax.f32 %v3778, 0.0
  %v3931 = vmax.f32 %v3779, 0.0
  %v3932 = vmax.f32 %v3780, 0.0
  %v3933 = vmax.f32 %v3781, 0.0
  %v3934 = vmax.f32 %v3782, 0.0
  %v3935 = vmax.f32 %v3783, 0.0
  %v3936 = vmax.f32 %v3784, 0.0
  %v3937 = vmax.f32 %v3785, 0.0
  %v3938 = vmax.f32 %v3786, 0.0
  %v3939 = vmax.f32 %v3787, 0.0
  %v3940 = vmax.f32 %v3788, 0.0
  %v3941 = vmax.f32 %v3789, 0.0
  %v3942 = vmax.f32 %v3790, 0.0
  %v3943 = vmax.f32 %v3791, 0.0
  %v3944 = vmax.f32 %v3792, 0.0
  %v3945 = vmax.f32 %v3793, 0.0
  %v3946 = vmax.f32 %v3794, 0.0
  %v3947 = vmax.f32 %v3795, 0.0
  %v3948 = vmax.f32 %v3796, 0.0
  %v3949 = vmax.f32 %v3797, 0.0
  %v3950 = vmax.f32 %v3798, 0.0
  %v3951 = vmax.f32 %v3799, 0.0
  %v3952 = vmax.f32 %v3800, 0.0
  %v3953 = vmax.f32 %v3801, 0.0
  %v3954 = vmax.f32 %v3802, 0.0
  %v3955 = vmax.f32 %v3803, 0.0
  %v3956 = vmax.f32 %v3804, 0.0
  %v3957 = vmax.f32 %v3805, 0.0
  %v3958 = vmax.f32 %v3806, 0.0
  %v3959 = vmax.f32 %v3807, 0.0
  %v3960 = vmax.f32 %v3808, 0.0
  %v3961 = vmax.f32 %v3809, 0.0
  %v3962 = vmax.f32 %v3810, 0.0
  %v3963 = vmax.f32 %v3811, 0.0
  %v3964 = vmax.f32 %v3812, 0.0
  %v3965 = vmax.f32 %v3813, 0.0
  %v3966 = vmax.f32 %v3814, 0.0
  %v3967 = vmax.f32 %v3815, 0.0
  %v3968 = vmax.f32 %v3816, 0.0
  %v3969 = vmax.f32 %v3817, 0.0
  %v3970 = vmax.f32 %v3818, 0.0
  %v3971 = vmax.f32 %v3819, 0.0
  %v3972 = vmax.f32 %v3820, 0.0
  %v3973 = vmax.f32 %v3821, 0.0
  %v3974 = vmax.f32 %v3822, 0.0
  %v3975 = vmax.f32 %v3823, 0.0
  %v3976 = vmax.f32 %v3824, 0.0
  %v3977 = vmax.f32 %v3825, 0.0
  %v3978 = vmax.f32 %v3826, 0.0
  %v3979 = vmax.f32 %v3827, 0.0
  %v3980 = vmax.f32 %v3828, 0.0
  %v3981 = vmax.f32 %v3829, 0.0
  %v3982 = vmax.f32 %v3830, 0.0
  %v3983 = vmax.f32 %v3831, 0.0
  %v3984 = vmax.f32 %v3832, 0.0
  %v3985 = vmax.f32 %v3833, 0.0
  %v3986 = vmax.f32 %v3834, 0.0
  %v3987 = vmax.f32 %v3835, 0.0
  %v3988 = vmax.f32 %v3836, 0.0
  %v3989 = vmax.f32 %v3837, 0.0
  %v3990 = vmax.f32 %v3838, 0.0
  %v3991 = vmax.f32 %v3839, 0.0
  %v3992 = vmax.f32 %v3840, 0.0
  %v3993 = vmax.f32 %v3841, 0.0
  %v3994 = vmax.f32 %v3842, 0.0
  %v3995 = vmax.f32 %v3843, 0.0
  %v3996 = vmax.f32 %v3844, 0.0
  %v3997 = vmax.f32 %v3845, 0.0
  %v3998 = vmax.f32 %v3846, 0.0
  %v3999 = vmax.f32 %v3847, 0.0
  %v4000 = vpack.c.bf16 %v3849, %v3848
  %v4001 = vpack.c.bf16 %v3851, %v3850
  %v4002 = vpack.c.bf16 %v3853, %v3852
  %v4003 = vpack.c.bf16 %v3855, %v3854
  %v4004 = vpack.c.bf16 %v3857, %v3856
  %v4005 = vpack.c.bf16 %v3859, %v3858
  %v4006 = vpack.c.bf16 %v3861, %v3860
  %v4007 = vpack.c.bf16 %v3863, %v3862
  %v4008 = vpack.c.bf16 %v3865, %v3864
  %v4009 = vpack.c.bf16 %v3867, %v3866
  %v4010 = vpack.c.bf16 %v3869, %v3868
  %v4011 = vpack.c.bf16 %v3871, %v3870
  %v4012 = vpack.c.bf16 %v3873, %v3872
  %v4013 = vpack.c.bf16 %v3875, %v3874
  %v4014 = vpack.c.bf16 %v3877, %v3876
  %v4015 = vpack.c.bf16 %v3879, %v3878
  %v4016 = vpack.c.bf16 %v3881, %v3880
  %v4017 = vpack.c.bf16 %v3883, %v3882
  %v4018 = vpack.c.bf16 %v3885, %v3884
  %v4019 = vpack.c.bf16 %v3887, %v3886
  %v4020 = vpack.c.bf16 %v3889, %v3888
  %v4021 = vpack.c.bf16 %v3891, %v3890
  %v4022 = vpack.c.bf16 %v3893, %v3892
  %v4023 = vpack.c.bf16 %v3895, %v3894
  %v4024 = vpack.c.bf16 %v3897, %v3896
  %v4025 = vpack.c.bf16 %v3899, %v3898
  %v4026 = vpack.c.bf16 %v3901, %v3900
  %v4027 = vpack.c.bf16 %v3903, %v3902
  %v4028 = vpack.c.bf16 %v3905, %v3904
  %v4029 = vpack.c.bf16 %v3907, %v3906
  %v4030 = vpack.c.bf16 %v3909, %v3908
  %v4031 = vpack.c.bf16 %v3911, %v3910
  %v4032 = vpack.c.bf16 %v3913, %v3912
  %v4033 = vpack.c.bf16 %v3915, %v3914
  %v4034 = vpack.c.bf16 %v3917, %v3916
  %v4035 = vpack.c.bf16 %v3919, %v3918
  %v4036 = vpack.c.bf16 %v3921, %v3920
  %v4037 = vpack.c.bf16 %v3923, %v3922
  %v4038 = vpack.c.bf16 %v3925, %v3924
  %v4039 = vpack.c.bf16 %v3927, %v3926
  %v4040 = vpack.c.bf16 %v3929, %v3928
  %v4041 = vpack.c.bf16 %v3931, %v3930
  %v4042 = vpack.c.bf16 %v3933, %v3932
  %v4043 = vpack.c.bf16 %v3935, %v3934
  %v4044 = vpack.c.bf16 %v3937, %v3936
  %v4045 = vpack.c.bf16 %v3939, %v3938
  %v4046 = vpack.c.bf16 %v3941, %v3940
  %v4047 = vpack.c.bf16 %v3943, %v3942
  %v4048 = vpack.c.bf16 %v3945, %v3944
  %v4049 = vpack.c.bf16 %v3947, %v3946
  %v4050 = vpack.c.bf16 %v3949, %v3948
  %v4051 = vpack.c.bf16 %v3951, %v3950
  %v4052 = vpack.c.bf16 %v3953, %v3952
  %v4053 = vpack.c.bf16 %v3955, %v3954
  %v4054 = vpack.c.bf16 %v3957, %v3956
  %v4055 = vpack.c.bf16 %v3959, %v3958
  %v4056 = vpack.c.bf16 %v3961, %v3960
  %v4057 = vpack.c.bf16 %v3963, %v3962
  %v4058 = vpack.c.bf16 %v3965, %v3964
  %v4059 = vpack.c.bf16 %v3967, %v3966
  %v4060 = vpack.c.bf16 %v3969, %v3968
  %v4061 = vpack.c.bf16 %v3971, %v3970
  %v4062 = vpack.c.bf16 %v3973, %v3972
  %v4063 = vpack.c.bf16 %v3975, %v3974
  %v4064 = vpack.c.bf16 %v3977, %v3976
  %v4065 = vpack.c.bf16 %v3979, %v3978
  %v4066 = vpack.c.bf16 %v3981, %v3980
  %v4067 = vpack.c.bf16 %v3983, %v3982
  %v4068 = vpack.c.bf16 %v3985, %v3984
  %v4069 = vpack.c.bf16 %v3987, %v3986
  %v4070 = vpack.c.bf16 %v3989, %v3988
  %v4071 = vpack.c.bf16 %v3991, %v3990
  %v4072 = vpack.c.bf16 %v3993, %v3992
  %v4073 = vpack.c.bf16 %v3995, %v3994
  %v4074 = vpack.c.bf16 %v3997, %v3996
  %v4075 = vpack.c.bf16 %v3999, %v3998
  %v4076 = vunpack.c.l.bf16 %v4000
  %v4077 = vunpack.c.h.bf16 %v4000
  %v4078 = vunpack.c.l.bf16 %v4001
  %v4079 = vunpack.c.h.bf16 %v4001
  %v4080 = vunpack.c.l.bf16 %v4002
  %v4081 = vunpack.c.h.bf16 %v4002
  %v4082 = vunpack.c.l.bf16 %v4003
  %v4083 = vunpack.c.h.bf16 %v4003
  %v4084 = vunpack.c.l.bf16 %v4004
  %v4085 = vunpack.c.h.bf16 %v4004
  %v4086 = vunpack.c.l.bf16 %v4005
  %v4087 = vunpack.c.h.bf16 %v4005
  %v4088 = vunpack.c.l.bf16 %v4006
  %v4089 = vunpack.c.h.bf16 %v4006
  %v4090 = vunpack.c.l.bf16 %v4007
  %v4091 = vunpack.c.h.bf16 %v4007
  %v4092 = vunpack.c.l.bf16 %v4008
  %v4093 = vunpack.c.h.bf16 %v4008
  %v4094 = vunpack.c.l.bf16 %v4009
  %v4095 = vunpack.c.h.bf16 %v4009
  %v4096 = vunpack.c.l.bf16 %v4010
  %v4097 = vunpack.c.h.bf16 %v4010
  %v4098 = vunpack.c.l.bf16 %v4011
  %v4099 = vunpack.c.h.bf16 %v4011
  %v4100 = vunpack.c.l.bf16 %v4012
  %v4101 = vunpack.c.h.bf16 %v4012
  %v4102 = vunpack.c.l.bf16 %v4013
  %v4103 = vunpack.c.h.bf16 %v4013
  %v4104 = vunpack.c.l.bf16 %v4014
  %v4105 = vunpack.c.h.bf16 %v4014
  %v4106 = vunpack.c.l.bf16 %v4015
  %v4107 = vunpack.c.h.bf16 %v4015
  %v4108 = vunpack.c.l.bf16 %v4016
  %v4109 = vunpack.c.h.bf16 %v4016
  %v4110 = vunpack.c.l.bf16 %v4017
  %v4111 = vunpack.c.h.bf16 %v4017
  %v4112 = vunpack.c.l.bf16 %v4018
  %v4113 = vunpack.c.h.bf16 %v4018
  %v4114 = vunpack.c.l.bf16 %v4019
  %v4115 = vunpack.c.h.bf16 %v4019
  %v4116 = vunpack.c.l.bf16 %v4020
  %v4117 = vunpack.c.h.bf16 %v4020
  %v4118 = vunpack.c.l.bf16 %v4021
  %v4119 = vunpack.c.h.bf16 %v4021
  %v4120 = vunpack.c.l.bf16 %v4022
  %v4121 = vunpack.c.h.bf16 %v4022
  %v4122 = vunpack.c.l.bf16 %v4023
  %v4123 = vunpack.c.h.bf16 %v4023
  %v4124 = vunpack.c.l.bf16 %v4024
  %v4125 = vunpack.c.h.bf16 %v4024
  %v4126 = vunpack.c.l.bf16 %v4025
  %v4127 = vunpack.c.h.bf16 %v4025
  %v4128 = vunpack.c.l.bf16 %v4026
  %v4129 = vunpack.c.h.bf16 %v4026
  %v4130 = vunpack.c.l.bf16 %v4027
  %v4131 = vunpack.c.h.bf16 %v4027
  %v4132 = vunpack.c.l.bf16 %v4028
  %v4133 = vunpack.c.h.bf16 %v4028
  %v4134 = vunpack.c.l.bf16 %v4029
  %v4135 = vunpack.c.h.bf16 %v4029
  %v4136 = vunpack.c.l.bf16 %v4030
  %v4137 = vunpack.c.h.bf16 %v4030
  %v4138 = vunpack.c.l.bf16 %v4031
  %v4139 = vunpack.c.h.bf16 %v4031
  %v4140 = vunpack.c.l.bf16 %v4032
  %v4141 = vunpack.c.h.bf16 %v4032
  %v4142 = vunpack.c.l.bf16 %v4033
  %v4143 = vunpack.c.h.bf16 %v4033
  %v4144 = vunpack.c.l.bf16 %v4034
  %v4145 = vunpack.c.h.bf16 %v4034
  %v4146 = vunpack.c.l.bf16 %v4035
  %v4147 = vunpack.c.h.bf16 %v4035
  %v4148 = vunpack.c.l.bf16 %v4036
  %v4149 = vunpack.c.h.bf16 %v4036
  %v4150 = vunpack.c.l.bf16 %v4037
  %v4151 = vunpack.c.h.bf16 %v4037
  %v4152 = vunpack.c.l.bf16 %v4038
  %v4153 = vunpack.c.h.bf16 %v4038
  %v4154 = vunpack.c.l.bf16 %v4039
  %v4155 = vunpack.c.h.bf16 %v4039
  %v4156 = vunpack.c.l.bf16 %v4040
  %v4157 = vunpack.c.h.bf16 %v4040
  %v4158 = vunpack.c.l.bf16 %v4041
  %v4159 = vunpack.c.h.bf16 %v4041
  %v4160 = vunpack.c.l.bf16 %v4042
  %v4161 = vunpack.c.h.bf16 %v4042
  %v4162 = vunpack.c.l.bf16 %v4043
  %v4163 = vunpack.c.h.bf16 %v4043
  %v4164 = vunpack.c.l.bf16 %v4044
  %v4165 = vunpack.c.h.bf16 %v4044
  %v4166 = vunpack.c.l.bf16 %v4045
  %v4167 = vunpack.c.h.bf16 %v4045
  %v4168 = vunpack.c.l.bf16 %v4046
  %v4169 = vunpack.c.h.bf16 %v4046
  %v4170 = vunpack.c.l.bf16 %v4047
  %v4171 = vunpack.c.h.bf16 %v4047
  %v4172 = vunpack.c.l.bf16 %v4048
  %v4173 = vunpack.c.h.bf16 %v4048
  %v4174 = vunpack.c.l.bf16 %v4049
  %v4175 = vunpack.c.h.bf16 %v4049
  %v4176 = vunpack.c.l.bf16 %v4050
  %v4177 = vunpack.c.h.bf16 %v4050
  %v4178 = vunpack.c.l.bf16 %v4051
  %v4179 = vunpack.c.h.bf16 %v4051
  %v4180 = vunpack.c.l.bf16 %v4052
  %v4181 = vunpack.c.h.bf16 %v4052
  %v4182 = vunpack.c.l.bf16 %v4053
  %v4183 = vunpack.c.h.bf16 %v4053
  %v4184 = vunpack.c.l.bf16 %v4054
  %v4185 = vunpack.c.h.bf16 %v4054
  %v4186 = vunpack.c.l.bf16 %v4055
  %v4187 = vunpack.c.h.bf16 %v4055
  %v4188 = vunpack.c.l.bf16 %v4056
  %v4189 = vunpack.c.h.bf16 %v4056
  %v4190 = vunpack.c.l.bf16 %v4057
  %v4191 = vunpack.c.h.bf16 %v4057
  %v4192 = vunpack.c.l.bf16 %v4058
  %v4193 = vunpack.c.h.bf16 %v4058
  %v4194 = vunpack.c.l.bf16 %v4059
  %v4195 = vunpack.c.h.bf16 %v4059
  %v4196 = vunpack.c.l.bf16 %v4060
  %v4197 = vunpack.c.h.bf16 %v4060
  %v4198 = vunpack.c.l.bf16 %v4061
  %v4199 = vunpack.c.h.bf16 %v4061
  %v4200 = vunpack.c.l.bf16 %v4062
  %v4201 = vunpack.c.h.bf16 %v4062
  %v4202 = vunpack.c.l.bf16 %v4063
  %v4203 = vunpack.c.h.bf16 %v4063
  %v4204 = vunpack.c.l.bf16 %v4064
  %v4205 = vunpack.c.h.bf16 %v4064
  %v4206 = vunpack.c.l.bf16 %v4065
  %v4207 = vunpack.c.h.bf16 %v4065
  %v4208 = vunpack.c.l.bf16 %v4066
  %v4209 = vunpack.c.h.bf16 %v4066
  %v4210 = vunpack.c.l.bf16 %v4067
  %v4211 = vunpack.c.h.bf16 %v4067
  %v4212 = vunpack.c.l.bf16 %v4068
  %v4213 = vunpack.c.h.bf16 %v4068
  %v4214 = vunpack.c.l.bf16 %v4069
  %v4215 = vunpack.c.h.bf16 %v4069
  %v4216 = vunpack.c.l.bf16 %v4070
  %v4217 = vunpack.c.h.bf16 %v4070
  %v4218 = vunpack.c.l.bf16 %v4071
  %v4219 = vunpack.c.h.bf16 %v4071
  %v4220 = vunpack.c.l.bf16 %v4072
  %v4221 = vunpack.c.h.bf16 %v4072
  %v4222 = vunpack.c.l.bf16 %v4073
  %v4223 = vunpack.c.h.bf16 %v4073
  %v4224 = vunpack.c.l.bf16 %v4074
  %v4225 = vunpack.c.h.bf16 %v4074
  %v4226 = vunpack.c.l.bf16 %v4075
  %v4227 = vunpack.c.h.bf16 %v4075
  %v4228 = vsub.f32 %v3848, %v4076
  %v4229 = vsub.f32 %v3849, %v4077
  %v4230 = vsub.f32 %v3850, %v4078
  %v4231 = vsub.f32 %v3851, %v4079
  %v4232 = vsub.f32 %v3852, %v4080
  %v4233 = vsub.f32 %v3853, %v4081
  %v4234 = vsub.f32 %v3854, %v4082
  %v4235 = vsub.f32 %v3855, %v4083
  %v4236 = vsub.f32 %v3856, %v4084
  %v4237 = vsub.f32 %v3857, %v4085
  %v4238 = vsub.f32 %v3858, %v4086
  %v4239 = vsub.f32 %v3859, %v4087
  %v4240 = vsub.f32 %v3860, %v4088
  %v4241 = vsub.f32 %v3861, %v4089
  %v4242 = vsub.f32 %v3862, %v4090
  %v4243 = vsub.f32 %v3863, %v4091
  %v4244 = vsub.f32 %v3864, %v4092
  %v4245 = vsub.f32 %v3865, %v4093
  %v4246 = vsub.f32 %v3866, %v4094
  %v4247 = vsub.f32 %v3867, %v4095
  %v4248 = vsub.f32 %v3868, %v4096
  %v4249 = vsub.f32 %v3869, %v4097
  %v4250 = vsub.f32 %v3870, %v4098
  %v4251 = vsub.f32 %v3871, %v4099
  %v4252 = vsub.f32 %v3872, %v4100
  %v4253 = vsub.f32 %v3873, %v4101
  %v4254 = vsub.f32 %v3874, %v4102
  %v4255 = vsub.f32 %v3875, %v4103
  %v4256 = vsub.f32 %v3876, %v4104
  %v4257 = vsub.f32 %v3877, %v4105
  %v4258 = vsub.f32 %v3878, %v4106
  %v4259 = vsub.f32 %v3879, %v4107
  %v4260 = vsub.f32 %v3880, %v4108
  %v4261 = vsub.f32 %v3881, %v4109
  %v4262 = vsub.f32 %v3882, %v4110
  %v4263 = vsub.f32 %v3883, %v4111
  %v4264 = vsub.f32 %v3884, %v4112
  %v4265 = vsub.f32 %v3885, %v4113
  %v4266 = vsub.f32 %v3886, %v4114
  %v4267 = vsub.f32 %v3887, %v4115
  %v4268 = vsub.f32 %v3888, %v4116
  %v4269 = vsub.f32 %v3889, %v4117
  %v4270 = vsub.f32 %v3890, %v4118
  %v4271 = vsub.f32 %v3891, %v4119
  %v4272 = vsub.f32 %v3892, %v4120
  %v4273 = vsub.f32 %v3893, %v4121
  %v4274 = vsub.f32 %v3894, %v4122
  %v4275 = vsub.f32 %v3895, %v4123
  %v4276 = vsub.f32 %v3896, %v4124
  %v4277 = vsub.f32 %v3897, %v4125
  %v4278 = vsub.f32 %v3898, %v4126
  %v4279 = vsub.f32 %v3899, %v4127
  %v4280 = vsub.f32 %v3900, %v4128
  %v4281 = vsub.f32 %v3901, %v4129
  %v4282 = vsub.f32 %v3902, %v4130
  %v4283 = vsub.f32 %v3903, %v4131
  %v4284 = vsub.f32 %v3904, %v4132
  %v4285 = vsub.f32 %v3905, %v4133
  %v4286 = vsub.f32 %v3906, %v4134
  %v4287 = vsub.f32 %v3907, %v4135
  %v4288 = vsub.f32 %v3908, %v4136
  %v4289 = vsub.f32 %v3909, %v4137
  %v4290 = vsub.f32 %v3910, %v4138
  %v4291 = vsub.f32 %v3911, %v4139
  %v4292 = vsub.f32 %v3912, %v4140
  %v4293 = vsub.f32 %v3913, %v4141
  %v4294 = vsub.f32 %v3914, %v4142
  %v4295 = vsub.f32 %v3915, %v4143
  %v4296 = vsub.f32 %v3916, %v4144
  %v4297 = vsub.f32 %v3917, %v4145
  %v4298 = vsub.f32 %v3918, %v4146
  %v4299 = vsub.f32 %v3919, %v4147
  %v4300 = vsub.f32 %v3920, %v4148
  %v4301 = vsub.f32 %v3921, %v4149
  %v4302 = vsub.f32 %v3922, %v4150
  %v4303 = vsub.f32 %v3923, %v4151
  %v4304 = vsub.f32 %v3924, %v4152
  %v4305 = vsub.f32 %v3925, %v4153
  %v4306 = vsub.f32 %v3926, %v4154
  %v4307 = vsub.f32 %v3927, %v4155
  %v4308 = vsub.f32 %v3928, %v4156
  %v4309 = vsub.f32 %v3929, %v4157
  %v4310 = vsub.f32 %v3930, %v4158
  %v4311 = vsub.f32 %v3931, %v4159
  %v4312 = vsub.f32 %v3932, %v4160
  %v4313 = vsub.f32 %v3933, %v4161
  %v4314 = vsub.f32 %v3934, %v4162
  %v4315 = vsub.f32 %v3935, %v4163
  %v4316 = vsub.f32 %v3936, %v4164
  %v4317 = vsub.f32 %v3937, %v4165
  %v4318 = vsub.f32 %v3938, %v4166
  %v4319 = vsub.f32 %v3939, %v4167
  %v4320 = vsub.f32 %v3940, %v4168
  %v4321 = vsub.f32 %v3941, %v4169
  %v4322 = vsub.f32 %v3942, %v4170
  %v4323 = vsub.f32 %v3943, %v4171
  %v4324 = vsub.f32 %v3944, %v4172
  %v4325 = vsub.f32 %v3945, %v4173
  %v4326 = vsub.f32 %v3946, %v4174
  %v4327 = vsub.f32 %v3947, %v4175
  %v4328 = vsub.f32 %v3948, %v4176
  %v4329 = vsub.f32 %v3949, %v4177
  %v4330 = vsub.f32 %v3950, %v4178
  %v4331 = vsub.f32 %v3951, %v4179
  %v4332 = vsub.f32 %v3952, %v4180
  %v4333 = vsub.f32 %v3953, %v4181
  %v4334 = vsub.f32 %v3954, %v4182
  %v4335 = vsub.f32 %v3955, %v4183
  %v4336 = vsub.f32 %v3956, %v4184
  %v4337 = vsub.f32 %v3957, %v4185
  %v4338 = vsub.f32 %v3958, %v4186
  %v4339 = vsub.f32 %v3959, %v4187
  %v4340 = vsub.f32 %v3960, %v4188
  %v4341 = vsub.f32 %v3961, %v4189
  %v4342 = vsub.f32 %v3962, %v4190
  %v4343 = vsub.f32 %v3963, %v4191
  %v4344 = vsub.f32 %v3964, %v4192
  %v4345 = vsub.f32 %v3965, %v4193
  %v4346 = vsub.f32 %v3966, %v4194
  %v4347 = vsub.f32 %v3967, %v4195
  %v4348 = vsub.f32 %v3968, %v4196
  %v4349 = vsub.f32 %v3969, %v4197
  %v4350 = vsub.f32 %v3970, %v4198
  %v4351 = vsub.f32 %v3971, %v4199
  %v4352 = vsub.f32 %v3972, %v4200
  %v4353 = vsub.f32 %v3973, %v4201
  %v4354 = vsub.f32 %v3974, %v4202
  %v4355 = vsub.f32 %v3975, %v4203
  %v4356 = vsub.f32 %v3976, %v4204
  %v4357 = vsub.f32 %v3977, %v4205
  %v4358 = vsub.f32 %v3978, %v4206
  %v4359 = vsub.f32 %v3979, %v4207
  %v4360 = vsub.f32 %v3980, %v4208
  %v4361 = vsub.f32 %v3981, %v4209
  %v4362 = vsub.f32 %v3982, %v4210
  %v4363 = vsub.f32 %v3983, %v4211
  %v4364 = vsub.f32 %v3984, %v4212
  %v4365 = vsub.f32 %v3985, %v4213
  %v4366 = vsub.f32 %v3986, %v4214
  %v4367 = vsub.f32 %v3987, %v4215
  %v4368 = vsub.f32 %v3988, %v4216
  %v4369 = vsub.f32 %v3989, %v4217
  %v4370 = vsub.f32 %v3990, %v4218
  %v4371 = vsub.f32 %v3991, %v4219
  %v4372 = vsub.f32 %v3992, %v4220
  %v4373 = vsub.f32 %v3993, %v4221
  %v4374 = vsub.f32 %v3994, %v4222
  %v4375 = vsub.f32 %v3995, %v4223
  %v4376 = vsub.f32 %v3996, %v4224
  %v4377 = vsub.f32 %v3997, %v4225
  %v4378 = vsub.f32 %v3998, %v4226
  %v4379 = vsub.f32 %v3999, %v4227
  %v4380 = vpack.c.bf16 %v4230, %v4228
  %v4381 = vpack.c.bf16 %v4231, %v4229
  %v4382 = vpack.c.bf16 %v4234, %v4232
  %v4383 = vpack.c.bf16 %v4235, %v4233
  %v4384 = vpack.c.bf16 %v4238, %v4236
  %v4385 = vpack.c.bf16 %v4239, %v4237
  %v4386 = vpack.c.bf16 %v4242, %v4240
  %v4387 = vpack.c.bf16 %v4243, %v4241
  %v4388 = vpack.c.bf16 %v4246, %v4244
  %v4389 = vpack.c.bf16 %v4247, %v4245
  %v4390 = vpack.c.bf16 %v4250, %v4248
  %v4391 = vpack.c.bf16 %v4251, %v4249
  %v4392 = vpack.c.bf16 %v4254, %v4252
  %v4393 = vpack.c.bf16 %v4255, %v4253
  %v4394 = vpack.c.bf16 %v4258, %v4256
  %v4395 = vpack.c.bf16 %v4259, %v4257
  %v4396 = vpack.c.bf16 %v4262, %v4260
  %v4397 = vpack.c.bf16 %v4263, %v4261
  %v4398 = vpack.c.bf16 %v4266, %v4264
  %v4399 = vpack.c.bf16 %v4267, %v4265
  %v4400 = vpack.c.bf16 %v4270, %v4268
  %v4401 = vpack.c.bf16 %v4271, %v4269
  %v4402 = vpack.c.bf16 %v4274, %v4272
  %v4403 = vpack.c.bf16 %v4275, %v4273
  %v4404 = vpack.c.bf16 %v4278, %v4276
  %v4405 = vpack.c.bf16 %v4279, %v4277
  %v4406 = vpack.c.bf16 %v4282, %v4280
  %v4407 = vpack.c.bf16 %v4283, %v4281
  %v4408 = vpack.c.bf16 %v4286, %v4284
  %v4409 = vpack.c.bf16 %v4287, %v4285
  %v4410 = vpack.c.bf16 %v4290, %v4288
  %v4411 = vpack.c.bf16 %v4291, %v4289
  %v4412 = vpack.c.bf16 %v4294, %v4292
  %v4413 = vpack.c.bf16 %v4295, %v4293
  %v4414 = vpack.c.bf16 %v4298, %v4296
  %v4415 = vpack.c.bf16 %v4299, %v4297
  %v4416 = vpack.c.bf16 %v4302, %v4300
  %v4417 = vpack.c.bf16 %v4303, %v4301
  %v4418 = vpack.c.bf16 %v4306, %v4304
  %v4419 = vpack.c.bf16 %v4307, %v4305
  %v4420 = vpack.c.bf16 %v4310, %v4308
  %v4421 = vpack.c.bf16 %v4311, %v4309
  %v4422 = vpack.c.bf16 %v4314, %v4312
  %v4423 = vpack.c.bf16 %v4315, %v4313
  %v4424 = vpack.c.bf16 %v4318, %v4316
  %v4425 = vpack.c.bf16 %v4319, %v4317
  %v4426 = vpack.c.bf16 %v4322, %v4320
  %v4427 = vpack.c.bf16 %v4323, %v4321
  %v4428 = vpack.c.bf16 %v4326, %v4324
  %v4429 = vpack.c.bf16 %v4327, %v4325
  %v4430 = vpack.c.bf16 %v4330, %v4328
  %v4431 = vpack.c.bf16 %v4331, %v4329
  %v4432 = vpack.c.bf16 %v4334, %v4332
  %v4433 = vpack.c.bf16 %v4335, %v4333
  %v4434 = vpack.c.bf16 %v4338, %v4336
  %v4435 = vpack.c.bf16 %v4339, %v4337
  %v4436 = vpack.c.bf16 %v4342, %v4340
  %v4437 = vpack.c.bf16 %v4343, %v4341
  %v4438 = vpack.c.bf16 %v4346, %v4344
  %v4439 = vpack.c.bf16 %v4347, %v4345
  %v4440 = vpack.c.bf16 %v4350, %v4348
  %v4441 = vpack.c.bf16 %v4351, %v4349
  %v4442 = vpack.c.bf16 %v4354, %v4352
  %v4443 = vpack.c.bf16 %v4355, %v4353
  %v4444 = vpack.c.bf16 %v4358, %v4356
  %v4445 = vpack.c.bf16 %v4359, %v4357
  %v4446 = vpack.c.bf16 %v4362, %v4360
  %v4447 = vpack.c.bf16 %v4363, %v4361
  %v4448 = vpack.c.bf16 %v4366, %v4364
  %v4449 = vpack.c.bf16 %v4367, %v4365
  %v4450 = vpack.c.bf16 %v4370, %v4368
  %v4451 = vpack.c.bf16 %v4371, %v4369
  %v4452 = vpack.c.bf16 %v4374, %v4372
  %v4453 = vpack.c.bf16 %v4375, %v4373
  %v4454 = vpack.c.bf16 %v4378, %v4376
  %v4455 = vpack.c.bf16 %v4379, %v4377
  %v4504 = vunpack.c.l.b16 %v2736
  %v4505 = vunpack.c.h.b16 %v2736
  %v4506 = vunpack.c.l.b16 %v2737
  %v4507 = vunpack.c.h.b16 %v2737
  %v4508 = vunpack.c.l.b16 %v2738
  %v4509 = vunpack.c.l.b16 %v2739
  %v4510 = vunpack.c.h.b16 %v2739
  %v4511 = vunpack.c.l.b16 %v2740
  %v4512 = vunpack.c.h.b16 %v2740
  %v4513 = vunpack.c.l.b16 %v2741
  %v4514 = vunpack.c.l.b16 %v2742
  %v4515 = vunpack.c.h.b16 %v2742
  %v4516 = vunpack.c.l.b16 %v2743
  %v4517 = vunpack.c.h.b16 %v2743
  %v4518 = vunpack.c.l.b16 %v2744
  %v4519 = vunpack.c.l.b16 %v2745
  %v4520 = vunpack.c.h.b16 %v2745
  %v4521 = vunpack.c.l.b16 %v2746
  %v4522 = vunpack.c.h.b16 %v2746
  %v4523 = vunpack.c.l.b16 %v2747
  %v4524 = vunpack.c.l.b16 %v2748
  %v4525 = vunpack.c.h.b16 %v2748
  %v4526 = vunpack.c.l.b16 %v2749
  %v4527 = vunpack.c.h.b16 %v2749
  %v4528 = vunpack.c.l.b16 %v2750
  %v4529 = vunpack.c.l.b16 %v2751
  %v4530 = vunpack.c.h.b16 %v2751
  %v4531 = vunpack.c.l.b16 %v2752
  %v4532 = vunpack.c.h.b16 %v2752
  %v4533 = vunpack.c.l.b16 %v2753
  %v4534 = vunpack.c.l.b16 %v2754
  %v4535 = vunpack.c.h.b16 %v2754
  %v4536 = vunpack.c.l.b16 %v2755
  %v4537 = vunpack.c.h.b16 %v2755
  %v4538 = vunpack.c.l.b16 %v2756
  %v4539 = vunpack.c.l.b16 %v2757
  %v4540 = vunpack.c.h.b16 %v2757
  %v4541 = vunpack.c.l.b16 %v2758
  %v4542 = vunpack.c.h.b16 %v2758
  %v4543 = vunpack.c.l.b16 %v2759
  %v4544 = vunpack.c.l.b16 %v2760
  %v4545 = vunpack.c.h.b16 %v2760
  %v4546 = vunpack.c.l.b16 %v2761
  %v4547 = vunpack.c.h.b16 %v2761
  %v4548 = vunpack.c.l.b16 %v2762
  %v4549 = vunpack.c.l.b16 %v2763
  %v4550 = vunpack.c.h.b16 %v2763
  %v4551 = vunpack.c.l.b16 %v2764
  %v4552 = vunpack.c.h.b16 %v2764
  %v4553 = vunpack.c.l.b16 %v2765
  %v4554 = vunpack.c.l.b16 %v2766
  %v4555 = vunpack.c.h.b16 %v2766
  %v4556 = vunpack.c.l.b16 %v2767
  %v4557 = vunpack.c.h.b16 %v2767
  %v4558 = vunpack.c.l.b16 %v2768
  %v4559 = vunpack.c.l.b16 %v2769
  %v4560 = vunpack.c.h.b16 %v2769
  %v4561 = vunpack.c.l.b16 %v2770
  %v4562 = vunpack.c.h.b16 %v2770
  %v4563 = vunpack.c.l.b16 %v2771
  %v4564 = vunpack.c.l.b16 %v2772
  %v4565 = vunpack.c.h.b16 %v2772
  %v4566 = vunpack.c.l.b16 %v2773
  %v4567 = vunpack.c.h.b16 %v2773
  %v4568 = vunpack.c.l.b16 %v2774
  %v4569 = vunpack.c.l.b16 %v2775
  %v4570 = vunpack.c.h.b16 %v2775
  %v4571 = vunpack.c.l.b16 %v2776
  %v4572 = vunpack.c.h.b16 %v2776
  %v4573 = vunpack.c.l.b16 %v2777
  %v4574 = vunpack.c.l.b16 %v2778
  %v4575 = vunpack.c.h.b16 %v2778
  %v4576 = vunpack.c.l.b16 %v2779
  %v4577 = vunpack.c.h.b16 %v2779
  %v4578 = vunpack.c.l.b16 %v2780
  %v4579 = vunpack.c.l.b16 %v2781
  %v4580 = vunpack.c.h.b16 %v2781
  %v4581 = vunpack.c.l.b16 %v2782
  %v4582 = vunpack.c.h.b16 %v2782
  %v4583 = vunpack.c.l.b16 %v2783
  %v4584 = vpack.c.b16 %v4509, %v4504
  %v4585 = vpack.c.b16 %v4510, %v4505
  %v4586 = vpack.c.b16 %v4511, %v4506
  %v4587 = vpack.c.b16 %v4512, %v4507
  %v4588 = vpack.c.b16 %v4513, %v4508
  %v4589 = vpack.c.b16 %v4519, %v4514
  %v4590 = vpack.c.b16 %v4520, %v4515
  %v4591 = vpack.c.b16 %v4521, %v4516
  %v4592 = vpack.c.b16 %v4522, %v4517
  %v4593 = vpack.c.b16 %v4523, %v4518
  %v4594 = vpack.c.b16 %v4529, %v4524
  %v4595 = vpack.c.b16 %v4530, %v4525
  %v4596 = vpack.c.b16 %v4531, %v4526
  %v4597 = vpack.c.b16 %v4532, %v4527
  %v4598 = vpack.c.b16 %v4533, %v4528
  %v4599 = vpack.c.b16 %v4539, %v4534
  %v4600 = vpack.c.b16 %v4540, %v4535
  %v4601 = vpack.c.b16 %v4541, %v4536
  %v4602 = vpack.c.b16 %v4542, %v4537
  %v4603 = vpack.c.b16 %v4543, %v4538
  %v4604 = vpack.c.b16 %v4549, %v4544
  %v4605 = vpack.c.b16 %v4550, %v4545
  %v4606 = vpack.c.b16 %v4551, %v4546
  %v4607 = vpack.c.b16 %v4552, %v4547
  %v4608 = vpack.c.b16 %v4553, %v4548
  %v4609 = vpack.c.b16 %v4559, %v4554
  %v4610 = vpack.c.b16 %v4560, %v4555
  %v4611 = vpack.c.b16 %v4561, %v4556
  %v4612 = vpack.c.b16 %v4562, %v4557
  %v4613 = vpack.c.b16 %v4563, %v4558
  %v4614 = vpack.c.b16 %v4569, %v4564
  %v4615 = vpack.c.b16 %v4570, %v4565
  %v4616 = vpack.c.b16 %v4571, %v4566
  %v4617 = vpack.c.b16 %v4572, %v4567
  %v4618 = vpack.c.b16 %v4573, %v4568
  %v4619 = vpack.c.b16 %v4579, %v4574
  %v4620 = vpack.c.b16 %v4580, %v4575
  %v4621 = vpack.c.b16 %v4581, %v4576
  %v4622 = vpack.c.b16 %v4582, %v4577
  %v4623 = vpack.c.b16 %v4583, %v4578
  %v4732 = vunpack.c.l.b16 %v4000
  %v4733 = vunpack.c.h.b16 %v4000
  %v4734 = vunpack.c.l.b16 %v4001
  %v4735 = vunpack.c.h.b16 %v4001
  %v4736 = vunpack.c.l.b16 %v4002
  %v4737 = vunpack.c.h.b16 %v4002
  %v4738 = vunpack.c.l.b16 %v4003
  %v4739 = vunpack.c.h.b16 %v4003
  %v4740 = vunpack.c.l.b16 %v4004
  %v4741 = vunpack.c.h.b16 %v4004
  %v4742 = vunpack.c.l.b16 %v4005
  %v4743 = vunpack.c.h.b16 %v4005
  %v4744 = vunpack.c.l.b16 %v4006
  %v4745 = vunpack.c.h.b16 %v4006
  %v4746 = vunpack.c.l.b16 %v4007
  %v4747 = vunpack.c.h.b16 %v4007
  %v4748 = vunpack.c.l.b16 %v4008
  %v4749 = vunpack.c.h.b16 %v4008
  %v4750 = vunpack.c.l.b16 %v4009
  %v4751 = vunpack.c.h.b16 %v4009
  %v4752 = vunpack.c.l.b16 %v4010
  %v4753 = vunpack.c.h.b16 %v4010
  %v4754 = vunpack.c.l.b16 %v4011
  %v4755 = vunpack.c.h.b16 %v4011
  %v4756 = vunpack.c.l.b16 %v4012
  %v4757 = vunpack.c.h.b16 %v4012
  %v4758 = vunpack.c.l.b16 %v4013
  %v4759 = vunpack.c.h.b16 %v4013
  %v4760 = vunpack.c.l.b16 %v4014
  %v4761 = vunpack.c.h.b16 %v4014
  %v4762 = vunpack.c.l.b16 %v4015
  %v4763 = vunpack.c.h.b16 %v4015
  %v4764 = vunpack.c.l.b16 %v4016
  %v4765 = vunpack.c.h.b16 %v4016
  %v4766 = vunpack.c.l.b16 %v4017
  %v4767 = vunpack.c.h.b16 %v4017
  %v4768 = vunpack.c.l.b16 %v4018
  %v4769 = vunpack.c.h.b16 %v4018
  %v4770 = vunpack.c.l.b16 %v4019
  %v4771 = vunpack.c.h.b16 %v4019
  %v4772 = vunpack.c.l.b16 %v4020
  %v4773 = vunpack.c.h.b16 %v4020
  %v4774 = vunpack.c.l.b16 %v4021
  %v4775 = vunpack.c.h.b16 %v4021
  %v4776 = vunpack.c.l.b16 %v4022
  %v4777 = vunpack.c.h.b16 %v4022
  %v4778 = vunpack.c.l.b16 %v4023
  %v4779 = vunpack.c.h.b16 %v4023
  %v4780 = vunpack.c.l.b16 %v4024
  %v4781 = vunpack.c.h.b16 %v4024
  %v4782 = vunpack.c.l.b16 %v4025
  %v4783 = vunpack.c.h.b16 %v4025
  %v4784 = vunpack.c.l.b16 %v4026
  %v4785 = vunpack.c.h.b16 %v4026
  %v4786 = vunpack.c.l.b16 %v4027
  %v4787 = vunpack.c.h.b16 %v4027
  %v4788 = vunpack.c.l.b16 %v4028
  %v4789 = vunpack.c.h.b16 %v4028
  %v4790 = vunpack.c.l.b16 %v4029
  %v4791 = vunpack.c.h.b16 %v4029
  %v4792 = vunpack.c.l.b16 %v4030
  %v4793 = vunpack.c.h.b16 %v4030
  %v4794 = vunpack.c.l.b16 %v4031
  %v4795 = vunpack.c.h.b16 %v4031
  %v4796 = vunpack.c.l.b16 %v4032
  %v4797 = vunpack.c.h.b16 %v4032
  %v4798 = vunpack.c.l.b16 %v4033
  %v4799 = vunpack.c.h.b16 %v4033
  %v4800 = vunpack.c.l.b16 %v4034
  %v4801 = vunpack.c.h.b16 %v4034
  %v4802 = vunpack.c.l.b16 %v4035
  %v4803 = vunpack.c.h.b16 %v4035
  %v4804 = vunpack.c.l.b16 %v4036
  %v4805 = vunpack.c.h.b16 %v4036
  %v4806 = vunpack.c.l.b16 %v4037
  %v4807 = vunpack.c.h.b16 %v4037
  %v4808 = vunpack.c.l.b16 %v4038
  %v4809 = vunpack.c.h.b16 %v4038
  %v4810 = vunpack.c.l.b16 %v4039
  %v4811 = vunpack.c.h.b16 %v4039
  %v4812 = vunpack.c.l.b16 %v4040
  %v4813 = vunpack.c.h.b16 %v4040
  %v4814 = vunpack.c.l.b16 %v4041
  %v4815 = vunpack.c.h.b16 %v4041
  %v4816 = vunpack.c.l.b16 %v4042
  %v4817 = vunpack.c.h.b16 %v4042
  %v4818 = vunpack.c.l.b16 %v4043
  %v4819 = vunpack.c.h.b16 %v4043
  %v4820 = vunpack.c.l.b16 %v4044
  %v4821 = vunpack.c.h.b16 %v4044
  %v4822 = vunpack.c.l.b16 %v4045
  %v4823 = vunpack.c.h.b16 %v4045
  %v4824 = vunpack.c.l.b16 %v4046
  %v4825 = vunpack.c.h.b16 %v4046
  %v4826 = vunpack.c.l.b16 %v4047
  %v4827 = vunpack.c.h.b16 %v4047
  %v4828 = vunpack.c.l.b16 %v4048
  %v4829 = vunpack.c.h.b16 %v4048
  %v4830 = vunpack.c.l.b16 %v4049
  %v4831 = vunpack.c.h.b16 %v4049
  %v4832 = vunpack.c.l.b16 %v4050
  %v4833 = vunpack.c.h.b16 %v4050
  %v4834 = vunpack.c.l.b16 %v4051
  %v4835 = vunpack.c.h.b16 %v4051
  %v4836 = vunpack.c.l.b16 %v4052
  %v4837 = vunpack.c.h.b16 %v4052
  %v4838 = vunpack.c.l.b16 %v4053
  %v4839 = vunpack.c.h.b16 %v4053
  %v4840 = vunpack.c.l.b16 %v4054
  %v4841 = vunpack.c.h.b16 %v4054
  %v4842 = vunpack.c.l.b16 %v4055
  %v4843 = vunpack.c.h.b16 %v4055
  %v4844 = vunpack.c.l.b16 %v4056
  %v4845 = vunpack.c.h.b16 %v4056
  %v4846 = vunpack.c.l.b16 %v4057
  %v4847 = vunpack.c.h.b16 %v4057
  %v4848 = vunpack.c.l.b16 %v4058
  %v4849 = vunpack.c.h.b16 %v4058
  %v4850 = vunpack.c.l.b16 %v4059
  %v4851 = vunpack.c.h.b16 %v4059
  %v4852 = vunpack.c.l.b16 %v4060
  %v4853 = vunpack.c.h.b16 %v4060
  %v4854 = vunpack.c.l.b16 %v4061
  %v4855 = vunpack.c.h.b16 %v4061
  %v4856 = vunpack.c.l.b16 %v4062
  %v4857 = vunpack.c.h.b16 %v4062
  %v4858 = vunpack.c.l.b16 %v4063
  %v4859 = vunpack.c.h.b16 %v4063
  %v4860 = vunpack.c.l.b16 %v4064
  %v4861 = vunpack.c.h.b16 %v4064
  %v4862 = vunpack.c.l.b16 %v4065
  %v4863 = vunpack.c.h.b16 %v4065
  %v4864 = vunpack.c.l.b16 %v4066
  %v4865 = vunpack.c.h.b16 %v4066
  %v4866 = vunpack.c.l.b16 %v4067
  %v4867 = vunpack.c.h.b16 %v4067
  %v4868 = vunpack.c.l.b16 %v4068
  %v4869 = vunpack.c.h.b16 %v4068
  %v4870 = vunpack.c.l.b16 %v4069
  %v4871 = vunpack.c.h.b16 %v4069
  %v4872 = vunpack.c.l.b16 %v4070
  %v4873 = vunpack.c.h.b16 %v4070
  %v4874 = vunpack.c.l.b16 %v4071
  %v4875 = vunpack.c.h.b16 %v4071
  %v4876 = vunpack.c.l.b16 %v4072
  %v4877 = vunpack.c.h.b16 %v4072
  %v4878 = vunpack.c.l.b16 %v4073
  %v4879 = vunpack.c.h.b16 %v4073
  %v4880 = vunpack.c.l.b16 %v4074
  %v4881 = vunpack.c.h.b16 %v4074
  %v4882 = vunpack.c.l.b16 %v4075
  %v4883 = vunpack.c.h.b16 %v4075
  %v4884 = vpack.c.b16 %v4734, %v4732
  %v4885 = vpack.c.b16 %v4735, %v4733
  %v4886 = vpack.c.b16 %v4738, %v4736
  %v4887 = vpack.c.b16 %v4739, %v4737
  %v4888 = vpack.c.b16 %v4742, %v4740
  %v4889 = vpack.c.b16 %v4743, %v4741
  %v4890 = vpack.c.b16 %v4746, %v4744
  %v4891 = vpack.c.b16 %v4747, %v4745
  %v4892 = vpack.c.b16 %v4750, %v4748
  %v4893 = vpack.c.b16 %v4751, %v4749
  %v4894 = vpack.c.b16 %v4754, %v4752
  %v4895 = vpack.c.b16 %v4755, %v4753
  %v4896 = vpack.c.b16 %v4758, %v4756
  %v4897 = vpack.c.b16 %v4759, %v4757
  %v4898 = vpack.c.b16 %v4762, %v4760
  %v4899 = vpack.c.b16 %v4763, %v4761
  %v4900 = vpack.c.b16 %v4766, %v4764
  %v4901 = vpack.c.b16 %v4767, %v4765
  %v4902 = vpack.c.b16 %v4770, %v4768
  %v4903 = vpack.c.b16 %v4771, %v4769
  %v4904 = vpack.c.b16 %v4774, %v4772
  %v4905 = vpack.c.b16 %v4775, %v4773
  %v4906 = vpack.c.b16 %v4778, %v4776
  %v4907 = vpack.c.b16 %v4779, %v4777
  %v4908 = vpack.c.b16 %v4782, %v4780
  %v4909 = vpack.c.b16 %v4783, %v4781
  %v4910 = vpack.c.b16 %v4786, %v4784
  %v4911 = vpack.c.b16 %v4787, %v4785
  %v4912 = vpack.c.b16 %v4790, %v4788
  %v4913 = vpack.c.b16 %v4791, %v4789
  %v4914 = vpack.c.b16 %v4794, %v4792
  %v4915 = vpack.c.b16 %v4795, %v4793
  %v4916 = vpack.c.b16 %v4798, %v4796
  %v4917 = vpack.c.b16 %v4799, %v4797
  %v4918 = vpack.c.b16 %v4802, %v4800
  %v4919 = vpack.c.b16 %v4803, %v4801
  %v4920 = vpack.c.b16 %v4806, %v4804
  %v4921 = vpack.c.b16 %v4807, %v4805
  %v4922 = vpack.c.b16 %v4810, %v4808
  %v4923 = vpack.c.b16 %v4811, %v4809
  %v4924 = vpack.c.b16 %v4814, %v4812
  %v4925 = vpack.c.b16 %v4815, %v4813
  %v4926 = vpack.c.b16 %v4818, %v4816
  %v4927 = vpack.c.b16 %v4819, %v4817
  %v4928 = vpack.c.b16 %v4822, %v4820
  %v4929 = vpack.c.b16 %v4823, %v4821
  %v4930 = vpack.c.b16 %v4826, %v4824
  %v4931 = vpack.c.b16 %v4827, %v4825
  %v4932 = vpack.c.b16 %v4830, %v4828
  %v4933 = vpack.c.b16 %v4831, %v4829
  %v4934 = vpack.c.b16 %v4834, %v4832
  %v4935 = vpack.c.b16 %v4835, %v4833
  %v4936 = vpack.c.b16 %v4838, %v4836
  %v4937 = vpack.c.b16 %v4839, %v4837
  %v4938 = vpack.c.b16 %v4842, %v4840
  %v4939 = vpack.c.b16 %v4843, %v4841
  %v4940 = vpack.c.b16 %v4846, %v4844
  %v4941 = vpack.c.b16 %v4847, %v4845
  %v4942 = vpack.c.b16 %v4850, %v4848
  %v4943 = vpack.c.b16 %v4851, %v4849
  %v4944 = vpack.c.b16 %v4854, %v4852
  %v4945 = vpack.c.b16 %v4855, %v4853
  %v4946 = vpack.c.b16 %v4858, %v4856
  %v4947 = vpack.c.b16 %v4859, %v4857
  %v4948 = vpack.c.b16 %v4862, %v4860
  %v4949 = vpack.c.b16 %v4863, %v4861
  %v4950 = vpack.c.b16 %v4866, %v4864
  %v4951 = vpack.c.b16 %v4867, %v4865
  %v4952 = vpack.c.b16 %v4870, %v4868
  %v4953 = vpack.c.b16 %v4871, %v4869
  %v4954 = vpack.c.b16 %v4874, %v4872
  %v4955 = vpack.c.b16 %v4875, %v4873
  %v4956 = vpack.c.b16 %v4878, %v4876
  %v4957 = vpack.c.b16 %v4879, %v4877
  %v4958 = vpack.c.b16 %v4882, %v4880
  %v4959 = vpack.c.b16 %v4883, %v4881
  %vm5036 = vcmask 785408
  %v5038 = vsel %vm5036, %v4588, 0
  %v5041 = vsel %vm5036, %v4593, 0
  %v5044 = vsel %vm5036, %v4598, 0
  %v5047 = vsel %vm5036, %v4603, 0
  %v5050 = vsel %vm5036, %v4608, 0
  %v5053 = vsel %vm5036, %v4613, 0
  %v5056 = vsel %vm5036, %v4618, 0
  %v5059 = vsel %vm5036, %v4623, 0
  %5061 = vmatpush.bf16.msra.mxu0 %v4898
  %5062 = vmatpush.bf16.msra.mxu0 %v4896
  %5063 = vmatpush.bf16.msra.mxu0 %v4894
  %5064 = vmatpush.bf16.msra.mxu0 %v4892
  %5065 = vmatpush.bf16.msra.mxu0 %v4890
  %5066 = vmatpush.bf16.msra.mxu0 %v4888
  %5067 = vmatpush.bf16.msra.mxu0 %v4886
  %5068 = vmatpush.bf16.msra.mxu0 %v4884
  %5069 = vmatmul.bf16.gmra.mxu0 %v4584
  %v5070 = vpop.f32.mrf.mxu0
  %v5071 = vadd.f32 0.0, %v5070
  %v5072 = vpop.f32.mrf.mxu0
  %v5073 = vadd.f32 0.0, %v5072
  %5074 = vmatmul.bf16.gmra.mxu0 %v4589
  %v5075 = vpop.f32.mrf.mxu0
  %v5076 = vadd.f32 0.0, %v5075
  %v5077 = vpop.f32.mrf.mxu0
  %v5078 = vadd.f32 0.0, %v5077
  %5079 = vmatmul.bf16.gmra.mxu0 %v4594
  %v5080 = vpop.f32.mrf.mxu0
  %v5081 = vadd.f32 0.0, %v5080
  %v5082 = vpop.f32.mrf.mxu0
  %v5083 = vadd.f32 0.0, %v5082
  %5084 = vmatmul.bf16.gmra.mxu0 %v4599
  %v5085 = vpop.f32.mrf.mxu0
  %v5086 = vadd.f32 0.0, %v5085
  %v5087 = vpop.f32.mrf.mxu0
  %v5088 = vadd.f32 0.0, %v5087
  %5089 = vmatmul.bf16.gmra.mxu0 %v4604
  %v5090 = vpop.f32.mrf.mxu0
  %v5091 = vadd.f32 0.0, %v5090
  %v5092 = vpop.f32.mrf.mxu0
  %v5093 = vadd.f32 0.0, %v5092
  %5094 = vmatmul.bf16.gmra.mxu0 %v4609
  %v5095 = vpop.f32.mrf.mxu0
  %v5096 = vadd.f32 0.0, %v5095
  %v5097 = vpop.f32.mrf.mxu0
  %v5098 = vadd.f32 0.0, %v5097
  %5099 = vmatmul.bf16.gmra.mxu0 %v4614
  %v5100 = vpop.f32.mrf.mxu0
  %v5101 = vadd.f32 0.0, %v5100
  %v5102 = vpop.f32.mrf.mxu0
  %v5103 = vadd.f32 0.0, %v5102
  %5104 = vmatmul.bf16.gmra.mxu0 %v4619
  %v5105 = vpop.f32.mrf.mxu0
  %v5106 = vadd.f32 0.0, %v5105
  %v5107 = vpop.f32.mrf.mxu0
  %v5108 = vadd.f32 0.0, %v5107
  %5109 = vdwg.mxu0
  %5110 = vmatpush.bf16.msra.mxu0 %v4914
  %5111 = vmatpush.bf16.msra.mxu0 %v4912
  %5112 = vmatpush.bf16.msra.mxu0 %v4910
  %5113 = vmatpush.bf16.msra.mxu0 %v4908
  %5114 = vmatpush.bf16.msra.mxu0 %v4906
  %5115 = vmatpush.bf16.msra.mxu0 %v4904
  %5116 = vmatpush.bf16.msra.mxu0 %v4902
  %5117 = vmatpush.bf16.msra.mxu0 %v4900
  %5118 = vmatmul.bf16.gmra.mxu0 %v4585
  %v5119 = vpop.f32.mrf.mxu0
  %v5120 = vadd.f32 %v5071, %v5119
  %v5121 = vpop.f32.mrf.mxu0
  %v5122 = vadd.f32 %v5073, %v5121
  %5123 = vmatmul.bf16.gmra.mxu0 %v4590
  %v5124 = vpop.f32.mrf.mxu0
  %v5125 = vadd.f32 %v5076, %v5124
  %v5126 = vpop.f32.mrf.mxu0
  %v5127 = vadd.f32 %v5078, %v5126
  %5128 = vmatmul.bf16.gmra.mxu0 %v4595
  %v5129 = vpop.f32.mrf.mxu0
  %v5130 = vadd.f32 %v5081, %v5129
  %v5131 = vpop.f32.mrf.mxu0
  %v5132 = vadd.f32 %v5083, %v5131
  %5133 = vmatmul.bf16.gmra.mxu0 %v4600
  %v5134 = vpop.f32.mrf.mxu0
  %v5135 = vadd.f32 %v5086, %v5134
  %v5136 = vpop.f32.mrf.mxu0
  %v5137 = vadd.f32 %v5088, %v5136
  %5138 = vmatmul.bf16.gmra.mxu0 %v4605
  %v5139 = vpop.f32.mrf.mxu0
  %v5140 = vadd.f32 %v5091, %v5139
  %v5141 = vpop.f32.mrf.mxu0
  %v5142 = vadd.f32 %v5093, %v5141
  %5143 = vmatmul.bf16.gmra.mxu0 %v4610
  %v5144 = vpop.f32.mrf.mxu0
  %v5145 = vadd.f32 %v5096, %v5144
  %v5146 = vpop.f32.mrf.mxu0
  %v5147 = vadd.f32 %v5098, %v5146
  %5148 = vmatmul.bf16.gmra.mxu0 %v4615
  %v5149 = vpop.f32.mrf.mxu0
  %v5150 = vadd.f32 %v5101, %v5149
  %v5151 = vpop.f32.mrf.mxu0
  %v5152 = vadd.f32 %v5103, %v5151
  %5153 = vmatmul.bf16.gmra.mxu0 %v4620
  %v5154 = vpop.f32.mrf.mxu0
  %v5155 = vadd.f32 %v5106, %v5154
  %v5156 = vpop.f32.mrf.mxu0
  %v5157 = vadd.f32 %v5108, %v5156
  %5158 = vdwg.mxu0
  %5159 = vmatpush.bf16.msra.mxu0 %v4930
  %5160 = vmatpush.bf16.msra.mxu0 %v4928
  %5161 = vmatpush.bf16.msra.mxu0 %v4926
  %5162 = vmatpush.bf16.msra.mxu0 %v4924
  %5163 = vmatpush.bf16.msra.mxu0 %v4922
  %5164 = vmatpush.bf16.msra.mxu0 %v4920
  %5165 = vmatpush.bf16.msra.mxu0 %v4918
  %5166 = vmatpush.bf16.msra.mxu0 %v4916
  %5167 = vmatmul.bf16.gmra.mxu0 %v4586
  %v5168 = vpop.f32.mrf.mxu0
  %v5169 = vadd.f32 %v5120, %v5168
  %v5170 = vpop.f32.mrf.mxu0
  %v5171 = vadd.f32 %v5122, %v5170
  %5172 = vmatmul.bf16.gmra.mxu0 %v4591
  %v5173 = vpop.f32.mrf.mxu0
  %v5174 = vadd.f32 %v5125, %v5173
  %v5175 = vpop.f32.mrf.mxu0
  %v5176 = vadd.f32 %v5127, %v5175
  %5177 = vmatmul.bf16.gmra.mxu0 %v4596
  %v5178 = vpop.f32.mrf.mxu0
  %v5179 = vadd.f32 %v5130, %v5178
  %v5180 = vpop.f32.mrf.mxu0
  %v5181 = vadd.f32 %v5132, %v5180
  %5182 = vmatmul.bf16.gmra.mxu0 %v4601
  %v5183 = vpop.f32.mrf.mxu0
  %v5184 = vadd.f32 %v5135, %v5183
  %v5185 = vpop.f32.mrf.mxu0
  %v5186 = vadd.f32 %v5137, %v5185
  %5187 = vmatmul.bf16.gmra.mxu0 %v4606
  %v5188 = vpop.f32.mrf.mxu0
  %v5189 = vadd.f32 %v5140, %v5188
  %v5190 = vpop.f32.mrf.mxu0
  %v5191 = vadd.f32 %v5142, %v5190
  %5192 = vmatmul.bf16.gmra.mxu0 %v4611
  %v5193 = vpop.f32.mrf.mxu0
  %v5194 = vadd.f32 %v5145, %v5193
  %v5195 = vpop.f32.mrf.mxu0
  %v5196 = vadd.f32 %v5147, %v5195
  %5197 = vmatmul.bf16.gmra.mxu0 %v4616
  %v5198 = vpop.f32.mrf.mxu0
  %v5199 = vadd.f32 %v5150, %v5198
  %v5200 = vpop.f32.mrf.mxu0
  %v5201 = vadd.f32 %v5152, %v5200
  %5202 = vmatmul.bf16.gmra.mxu0 %v4621
  %v5203 = vpop.f32.mrf.mxu0
  %v5204 = vadd.f32 %v5155, %v5203
  %v5205 = vpop.f32.mrf.mxu0
  %v5206 = vadd.f32 %v5157, %v5205
  %5207 = vdwg.mxu0
  %5208 = vmatpush.bf16.msra.mxu0 %v4946
  %5209 = vmatpush.bf16.msra.mxu0 %v4944
  %5210 = vmatpush.bf16.msra.mxu0 %v4942
  %5211 = vmatpush.bf16.msra.mxu0 %v4940
  %5212 = vmatpush.bf16.msra.mxu0 %v4938
  %5213 = vmatpush.bf16.msra.mxu0 %v4936
  %5214 = vmatpush.bf16.msra.mxu0 %v4934
  %5215 = vmatpush.bf16.msra.mxu0 %v4932
  %5216 = vmatmul.bf16.gmra.mxu0 %v4587
  %v5217 = vpop.f32.mrf.mxu0
  %v5218 = vadd.f32 %v5169, %v5217
  %v5219 = vpop.f32.mrf.mxu0
  %v5220 = vadd.f32 %v5171, %v5219
  %5221 = vmatmul.bf16.gmra.mxu0 %v4592
  %v5222 = vpop.f32.mrf.mxu0
  %v5223 = vadd.f32 %v5174, %v5222
  %v5224 = vpop.f32.mrf.mxu0
  %v5225 = vadd.f32 %v5176, %v5224
  %5226 = vmatmul.bf16.gmra.mxu0 %v4597
  %v5227 = vpop.f32.mrf.mxu0
  %v5228 = vadd.f32 %v5179, %v5227
  %v5229 = vpop.f32.mrf.mxu0
  %v5230 = vadd.f32 %v5181, %v5229
  %5231 = vmatmul.bf16.gmra.mxu0 %v4602
  %v5232 = vpop.f32.mrf.mxu0
  %v5233 = vadd.f32 %v5184, %v5232
  %v5234 = vpop.f32.mrf.mxu0
  %v5235 = vadd.f32 %v5186, %v5234
  %5236 = vmatmul.bf16.gmra.mxu0 %v4607
  %v5237 = vpop.f32.mrf.mxu0
  %v5238 = vadd.f32 %v5189, %v5237
  %v5239 = vpop.f32.mrf.mxu0
  %v5240 = vadd.f32 %v5191, %v5239
  %5241 = vmatmul.bf16.gmra.mxu0 %v4612
  %v5242 = vpop.f32.mrf.mxu0
  %v5243 = vadd.f32 %v5194, %v5242
  %v5244 = vpop.f32.mrf.mxu0
  %v5245 = vadd.f32 %v5196, %v5244
  %5246 = vmatmul.bf16.gmra.mxu0 %v4617
  %v5247 = vpop.f32.mrf.mxu0
  %v5248 = vadd.f32 %v5199, %v5247
  %v5249 = vpop.f32.mrf.mxu0
  %v5250 = vadd.f32 %v5201, %v5249
  %5251 = vmatmul.bf16.gmra.mxu0 %v4622
  %v5252 = vpop.f32.mrf.mxu0
  %v5253 = vadd.f32 %v5204, %v5252
  %v5254 = vpop.f32.mrf.mxu0
  %v5255 = vadd.f32 %v5206, %v5254
  %5256 = vdwg.mxu0
  %5257 = vmatpush.bf16.msra.mxu0 0
  %5258 = vmatpush.bf16.msra.mxu0 0
  %5259 = vmatpush.bf16.msra.mxu0 %v4958
  %5260 = vmatpush.bf16.msra.mxu0 %v4956
  %5261 = vmatpush.bf16.msra.mxu0 %v4954
  %5262 = vmatpush.bf16.msra.mxu0 %v4952
  %5263 = vmatpush.bf16.msra.mxu0 %v4950
  %5264 = vmatpush.bf16.msra.mxu0 %v4948
  %5265 = vmatmul.bf16.gmra.mxu0 %v5038
  %v5266 = vpop.f32.mrf.mxu0
  %v5267 = vadd.f32 %v5218, %v5266
  %v5268 = vpop.f32.mrf.mxu0
  %v5269 = vadd.f32 %v5220, %v5268
  %5270 = vmatmul.bf16.gmra.mxu0 %v5041
  %v5271 = vpop.f32.mrf.mxu0
  %v5272 = vadd.f32 %v5223, %v5271
  %v5273 = vpop.f32.mrf.mxu0
  %v5274 = vadd.f32 %v5225, %v5273
  %5275 = vmatmul.bf16.gmra.mxu0 %v5044
  %v5276 = vpop.f32.mrf.mxu0
  %v5277 = vadd.f32 %v5228, %v5276
  %v5278 = vpop.f32.mrf.mxu0
  %v5279 = vadd.f32 %v5230, %v5278
  %5280 = vmatmul.bf16.gmra.mxu0 %v5047
  %v5281 = vpop.f32.mrf.mxu0
  %v5282 = vadd.f32 %v5233, %v5281
  %v5283 = vpop.f32.mrf.mxu0
  %v5284 = vadd.f32 %v5235, %v5283
  %5285 = vmatmul.bf16.gmra.mxu0 %v5050
  %v5286 = vpop.f32.mrf.mxu0
  %v5287 = vadd.f32 %v5238, %v5286
  %v5288 = vpop.f32.mrf.mxu0
  %v5289 = vadd.f32 %v5240, %v5288
  %5290 = vmatmul.bf16.gmra.mxu0 %v5053
  %v5291 = vpop.f32.mrf.mxu0
  %v5292 = vadd.f32 %v5243, %v5291
  %v5293 = vpop.f32.mrf.mxu0
  %v5294 = vadd.f32 %v5245, %v5293
  %5295 = vmatmul.bf16.gmra.mxu0 %v5056
  %v5296 = vpop.f32.mrf.mxu0
  %v5297 = vadd.f32 %v5248, %v5296
  %v5298 = vpop.f32.mrf.mxu0
  %v5299 = vadd.f32 %v5250, %v5298
  %5300 = vmatmul.bf16.gmra.mxu0 %v5059
  %v5301 = vpop.f32.mrf.mxu0
  %v5302 = vadd.f32 %v5253, %v5301
  %v5303 = vpop.f32.mrf.mxu0
  %v5304 = vadd.f32 %v5255, %v5303
  %5305 = vdwg.mxu0
  %5306 = vmatpush.bf16.msra.mxu0 %v4899
  %5307 = vmatpush.bf16.msra.mxu0 %v4897
  %5308 = vmatpush.bf16.msra.mxu0 %v4895
  %5309 = vmatpush.bf16.msra.mxu0 %v4893
  %5310 = vmatpush.bf16.msra.mxu0 %v4891
  %5311 = vmatpush.bf16.msra.mxu0 %v4889
  %5312 = vmatpush.bf16.msra.mxu0 %v4887
  %5313 = vmatpush.bf16.msra.mxu0 %v4885
  %5314 = vmatmul.bf16.gmra.mxu0 %v4584
  %v5315 = vpop.f32.mrf.mxu0
  %v5316 = vadd.f32 0.0, %v5315
  %v5317 = vpop.f32.mrf.mxu0
  %v5318 = vadd.f32 0.0, %v5317
  %5319 = vmatmul.bf16.gmra.mxu0 %v4589
  %v5320 = vpop.f32.mrf.mxu0
  %v5321 = vadd.f32 0.0, %v5320
  %v5322 = vpop.f32.mrf.mxu0
  %v5323 = vadd.f32 0.0, %v5322
  %5324 = vmatmul.bf16.gmra.mxu0 %v4594
  %v5325 = vpop.f32.mrf.mxu0
  %v5326 = vadd.f32 0.0, %v5325
  %v5327 = vpop.f32.mrf.mxu0
  %v5328 = vadd.f32 0.0, %v5327
  %5329 = vmatmul.bf16.gmra.mxu0 %v4599
  %v5330 = vpop.f32.mrf.mxu0
  %v5331 = vadd.f32 0.0, %v5330
  %v5332 = vpop.f32.mrf.mxu0
  %v5333 = vadd.f32 0.0, %v5332
  %5334 = vmatmul.bf16.gmra.mxu0 %v4604
  %v5335 = vpop.f32.mrf.mxu0
  %v5336 = vadd.f32 0.0, %v5335
  %v5337 = vpop.f32.mrf.mxu0
  %v5338 = vadd.f32 0.0, %v5337
  %5339 = vmatmul.bf16.gmra.mxu0 %v4609
  %v5340 = vpop.f32.mrf.mxu0
  %v5341 = vadd.f32 0.0, %v5340
  %v5342 = vpop.f32.mrf.mxu0
  %v5343 = vadd.f32 0.0, %v5342
  %5344 = vmatmul.bf16.gmra.mxu0 %v4614
  %v5345 = vpop.f32.mrf.mxu0
  %v5346 = vadd.f32 0.0, %v5345
  %v5347 = vpop.f32.mrf.mxu0
  %v5348 = vadd.f32 0.0, %v5347
  %5349 = vmatmul.bf16.gmra.mxu0 %v4619
  %v5350 = vpop.f32.mrf.mxu0
  %v5351 = vadd.f32 0.0, %v5350
  %v5352 = vpop.f32.mrf.mxu0
  %v5353 = vadd.f32 0.0, %v5352
  %5354 = vdwg.mxu0
  %5355 = vmatpush.bf16.msra.mxu0 %v4915
  %5356 = vmatpush.bf16.msra.mxu0 %v4913
  %5357 = vmatpush.bf16.msra.mxu0 %v4911
  %5358 = vmatpush.bf16.msra.mxu0 %v4909
  %5359 = vmatpush.bf16.msra.mxu0 %v4907
  %5360 = vmatpush.bf16.msra.mxu0 %v4905
  %5361 = vmatpush.bf16.msra.mxu0 %v4903
  %5362 = vmatpush.bf16.msra.mxu0 %v4901
  %5363 = vmatmul.bf16.gmra.mxu0 %v4585
  %v5364 = vpop.f32.mrf.mxu0
  %v5365 = vadd.f32 %v5316, %v5364
  %v5366 = vpop.f32.mrf.mxu0
  %v5367 = vadd.f32 %v5318, %v5366
  %5368 = vmatmul.bf16.gmra.mxu0 %v4590
  %v5369 = vpop.f32.mrf.mxu0
  %v5370 = vadd.f32 %v5321, %v5369
  %v5371 = vpop.f32.mrf.mxu0
  %v5372 = vadd.f32 %v5323, %v5371
  %5373 = vmatmul.bf16.gmra.mxu0 %v4595
  %v5374 = vpop.f32.mrf.mxu0
  %v5375 = vadd.f32 %v5326, %v5374
  %v5376 = vpop.f32.mrf.mxu0
  %v5377 = vadd.f32 %v5328, %v5376
  %5378 = vmatmul.bf16.gmra.mxu0 %v4600
  %v5379 = vpop.f32.mrf.mxu0
  %v5380 = vadd.f32 %v5331, %v5379
  %v5381 = vpop.f32.mrf.mxu0
  %v5382 = vadd.f32 %v5333, %v5381
  %5383 = vmatmul.bf16.gmra.mxu0 %v4605
  %v5384 = vpop.f32.mrf.mxu0
  %v5385 = vadd.f32 %v5336, %v5384
  %v5386 = vpop.f32.mrf.mxu0
  %v5387 = vadd.f32 %v5338, %v5386
  %5388 = vmatmul.bf16.gmra.mxu0 %v4610
  %v5389 = vpop.f32.mrf.mxu0
  %v5390 = vadd.f32 %v5341, %v5389
  %v5391 = vpop.f32.mrf.mxu0
  %v5392 = vadd.f32 %v5343, %v5391
  %5393 = vmatmul.bf16.gmra.mxu0 %v4615
  %v5394 = vpop.f32.mrf.mxu0
  %v5395 = vadd.f32 %v5346, %v5394
  %v5396 = vpop.f32.mrf.mxu0
  %v5397 = vadd.f32 %v5348, %v5396
  %5398 = vmatmul.bf16.gmra.mxu0 %v4620
  %v5399 = vpop.f32.mrf.mxu0
  %v5400 = vadd.f32 %v5351, %v5399
  %v5401 = vpop.f32.mrf.mxu0
  %v5402 = vadd.f32 %v5353, %v5401
  %5403 = vdwg.mxu0
  %5404 = vmatpush.bf16.msra.mxu0 %v4931
  %5405 = vmatpush.bf16.msra.mxu0 %v4929
  %5406 = vmatpush.bf16.msra.mxu0 %v4927
  %5407 = vmatpush.bf16.msra.mxu0 %v4925
  %5408 = vmatpush.bf16.msra.mxu0 %v4923
  %5409 = vmatpush.bf16.msra.mxu0 %v4921
  %5410 = vmatpush.bf16.msra.mxu0 %v4919
  %5411 = vmatpush.bf16.msra.mxu0 %v4917
  %5412 = vmatmul.bf16.gmra.mxu0 %v4586
  %v5413 = vpop.f32.mrf.mxu0
  %v5414 = vadd.f32 %v5365, %v5413
  %v5415 = vpop.f32.mrf.mxu0
  %v5416 = vadd.f32 %v5367, %v5415
  %5417 = vmatmul.bf16.gmra.mxu0 %v4591
  %v5418 = vpop.f32.mrf.mxu0
  %v5419 = vadd.f32 %v5370, %v5418
  %v5420 = vpop.f32.mrf.mxu0
  %v5421 = vadd.f32 %v5372, %v5420
  %5422 = vmatmul.bf16.gmra.mxu0 %v4596
  %v5423 = vpop.f32.mrf.mxu0
  %v5424 = vadd.f32 %v5375, %v5423
  %v5425 = vpop.f32.mrf.mxu0
  %v5426 = vadd.f32 %v5377, %v5425
  %5427 = vmatmul.bf16.gmra.mxu0 %v4601
  %v5428 = vpop.f32.mrf.mxu0
  %v5429 = vadd.f32 %v5380, %v5428
  %v5430 = vpop.f32.mrf.mxu0
  %v5431 = vadd.f32 %v5382, %v5430
  %5432 = vmatmul.bf16.gmra.mxu0 %v4606
  %v5433 = vpop.f32.mrf.mxu0
  %v5434 = vadd.f32 %v5385, %v5433
  %v5435 = vpop.f32.mrf.mxu0
  %v5436 = vadd.f32 %v5387, %v5435
  %5437 = vmatmul.bf16.gmra.mxu0 %v4611
  %v5438 = vpop.f32.mrf.mxu0
  %v5439 = vadd.f32 %v5390, %v5438
  %v5440 = vpop.f32.mrf.mxu0
  %v5441 = vadd.f32 %v5392, %v5440
  %5442 = vmatmul.bf16.gmra.mxu0 %v4616
  %v5443 = vpop.f32.mrf.mxu0
  %v5444 = vadd.f32 %v5395, %v5443
  %v5445 = vpop.f32.mrf.mxu0
  %v5446 = vadd.f32 %v5397, %v5445
  %5447 = vmatmul.bf16.gmra.mxu0 %v4621
  %v5448 = vpop.f32.mrf.mxu0
  %v5449 = vadd.f32 %v5400, %v5448
  %v5450 = vpop.f32.mrf.mxu0
  %v5451 = vadd.f32 %v5402, %v5450
  %5452 = vdwg.mxu0
  %5453 = vmatpush.bf16.msra.mxu0 %v4947
  %5454 = vmatpush.bf16.msra.mxu0 %v4945
  %5455 = vmatpush.bf16.msra.mxu0 %v4943
  %5456 = vmatpush.bf16.msra.mxu0 %v4941
  %5457 = vmatpush.bf16.msra.mxu0 %v4939
  %5458 = vmatpush.bf16.msra.mxu0 %v4937
  %5459 = vmatpush.bf16.msra.mxu0 %v4935
  %5460 = vmatpush.bf16.msra.mxu0 %v4933
  %5461 = vmatmul.bf16.gmra.mxu0 %v4587
  %v5462 = vpop.f32.mrf.mxu0
  %v5463 = vadd.f32 %v5414, %v5462
  %v5464 = vpop.f32.mrf.mxu0
  %v5465 = vadd.f32 %v5416, %v5464
  %5466 = vmatmul.bf16.gmra.mxu0 %v4592
  %v5467 = vpop.f32.mrf.mxu0
  %v5468 = vadd.f32 %v5419, %v5467
  %v5469 = vpop.f32.mrf.mxu0
  %v5470 = vadd.f32 %v5421, %v5469
  %5471 = vmatmul.bf16.gmra.mxu0 %v4597
  %v5472 = vpop.f32.mrf.mxu0
  %v5473 = vadd.f32 %v5424, %v5472
  %v5474 = vpop.f32.mrf.mxu0
  %v5475 = vadd.f32 %v5426, %v5474
  %5476 = vmatmul.bf16.gmra.mxu0 %v4602
  %v5477 = vpop.f32.mrf.mxu0
  %v5478 = vadd.f32 %v5429, %v5477
  %v5479 = vpop.f32.mrf.mxu0
  %v5480 = vadd.f32 %v5431, %v5479
  %5481 = vmatmul.bf16.gmra.mxu0 %v4607
  %v5482 = vpop.f32.mrf.mxu0
  %v5483 = vadd.f32 %v5434, %v5482
  %v5484 = vpop.f32.mrf.mxu0
  %v5485 = vadd.f32 %v5436, %v5484
  %5486 = vmatmul.bf16.gmra.mxu0 %v4612
  %v5487 = vpop.f32.mrf.mxu0
  %v5488 = vadd.f32 %v5439, %v5487
  %v5489 = vpop.f32.mrf.mxu0
  %v5490 = vadd.f32 %v5441, %v5489
  %5491 = vmatmul.bf16.gmra.mxu0 %v4617
  %v5492 = vpop.f32.mrf.mxu0
  %v5493 = vadd.f32 %v5444, %v5492
  %v5494 = vpop.f32.mrf.mxu0
  %v5495 = vadd.f32 %v5446, %v5494
  %5496 = vmatmul.bf16.gmra.mxu0 %v4622
  %v5497 = vpop.f32.mrf.mxu0
  %v5498 = vadd.f32 %v5449, %v5497
  %v5499 = vpop.f32.mrf.mxu0
  %v5500 = vadd.f32 %v5451, %v5499
  %5501 = vdwg.mxu0
  %5502 = vmatpush.bf16.msra.mxu0 0
  %5503 = vmatpush.bf16.msra.mxu0 0
  %5504 = vmatpush.bf16.msra.mxu0 %v4959
  %5505 = vmatpush.bf16.msra.mxu0 %v4957
  %5506 = vmatpush.bf16.msra.mxu0 %v4955
  %5507 = vmatpush.bf16.msra.mxu0 %v4953
  %5508 = vmatpush.bf16.msra.mxu0 %v4951
  %5509 = vmatpush.bf16.msra.mxu0 %v4949
  %5510 = vmatmul.bf16.gmra.mxu0 %v5038
  %v5511 = vpop.f32.mrf.mxu0
  %v5512 = vadd.f32 %v5463, %v5511
  %v5513 = vpop.f32.mrf.mxu0
  %v5514 = vadd.f32 %v5465, %v5513
  %5515 = vmatmul.bf16.gmra.mxu0 %v5041
  %v5516 = vpop.f32.mrf.mxu0
  %v5517 = vadd.f32 %v5468, %v5516
  %v5518 = vpop.f32.mrf.mxu0
  %v5519 = vadd.f32 %v5470, %v5518
  %5520 = vmatmul.bf16.gmra.mxu0 %v5044
  %v5521 = vpop.f32.mrf.mxu0
  %v5522 = vadd.f32 %v5473, %v5521
  %v5523 = vpop.f32.mrf.mxu0
  %v5524 = vadd.f32 %v5475, %v5523
  %5525 = vmatmul.bf16.gmra.mxu0 %v5047
  %v5526 = vpop.f32.mrf.mxu0
  %v5527 = vadd.f32 %v5478, %v5526
  %v5528 = vpop.f32.mrf.mxu0
  %v5529 = vadd.f32 %v5480, %v5528
  %5530 = vmatmul.bf16.gmra.mxu0 %v5050
  %v5531 = vpop.f32.mrf.mxu0
  %v5532 = vadd.f32 %v5483, %v5531
  %v5533 = vpop.f32.mrf.mxu0
  %v5534 = vadd.f32 %v5485, %v5533
  %5535 = vmatmul.bf16.gmra.mxu0 %v5053
  %v5536 = vpop.f32.mrf.mxu0
  %v5537 = vadd.f32 %v5488, %v5536
  %v5538 = vpop.f32.mrf.mxu0
  %v5539 = vadd.f32 %v5490, %v5538
  %5540 = vmatmul.bf16.gmra.mxu0 %v5056
  %v5541 = vpop.f32.mrf.mxu0
  %v5542 = vadd.f32 %v5493, %v5541
  %v5543 = vpop.f32.mrf.mxu0
  %v5544 = vadd.f32 %v5495, %v5543
  %5545 = vmatmul.bf16.gmra.mxu0 %v5059
  %v5546 = vpop.f32.mrf.mxu0
  %v5547 = vadd.f32 %v5498, %v5546
  %v5548 = vpop.f32.mrf.mxu0
  %v5549 = vadd.f32 %v5500, %v5548
  %5550 = vdwg.mxu0
  %v5599 = vunpack.c.l.b16 %v2688
  %v5600 = vunpack.c.h.b16 %v2688
  %v5601 = vunpack.c.l.b16 %v2689
  %v5602 = vunpack.c.h.b16 %v2689
  %v5603 = vunpack.c.l.b16 %v2690
  %v5604 = vunpack.c.l.b16 %v2691
  %v5605 = vunpack.c.h.b16 %v2691
  %v5606 = vunpack.c.l.b16 %v2692
  %v5607 = vunpack.c.h.b16 %v2692
  %v5608 = vunpack.c.l.b16 %v2693
  %v5609 = vunpack.c.l.b16 %v2694
  %v5610 = vunpack.c.h.b16 %v2694
  %v5611 = vunpack.c.l.b16 %v2695
  %v5612 = vunpack.c.h.b16 %v2695
  %v5613 = vunpack.c.l.b16 %v2696
  %v5614 = vunpack.c.l.b16 %v2697
  %v5615 = vunpack.c.h.b16 %v2697
  %v5616 = vunpack.c.l.b16 %v2698
  %v5617 = vunpack.c.h.b16 %v2698
  %v5618 = vunpack.c.l.b16 %v2699
  %v5619 = vunpack.c.l.b16 %v2700
  %v5620 = vunpack.c.h.b16 %v2700
  %v5621 = vunpack.c.l.b16 %v2701
  %v5622 = vunpack.c.h.b16 %v2701
  %v5623 = vunpack.c.l.b16 %v2702
  %v5624 = vunpack.c.l.b16 %v2703
  %v5625 = vunpack.c.h.b16 %v2703
  %v5626 = vunpack.c.l.b16 %v2704
  %v5627 = vunpack.c.h.b16 %v2704
  %v5628 = vunpack.c.l.b16 %v2705
  %v5629 = vunpack.c.l.b16 %v2706
  %v5630 = vunpack.c.h.b16 %v2706
  %v5631 = vunpack.c.l.b16 %v2707
  %v5632 = vunpack.c.h.b16 %v2707
  %v5633 = vunpack.c.l.b16 %v2708
  %v5634 = vunpack.c.l.b16 %v2709
  %v5635 = vunpack.c.h.b16 %v2709
  %v5636 = vunpack.c.l.b16 %v2710
  %v5637 = vunpack.c.h.b16 %v2710
  %v5638 = vunpack.c.l.b16 %v2711
  %v5639 = vunpack.c.l.b16 %v2712
  %v5640 = vunpack.c.h.b16 %v2712
  %v5641 = vunpack.c.l.b16 %v2713
  %v5642 = vunpack.c.h.b16 %v2713
  %v5643 = vunpack.c.l.b16 %v2714
  %v5644 = vunpack.c.l.b16 %v2715
  %v5645 = vunpack.c.h.b16 %v2715
  %v5646 = vunpack.c.l.b16 %v2716
  %v5647 = vunpack.c.h.b16 %v2716
  %v5648 = vunpack.c.l.b16 %v2717
  %v5649 = vunpack.c.l.b16 %v2718
  %v5650 = vunpack.c.h.b16 %v2718
  %v5651 = vunpack.c.l.b16 %v2719
  %v5652 = vunpack.c.h.b16 %v2719
  %v5653 = vunpack.c.l.b16 %v2720
  %v5654 = vunpack.c.l.b16 %v2721
  %v5655 = vunpack.c.h.b16 %v2721
  %v5656 = vunpack.c.l.b16 %v2722
  %v5657 = vunpack.c.h.b16 %v2722
  %v5658 = vunpack.c.l.b16 %v2723
  %v5659 = vunpack.c.l.b16 %v2724
  %v5660 = vunpack.c.h.b16 %v2724
  %v5661 = vunpack.c.l.b16 %v2725
  %v5662 = vunpack.c.h.b16 %v2725
  %v5663 = vunpack.c.l.b16 %v2726
  %v5664 = vunpack.c.l.b16 %v2727
  %v5665 = vunpack.c.h.b16 %v2727
  %v5666 = vunpack.c.l.b16 %v2728
  %v5667 = vunpack.c.h.b16 %v2728
  %v5668 = vunpack.c.l.b16 %v2729
  %v5669 = vunpack.c.l.b16 %v2730
  %v5670 = vunpack.c.h.b16 %v2730
  %v5671 = vunpack.c.l.b16 %v2731
  %v5672 = vunpack.c.h.b16 %v2731
  %v5673 = vunpack.c.l.b16 %v2732
  %v5674 = vunpack.c.l.b16 %v2733
  %v5675 = vunpack.c.h.b16 %v2733
  %v5676 = vunpack.c.l.b16 %v2734
  %v5677 = vunpack.c.h.b16 %v2734
  %v5678 = vunpack.c.l.b16 %v2735
  %v5679 = vpack.c.b16 %v5604, %v5599
  %v5680 = vpack.c.b16 %v5605, %v5600
  %v5681 = vpack.c.b16 %v5606, %v5601
  %v5682 = vpack.c.b16 %v5607, %v5602
  %v5683 = vpack.c.b16 %v5608, %v5603
  %v5684 = vpack.c.b16 %v5614, %v5609
  %v5685 = vpack.c.b16 %v5615, %v5610
  %v5686 = vpack.c.b16 %v5616, %v5611
  %v5687 = vpack.c.b16 %v5617, %v5612
  %v5688 = vpack.c.b16 %v5618, %v5613
  %v5689 = vpack.c.b16 %v5624, %v5619
  %v5690 = vpack.c.b16 %v5625, %v5620
  %v5691 = vpack.c.b16 %v5626, %v5621
  %v5692 = vpack.c.b16 %v5627, %v5622
  %v5693 = vpack.c.b16 %v5628, %v5623
  %v5694 = vpack.c.b16 %v5634, %v5629
  %v5695 = vpack.c.b16 %v5635, %v5630
  %v5696 = vpack.c.b16 %v5636, %v5631
  %v5697 = vpack.c.b16 %v5637, %v5632
  %v5698 = vpack.c.b16 %v5638, %v5633
  %v5699 = vpack.c.b16 %v5644, %v5639
  %v5700 = vpack.c.b16 %v5645, %v5640
  %v5701 = vpack.c.b16 %v5646, %v5641
  %v5702 = vpack.c.b16 %v5647, %v5642
  %v5703 = vpack.c.b16 %v5648, %v5643
  %v5704 = vpack.c.b16 %v5654, %v5649
  %v5705 = vpack.c.b16 %v5655, %v5650
  %v5706 = vpack.c.b16 %v5656, %v5651
  %v5707 = vpack.c.b16 %v5657, %v5652
  %v5708 = vpack.c.b16 %v5658, %v5653
  %v5709 = vpack.c.b16 %v5664, %v5659
  %v5710 = vpack.c.b16 %v5665, %v5660
  %v5711 = vpack.c.b16 %v5666, %v5661
  %v5712 = vpack.c.b16 %v5667, %v5662
  %v5713 = vpack.c.b16 %v5668, %v5663
  %v5714 = vpack.c.b16 %v5674, %v5669
  %v5715 = vpack.c.b16 %v5675, %v5670
  %v5716 = vpack.c.b16 %v5676, %v5671
  %v5717 = vpack.c.b16 %v5677, %v5672
  %v5718 = vpack.c.b16 %v5678, %v5673
  %v5752 = vsel %vm5036, %v5683, 0
  %v5755 = vsel %vm5036, %v5688, 0
  %v5758 = vsel %vm5036, %v5693, 0
  %v5761 = vsel %vm5036, %v5698, 0
  %v5764 = vsel %vm5036, %v5703, 0
  %v5767 = vsel %vm5036, %v5708, 0
  %v5770 = vsel %vm5036, %v5713, 0
  %v5773 = vsel %vm5036, %v5718, 0
  %5775 = vmatpush.bf16.msra.mxu0 %v4898
  %5776 = vmatpush.bf16.msra.mxu0 %v4896
  %5777 = vmatpush.bf16.msra.mxu0 %v4894
  %5778 = vmatpush.bf16.msra.mxu0 %v4892
  %5779 = vmatpush.bf16.msra.mxu0 %v4890
  %5780 = vmatpush.bf16.msra.mxu0 %v4888
  %5781 = vmatpush.bf16.msra.mxu0 %v4886
  %5782 = vmatpush.bf16.msra.mxu0 %v4884
  %5783 = vmatmul.bf16.gmra.mxu0 %v5679
  %v5784 = vpop.f32.mrf.mxu0
  %v5785 = vadd.f32 %v5267, %v5784
  %v5786 = vpop.f32.mrf.mxu0
  %v5787 = vadd.f32 %v5269, %v5786
  %5788 = vmatmul.bf16.gmra.mxu0 %v5684
  %v5789 = vpop.f32.mrf.mxu0
  %v5790 = vadd.f32 %v5272, %v5789
  %v5791 = vpop.f32.mrf.mxu0
  %v5792 = vadd.f32 %v5274, %v5791
  %5793 = vmatmul.bf16.gmra.mxu0 %v5689
  %v5794 = vpop.f32.mrf.mxu0
  %v5795 = vadd.f32 %v5277, %v5794
  %v5796 = vpop.f32.mrf.mxu0
  %v5797 = vadd.f32 %v5279, %v5796
  %5798 = vmatmul.bf16.gmra.mxu0 %v5694
  %v5799 = vpop.f32.mrf.mxu0
  %v5800 = vadd.f32 %v5282, %v5799
  %v5801 = vpop.f32.mrf.mxu0
  %v5802 = vadd.f32 %v5284, %v5801
  %5803 = vmatmul.bf16.gmra.mxu0 %v5699
  %v5804 = vpop.f32.mrf.mxu0
  %v5805 = vadd.f32 %v5287, %v5804
  %v5806 = vpop.f32.mrf.mxu0
  %v5807 = vadd.f32 %v5289, %v5806
  %5808 = vmatmul.bf16.gmra.mxu0 %v5704
  %v5809 = vpop.f32.mrf.mxu0
  %v5810 = vadd.f32 %v5292, %v5809
  %v5811 = vpop.f32.mrf.mxu0
  %v5812 = vadd.f32 %v5294, %v5811
  %5813 = vmatmul.bf16.gmra.mxu0 %v5709
  %v5814 = vpop.f32.mrf.mxu0
  %v5815 = vadd.f32 %v5297, %v5814
  %v5816 = vpop.f32.mrf.mxu0
  %v5817 = vadd.f32 %v5299, %v5816
  %5818 = vmatmul.bf16.gmra.mxu0 %v5714
  %v5819 = vpop.f32.mrf.mxu0
  %v5820 = vadd.f32 %v5302, %v5819
  %v5821 = vpop.f32.mrf.mxu0
  %v5822 = vadd.f32 %v5304, %v5821
  %5823 = vdwg.mxu0
  %5824 = vmatpush.bf16.msra.mxu0 %v4914
  %5825 = vmatpush.bf16.msra.mxu0 %v4912
  %5826 = vmatpush.bf16.msra.mxu0 %v4910
  %5827 = vmatpush.bf16.msra.mxu0 %v4908
  %5828 = vmatpush.bf16.msra.mxu0 %v4906
  %5829 = vmatpush.bf16.msra.mxu0 %v4904
  %5830 = vmatpush.bf16.msra.mxu0 %v4902
  %5831 = vmatpush.bf16.msra.mxu0 %v4900
  %5832 = vmatmul.bf16.gmra.mxu0 %v5680
  %v5833 = vpop.f32.mrf.mxu0
  %v5834 = vadd.f32 %v5785, %v5833
  %v5835 = vpop.f32.mrf.mxu0
  %v5836 = vadd.f32 %v5787, %v5835
  %5837 = vmatmul.bf16.gmra.mxu0 %v5685
  %v5838 = vpop.f32.mrf.mxu0
  %v5839 = vadd.f32 %v5790, %v5838
  %v5840 = vpop.f32.mrf.mxu0
  %v5841 = vadd.f32 %v5792, %v5840
  %5842 = vmatmul.bf16.gmra.mxu0 %v5690
  %v5843 = vpop.f32.mrf.mxu0
  %v5844 = vadd.f32 %v5795, %v5843
  %v5845 = vpop.f32.mrf.mxu0
  %v5846 = vadd.f32 %v5797, %v5845
  %5847 = vmatmul.bf16.gmra.mxu0 %v5695
  %v5848 = vpop.f32.mrf.mxu0
  %v5849 = vadd.f32 %v5800, %v5848
  %v5850 = vpop.f32.mrf.mxu0
  %v5851 = vadd.f32 %v5802, %v5850
  %5852 = vmatmul.bf16.gmra.mxu0 %v5700
  %v5853 = vpop.f32.mrf.mxu0
  %v5854 = vadd.f32 %v5805, %v5853
  %v5855 = vpop.f32.mrf.mxu0
  %v5856 = vadd.f32 %v5807, %v5855
  %5857 = vmatmul.bf16.gmra.mxu0 %v5705
  %v5858 = vpop.f32.mrf.mxu0
  %v5859 = vadd.f32 %v5810, %v5858
  %v5860 = vpop.f32.mrf.mxu0
  %v5861 = vadd.f32 %v5812, %v5860
  %5862 = vmatmul.bf16.gmra.mxu0 %v5710
  %v5863 = vpop.f32.mrf.mxu0
  %v5864 = vadd.f32 %v5815, %v5863
  %v5865 = vpop.f32.mrf.mxu0
  %v5866 = vadd.f32 %v5817, %v5865
  %5867 = vmatmul.bf16.gmra.mxu0 %v5715
  %v5868 = vpop.f32.mrf.mxu0
  %v5869 = vadd.f32 %v5820, %v5868
  %v5870 = vpop.f32.mrf.mxu0
  %v5871 = vadd.f32 %v5822, %v5870
  %5872 = vdwg.mxu0
  %5873 = vmatpush.bf16.msra.mxu0 %v4930
  %5874 = vmatpush.bf16.msra.mxu0 %v4928
  %5875 = vmatpush.bf16.msra.mxu0 %v4926
  %5876 = vmatpush.bf16.msra.mxu0 %v4924
  %5877 = vmatpush.bf16.msra.mxu0 %v4922
  %5878 = vmatpush.bf16.msra.mxu0 %v4920
  %5879 = vmatpush.bf16.msra.mxu0 %v4918
  %5880 = vmatpush.bf16.msra.mxu0 %v4916
  %5881 = vmatmul.bf16.gmra.mxu0 %v5681
  %v5882 = vpop.f32.mrf.mxu0
  %v5883 = vadd.f32 %v5834, %v5882
  %v5884 = vpop.f32.mrf.mxu0
  %v5885 = vadd.f32 %v5836, %v5884
  %5886 = vmatmul.bf16.gmra.mxu0 %v5686
  %v5887 = vpop.f32.mrf.mxu0
  %v5888 = vadd.f32 %v5839, %v5887
  %v5889 = vpop.f32.mrf.mxu0
  %v5890 = vadd.f32 %v5841, %v5889
  %5891 = vmatmul.bf16.gmra.mxu0 %v5691
  %v5892 = vpop.f32.mrf.mxu0
  %v5893 = vadd.f32 %v5844, %v5892
  %v5894 = vpop.f32.mrf.mxu0
  %v5895 = vadd.f32 %v5846, %v5894
  %5896 = vmatmul.bf16.gmra.mxu0 %v5696
  %v5897 = vpop.f32.mrf.mxu0
  %v5898 = vadd.f32 %v5849, %v5897
  %v5899 = vpop.f32.mrf.mxu0
  %v5900 = vadd.f32 %v5851, %v5899
  %5901 = vmatmul.bf16.gmra.mxu0 %v5701
  %v5902 = vpop.f32.mrf.mxu0
  %v5903 = vadd.f32 %v5854, %v5902
  %v5904 = vpop.f32.mrf.mxu0
  %v5905 = vadd.f32 %v5856, %v5904
  %5906 = vmatmul.bf16.gmra.mxu0 %v5706
  %v5907 = vpop.f32.mrf.mxu0
  %v5908 = vadd.f32 %v5859, %v5907
  %v5909 = vpop.f32.mrf.mxu0
  %v5910 = vadd.f32 %v5861, %v5909
  %5911 = vmatmul.bf16.gmra.mxu0 %v5711
  %v5912 = vpop.f32.mrf.mxu0
  %v5913 = vadd.f32 %v5864, %v5912
  %v5914 = vpop.f32.mrf.mxu0
  %v5915 = vadd.f32 %v5866, %v5914
  %5916 = vmatmul.bf16.gmra.mxu0 %v5716
  %v5917 = vpop.f32.mrf.mxu0
  %v5918 = vadd.f32 %v5869, %v5917
  %v5919 = vpop.f32.mrf.mxu0
  %v5920 = vadd.f32 %v5871, %v5919
  %5921 = vdwg.mxu0
  %5922 = vmatpush.bf16.msra.mxu0 %v4946
  %5923 = vmatpush.bf16.msra.mxu0 %v4944
  %5924 = vmatpush.bf16.msra.mxu0 %v4942
  %5925 = vmatpush.bf16.msra.mxu0 %v4940
  %5926 = vmatpush.bf16.msra.mxu0 %v4938
  %5927 = vmatpush.bf16.msra.mxu0 %v4936
  %5928 = vmatpush.bf16.msra.mxu0 %v4934
  %5929 = vmatpush.bf16.msra.mxu0 %v4932
  %5930 = vmatmul.bf16.gmra.mxu0 %v5682
  %v5931 = vpop.f32.mrf.mxu0
  %v5932 = vadd.f32 %v5883, %v5931
  %v5933 = vpop.f32.mrf.mxu0
  %v5934 = vadd.f32 %v5885, %v5933
  %5935 = vmatmul.bf16.gmra.mxu0 %v5687
  %v5936 = vpop.f32.mrf.mxu0
  %v5937 = vadd.f32 %v5888, %v5936
  %v5938 = vpop.f32.mrf.mxu0
  %v5939 = vadd.f32 %v5890, %v5938
  %5940 = vmatmul.bf16.gmra.mxu0 %v5692
  %v5941 = vpop.f32.mrf.mxu0
  %v5942 = vadd.f32 %v5893, %v5941
  %v5943 = vpop.f32.mrf.mxu0
  %v5944 = vadd.f32 %v5895, %v5943
  %5945 = vmatmul.bf16.gmra.mxu0 %v5697
  %v5946 = vpop.f32.mrf.mxu0
  %v5947 = vadd.f32 %v5898, %v5946
  %v5948 = vpop.f32.mrf.mxu0
  %v5949 = vadd.f32 %v5900, %v5948
  %5950 = vmatmul.bf16.gmra.mxu0 %v5702
  %v5951 = vpop.f32.mrf.mxu0
  %v5952 = vadd.f32 %v5903, %v5951
  %v5953 = vpop.f32.mrf.mxu0
  %v5954 = vadd.f32 %v5905, %v5953
  %5955 = vmatmul.bf16.gmra.mxu0 %v5707
  %v5956 = vpop.f32.mrf.mxu0
  %v5957 = vadd.f32 %v5908, %v5956
  %v5958 = vpop.f32.mrf.mxu0
  %v5959 = vadd.f32 %v5910, %v5958
  %5960 = vmatmul.bf16.gmra.mxu0 %v5712
  %v5961 = vpop.f32.mrf.mxu0
  %v5962 = vadd.f32 %v5913, %v5961
  %v5963 = vpop.f32.mrf.mxu0
  %v5964 = vadd.f32 %v5915, %v5963
  %5965 = vmatmul.bf16.gmra.mxu0 %v5717
  %v5966 = vpop.f32.mrf.mxu0
  %v5967 = vadd.f32 %v5918, %v5966
  %v5968 = vpop.f32.mrf.mxu0
  %v5969 = vadd.f32 %v5920, %v5968
  %5970 = vdwg.mxu0
  %5971 = vmatpush.bf16.msra.mxu0 0
  %5972 = vmatpush.bf16.msra.mxu0 0
  %5973 = vmatpush.bf16.msra.mxu0 %v4958
  %5974 = vmatpush.bf16.msra.mxu0 %v4956
  %5975 = vmatpush.bf16.msra.mxu0 %v4954
  %5976 = vmatpush.bf16.msra.mxu0 %v4952
  %5977 = vmatpush.bf16.msra.mxu0 %v4950
  %5978 = vmatpush.bf16.msra.mxu0 %v4948
  %5979 = vmatmul.bf16.gmra.mxu0 %v5752
  %v5980 = vpop.f32.mrf.mxu0
  %v5981 = vadd.f32 %v5932, %v5980
  %v5982 = vpop.f32.mrf.mxu0
  %v5983 = vadd.f32 %v5934, %v5982
  %5984 = vmatmul.bf16.gmra.mxu0 %v5755
  %v5985 = vpop.f32.mrf.mxu0
  %v5986 = vadd.f32 %v5937, %v5985
  %v5987 = vpop.f32.mrf.mxu0
  %v5988 = vadd.f32 %v5939, %v5987
  %5989 = vmatmul.bf16.gmra.mxu0 %v5758
  %v5990 = vpop.f32.mrf.mxu0
  %v5991 = vadd.f32 %v5942, %v5990
  %v5992 = vpop.f32.mrf.mxu0
  %v5993 = vadd.f32 %v5944, %v5992
  %5994 = vmatmul.bf16.gmra.mxu0 %v5761
  %v5995 = vpop.f32.mrf.mxu0
  %v5996 = vadd.f32 %v5947, %v5995
  %v5997 = vpop.f32.mrf.mxu0
  %v5998 = vadd.f32 %v5949, %v5997
  %5999 = vmatmul.bf16.gmra.mxu0 %v5764
  %v6000 = vpop.f32.mrf.mxu0
  %v6001 = vadd.f32 %v5952, %v6000
  %v6002 = vpop.f32.mrf.mxu0
  %v6003 = vadd.f32 %v5954, %v6002
  %6004 = vmatmul.bf16.gmra.mxu0 %v5767
  %v6005 = vpop.f32.mrf.mxu0
  %v6006 = vadd.f32 %v5957, %v6005
  %v6007 = vpop.f32.mrf.mxu0
  %v6008 = vadd.f32 %v5959, %v6007
  %6009 = vmatmul.bf16.gmra.mxu0 %v5770
  %v6010 = vpop.f32.mrf.mxu0
  %v6011 = vadd.f32 %v5962, %v6010
  %v6012 = vpop.f32.mrf.mxu0
  %v6013 = vadd.f32 %v5964, %v6012
  %6014 = vmatmul.bf16.gmra.mxu0 %v5773
  %v6015 = vpop.f32.mrf.mxu0
  %v6016 = vadd.f32 %v5967, %v6015
  %v6017 = vpop.f32.mrf.mxu0
  %v6018 = vadd.f32 %v5969, %v6017
  %6019 = vdwg.mxu0
  %6020 = vmatpush.bf16.msra.mxu0 %v4899
  %6021 = vmatpush.bf16.msra.mxu0 %v4897
  %6022 = vmatpush.bf16.msra.mxu0 %v4895
  %6023 = vmatpush.bf16.msra.mxu0 %v4893
  %6024 = vmatpush.bf16.msra.mxu0 %v4891
  %6025 = vmatpush.bf16.msra.mxu0 %v4889
  %6026 = vmatpush.bf16.msra.mxu0 %v4887
  %6027 = vmatpush.bf16.msra.mxu0 %v4885
  %6028 = vmatmul.bf16.gmra.mxu0 %v5679
  %v6029 = vpop.f32.mrf.mxu0
  %v6030 = vadd.f32 %v5512, %v6029
  %v6031 = vpop.f32.mrf.mxu0
  %v6032 = vadd.f32 %v5514, %v6031
  %6033 = vmatmul.bf16.gmra.mxu0 %v5684
  %v6034 = vpop.f32.mrf.mxu0
  %v6035 = vadd.f32 %v5517, %v6034
  %v6036 = vpop.f32.mrf.mxu0
  %v6037 = vadd.f32 %v5519, %v6036
  %6038 = vmatmul.bf16.gmra.mxu0 %v5689
  %v6039 = vpop.f32.mrf.mxu0
  %v6040 = vadd.f32 %v5522, %v6039
  %v6041 = vpop.f32.mrf.mxu0
  %v6042 = vadd.f32 %v5524, %v6041
  %6043 = vmatmul.bf16.gmra.mxu0 %v5694
  %v6044 = vpop.f32.mrf.mxu0
  %v6045 = vadd.f32 %v5527, %v6044
  %v6046 = vpop.f32.mrf.mxu0
  %v6047 = vadd.f32 %v5529, %v6046
  %6048 = vmatmul.bf16.gmra.mxu0 %v5699
  %v6049 = vpop.f32.mrf.mxu0
  %v6050 = vadd.f32 %v5532, %v6049
  %v6051 = vpop.f32.mrf.mxu0
  %v6052 = vadd.f32 %v5534, %v6051
  %6053 = vmatmul.bf16.gmra.mxu0 %v5704
  %v6054 = vpop.f32.mrf.mxu0
  %v6055 = vadd.f32 %v5537, %v6054
  %v6056 = vpop.f32.mrf.mxu0
  %v6057 = vadd.f32 %v5539, %v6056
  %6058 = vmatmul.bf16.gmra.mxu0 %v5709
  %v6059 = vpop.f32.mrf.mxu0
  %v6060 = vadd.f32 %v5542, %v6059
  %v6061 = vpop.f32.mrf.mxu0
  %v6062 = vadd.f32 %v5544, %v6061
  %6063 = vmatmul.bf16.gmra.mxu0 %v5714
  %v6064 = vpop.f32.mrf.mxu0
  %v6065 = vadd.f32 %v5547, %v6064
  %v6066 = vpop.f32.mrf.mxu0
  %v6067 = vadd.f32 %v5549, %v6066
  %6068 = vdwg.mxu0
  %6069 = vmatpush.bf16.msra.mxu0 %v4915
  %6070 = vmatpush.bf16.msra.mxu0 %v4913
  %6071 = vmatpush.bf16.msra.mxu0 %v4911
  %6072 = vmatpush.bf16.msra.mxu0 %v4909
  %6073 = vmatpush.bf16.msra.mxu0 %v4907
  %6074 = vmatpush.bf16.msra.mxu0 %v4905
  %6075 = vmatpush.bf16.msra.mxu0 %v4903
  %6076 = vmatpush.bf16.msra.mxu0 %v4901
  %6077 = vmatmul.bf16.gmra.mxu0 %v5680
  %v6078 = vpop.f32.mrf.mxu0
  %v6079 = vadd.f32 %v6030, %v6078
  %v6080 = vpop.f32.mrf.mxu0
  %v6081 = vadd.f32 %v6032, %v6080
  %6082 = vmatmul.bf16.gmra.mxu0 %v5685
  %v6083 = vpop.f32.mrf.mxu0
  %v6084 = vadd.f32 %v6035, %v6083
  %v6085 = vpop.f32.mrf.mxu0
  %v6086 = vadd.f32 %v6037, %v6085
  %6087 = vmatmul.bf16.gmra.mxu0 %v5690
  %v6088 = vpop.f32.mrf.mxu0
  %v6089 = vadd.f32 %v6040, %v6088
  %v6090 = vpop.f32.mrf.mxu0
  %v6091 = vadd.f32 %v6042, %v6090
  %6092 = vmatmul.bf16.gmra.mxu0 %v5695
  %v6093 = vpop.f32.mrf.mxu0
  %v6094 = vadd.f32 %v6045, %v6093
  %v6095 = vpop.f32.mrf.mxu0
  %v6096 = vadd.f32 %v6047, %v6095
  %6097 = vmatmul.bf16.gmra.mxu0 %v5700
  %v6098 = vpop.f32.mrf.mxu0
  %v6099 = vadd.f32 %v6050, %v6098
  %v6100 = vpop.f32.mrf.mxu0
  %v6101 = vadd.f32 %v6052, %v6100
  %6102 = vmatmul.bf16.gmra.mxu0 %v5705
  %v6103 = vpop.f32.mrf.mxu0
  %v6104 = vadd.f32 %v6055, %v6103
  %v6105 = vpop.f32.mrf.mxu0
  %v6106 = vadd.f32 %v6057, %v6105
  %6107 = vmatmul.bf16.gmra.mxu0 %v5710
  %v6108 = vpop.f32.mrf.mxu0
  %v6109 = vadd.f32 %v6060, %v6108
  %v6110 = vpop.f32.mrf.mxu0
  %v6111 = vadd.f32 %v6062, %v6110
  %6112 = vmatmul.bf16.gmra.mxu0 %v5715
  %v6113 = vpop.f32.mrf.mxu0
  %v6114 = vadd.f32 %v6065, %v6113
  %v6115 = vpop.f32.mrf.mxu0
  %v6116 = vadd.f32 %v6067, %v6115
  %6117 = vdwg.mxu0
  %6118 = vmatpush.bf16.msra.mxu0 %v4931
  %6119 = vmatpush.bf16.msra.mxu0 %v4929
  %6120 = vmatpush.bf16.msra.mxu0 %v4927
  %6121 = vmatpush.bf16.msra.mxu0 %v4925
  %6122 = vmatpush.bf16.msra.mxu0 %v4923
  %6123 = vmatpush.bf16.msra.mxu0 %v4921
  %6124 = vmatpush.bf16.msra.mxu0 %v4919
  %6125 = vmatpush.bf16.msra.mxu0 %v4917
  %6126 = vmatmul.bf16.gmra.mxu0 %v5681
  %v6127 = vpop.f32.mrf.mxu0
  %v6128 = vadd.f32 %v6079, %v6127
  %v6129 = vpop.f32.mrf.mxu0
  %v6130 = vadd.f32 %v6081, %v6129
  %6131 = vmatmul.bf16.gmra.mxu0 %v5686
  %v6132 = vpop.f32.mrf.mxu0
  %v6133 = vadd.f32 %v6084, %v6132
  %v6134 = vpop.f32.mrf.mxu0
  %v6135 = vadd.f32 %v6086, %v6134
  %6136 = vmatmul.bf16.gmra.mxu0 %v5691
  %v6137 = vpop.f32.mrf.mxu0
  %v6138 = vadd.f32 %v6089, %v6137
  %v6139 = vpop.f32.mrf.mxu0
  %v6140 = vadd.f32 %v6091, %v6139
  %6141 = vmatmul.bf16.gmra.mxu0 %v5696
  %v6142 = vpop.f32.mrf.mxu0
  %v6143 = vadd.f32 %v6094, %v6142
  %v6144 = vpop.f32.mrf.mxu0
  %v6145 = vadd.f32 %v6096, %v6144
  %6146 = vmatmul.bf16.gmra.mxu0 %v5701
  %v6147 = vpop.f32.mrf.mxu0
  %v6148 = vadd.f32 %v6099, %v6147
  %v6149 = vpop.f32.mrf.mxu0
  %v6150 = vadd.f32 %v6101, %v6149
  %6151 = vmatmul.bf16.gmra.mxu0 %v5706
  %v6152 = vpop.f32.mrf.mxu0
  %v6153 = vadd.f32 %v6104, %v6152
  %v6154 = vpop.f32.mrf.mxu0
  %v6155 = vadd.f32 %v6106, %v6154
  %6156 = vmatmul.bf16.gmra.mxu0 %v5711
  %v6157 = vpop.f32.mrf.mxu0
  %v6158 = vadd.f32 %v6109, %v6157
  %v6159 = vpop.f32.mrf.mxu0
  %v6160 = vadd.f32 %v6111, %v6159
  %6161 = vmatmul.bf16.gmra.mxu0 %v5716
  %v6162 = vpop.f32.mrf.mxu0
  %v6163 = vadd.f32 %v6114, %v6162
  %v6164 = vpop.f32.mrf.mxu0
  %v6165 = vadd.f32 %v6116, %v6164
  %6166 = vdwg.mxu0
  %6167 = vmatpush.bf16.msra.mxu0 %v4947
  %6168 = vmatpush.bf16.msra.mxu0 %v4945
  %6169 = vmatpush.bf16.msra.mxu0 %v4943
  %6170 = vmatpush.bf16.msra.mxu0 %v4941
  %6171 = vmatpush.bf16.msra.mxu0 %v4939
  %6172 = vmatpush.bf16.msra.mxu0 %v4937
  %6173 = vmatpush.bf16.msra.mxu0 %v4935
  %6174 = vmatpush.bf16.msra.mxu0 %v4933
  %6175 = vmatmul.bf16.gmra.mxu0 %v5682
  %v6176 = vpop.f32.mrf.mxu0
  %v6177 = vadd.f32 %v6128, %v6176
  %v6178 = vpop.f32.mrf.mxu0
  %v6179 = vadd.f32 %v6130, %v6178
  %6180 = vmatmul.bf16.gmra.mxu0 %v5687
  %v6181 = vpop.f32.mrf.mxu0
  %v6182 = vadd.f32 %v6133, %v6181
  %v6183 = vpop.f32.mrf.mxu0
  %v6184 = vadd.f32 %v6135, %v6183
  %6185 = vmatmul.bf16.gmra.mxu0 %v5692
  %v6186 = vpop.f32.mrf.mxu0
  %v6187 = vadd.f32 %v6138, %v6186
  %v6188 = vpop.f32.mrf.mxu0
  %v6189 = vadd.f32 %v6140, %v6188
  %6190 = vmatmul.bf16.gmra.mxu0 %v5697
  %v6191 = vpop.f32.mrf.mxu0
  %v6192 = vadd.f32 %v6143, %v6191
  %v6193 = vpop.f32.mrf.mxu0
  %v6194 = vadd.f32 %v6145, %v6193
  %6195 = vmatmul.bf16.gmra.mxu0 %v5702
  %v6196 = vpop.f32.mrf.mxu0
  %v6197 = vadd.f32 %v6148, %v6196
  %v6198 = vpop.f32.mrf.mxu0
  %v6199 = vadd.f32 %v6150, %v6198
  %6200 = vmatmul.bf16.gmra.mxu0 %v5707
  %v6201 = vpop.f32.mrf.mxu0
  %v6202 = vadd.f32 %v6153, %v6201
  %v6203 = vpop.f32.mrf.mxu0
  %v6204 = vadd.f32 %v6155, %v6203
  %6205 = vmatmul.bf16.gmra.mxu0 %v5712
  %v6206 = vpop.f32.mrf.mxu0
  %v6207 = vadd.f32 %v6158, %v6206
  %v6208 = vpop.f32.mrf.mxu0
  %v6209 = vadd.f32 %v6160, %v6208
  %6210 = vmatmul.bf16.gmra.mxu0 %v5717
  %v6211 = vpop.f32.mrf.mxu0
  %v6212 = vadd.f32 %v6163, %v6211
  %v6213 = vpop.f32.mrf.mxu0
  %v6214 = vadd.f32 %v6165, %v6213
  %6215 = vdwg.mxu0
  %6216 = vmatpush.bf16.msra.mxu0 0
  %6217 = vmatpush.bf16.msra.mxu0 0
  %6218 = vmatpush.bf16.msra.mxu0 %v4959
  %6219 = vmatpush.bf16.msra.mxu0 %v4957
  %6220 = vmatpush.bf16.msra.mxu0 %v4955
  %6221 = vmatpush.bf16.msra.mxu0 %v4953
  %6222 = vmatpush.bf16.msra.mxu0 %v4951
  %6223 = vmatpush.bf16.msra.mxu0 %v4949
  %6224 = vmatmul.bf16.gmra.mxu0 %v5752
  %v6225 = vpop.f32.mrf.mxu0
  %v6226 = vadd.f32 %v6177, %v6225
  %v6227 = vpop.f32.mrf.mxu0
  %v6228 = vadd.f32 %v6179, %v6227
  %6229 = vmatmul.bf16.gmra.mxu0 %v5755
  %v6230 = vpop.f32.mrf.mxu0
  %v6231 = vadd.f32 %v6182, %v6230
  %v6232 = vpop.f32.mrf.mxu0
  %v6233 = vadd.f32 %v6184, %v6232
  %6234 = vmatmul.bf16.gmra.mxu0 %v5758
  %v6235 = vpop.f32.mrf.mxu0
  %v6236 = vadd.f32 %v6187, %v6235
  %v6237 = vpop.f32.mrf.mxu0
  %v6238 = vadd.f32 %v6189, %v6237
  %6239 = vmatmul.bf16.gmra.mxu0 %v5761
  %v6240 = vpop.f32.mrf.mxu0
  %v6241 = vadd.f32 %v6192, %v6240
  %v6242 = vpop.f32.mrf.mxu0
  %v6243 = vadd.f32 %v6194, %v6242
  %6244 = vmatmul.bf16.gmra.mxu0 %v5764
  %v6245 = vpop.f32.mrf.mxu0
  %v6246 = vadd.f32 %v6197, %v6245
  %v6247 = vpop.f32.mrf.mxu0
  %v6248 = vadd.f32 %v6199, %v6247
  %6249 = vmatmul.bf16.gmra.mxu0 %v5767
  %v6250 = vpop.f32.mrf.mxu0
  %v6251 = vadd.f32 %v6202, %v6250
  %v6252 = vpop.f32.mrf.mxu0
  %v6253 = vadd.f32 %v6204, %v6252
  %6254 = vmatmul.bf16.gmra.mxu0 %v5770
  %v6255 = vpop.f32.mrf.mxu0
  %v6256 = vadd.f32 %v6207, %v6255
  %v6257 = vpop.f32.mrf.mxu0
  %v6258 = vadd.f32 %v6209, %v6257
  %6259 = vmatmul.bf16.gmra.mxu0 %v5773
  %v6260 = vpop.f32.mrf.mxu0
  %v6261 = vadd.f32 %v6212, %v6260
  %v6262 = vpop.f32.mrf.mxu0
  %v6263 = vadd.f32 %v6214, %v6262
  %6264 = vdwg.mxu0
  %6265 = vmatpush.bf16.msra.mxu0 %v4394
  %6266 = vmatpush.bf16.msra.mxu0 %v4392
  %6267 = vmatpush.bf16.msra.mxu0 %v4390
  %6268 = vmatpush.bf16.msra.mxu0 %v4388
  %6269 = vmatpush.bf16.msra.mxu0 %v4386
  %6270 = vmatpush.bf16.msra.mxu0 %v4384
  %6271 = vmatpush.bf16.msra.mxu0 %v4382
  %6272 = vmatpush.bf16.msra.mxu0 %v4380
  %6273 = vmatmul.bf16.gmra.mxu0 %v5679
  %v6274 = vpop.f32.mrf.mxu0
  %v6275 = vadd.f32 0.0, %v6274
  %v6276 = vpop.f32.mrf.mxu0
  %v6277 = vadd.f32 0.0, %v6276
  %6278 = vmatmul.bf16.gmra.mxu0 %v5684
  %v6279 = vpop.f32.mrf.mxu0
  %v6280 = vadd.f32 0.0, %v6279
  %v6281 = vpop.f32.mrf.mxu0
  %v6282 = vadd.f32 0.0, %v6281
  %6283 = vmatmul.bf16.gmra.mxu0 %v5689
  %v6284 = vpop.f32.mrf.mxu0
  %v6285 = vadd.f32 0.0, %v6284
  %v6286 = vpop.f32.mrf.mxu0
  %v6287 = vadd.f32 0.0, %v6286
  %6288 = vmatmul.bf16.gmra.mxu0 %v5694
  %v6289 = vpop.f32.mrf.mxu0
  %v6290 = vadd.f32 0.0, %v6289
  %v6291 = vpop.f32.mrf.mxu0
  %v6292 = vadd.f32 0.0, %v6291
  %6293 = vmatmul.bf16.gmra.mxu0 %v5699
  %v6294 = vpop.f32.mrf.mxu0
  %v6295 = vadd.f32 0.0, %v6294
  %v6296 = vpop.f32.mrf.mxu0
  %v6297 = vadd.f32 0.0, %v6296
  %6298 = vmatmul.bf16.gmra.mxu0 %v5704
  %v6299 = vpop.f32.mrf.mxu0
  %v6300 = vadd.f32 0.0, %v6299
  %v6301 = vpop.f32.mrf.mxu0
  %v6302 = vadd.f32 0.0, %v6301
  %6303 = vmatmul.bf16.gmra.mxu0 %v5709
  %v6304 = vpop.f32.mrf.mxu0
  %v6305 = vadd.f32 0.0, %v6304
  %v6306 = vpop.f32.mrf.mxu0
  %v6307 = vadd.f32 0.0, %v6306
  %6308 = vmatmul.bf16.gmra.mxu0 %v5714
  %v6309 = vpop.f32.mrf.mxu0
  %v6310 = vadd.f32 0.0, %v6309
  %v6311 = vpop.f32.mrf.mxu0
  %v6312 = vadd.f32 0.0, %v6311
  %6313 = vdwg.mxu0
  %6314 = vmatpush.bf16.msra.mxu0 %v4410
  %6315 = vmatpush.bf16.msra.mxu0 %v4408
  %6316 = vmatpush.bf16.msra.mxu0 %v4406
  %6317 = vmatpush.bf16.msra.mxu0 %v4404
  %6318 = vmatpush.bf16.msra.mxu0 %v4402
  %6319 = vmatpush.bf16.msra.mxu0 %v4400
  %6320 = vmatpush.bf16.msra.mxu0 %v4398
  %6321 = vmatpush.bf16.msra.mxu0 %v4396
  %6322 = vmatmul.bf16.gmra.mxu0 %v5680
  %v6323 = vpop.f32.mrf.mxu0
  %v6324 = vadd.f32 %v6275, %v6323
  %v6325 = vpop.f32.mrf.mxu0
  %v6326 = vadd.f32 %v6277, %v6325
  %6327 = vmatmul.bf16.gmra.mxu0 %v5685
  %v6328 = vpop.f32.mrf.mxu0
  %v6329 = vadd.f32 %v6280, %v6328
  %v6330 = vpop.f32.mrf.mxu0
  %v6331 = vadd.f32 %v6282, %v6330
  %6332 = vmatmul.bf16.gmra.mxu0 %v5690
  %v6333 = vpop.f32.mrf.mxu0
  %v6334 = vadd.f32 %v6285, %v6333
  %v6335 = vpop.f32.mrf.mxu0
  %v6336 = vadd.f32 %v6287, %v6335
  %6337 = vmatmul.bf16.gmra.mxu0 %v5695
  %v6338 = vpop.f32.mrf.mxu0
  %v6339 = vadd.f32 %v6290, %v6338
  %v6340 = vpop.f32.mrf.mxu0
  %v6341 = vadd.f32 %v6292, %v6340
  %6342 = vmatmul.bf16.gmra.mxu0 %v5700
  %v6343 = vpop.f32.mrf.mxu0
  %v6344 = vadd.f32 %v6295, %v6343
  %v6345 = vpop.f32.mrf.mxu0
  %v6346 = vadd.f32 %v6297, %v6345
  %6347 = vmatmul.bf16.gmra.mxu0 %v5705
  %v6348 = vpop.f32.mrf.mxu0
  %v6349 = vadd.f32 %v6300, %v6348
  %v6350 = vpop.f32.mrf.mxu0
  %v6351 = vadd.f32 %v6302, %v6350
  %6352 = vmatmul.bf16.gmra.mxu0 %v5710
  %v6353 = vpop.f32.mrf.mxu0
  %v6354 = vadd.f32 %v6305, %v6353
  %v6355 = vpop.f32.mrf.mxu0
  %v6356 = vadd.f32 %v6307, %v6355
  %6357 = vmatmul.bf16.gmra.mxu0 %v5715
  %v6358 = vpop.f32.mrf.mxu0
  %v6359 = vadd.f32 %v6310, %v6358
  %v6360 = vpop.f32.mrf.mxu0
  %v6361 = vadd.f32 %v6312, %v6360
  %6362 = vdwg.mxu0
  %6363 = vmatpush.bf16.msra.mxu0 %v4426
  %6364 = vmatpush.bf16.msra.mxu0 %v4424
  %6365 = vmatpush.bf16.msra.mxu0 %v4422
  %6366 = vmatpush.bf16.msra.mxu0 %v4420
  %6367 = vmatpush.bf16.msra.mxu0 %v4418
  %6368 = vmatpush.bf16.msra.mxu0 %v4416
  %6369 = vmatpush.bf16.msra.mxu0 %v4414
  %6370 = vmatpush.bf16.msra.mxu0 %v4412
  %6371 = vmatmul.bf16.gmra.mxu0 %v5681
  %v6372 = vpop.f32.mrf.mxu0
  %v6373 = vadd.f32 %v6324, %v6372
  %v6374 = vpop.f32.mrf.mxu0
  %v6375 = vadd.f32 %v6326, %v6374
  %6376 = vmatmul.bf16.gmra.mxu0 %v5686
  %v6377 = vpop.f32.mrf.mxu0
  %v6378 = vadd.f32 %v6329, %v6377
  %v6379 = vpop.f32.mrf.mxu0
  %v6380 = vadd.f32 %v6331, %v6379
  %6381 = vmatmul.bf16.gmra.mxu0 %v5691
  %v6382 = vpop.f32.mrf.mxu0
  %v6383 = vadd.f32 %v6334, %v6382
  %v6384 = vpop.f32.mrf.mxu0
  %v6385 = vadd.f32 %v6336, %v6384
  %6386 = vmatmul.bf16.gmra.mxu0 %v5696
  %v6387 = vpop.f32.mrf.mxu0
  %v6388 = vadd.f32 %v6339, %v6387
  %v6389 = vpop.f32.mrf.mxu0
  %v6390 = vadd.f32 %v6341, %v6389
  %6391 = vmatmul.bf16.gmra.mxu0 %v5701
  %v6392 = vpop.f32.mrf.mxu0
  %v6393 = vadd.f32 %v6344, %v6392
  %v6394 = vpop.f32.mrf.mxu0
  %v6395 = vadd.f32 %v6346, %v6394
  %6396 = vmatmul.bf16.gmra.mxu0 %v5706
  %v6397 = vpop.f32.mrf.mxu0
  %v6398 = vadd.f32 %v6349, %v6397
  %v6399 = vpop.f32.mrf.mxu0
  %v6400 = vadd.f32 %v6351, %v6399
  %6401 = vmatmul.bf16.gmra.mxu0 %v5711
  %v6402 = vpop.f32.mrf.mxu0
  %v6403 = vadd.f32 %v6354, %v6402
  %v6404 = vpop.f32.mrf.mxu0
  %v6405 = vadd.f32 %v6356, %v6404
  %6406 = vmatmul.bf16.gmra.mxu0 %v5716
  %v6407 = vpop.f32.mrf.mxu0
  %v6408 = vadd.f32 %v6359, %v6407
  %v6409 = vpop.f32.mrf.mxu0
  %v6410 = vadd.f32 %v6361, %v6409
  %6411 = vdwg.mxu0
  %6412 = vmatpush.bf16.msra.mxu0 %v4442
  %6413 = vmatpush.bf16.msra.mxu0 %v4440
  %6414 = vmatpush.bf16.msra.mxu0 %v4438
  %6415 = vmatpush.bf16.msra.mxu0 %v4436
  %6416 = vmatpush.bf16.msra.mxu0 %v4434
  %6417 = vmatpush.bf16.msra.mxu0 %v4432
  %6418 = vmatpush.bf16.msra.mxu0 %v4430
  %6419 = vmatpush.bf16.msra.mxu0 %v4428
  %6420 = vmatmul.bf16.gmra.mxu0 %v5682
  %v6421 = vpop.f32.mrf.mxu0
  %v6422 = vadd.f32 %v6373, %v6421
  %v6423 = vpop.f32.mrf.mxu0
  %v6424 = vadd.f32 %v6375, %v6423
  %6425 = vmatmul.bf16.gmra.mxu0 %v5687
  %v6426 = vpop.f32.mrf.mxu0
  %v6427 = vadd.f32 %v6378, %v6426
  %v6428 = vpop.f32.mrf.mxu0
  %v6429 = vadd.f32 %v6380, %v6428
  %6430 = vmatmul.bf16.gmra.mxu0 %v5692
  %v6431 = vpop.f32.mrf.mxu0
  %v6432 = vadd.f32 %v6383, %v6431
  %v6433 = vpop.f32.mrf.mxu0
  %v6434 = vadd.f32 %v6385, %v6433
  %6435 = vmatmul.bf16.gmra.mxu0 %v5697
  %v6436 = vpop.f32.mrf.mxu0
  %v6437 = vadd.f32 %v6388, %v6436
  %v6438 = vpop.f32.mrf.mxu0
  %v6439 = vadd.f32 %v6390, %v6438
  %6440 = vmatmul.bf16.gmra.mxu0 %v5702
  %v6441 = vpop.f32.mrf.mxu0
  %v6442 = vadd.f32 %v6393, %v6441
  %v6443 = vpop.f32.mrf.mxu0
  %v6444 = vadd.f32 %v6395, %v6443
  %6445 = vmatmul.bf16.gmra.mxu0 %v5707
  %v6446 = vpop.f32.mrf.mxu0
  %v6447 = vadd.f32 %v6398, %v6446
  %v6448 = vpop.f32.mrf.mxu0
  %v6449 = vadd.f32 %v6400, %v6448
  %6450 = vmatmul.bf16.gmra.mxu0 %v5712
  %v6451 = vpop.f32.mrf.mxu0
  %v6452 = vadd.f32 %v6403, %v6451
  %v6453 = vpop.f32.mrf.mxu0
  %v6454 = vadd.f32 %v6405, %v6453
  %6455 = vmatmul.bf16.gmra.mxu0 %v5717
  %v6456 = vpop.f32.mrf.mxu0
  %v6457 = vadd.f32 %v6408, %v6456
  %v6458 = vpop.f32.mrf.mxu0
  %v6459 = vadd.f32 %v6410, %v6458
  %6460 = vdwg.mxu0
  %6461 = vmatpush.bf16.msra.mxu0 0
  %6462 = vmatpush.bf16.msra.mxu0 0
  %6463 = vmatpush.bf16.msra.mxu0 %v4454
  %6464 = vmatpush.bf16.msra.mxu0 %v4452
  %6465 = vmatpush.bf16.msra.mxu0 %v4450
  %6466 = vmatpush.bf16.msra.mxu0 %v4448
  %6467 = vmatpush.bf16.msra.mxu0 %v4446
  %6468 = vmatpush.bf16.msra.mxu0 %v4444
  %6469 = vmatmul.bf16.gmra.mxu0 %v5752
  %v6470 = vpop.f32.mrf.mxu0
  %v6471 = vadd.f32 %v6422, %v6470
  %v6472 = vpop.f32.mrf.mxu0
  %v6473 = vadd.f32 %v6424, %v6472
  %6474 = vmatmul.bf16.gmra.mxu0 %v5755
  %v6475 = vpop.f32.mrf.mxu0
  %v6476 = vadd.f32 %v6427, %v6475
  %v6477 = vpop.f32.mrf.mxu0
  %v6478 = vadd.f32 %v6429, %v6477
  %6479 = vmatmul.bf16.gmra.mxu0 %v5758
  %v6480 = vpop.f32.mrf.mxu0
  %v6481 = vadd.f32 %v6432, %v6480
  %v6482 = vpop.f32.mrf.mxu0
  %v6483 = vadd.f32 %v6434, %v6482
  %6484 = vmatmul.bf16.gmra.mxu0 %v5761
  %v6485 = vpop.f32.mrf.mxu0
  %v6486 = vadd.f32 %v6437, %v6485
  %v6487 = vpop.f32.mrf.mxu0
  %v6488 = vadd.f32 %v6439, %v6487
  %6489 = vmatmul.bf16.gmra.mxu0 %v5764
  %v6490 = vpop.f32.mrf.mxu0
  %v6491 = vadd.f32 %v6442, %v6490
  %v6492 = vpop.f32.mrf.mxu0
  %v6493 = vadd.f32 %v6444, %v6492
  %6494 = vmatmul.bf16.gmra.mxu0 %v5767
  %v6495 = vpop.f32.mrf.mxu0
  %v6496 = vadd.f32 %v6447, %v6495
  %v6497 = vpop.f32.mrf.mxu0
  %v6498 = vadd.f32 %v6449, %v6497
  %6499 = vmatmul.bf16.gmra.mxu0 %v5770
  %v6500 = vpop.f32.mrf.mxu0
  %v6501 = vadd.f32 %v6452, %v6500
  %v6502 = vpop.f32.mrf.mxu0
  %v6503 = vadd.f32 %v6454, %v6502
  %6504 = vmatmul.bf16.gmra.mxu0 %v5773
  %v6505 = vpop.f32.mrf.mxu0
  %v6506 = vadd.f32 %v6457, %v6505
  %v6507 = vpop.f32.mrf.mxu0
  %v6508 = vadd.f32 %v6459, %v6507
  %6509 = vdwg.mxu0
  %6510 = vmatpush.bf16.msra.mxu0 %v4395
  %6511 = vmatpush.bf16.msra.mxu0 %v4393
  %6512 = vmatpush.bf16.msra.mxu0 %v4391
  %6513 = vmatpush.bf16.msra.mxu0 %v4389
  %6514 = vmatpush.bf16.msra.mxu0 %v4387
  %6515 = vmatpush.bf16.msra.mxu0 %v4385
  %6516 = vmatpush.bf16.msra.mxu0 %v4383
  %6517 = vmatpush.bf16.msra.mxu0 %v4381
  %6518 = vmatmul.bf16.gmra.mxu0 %v5679
  %v6519 = vpop.f32.mrf.mxu0
  %v6520 = vadd.f32 0.0, %v6519
  %v6521 = vpop.f32.mrf.mxu0
  %v6522 = vadd.f32 0.0, %v6521
  %6523 = vmatmul.bf16.gmra.mxu0 %v5684
  %v6524 = vpop.f32.mrf.mxu0
  %v6525 = vadd.f32 0.0, %v6524
  %v6526 = vpop.f32.mrf.mxu0
  %v6527 = vadd.f32 0.0, %v6526
  %6528 = vmatmul.bf16.gmra.mxu0 %v5689
  %v6529 = vpop.f32.mrf.mxu0
  %v6530 = vadd.f32 0.0, %v6529
  %v6531 = vpop.f32.mrf.mxu0
  %v6532 = vadd.f32 0.0, %v6531
  %6533 = vmatmul.bf16.gmra.mxu0 %v5694
  %v6534 = vpop.f32.mrf.mxu0
  %v6535 = vadd.f32 0.0, %v6534
  %v6536 = vpop.f32.mrf.mxu0
  %v6537 = vadd.f32 0.0, %v6536
  %6538 = vmatmul.bf16.gmra.mxu0 %v5699
  %v6539 = vpop.f32.mrf.mxu0
  %v6540 = vadd.f32 0.0, %v6539
  %v6541 = vpop.f32.mrf.mxu0
  %v6542 = vadd.f32 0.0, %v6541
  %6543 = vmatmul.bf16.gmra.mxu0 %v5704
  %v6544 = vpop.f32.mrf.mxu0
  %v6545 = vadd.f32 0.0, %v6544
  %v6546 = vpop.f32.mrf.mxu0
  %v6547 = vadd.f32 0.0, %v6546
  %6548 = vmatmul.bf16.gmra.mxu0 %v5709
  %v6549 = vpop.f32.mrf.mxu0
  %v6550 = vadd.f32 0.0, %v6549
  %v6551 = vpop.f32.mrf.mxu0
  %v6552 = vadd.f32 0.0, %v6551
  %6553 = vmatmul.bf16.gmra.mxu0 %v5714
  %v6554 = vpop.f32.mrf.mxu0
  %v6555 = vadd.f32 0.0, %v6554
  %v6556 = vpop.f32.mrf.mxu0
  %v6557 = vadd.f32 0.0, %v6556
  %6558 = vdwg.mxu0
  %6559 = vmatpush.bf16.msra.mxu0 %v4411
  %6560 = vmatpush.bf16.msra.mxu0 %v4409
  %6561 = vmatpush.bf16.msra.mxu0 %v4407
  %6562 = vmatpush.bf16.msra.mxu0 %v4405
  %6563 = vmatpush.bf16.msra.mxu0 %v4403
  %6564 = vmatpush.bf16.msra.mxu0 %v4401
  %6565 = vmatpush.bf16.msra.mxu0 %v4399
  %6566 = vmatpush.bf16.msra.mxu0 %v4397
  %6567 = vmatmul.bf16.gmra.mxu0 %v5680
  %v6568 = vpop.f32.mrf.mxu0
  %v6569 = vadd.f32 %v6520, %v6568
  %v6570 = vpop.f32.mrf.mxu0
  %v6571 = vadd.f32 %v6522, %v6570
  %6572 = vmatmul.bf16.gmra.mxu0 %v5685
  %v6573 = vpop.f32.mrf.mxu0
  %v6574 = vadd.f32 %v6525, %v6573
  %v6575 = vpop.f32.mrf.mxu0
  %v6576 = vadd.f32 %v6527, %v6575
  %6577 = vmatmul.bf16.gmra.mxu0 %v5690
  %v6578 = vpop.f32.mrf.mxu0
  %v6579 = vadd.f32 %v6530, %v6578
  %v6580 = vpop.f32.mrf.mxu0
  %v6581 = vadd.f32 %v6532, %v6580
  %6582 = vmatmul.bf16.gmra.mxu0 %v5695
  %v6583 = vpop.f32.mrf.mxu0
  %v6584 = vadd.f32 %v6535, %v6583
  %v6585 = vpop.f32.mrf.mxu0
  %v6586 = vadd.f32 %v6537, %v6585
  %6587 = vmatmul.bf16.gmra.mxu0 %v5700
  %v6588 = vpop.f32.mrf.mxu0
  %v6589 = vadd.f32 %v6540, %v6588
  %v6590 = vpop.f32.mrf.mxu0
  %v6591 = vadd.f32 %v6542, %v6590
  %6592 = vmatmul.bf16.gmra.mxu0 %v5705
  %v6593 = vpop.f32.mrf.mxu0
  %v6594 = vadd.f32 %v6545, %v6593
  %v6595 = vpop.f32.mrf.mxu0
  %v6596 = vadd.f32 %v6547, %v6595
  %6597 = vmatmul.bf16.gmra.mxu0 %v5710
  %v6598 = vpop.f32.mrf.mxu0
  %v6599 = vadd.f32 %v6550, %v6598
  %v6600 = vpop.f32.mrf.mxu0
  %v6601 = vadd.f32 %v6552, %v6600
  %6602 = vmatmul.bf16.gmra.mxu0 %v5715
  %v6603 = vpop.f32.mrf.mxu0
  %v6604 = vadd.f32 %v6555, %v6603
  %v6605 = vpop.f32.mrf.mxu0
  %v6606 = vadd.f32 %v6557, %v6605
  %6607 = vdwg.mxu0
  %6608 = vmatpush.bf16.msra.mxu0 %v4427
  %6609 = vmatpush.bf16.msra.mxu0 %v4425
  %6610 = vmatpush.bf16.msra.mxu0 %v4423
  %6611 = vmatpush.bf16.msra.mxu0 %v4421
  %6612 = vmatpush.bf16.msra.mxu0 %v4419
  %6613 = vmatpush.bf16.msra.mxu0 %v4417
  %6614 = vmatpush.bf16.msra.mxu0 %v4415
  %6615 = vmatpush.bf16.msra.mxu0 %v4413
  %6616 = vmatmul.bf16.gmra.mxu0 %v5681
  %v6617 = vpop.f32.mrf.mxu0
  %v6618 = vadd.f32 %v6569, %v6617
  %v6619 = vpop.f32.mrf.mxu0
  %v6620 = vadd.f32 %v6571, %v6619
  %6621 = vmatmul.bf16.gmra.mxu0 %v5686
  %v6622 = vpop.f32.mrf.mxu0
  %v6623 = vadd.f32 %v6574, %v6622
  %v6624 = vpop.f32.mrf.mxu0
  %v6625 = vadd.f32 %v6576, %v6624
  %6626 = vmatmul.bf16.gmra.mxu0 %v5691
  %v6627 = vpop.f32.mrf.mxu0
  %v6628 = vadd.f32 %v6579, %v6627
  %v6629 = vpop.f32.mrf.mxu0
  %v6630 = vadd.f32 %v6581, %v6629
  %6631 = vmatmul.bf16.gmra.mxu0 %v5696
  %v6632 = vpop.f32.mrf.mxu0
  %v6633 = vadd.f32 %v6584, %v6632
  %v6634 = vpop.f32.mrf.mxu0
  %v6635 = vadd.f32 %v6586, %v6634
  %6636 = vmatmul.bf16.gmra.mxu0 %v5701
  %v6637 = vpop.f32.mrf.mxu0
  %v6638 = vadd.f32 %v6589, %v6637
  %v6639 = vpop.f32.mrf.mxu0
  %v6640 = vadd.f32 %v6591, %v6639
  %6641 = vmatmul.bf16.gmra.mxu0 %v5706
  %v6642 = vpop.f32.mrf.mxu0
  %v6643 = vadd.f32 %v6594, %v6642
  %v6644 = vpop.f32.mrf.mxu0
  %v6645 = vadd.f32 %v6596, %v6644
  %6646 = vmatmul.bf16.gmra.mxu0 %v5711
  %v6647 = vpop.f32.mrf.mxu0
  %v6648 = vadd.f32 %v6599, %v6647
  %v6649 = vpop.f32.mrf.mxu0
  %v6650 = vadd.f32 %v6601, %v6649
  %6651 = vmatmul.bf16.gmra.mxu0 %v5716
  %v6652 = vpop.f32.mrf.mxu0
  %v6653 = vadd.f32 %v6604, %v6652
  %v6654 = vpop.f32.mrf.mxu0
  %v6655 = vadd.f32 %v6606, %v6654
  %6656 = vdwg.mxu0
  %6657 = vmatpush.bf16.msra.mxu0 %v4443
  %6658 = vmatpush.bf16.msra.mxu0 %v4441
  %6659 = vmatpush.bf16.msra.mxu0 %v4439
  %6660 = vmatpush.bf16.msra.mxu0 %v4437
  %6661 = vmatpush.bf16.msra.mxu0 %v4435
  %6662 = vmatpush.bf16.msra.mxu0 %v4433
  %6663 = vmatpush.bf16.msra.mxu0 %v4431
  %6664 = vmatpush.bf16.msra.mxu0 %v4429
  %6665 = vmatmul.bf16.gmra.mxu0 %v5682
  %v6666 = vpop.f32.mrf.mxu0
  %v6667 = vadd.f32 %v6618, %v6666
  %v6668 = vpop.f32.mrf.mxu0
  %v6669 = vadd.f32 %v6620, %v6668
  %6670 = vmatmul.bf16.gmra.mxu0 %v5687
  %v6671 = vpop.f32.mrf.mxu0
  %v6672 = vadd.f32 %v6623, %v6671
  %v6673 = vpop.f32.mrf.mxu0
  %v6674 = vadd.f32 %v6625, %v6673
  %6675 = vmatmul.bf16.gmra.mxu0 %v5692
  %v6676 = vpop.f32.mrf.mxu0
  %v6677 = vadd.f32 %v6628, %v6676
  %v6678 = vpop.f32.mrf.mxu0
  %v6679 = vadd.f32 %v6630, %v6678
  %6680 = vmatmul.bf16.gmra.mxu0 %v5697
  %v6681 = vpop.f32.mrf.mxu0
  %v6682 = vadd.f32 %v6633, %v6681
  %v6683 = vpop.f32.mrf.mxu0
  %v6684 = vadd.f32 %v6635, %v6683
  %6685 = vmatmul.bf16.gmra.mxu0 %v5702
  %v6686 = vpop.f32.mrf.mxu0
  %v6687 = vadd.f32 %v6638, %v6686
  %v6688 = vpop.f32.mrf.mxu0
  %v6689 = vadd.f32 %v6640, %v6688
  %6690 = vmatmul.bf16.gmra.mxu0 %v5707
  %v6691 = vpop.f32.mrf.mxu0
  %v6692 = vadd.f32 %v6643, %v6691
  %v6693 = vpop.f32.mrf.mxu0
  %v6694 = vadd.f32 %v6645, %v6693
  %6695 = vmatmul.bf16.gmra.mxu0 %v5712
  %v6696 = vpop.f32.mrf.mxu0
  %v6697 = vadd.f32 %v6648, %v6696
  %v6698 = vpop.f32.mrf.mxu0
  %v6699 = vadd.f32 %v6650, %v6698
  %6700 = vmatmul.bf16.gmra.mxu0 %v5717
  %v6701 = vpop.f32.mrf.mxu0
  %v6702 = vadd.f32 %v6653, %v6701
  %v6703 = vpop.f32.mrf.mxu0
  %v6704 = vadd.f32 %v6655, %v6703
  %6705 = vdwg.mxu0
  %6706 = vmatpush.bf16.msra.mxu0 0
  %6707 = vmatpush.bf16.msra.mxu0 0
  %6708 = vmatpush.bf16.msra.mxu0 %v4455
  %6709 = vmatpush.bf16.msra.mxu0 %v4453
  %6710 = vmatpush.bf16.msra.mxu0 %v4451
  %6711 = vmatpush.bf16.msra.mxu0 %v4449
  %6712 = vmatpush.bf16.msra.mxu0 %v4447
  %6713 = vmatpush.bf16.msra.mxu0 %v4445
  %6714 = vmatmul.bf16.gmra.mxu0 %v5752
  %v6715 = vpop.f32.mrf.mxu0
  %v6716 = vadd.f32 %v6667, %v6715
  %v6717 = vpop.f32.mrf.mxu0
  %v6718 = vadd.f32 %v6669, %v6717
  %6719 = vmatmul.bf16.gmra.mxu0 %v5755
  %v6720 = vpop.f32.mrf.mxu0
  %v6721 = vadd.f32 %v6672, %v6720
  %v6722 = vpop.f32.mrf.mxu0
  %v6723 = vadd.f32 %v6674, %v6722
  %6724 = vmatmul.bf16.gmra.mxu0 %v5758
  %v6725 = vpop.f32.mrf.mxu0
  %v6726 = vadd.f32 %v6677, %v6725
  %v6727 = vpop.f32.mrf.mxu0
  %v6728 = vadd.f32 %v6679, %v6727
  %6729 = vmatmul.bf16.gmra.mxu0 %v5761
  %v6730 = vpop.f32.mrf.mxu0
  %v6731 = vadd.f32 %v6682, %v6730
  %v6732 = vpop.f32.mrf.mxu0
  %v6733 = vadd.f32 %v6684, %v6732
  %6734 = vmatmul.bf16.gmra.mxu0 %v5764
  %v6735 = vpop.f32.mrf.mxu0
  %v6736 = vadd.f32 %v6687, %v6735
  %v6737 = vpop.f32.mrf.mxu0
  %v6738 = vadd.f32 %v6689, %v6737
  %6739 = vmatmul.bf16.gmra.mxu0 %v5767
  %v6740 = vpop.f32.mrf.mxu0
  %v6741 = vadd.f32 %v6692, %v6740
  %v6742 = vpop.f32.mrf.mxu0
  %v6743 = vadd.f32 %v6694, %v6742
  %6744 = vmatmul.bf16.gmra.mxu0 %v5770
  %v6745 = vpop.f32.mrf.mxu0
  %v6746 = vadd.f32 %v6697, %v6745
  %v6747 = vpop.f32.mrf.mxu0
  %v6748 = vadd.f32 %v6699, %v6747
  %6749 = vmatmul.bf16.gmra.mxu0 %v5773
  %v6750 = vpop.f32.mrf.mxu0
  %v6751 = vadd.f32 %v6702, %v6750
  %v6752 = vpop.f32.mrf.mxu0
  %v6753 = vadd.f32 %v6704, %v6752
  %6754 = vdwg.mxu0
  %v6755 = vadd.f32 %v5981, %v6471
  %v6756 = vadd.f32 %v6226, %v6716
  %v6757 = vadd.f32 %v5983, %v6473
  %v6758 = vadd.f32 %v6228, %v6718
  %v6759 = vadd.f32 %v5986, %v6476
  %v6760 = vadd.f32 %v6231, %v6721
  %v6761 = vadd.f32 %v5988, %v6478
  %v6762 = vadd.f32 %v6233, %v6723
  %v6763 = vadd.f32 %v5991, %v6481
  %v6764 = vadd.f32 %v6236, %v6726
  %v6765 = vadd.f32 %v5993, %v6483
  %v6766 = vadd.f32 %v6238, %v6728
  %v6767 = vadd.f32 %v5996, %v6486
  %v6768 = vadd.f32 %v6241, %v6731
  %v6769 = vadd.f32 %v5998, %v6488
  %v6770 = vadd.f32 %v6243, %v6733
  %v6771 = vadd.f32 %v6001, %v6491
  %v6772 = vadd.f32 %v6246, %v6736
  %v6773 = vadd.f32 %v6003, %v6493
  %v6774 = vadd.f32 %v6248, %v6738
  %v6775 = vadd.f32 %v6006, %v6496
  %v6776 = vadd.f32 %v6251, %v6741
  %v6777 = vadd.f32 %v6008, %v6498
  %v6778 = vadd.f32 %v6253, %v6743
  %v6779 = vadd.f32 %v6011, %v6501
  %v6780 = vadd.f32 %v6256, %v6746
  %v6781 = vadd.f32 %v6013, %v6503
  %v6782 = vadd.f32 %v6258, %v6748
  %v6783 = vadd.f32 %v6016, %v6506
  %v6784 = vadd.f32 %v6261, %v6751
  %v6785 = vadd.f32 %v6018, %v6508
  %v6786 = vadd.f32 %v6263, %v6753
  %6787 = vst [vmem:[%s7] sm:$0xff] %v6755
  %6788 = vst.msk [vmem:[%s7 + $0x8] sm:$0xff] %vm179, %v6756
  %6789 = vst [vmem:[%s7 + $0x10] sm:$0xff] %v6757
  %6790 = vst.msk [vmem:[%s7 + $0x18] sm:$0xff] %vm179, %v6758
  %6791 = vst [vmem:[%s7 + $0x20] sm:$0xff] %v6759
  %6792 = vst.msk [vmem:[%s7 + $0x28] sm:$0xff] %vm179, %v6760
  %6793 = vst [vmem:[%s7 + $0x30] sm:$0xff] %v6761
  %6794 = vst.msk [vmem:[%s7 + $0x38] sm:$0xff] %vm179, %v6762
  %6795 = vst [vmem:[%s7 + $0x40] sm:$0xff] %v6763
  %6796 = vst.msk [vmem:[%s7 + $0x48] sm:$0xff] %vm179, %v6764
  %6797 = vst [vmem:[%s7 + $0x50] sm:$0xff] %v6765
  %6798 = vst.msk [vmem:[%s7 + $0x58] sm:$0xff] %vm179, %v6766
  %6799 = vst [vmem:[%s7 + $0x60] sm:$0xff] %v6767
  %6800 = vst.msk [vmem:[%s7 + $0x68] sm:$0xff] %vm179, %v6768
  %6801 = vst [vmem:[%s7 + $0x70] sm:$0xff] %v6769
  %6802 = vst.msk [vmem:[%s7 + $0x78] sm:$0xff] %vm179, %v6770
  %6803 = vst [vmem:[%s7 + $0x80] sm:$0xff] %v6771
  %6804 = vst.msk [vmem:[%s7 + $0x88] sm:$0xff] %vm179, %v6772
  %6805 = vst [vmem:[%s7 + $0x90] sm:$0xff] %v6773
  %6806 = vst.msk [vmem:[%s7 + $0x98] sm:$0xff] %vm179, %v6774
  %6807 = vst [vmem:[%s7 + $0xa0] sm:$0xff] %v6775
  %6808 = vst.msk [vmem:[%s7 + $0xa8] sm:$0xff] %vm179, %v6776
  %6809 = vst [vmem:[%s7 + $0xb0] sm:$0xff] %v6777
  %6810 = vst.msk [vmem:[%s7 + $0xb8] sm:$0xff] %vm179, %v6778
  %6811 = vst [vmem:[%s7 + $0xc0] sm:$0xff] %v6779
  %6812 = vst.msk [vmem:[%s7 + $0xc8] sm:$0xff] %vm179, %v6780
  %6813 = vst [vmem:[%s7 + $0xd0] sm:$0xff] %v6781
  %6814 = vst.msk [vmem:[%s7 + $0xd8] sm:$0xff] %vm179, %v6782
  %6815 = vst [vmem:[%s7 + $0xe0] sm:$0xff] %v6783
  %6816 = vst.msk [vmem:[%s7 + $0xe8] sm:$0xff] %vm179, %v6784
  %6817 = vst [vmem:[%s7 + $0xf0] sm:$0xff] %v6785
  %6818 = vst.msk [vmem:[%s7 + $0xf8] sm:$0xff] %vm179, %v6786
  %v6819 = vsel %vm179, %v6756, 0.0
  %v6820 = vadd.f32 %v6755, %v6819
  %6821 = vadd.xlane.f32.xlu0 %v6820
  %v6822 = vpop.xlane.xlu0 %6821
  %v6823 = vsel %vm179, %v6758, 0.0
  %v6824 = vadd.f32 %v6757, %v6823
  %6825 = vadd.xlane.f32.xlu0 %v6824
  %v6826 = vpop.xlane.xlu0 %6825
  %v6827 = vsel %vm179, %v6760, 0.0
  %v6828 = vadd.f32 %v6759, %v6827
  %6829 = vadd.xlane.f32.xlu0 %v6828
  %v6830 = vpop.xlane.xlu0 %6829
  %v6831 = vsel %vm179, %v6762, 0.0
  %v6832 = vadd.f32 %v6761, %v6831
  %6833 = vadd.xlane.f32.xlu0 %v6832
  %v6834 = vpop.xlane.xlu0 %6833
  %v6835 = vsel %vm179, %v6764, 0.0
  %v6836 = vadd.f32 %v6763, %v6835
  %6837 = vadd.xlane.f32.xlu0 %v6836
  %v6838 = vpop.xlane.xlu0 %6837
  %v6839 = vsel %vm179, %v6766, 0.0
  %v6840 = vadd.f32 %v6765, %v6839
  %6841 = vadd.xlane.f32.xlu0 %v6840
  %v6842 = vpop.xlane.xlu0 %6841
  %v6843 = vsel %vm179, %v6768, 0.0
  %v6844 = vadd.f32 %v6767, %v6843
  %6845 = vadd.xlane.f32.xlu0 %v6844
  %v6846 = vpop.xlane.xlu0 %6845
  %v6847 = vsel %vm179, %v6770, 0.0
  %v6848 = vadd.f32 %v6769, %v6847
  %6849 = vadd.xlane.f32.xlu0 %v6848
  %v6850 = vpop.xlane.xlu0 %6849
  %v6851 = vsel %vm179, %v6772, 0.0
  %v6852 = vadd.f32 %v6771, %v6851
  %6853 = vadd.xlane.f32.xlu0 %v6852
  %v6854 = vpop.xlane.xlu0 %6853
  %v6855 = vsel %vm179, %v6774, 0.0
  %v6856 = vadd.f32 %v6773, %v6855
  %6857 = vadd.xlane.f32.xlu0 %v6856
  %v6858 = vpop.xlane.xlu0 %6857
  %v6859 = vsel %vm179, %v6776, 0.0
  %v6860 = vadd.f32 %v6775, %v6859
  %6861 = vadd.xlane.f32.xlu0 %v6860
  %v6862 = vpop.xlane.xlu0 %6861
  %v6863 = vsel %vm179, %v6778, 0.0
  %v6864 = vadd.f32 %v6777, %v6863
  %6865 = vadd.xlane.f32.xlu0 %v6864
  %v6866 = vpop.xlane.xlu0 %6865
  %v6867 = vsel %vm179, %v6780, 0.0
  %v6868 = vadd.f32 %v6779, %v6867
  %6869 = vadd.xlane.f32.xlu0 %v6868
  %v6870 = vpop.xlane.xlu0 %6869
  %v6871 = vsel %vm179, %v6782, 0.0
  %v6872 = vadd.f32 %v6781, %v6871
  %6873 = vadd.xlane.f32.xlu0 %v6872
  %v6874 = vpop.xlane.xlu0 %6873
  %v6875 = vsel %vm179, %v6784, 0.0
  %v6876 = vadd.f32 %v6783, %v6875
  %6877 = vadd.xlane.f32.xlu0 %v6876
  %v6878 = vpop.xlane.xlu0 %6877
  %v6879 = vsel %vm179, %v6786, 0.0
  %v6880 = vadd.f32 %v6785, %v6879
  %6881 = vadd.xlane.f32.xlu0 %v6880
  %v6882 = vpop.xlane.xlu0 %6881
  %v6883 = vadd.f32 %v6822, 0.0
  %v6884 = vadd.f32 %v6826, 0.0
  %v6885 = vadd.f32 %v6830, 0.0
  %v6886 = vadd.f32 %v6834, 0.0
  %v6887 = vadd.f32 %v6838, 0.0
  %v6888 = vadd.f32 %v6842, 0.0
  %v6889 = vadd.f32 %v6846, 0.0
  %v6890 = vadd.f32 %v6850, 0.0
  %v6891 = vadd.f32 %v6854, 0.0
  %v6892 = vadd.f32 %v6858, 0.0
  %v6893 = vadd.f32 %v6862, 0.0
  %v6894 = vadd.f32 %v6866, 0.0
  %v6895 = vadd.f32 %v6870, 0.0
  %v6896 = vadd.f32 %v6874, 0.0
  %v6897 = vadd.f32 %v6878, 0.0
  %v6898 = vadd.f32 %v6882, 0.0
  %v6899 = vmul.f32 %v6755, %v6755
  %v6900 = vmul.f32 %v6756, %v6756
  %v6901 = vmul.f32 %v6757, %v6757
  %v6902 = vmul.f32 %v6758, %v6758
  %v6903 = vmul.f32 %v6759, %v6759
  %v6904 = vmul.f32 %v6760, %v6760
  %v6905 = vmul.f32 %v6761, %v6761
  %v6906 = vmul.f32 %v6762, %v6762
  %v6907 = vmul.f32 %v6763, %v6763
  %v6908 = vmul.f32 %v6764, %v6764
  %v6909 = vmul.f32 %v6765, %v6765
  %v6910 = vmul.f32 %v6766, %v6766
  %v6911 = vmul.f32 %v6767, %v6767
  %v6912 = vmul.f32 %v6768, %v6768
  %v6913 = vmul.f32 %v6769, %v6769
  %v6914 = vmul.f32 %v6770, %v6770
  %v6915 = vmul.f32 %v6771, %v6771
  %v6916 = vmul.f32 %v6772, %v6772
  %v6917 = vmul.f32 %v6773, %v6773
  %v6918 = vmul.f32 %v6774, %v6774
  %v6919 = vmul.f32 %v6775, %v6775
  %v6920 = vmul.f32 %v6776, %v6776
  %v6921 = vmul.f32 %v6777, %v6777
  %v6922 = vmul.f32 %v6778, %v6778
  %v6923 = vmul.f32 %v6779, %v6779
  %v6924 = vmul.f32 %v6780, %v6780
  %v6925 = vmul.f32 %v6781, %v6781
  %v6926 = vmul.f32 %v6782, %v6782
  %v6927 = vmul.f32 %v6783, %v6783
  %v6928 = vmul.f32 %v6784, %v6784
  %v6929 = vmul.f32 %v6785, %v6785
  %v6930 = vmul.f32 %v6786, %v6786
  %v6931 = vsel %vm179, %v6900, 0.0
  %v6932 = vadd.f32 %v6899, %v6931
  %6933 = vadd.xlane.f32.xlu0 %v6932
  %v6934 = vpop.xlane.xlu0 %6933
  %v6935 = vsel %vm179, %v6902, 0.0
  %v6936 = vadd.f32 %v6901, %v6935
  %6937 = vadd.xlane.f32.xlu0 %v6936
  %v6938 = vpop.xlane.xlu0 %6937
  %v6939 = vsel %vm179, %v6904, 0.0
  %v6940 = vadd.f32 %v6903, %v6939
  %6941 = vadd.xlane.f32.xlu0 %v6940
  %v6942 = vpop.xlane.xlu0 %6941
  %v6943 = vsel %vm179, %v6906, 0.0
  %v6944 = vadd.f32 %v6905, %v6943
  %6945 = vadd.xlane.f32.xlu0 %v6944
  %v6946 = vpop.xlane.xlu0 %6945
  %v6947 = vsel %vm179, %v6908, 0.0
  %v6948 = vadd.f32 %v6907, %v6947
  %6949 = vadd.xlane.f32.xlu0 %v6948
  %v6950 = vpop.xlane.xlu0 %6949
  %v6951 = vsel %vm179, %v6910, 0.0
  %v6952 = vadd.f32 %v6909, %v6951
  %6953 = vadd.xlane.f32.xlu0 %v6952
  %v6954 = vpop.xlane.xlu0 %6953
  %v6955 = vsel %vm179, %v6912, 0.0
  %v6956 = vadd.f32 %v6911, %v6955
  %6957 = vadd.xlane.f32.xlu0 %v6956
  %v6958 = vpop.xlane.xlu0 %6957
  %v6959 = vsel %vm179, %v6914, 0.0
  %v6960 = vadd.f32 %v6913, %v6959
  %6961 = vadd.xlane.f32.xlu0 %v6960
  %v6962 = vpop.xlane.xlu0 %6961
  %v6963 = vsel %vm179, %v6916, 0.0
  %v6964 = vadd.f32 %v6915, %v6963
  %6965 = vadd.xlane.f32.xlu0 %v6964
  %v6966 = vpop.xlane.xlu0 %6965
  %v6967 = vsel %vm179, %v6918, 0.0
  %v6968 = vadd.f32 %v6917, %v6967
  %6969 = vadd.xlane.f32.xlu0 %v6968
  %v6970 = vpop.xlane.xlu0 %6969
  %v6971 = vsel %vm179, %v6920, 0.0
  %v6972 = vadd.f32 %v6919, %v6971
  %6973 = vadd.xlane.f32.xlu0 %v6972
  %v6974 = vpop.xlane.xlu0 %6973
  %v6975 = vsel %vm179, %v6922, 0.0
  %v6976 = vadd.f32 %v6921, %v6975
  %6977 = vadd.xlane.f32.xlu0 %v6976
  %v6978 = vpop.xlane.xlu0 %6977
  %v6979 = vsel %vm179, %v6924, 0.0
  %v6980 = vadd.f32 %v6923, %v6979
  %6981 = vadd.xlane.f32.xlu0 %v6980
  %v6982 = vpop.xlane.xlu0 %6981
  %v6983 = vsel %vm179, %v6926, 0.0
  %v6984 = vadd.f32 %v6925, %v6983
  %6985 = vadd.xlane.f32.xlu0 %v6984
  %v6986 = vpop.xlane.xlu0 %6985
  %v6987 = vsel %vm179, %v6928, 0.0
  %v6988 = vadd.f32 %v6927, %v6987
  %6989 = vadd.xlane.f32.xlu0 %v6988
  %v6990 = vpop.xlane.xlu0 %6989
  %v6991 = vsel %vm179, %v6930, 0.0
  %v6992 = vadd.f32 %v6929, %v6991
  %6993 = vadd.xlane.f32.xlu0 %v6992
  %v6994 = vpop.xlane.xlu0 %6993
  %v6995 = vadd.f32 %v6934, 0.0
  %v6996 = vadd.f32 %v6938, 0.0
  %v6997 = vadd.f32 %v6942, 0.0
  %v6998 = vadd.f32 %v6946, 0.0
  %v6999 = vadd.f32 %v6950, 0.0
  %v7000 = vadd.f32 %v6954, 0.0
  %v7001 = vadd.f32 %v6958, 0.0
  %v7002 = vadd.f32 %v6962, 0.0
  %v7003 = vadd.f32 %v6966, 0.0
  %v7004 = vadd.f32 %v6970, 0.0
  %v7005 = vadd.f32 %v6974, 0.0
  %v7006 = vadd.f32 %v6978, 0.0
  %v7007 = vadd.f32 %v6982, 0.0
  %v7008 = vadd.f32 %v6986, 0.0
  %v7009 = vadd.f32 %v6990, 0.0
  %v7010 = vadd.f32 %v6994, 0.0
  %v7011 = vmul.f32 %v6883, 0.0051020407
  %v7012 = vmul.f32 %v6884, 0.0051020407
  %v7013 = vmul.f32 %v6885, 0.0051020407
  %v7014 = vmul.f32 %v6886, 0.0051020407
  %v7015 = vmul.f32 %v6887, 0.0051020407
  %v7016 = vmul.f32 %v6888, 0.0051020407
  %v7017 = vmul.f32 %v6889, 0.0051020407
  %v7018 = vmul.f32 %v6890, 0.0051020407
  %v7019 = vmul.f32 %v6891, 0.0051020407
  %v7020 = vmul.f32 %v6892, 0.0051020407
  %v7021 = vmul.f32 %v6893, 0.0051020407
  %v7022 = vmul.f32 %v6894, 0.0051020407
  %v7023 = vmul.f32 %v6895, 0.0051020407
  %v7024 = vmul.f32 %v6896, 0.0051020407
  %v7025 = vmul.f32 %v6897, 0.0051020407
  %v7026 = vmul.f32 %v6898, 0.0051020407
  %v7027 = vmul.f32 %v6995, 0.0051020407
  %v7028 = vmul.f32 %v6996, 0.0051020407
  %v7029 = vmul.f32 %v6997, 0.0051020407
  %v7030 = vmul.f32 %v6998, 0.0051020407
  %v7031 = vmul.f32 %v6999, 0.0051020407
  %v7032 = vmul.f32 %v7000, 0.0051020407
  %v7033 = vmul.f32 %v7001, 0.0051020407
  %v7034 = vmul.f32 %v7002, 0.0051020407
  %v7035 = vmul.f32 %v7003, 0.0051020407
  %v7036 = vmul.f32 %v7004, 0.0051020407
  %v7037 = vmul.f32 %v7005, 0.0051020407
  %v7038 = vmul.f32 %v7006, 0.0051020407
  %v7039 = vmul.f32 %v7007, 0.0051020407
  %v7040 = vmul.f32 %v7008, 0.0051020407
  %v7041 = vmul.f32 %v7009, 0.0051020407
  %v7042 = vmul.f32 %v7010, 0.0051020407
  %v7043 = vmul.f32 %v7011, %v7011
  %v7044 = vmul.f32 %v7012, %v7012
  %v7045 = vmul.f32 %v7013, %v7013
  %v7046 = vmul.f32 %v7014, %v7014
  %v7047 = vmul.f32 %v7015, %v7015
  %v7048 = vmul.f32 %v7016, %v7016
  %v7049 = vmul.f32 %v7017, %v7017
  %v7050 = vmul.f32 %v7018, %v7018
  %v7051 = vmul.f32 %v7019, %v7019
  %v7052 = vmul.f32 %v7020, %v7020
  %v7053 = vmul.f32 %v7021, %v7021
  %v7054 = vmul.f32 %v7022, %v7022
  %v7055 = vmul.f32 %v7023, %v7023
  %v7056 = vmul.f32 %v7024, %v7024
  %v7057 = vmul.f32 %v7025, %v7025
  %v7058 = vmul.f32 %v7026, %v7026
  %v7059 = vsub.f32 %v7027, %v7043
  %v7060 = vsub.f32 %v7028, %v7044
  %v7061 = vsub.f32 %v7029, %v7045
  %v7062 = vsub.f32 %v7030, %v7046
  %v7063 = vsub.f32 %v7031, %v7047
  %v7064 = vsub.f32 %v7032, %v7048
  %v7065 = vsub.f32 %v7033, %v7049
  %v7066 = vsub.f32 %v7034, %v7050
  %v7067 = vsub.f32 %v7035, %v7051
  %v7068 = vsub.f32 %v7036, %v7052
  %v7069 = vsub.f32 %v7037, %v7053
  %v7070 = vsub.f32 %v7038, %v7054
  %v7071 = vsub.f32 %v7039, %v7055
  %v7072 = vsub.f32 %v7040, %v7056
  %v7073 = vsub.f32 %v7041, %v7057
  %v7074 = vsub.f32 %v7042, %v7058
  %v7075 = vmax.f32 %v7059, 0.0
  %v7076 = vmax.f32 %v7060, 0.0
  %v7077 = vmax.f32 %v7061, 0.0
  %v7078 = vmax.f32 %v7062, 0.0
  %v7079 = vmax.f32 %v7063, 0.0
  %v7080 = vmax.f32 %v7064, 0.0
  %v7081 = vmax.f32 %v7065, 0.0
  %v7082 = vmax.f32 %v7066, 0.0
  %v7083 = vmax.f32 %v7067, 0.0
  %v7084 = vmax.f32 %v7068, 0.0
  %v7085 = vmax.f32 %v7069, 0.0
  %v7086 = vmax.f32 %v7070, 0.0
  %v7087 = vmax.f32 %v7071, 0.0
  %v7088 = vmax.f32 %v7072, 0.0
  %v7089 = vmax.f32 %v7073, 0.0
  %v7090 = vmax.f32 %v7074, 0.0
  %v7091 = vld [vmem:[%s5] sm:$0xff]
  %v7092 = vld [vmem:[%s5 + $0x8] sm:$0xff]
  %v7093 = vld [vmem:[%s5 + $0x10] sm:$0xff]
  %v7094 = vld [vmem:[%s5 + $0x18] sm:$0xff]
  %v7095 = vld [vmem:[%s5 + $0x20] sm:$0xff]
  %v7096 = vld [vmem:[%s5 + $0x28] sm:$0xff]
  %v7097 = vld [vmem:[%s5 + $0x30] sm:$0xff]
  %v7098 = vld [vmem:[%s5 + $0x38] sm:$0xff]
  %v7099 = vld [vmem:[%s5 + $0x40] sm:$0xff]
  %v7100 = vld [vmem:[%s5 + $0x48] sm:$0xff]
  %v7101 = vld [vmem:[%s5 + $0x50] sm:$0xff]
  %v7102 = vld [vmem:[%s5 + $0x58] sm:$0xff]
  %v7103 = vld [vmem:[%s5 + $0x60] sm:$0xff]
  %v7104 = vld [vmem:[%s5 + $0x68] sm:$0xff]
  %v7105 = vld [vmem:[%s5 + $0x70] sm:$0xff]
  %v7106 = vld [vmem:[%s5 + $0x78] sm:$0xff]
  %v7107 = vadd.f32 %v7075, 1e-05
  %v7108 = vadd.f32 %v7076, 1e-05
  %v7109 = vadd.f32 %v7077, 1e-05
  %v7110 = vadd.f32 %v7078, 1e-05
  %v7111 = vadd.f32 %v7079, 1e-05
  %v7112 = vadd.f32 %v7080, 1e-05
  %v7113 = vadd.f32 %v7081, 1e-05
  %v7114 = vadd.f32 %v7082, 1e-05
  %v7115 = vadd.f32 %v7083, 1e-05
  %v7116 = vadd.f32 %v7084, 1e-05
  %v7117 = vadd.f32 %v7085, 1e-05
  %v7118 = vadd.f32 %v7086, 1e-05
  %v7119 = vadd.f32 %v7087, 1e-05
  %v7120 = vadd.f32 %v7088, 1e-05
  %v7121 = vadd.f32 %v7089, 1e-05
  %v7122 = vadd.f32 %v7090, 1e-05
  %v7123 = vrsqrt.pop %v7107
  %v7124 = vmul.f32 %v7123, %v7107
  %v7125 = vmul.f32 %v7124, %v7123
  %v7126 = vmul.f32 0.5, %v7125
  %v7127 = vsub.f32 1.5, %v7126
  %v7128 = vmul.f32 %v7123, %v7127
  %vm7129 = vweird.f32 %v7107
  %vm7130 = vweird.f32 %v7123
  %vm7131 = vmor %vm7129, %vm7130
  %v7132 = vsel %vm7131, %v7123, %v7128
  %v7133 = vrsqrt.pop %v7108
  %v7134 = vmul.f32 %v7133, %v7108
  %v7135 = vmul.f32 %v7134, %v7133
  %v7136 = vmul.f32 0.5, %v7135
  %v7137 = vsub.f32 1.5, %v7136
  %v7138 = vmul.f32 %v7133, %v7137
  %vm7139 = vweird.f32 %v7108
  %vm7140 = vweird.f32 %v7133
  %vm7141 = vmor %vm7139, %vm7140
  %v7142 = vsel %vm7141, %v7133, %v7138
  %v7143 = vrsqrt.pop %v7109
  %v7144 = vmul.f32 %v7143, %v7109
  %v7145 = vmul.f32 %v7144, %v7143
  %v7146 = vmul.f32 0.5, %v7145
  %v7147 = vsub.f32 1.5, %v7146
  %v7148 = vmul.f32 %v7143, %v7147
  %vm7149 = vweird.f32 %v7109
  %vm7150 = vweird.f32 %v7143
  %vm7151 = vmor %vm7149, %vm7150
  %v7152 = vsel %vm7151, %v7143, %v7148
  %v7153 = vrsqrt.pop %v7110
  %v7154 = vmul.f32 %v7153, %v7110
  %v7155 = vmul.f32 %v7154, %v7153
  %v7156 = vmul.f32 0.5, %v7155
  %v7157 = vsub.f32 1.5, %v7156
  %v7158 = vmul.f32 %v7153, %v7157
  %vm7159 = vweird.f32 %v7110
  %vm7160 = vweird.f32 %v7153
  %vm7161 = vmor %vm7159, %vm7160
  %v7162 = vsel %vm7161, %v7153, %v7158
  %v7163 = vrsqrt.pop %v7111
  %v7164 = vmul.f32 %v7163, %v7111
  %v7165 = vmul.f32 %v7164, %v7163
  %v7166 = vmul.f32 0.5, %v7165
  %v7167 = vsub.f32 1.5, %v7166
  %v7168 = vmul.f32 %v7163, %v7167
  %vm7169 = vweird.f32 %v7111
  %vm7170 = vweird.f32 %v7163
  %vm7171 = vmor %vm7169, %vm7170
  %v7172 = vsel %vm7171, %v7163, %v7168
  %v7173 = vrsqrt.pop %v7112
  %v7174 = vmul.f32 %v7173, %v7112
  %v7175 = vmul.f32 %v7174, %v7173
  %v7176 = vmul.f32 0.5, %v7175
  %v7177 = vsub.f32 1.5, %v7176
  %v7178 = vmul.f32 %v7173, %v7177
  %vm7179 = vweird.f32 %v7112
  %vm7180 = vweird.f32 %v7173
  %vm7181 = vmor %vm7179, %vm7180
  %v7182 = vsel %vm7181, %v7173, %v7178
  %v7183 = vrsqrt.pop %v7113
  %v7184 = vmul.f32 %v7183, %v7113
  %v7185 = vmul.f32 %v7184, %v7183
  %v7186 = vmul.f32 0.5, %v7185
  %v7187 = vsub.f32 1.5, %v7186
  %v7188 = vmul.f32 %v7183, %v7187
  %vm7189 = vweird.f32 %v7113
  %vm7190 = vweird.f32 %v7183
  %vm7191 = vmor %vm7189, %vm7190
  %v7192 = vsel %vm7191, %v7183, %v7188
  %v7193 = vrsqrt.pop %v7114
  %v7194 = vmul.f32 %v7193, %v7114
  %v7195 = vmul.f32 %v7194, %v7193
  %v7196 = vmul.f32 0.5, %v7195
  %v7197 = vsub.f32 1.5, %v7196
  %v7198 = vmul.f32 %v7193, %v7197
  %vm7199 = vweird.f32 %v7114
  %vm7200 = vweird.f32 %v7193
  %vm7201 = vmor %vm7199, %vm7200
  %v7202 = vsel %vm7201, %v7193, %v7198
  %v7203 = vrsqrt.pop %v7115
  %v7204 = vmul.f32 %v7203, %v7115
  %v7205 = vmul.f32 %v7204, %v7203
  %v7206 = vmul.f32 0.5, %v7205
  %v7207 = vsub.f32 1.5, %v7206
  %v7208 = vmul.f32 %v7203, %v7207
  %vm7209 = vweird.f32 %v7115
  %vm7210 = vweird.f32 %v7203
  %vm7211 = vmor %vm7209, %vm7210
  %v7212 = vsel %vm7211, %v7203, %v7208
  %v7213 = vrsqrt.pop %v7116
  %v7214 = vmul.f32 %v7213, %v7116
  %v7215 = vmul.f32 %v7214, %v7213
  %v7216 = vmul.f32 0.5, %v7215
  %v7217 = vsub.f32 1.5, %v7216
  %v7218 = vmul.f32 %v7213, %v7217
  %vm7219 = vweird.f32 %v7116
  %vm7220 = vweird.f32 %v7213
  %vm7221 = vmor %vm7219, %vm7220
  %v7222 = vsel %vm7221, %v7213, %v7218
  %v7223 = vrsqrt.pop %v7117
  %v7224 = vmul.f32 %v7223, %v7117
  %v7225 = vmul.f32 %v7224, %v7223
  %v7226 = vmul.f32 0.5, %v7225
  %v7227 = vsub.f32 1.5, %v7226
  %v7228 = vmul.f32 %v7223, %v7227
  %vm7229 = vweird.f32 %v7117
  %vm7230 = vweird.f32 %v7223
  %vm7231 = vmor %vm7229, %vm7230
  %v7232 = vsel %vm7231, %v7223, %v7228
  %v7233 = vrsqrt.pop %v7118
  %v7234 = vmul.f32 %v7233, %v7118
  %v7235 = vmul.f32 %v7234, %v7233
  %v7236 = vmul.f32 0.5, %v7235
  %v7237 = vsub.f32 1.5, %v7236
  %v7238 = vmul.f32 %v7233, %v7237
  %vm7239 = vweird.f32 %v7118
  %vm7240 = vweird.f32 %v7233
  %vm7241 = vmor %vm7239, %vm7240
  %v7242 = vsel %vm7241, %v7233, %v7238
  %v7243 = vrsqrt.pop %v7119
  %v7244 = vmul.f32 %v7243, %v7119
  %v7245 = vmul.f32 %v7244, %v7243
  %v7246 = vmul.f32 0.5, %v7245
  %v7247 = vsub.f32 1.5, %v7246
  %v7248 = vmul.f32 %v7243, %v7247
  %vm7249 = vweird.f32 %v7119
  %vm7250 = vweird.f32 %v7243
  %vm7251 = vmor %vm7249, %vm7250
  %v7252 = vsel %vm7251, %v7243, %v7248
  %v7253 = vrsqrt.pop %v7120
  %v7254 = vmul.f32 %v7253, %v7120
  %v7255 = vmul.f32 %v7254, %v7253
  %v7256 = vmul.f32 0.5, %v7255
  %v7257 = vsub.f32 1.5, %v7256
  %v7258 = vmul.f32 %v7253, %v7257
  %vm7259 = vweird.f32 %v7120
  %vm7260 = vweird.f32 %v7253
  %vm7261 = vmor %vm7259, %vm7260
  %v7262 = vsel %vm7261, %v7253, %v7258
  %v7263 = vrsqrt.pop %v7121
  %v7264 = vmul.f32 %v7263, %v7121
  %v7265 = vmul.f32 %v7264, %v7263
  %v7266 = vmul.f32 0.5, %v7265
  %v7267 = vsub.f32 1.5, %v7266
  %v7268 = vmul.f32 %v7263, %v7267
  %vm7269 = vweird.f32 %v7121
  %vm7270 = vweird.f32 %v7263
  %vm7271 = vmor %vm7269, %vm7270
  %v7272 = vsel %vm7271, %v7263, %v7268
  %v7273 = vrsqrt.pop %v7122
  %v7274 = vmul.f32 %v7273, %v7122
  %v7275 = vmul.f32 %v7274, %v7273
  %v7276 = vmul.f32 0.5, %v7275
  %v7277 = vsub.f32 1.5, %v7276
  %v7278 = vmul.f32 %v7273, %v7277
  %vm7279 = vweird.f32 %v7122
  %vm7280 = vweird.f32 %v7273
  %vm7281 = vmor %vm7279, %vm7280
  %v7282 = vsel %vm7281, %v7273, %v7278
  %v7283 = vmul.f32 %v7091, %v7132
  %v7284 = vmul.f32 %v7092, %v7142
  %v7285 = vmul.f32 %v7093, %v7152
  %v7286 = vmul.f32 %v7094, %v7162
  %v7287 = vmul.f32 %v7095, %v7172
  %v7288 = vmul.f32 %v7096, %v7182
  %v7289 = vmul.f32 %v7097, %v7192
  %v7290 = vmul.f32 %v7098, %v7202
  %v7291 = vmul.f32 %v7099, %v7212
  %v7292 = vmul.f32 %v7100, %v7222
  %v7293 = vmul.f32 %v7101, %v7232
  %v7294 = vmul.f32 %v7102, %v7242
  %v7295 = vmul.f32 %v7103, %v7252
  %v7296 = vmul.f32 %v7104, %v7262
  %v7297 = vmul.f32 %v7105, %v7272
  %v7298 = vmul.f32 %v7106, %v7282
  %v7299 = vld [vmem:[%s6] sm:$0xff]
  %v7300 = vld [vmem:[%s6 + $0x8] sm:$0xff]
  %v7301 = vld [vmem:[%s6 + $0x10] sm:$0xff]
  %v7302 = vld [vmem:[%s6 + $0x18] sm:$0xff]
  %v7303 = vld [vmem:[%s6 + $0x20] sm:$0xff]
  %v7304 = vld [vmem:[%s6 + $0x28] sm:$0xff]
  %v7305 = vld [vmem:[%s6 + $0x30] sm:$0xff]
  %v7306 = vld [vmem:[%s6 + $0x38] sm:$0xff]
  %v7307 = vld [vmem:[%s6 + $0x40] sm:$0xff]
  %v7308 = vld [vmem:[%s6 + $0x48] sm:$0xff]
  %v7309 = vld [vmem:[%s6 + $0x50] sm:$0xff]
  %v7310 = vld [vmem:[%s6 + $0x58] sm:$0xff]
  %v7311 = vld [vmem:[%s6 + $0x60] sm:$0xff]
  %v7312 = vld [vmem:[%s6 + $0x68] sm:$0xff]
  %v7313 = vld [vmem:[%s6 + $0x70] sm:$0xff]
  %v7314 = vld [vmem:[%s6 + $0x78] sm:$0xff]
  %v7315 = vmul.f32 %v7011, %v7283
  %v7316 = vmul.f32 %v7012, %v7284
  %v7317 = vmul.f32 %v7013, %v7285
  %v7318 = vmul.f32 %v7014, %v7286
  %v7319 = vmul.f32 %v7015, %v7287
  %v7320 = vmul.f32 %v7016, %v7288
  %v7321 = vmul.f32 %v7017, %v7289
  %v7322 = vmul.f32 %v7018, %v7290
  %v7323 = vmul.f32 %v7019, %v7291
  %v7324 = vmul.f32 %v7020, %v7292
  %v7325 = vmul.f32 %v7021, %v7293
  %v7326 = vmul.f32 %v7022, %v7294
  %v7327 = vmul.f32 %v7023, %v7295
  %v7328 = vmul.f32 %v7024, %v7296
  %v7329 = vmul.f32 %v7025, %v7297
  %v7330 = vmul.f32 %v7026, %v7298
  %v7331 = vsub.f32 %v7299, %v7315
  %v7332 = vsub.f32 %v7300, %v7316
  %v7333 = vsub.f32 %v7301, %v7317
  %v7334 = vsub.f32 %v7302, %v7318
  %v7335 = vsub.f32 %v7303, %v7319
  %v7336 = vsub.f32 %v7304, %v7320
  %v7337 = vsub.f32 %v7305, %v7321
  %v7338 = vsub.f32 %v7306, %v7322
  %v7339 = vsub.f32 %v7307, %v7323
  %v7340 = vsub.f32 %v7308, %v7324
  %v7341 = vsub.f32 %v7309, %v7325
  %v7342 = vsub.f32 %v7310, %v7326
  %v7343 = vsub.f32 %v7311, %v7327
  %v7344 = vsub.f32 %v7312, %v7328
  %v7345 = vsub.f32 %v7313, %v7329
  %v7346 = vsub.f32 %v7314, %v7330
  %v7347 = vld [vmem:[%s7] sm:$0xff]
  %v7348 = vld [vmem:[%s7 + $0x8] sm:$0xff]
  %v7349 = vld [vmem:[%s7 + $0x10] sm:$0xff]
  %v7350 = vld [vmem:[%s7 + $0x18] sm:$0xff]
  %v7351 = vld [vmem:[%s7 + $0x20] sm:$0xff]
  %v7352 = vld [vmem:[%s7 + $0x28] sm:$0xff]
  %v7353 = vld [vmem:[%s7 + $0x30] sm:$0xff]
  %v7354 = vld [vmem:[%s7 + $0x38] sm:$0xff]
  %v7355 = vld [vmem:[%s7 + $0x40] sm:$0xff]
  %v7356 = vld [vmem:[%s7 + $0x48] sm:$0xff]
  %v7357 = vld [vmem:[%s7 + $0x50] sm:$0xff]
  %v7358 = vld [vmem:[%s7 + $0x58] sm:$0xff]
  %v7359 = vld [vmem:[%s7 + $0x60] sm:$0xff]
  %v7360 = vld [vmem:[%s7 + $0x68] sm:$0xff]
  %v7361 = vld [vmem:[%s7 + $0x70] sm:$0xff]
  %v7362 = vld [vmem:[%s7 + $0x78] sm:$0xff]
  %v7363 = vld [vmem:[%s7 + $0x80] sm:$0xff]
  %v7364 = vld [vmem:[%s7 + $0x88] sm:$0xff]
  %v7365 = vld [vmem:[%s7 + $0x90] sm:$0xff]
  %v7366 = vld [vmem:[%s7 + $0x98] sm:$0xff]
  %v7367 = vld [vmem:[%s7 + $0xa0] sm:$0xff]
  %v7368 = vld [vmem:[%s7 + $0xa8] sm:$0xff]
  %v7369 = vld [vmem:[%s7 + $0xb0] sm:$0xff]
  %v7370 = vld [vmem:[%s7 + $0xb8] sm:$0xff]
  %v7371 = vld [vmem:[%s7 + $0xc0] sm:$0xff]
  %v7372 = vld [vmem:[%s7 + $0xc8] sm:$0xff]
  %v7373 = vld [vmem:[%s7 + $0xd0] sm:$0xff]
  %v7374 = vld [vmem:[%s7 + $0xd8] sm:$0xff]
  %v7375 = vld [vmem:[%s7 + $0xe0] sm:$0xff]
  %v7376 = vld [vmem:[%s7 + $0xe8] sm:$0xff]
  %v7377 = vld [vmem:[%s7 + $0xf0] sm:$0xff]
  %v7378 = vld [vmem:[%s7 + $0xf8] sm:$0xff]
  %7380 = vset.pattern.permute.xlu0 0
  %7381 = vperm.xlu0 %7380, %v7283
  %v7382 = vpop.permute.xlu0 %7381
  %7385 = vset.pattern.permute.xlu0 0
  %7386 = vperm.xlu0 %7385, %v7284
  %v7387 = vpop.permute.xlu0 %7386
  %7390 = vset.pattern.permute.xlu0 0
  %7391 = vperm.xlu0 %7390, %v7285
  %v7392 = vpop.permute.xlu0 %7391
  %7395 = vset.pattern.permute.xlu0 0
  %7396 = vperm.xlu0 %7395, %v7286
  %v7397 = vpop.permute.xlu0 %7396
  %7400 = vset.pattern.permute.xlu0 0
  %7401 = vperm.xlu0 %7400, %v7287
  %v7402 = vpop.permute.xlu0 %7401
  %7405 = vset.pattern.permute.xlu0 0
  %7406 = vperm.xlu0 %7405, %v7288
  %v7407 = vpop.permute.xlu0 %7406
  %7410 = vset.pattern.permute.xlu0 0
  %7411 = vperm.xlu0 %7410, %v7289
  %v7412 = vpop.permute.xlu0 %7411
  %7415 = vset.pattern.permute.xlu0 0
  %7416 = vperm.xlu0 %7415, %v7290
  %v7417 = vpop.permute.xlu0 %7416
  %7420 = vset.pattern.permute.xlu0 0
  %7421 = vperm.xlu0 %7420, %v7291
  %v7422 = vpop.permute.xlu0 %7421
  %7425 = vset.pattern.permute.xlu0 0
  %7426 = vperm.xlu0 %7425, %v7292
  %v7427 = vpop.permute.xlu0 %7426
  %7430 = vset.pattern.permute.xlu0 0
  %7431 = vperm.xlu0 %7430, %v7293
  %v7432 = vpop.permute.xlu0 %7431
  %7435 = vset.pattern.permute.xlu0 0
  %7436 = vperm.xlu0 %7435, %v7294
  %v7437 = vpop.permute.xlu0 %7436
  %7440 = vset.pattern.permute.xlu0 0
  %7441 = vperm.xlu0 %7440, %v7295
  %v7442 = vpop.permute.xlu0 %7441
  %7445 = vset.pattern.permute.xlu0 0
  %7446 = vperm.xlu0 %7445, %v7296
  %v7447 = vpop.permute.xlu0 %7446
  %7450 = vset.pattern.permute.xlu0 0
  %7451 = vperm.xlu0 %7450, %v7297
  %v7452 = vpop.permute.xlu0 %7451
  %7455 = vset.pattern.permute.xlu0 0
  %7456 = vperm.xlu0 %7455, %v7298
  %v7457 = vpop.permute.xlu0 %7456
  %v7459 = vmul.f32 %v7347, %v7382
  %v7460 = vmul.f32 %v7348, %v7382
  %v7461 = vmul.f32 %v7349, %v7387
  %v7462 = vmul.f32 %v7350, %v7387
  %v7463 = vmul.f32 %v7351, %v7392
  %v7464 = vmul.f32 %v7352, %v7392
  %v7465 = vmul.f32 %v7353, %v7397
  %v7466 = vmul.f32 %v7354, %v7397
  %v7467 = vmul.f32 %v7355, %v7402
  %v7468 = vmul.f32 %v7356, %v7402
  %v7469 = vmul.f32 %v7357, %v7407
  %v7470 = vmul.f32 %v7358, %v7407
  %v7471 = vmul.f32 %v7359, %v7412
  %v7472 = vmul.f32 %v7360, %v7412
  %v7473 = vmul.f32 %v7361, %v7417
  %v7474 = vmul.f32 %v7362, %v7417
  %v7475 = vmul.f32 %v7363, %v7422
  %v7476 = vmul.f32 %v7364, %v7422
  %v7477 = vmul.f32 %v7365, %v7427
  %v7478 = vmul.f32 %v7366, %v7427
  %v7479 = vmul.f32 %v7367, %v7432
  %v7480 = vmul.f32 %v7368, %v7432
  %v7481 = vmul.f32 %v7369, %v7437
  %v7482 = vmul.f32 %v7370, %v7437
  %v7483 = vmul.f32 %v7371, %v7442
  %v7484 = vmul.f32 %v7372, %v7442
  %v7485 = vmul.f32 %v7373, %v7447
  %v7486 = vmul.f32 %v7374, %v7447
  %v7487 = vmul.f32 %v7375, %v7452
  %v7488 = vmul.f32 %v7376, %v7452
  %v7489 = vmul.f32 %v7377, %v7457
  %v7490 = vmul.f32 %v7378, %v7457
  %7492 = vset.pattern.permute.xlu0 0
  %7493 = vperm.xlu0 %7492, %v7331
  %v7494 = vpop.permute.xlu0 %7493
  %7497 = vset.pattern.permute.xlu0 0
  %7498 = vperm.xlu0 %7497, %v7332
  %v7499 = vpop.permute.xlu0 %7498
  %7502 = vset.pattern.permute.xlu0 0
  %7503 = vperm.xlu0 %7502, %v7333
  %v7504 = vpop.permute.xlu0 %7503
  %7507 = vset.pattern.permute.xlu0 0
  %7508 = vperm.xlu0 %7507, %v7334
  %v7509 = vpop.permute.xlu0 %7508
  %7512 = vset.pattern.permute.xlu0 0
  %7513 = vperm.xlu0 %7512, %v7335
  %v7514 = vpop.permute.xlu0 %7513
  %7517 = vset.pattern.permute.xlu0 0
  %7518 = vperm.xlu0 %7517, %v7336
  %v7519 = vpop.permute.xlu0 %7518
  %7522 = vset.pattern.permute.xlu0 0
  %7523 = vperm.xlu0 %7522, %v7337
  %v7524 = vpop.permute.xlu0 %7523
  %7527 = vset.pattern.permute.xlu0 0
  %7528 = vperm.xlu0 %7527, %v7338
  %v7529 = vpop.permute.xlu0 %7528
  %7532 = vset.pattern.permute.xlu0 0
  %7533 = vperm.xlu0 %7532, %v7339
  %v7534 = vpop.permute.xlu0 %7533
  %7537 = vset.pattern.permute.xlu0 0
  %7538 = vperm.xlu0 %7537, %v7340
  %v7539 = vpop.permute.xlu0 %7538
  %7542 = vset.pattern.permute.xlu0 0
  %7543 = vperm.xlu0 %7542, %v7341
  %v7544 = vpop.permute.xlu0 %7543
  %7547 = vset.pattern.permute.xlu0 0
  %7548 = vperm.xlu0 %7547, %v7342
  %v7549 = vpop.permute.xlu0 %7548
  %7552 = vset.pattern.permute.xlu0 0
  %7553 = vperm.xlu0 %7552, %v7343
  %v7554 = vpop.permute.xlu0 %7553
  %7557 = vset.pattern.permute.xlu0 0
  %7558 = vperm.xlu0 %7557, %v7344
  %v7559 = vpop.permute.xlu0 %7558
  %7562 = vset.pattern.permute.xlu0 0
  %7563 = vperm.xlu0 %7562, %v7345
  %v7564 = vpop.permute.xlu0 %7563
  %7567 = vset.pattern.permute.xlu0 0
  %7568 = vperm.xlu0 %7567, %v7346
  %v7569 = vpop.permute.xlu0 %7568
  %v7571 = vadd.f32 %v7459, %v7494
  %v7572 = vadd.f32 %v7460, %v7494
  %v7573 = vadd.f32 %v7461, %v7499
  %v7574 = vadd.f32 %v7462, %v7499
  %v7575 = vadd.f32 %v7463, %v7504
  %v7576 = vadd.f32 %v7464, %v7504
  %v7577 = vadd.f32 %v7465, %v7509
  %v7578 = vadd.f32 %v7466, %v7509
  %v7579 = vadd.f32 %v7467, %v7514
  %v7580 = vadd.f32 %v7468, %v7514
  %v7581 = vadd.f32 %v7469, %v7519
  %v7582 = vadd.f32 %v7470, %v7519
  %v7583 = vadd.f32 %v7471, %v7524
  %v7584 = vadd.f32 %v7472, %v7524
  %v7585 = vadd.f32 %v7473, %v7529
  %v7586 = vadd.f32 %v7474, %v7529
  %v7587 = vadd.f32 %v7475, %v7534
  %v7588 = vadd.f32 %v7476, %v7534
  %v7589 = vadd.f32 %v7477, %v7539
  %v7590 = vadd.f32 %v7478, %v7539
  %v7591 = vadd.f32 %v7479, %v7544
  %v7592 = vadd.f32 %v7480, %v7544
  %v7593 = vadd.f32 %v7481, %v7549
  %v7594 = vadd.f32 %v7482, %v7549
  %v7595 = vadd.f32 %v7483, %v7554
  %v7596 = vadd.f32 %v7484, %v7554
  %v7597 = vadd.f32 %v7485, %v7559
  %v7598 = vadd.f32 %v7486, %v7559
  %v7599 = vadd.f32 %v7487, %v7564
  %v7600 = vadd.f32 %v7488, %v7564
  %v7601 = vadd.f32 %v7489, %v7569
  %v7602 = vadd.f32 %v7490, %v7569
  %7603 = vst [vmem:[%s7] sm:$0xff] %v7571
  %7604 = vst.msk [vmem:[%s7 + $0x8] sm:$0xff] %vm179, %v7572
  %7605 = vst [vmem:[%s7 + $0x10] sm:$0xff] %v7573
  %7606 = vst.msk [vmem:[%s7 + $0x18] sm:$0xff] %vm179, %v7574
  %7607 = vst [vmem:[%s7 + $0x20] sm:$0xff] %v7575
  %7608 = vst.msk [vmem:[%s7 + $0x28] sm:$0xff] %vm179, %v7576
  %7609 = vst [vmem:[%s7 + $0x30] sm:$0xff] %v7577
  %7610 = vst.msk [vmem:[%s7 + $0x38] sm:$0xff] %vm179, %v7578
  %7611 = vst [vmem:[%s7 + $0x40] sm:$0xff] %v7579
  %7612 = vst.msk [vmem:[%s7 + $0x48] sm:$0xff] %vm179, %v7580
  %7613 = vst [vmem:[%s7 + $0x50] sm:$0xff] %v7581
  %7614 = vst.msk [vmem:[%s7 + $0x58] sm:$0xff] %vm179, %v7582
  %7615 = vst [vmem:[%s7 + $0x60] sm:$0xff] %v7583
  %7616 = vst.msk [vmem:[%s7 + $0x68] sm:$0xff] %vm179, %v7584
  %7617 = vst [vmem:[%s7 + $0x70] sm:$0xff] %v7585
  %7618 = vst.msk [vmem:[%s7 + $0x78] sm:$0xff] %vm179, %v7586
  %7619 = vst [vmem:[%s7 + $0x80] sm:$0xff] %v7587
  %7620 = vst.msk [vmem:[%s7 + $0x88] sm:$0xff] %vm179, %v7588
  %7621 = vst [vmem:[%s7 + $0x90] sm:$0xff] %v7589
  %7622 = vst.msk [vmem:[%s7 + $0x98] sm:$0xff] %vm179, %v7590
  %7623 = vst [vmem:[%s7 + $0xa0] sm:$0xff] %v7591
  %7624 = vst.msk [vmem:[%s7 + $0xa8] sm:$0xff] %vm179, %v7592
  %7625 = vst [vmem:[%s7 + $0xb0] sm:$0xff] %v7593
  %7626 = vst.msk [vmem:[%s7 + $0xb8] sm:$0xff] %vm179, %v7594
  %7627 = vst [vmem:[%s7 + $0xc0] sm:$0xff] %v7595
  %7628 = vst.msk [vmem:[%s7 + $0xc8] sm:$0xff] %vm179, %v7596
  %7629 = vst [vmem:[%s7 + $0xd0] sm:$0xff] %v7597
  %7630 = vst.msk [vmem:[%s7 + $0xd8] sm:$0xff] %vm179, %v7598
  %7631 = vst [vmem:[%s7 + $0xe0] sm:$0xff] %v7599
  %7632 = vst.msk [vmem:[%s7 + $0xe8] sm:$0xff] %vm179, %v7600
  %7633 = vst [vmem:[%s7 + $0xf0] sm:$0xff] %v7601
  %7634 = vst.msk [vmem:[%s7 + $0xf8] sm:$0xff] %vm179, %v7602
  // Predicated region
  $region30: #{bn_relu_conv_bn.1} parent=0 // pred_check
    _
  $region31: #{bn_relu_conv_bn.1} parent=0 // pred_check_branch
    %7636 = sbr.rel (0) target = $region33
  $region32: #{bn_relu_conv_bn.1} parent=0 // pred_region
    _
  $region33: #{bn_relu_conv_bn.1} parent=0 // pred_fallthru
    _
  // Predicated region
  $region34: #{bn_relu_conv_bn.1} parent=0 // pred_check
    _
  $region35: #{bn_relu_conv_bn.1} parent=0 // pred_check_branch
    %7638 = sbr.rel (0) target = $region37
  $region36: #{bn_relu_conv_bn.1} parent=0 // pred_region
    _
  $region37: #{bn_relu_conv_bn.1} parent=0 // pred_fallthru
    _

</llo_original>
